<compile_context>
chip_gen: v6e
topology: v6e:2x2x1
jax: 0.10.0
libtpu: 0.0.40
codegen_flags: <defaults>
</compile_context>

<pallas_src>
import numpy as np
import jax
import jax.numpy as jnp
from jax.experimental import pallas as pl
from jax.experimental.pallas import tpu as pltpu  # noqa: F401  (kept per template)

# ----------------- configuration (stand-in for `args`) -----------------
IMG_SIZE     = 7          # odd, >= 5 (hs_cw_vit ring construction)
IN_CHANS     = 32
SET_EMBED_LINEAR = False  # -> self.dim = in_chans (cw_vit.__init__)
DIM          = IN_CHANS
NUM_CLASSES  = 10         # args.CLASSES_NUM
HEADS        = 4          # args.heads   (main transformer)
DEPTH        = 2          # args.depth
MLP_DIM      = 64         # args.mlp_dim
DIM_HEAD     = 64
R_HEADS      = 3          # ratio_transformer heads (hard-coded in module)
R_DEPTH      = 7          # ratio_transformer depth (hard-coded in module)
POOL         = 'cls'      # hs_cw_vit default
BATCH        = 2
LN_EPS       = 1e-5
INIT_SCALE   = 0.02
NEG_BIG      = -1e30      # additive mask for cross-batch attention entries
# pos_embed = 'sin', cw_pe = 0, has_pe = 1, dropout = emb_dropout = 0 -> identities


# ----------------- host-side helpers (exact ports of the torch glue) -----------------
def get_sinusoid_encoding(n_position, d_hid):
    def angle_vec(pos):
        return [pos / np.power(10000, 2 * (j // 2) / d_hid) for j in range(d_hid)]
    tab = np.array([angle_vec(p) for p in range(n_position)], dtype=np.float64)
    tab[:, 0::2] = np.sin(tab[:, 0::2])
    tab[:, 1::2] = np.cos(tab[:, 1::2])
    return jnp.asarray(tab[None], dtype=jnp.float32)          # (1, n_pos, d_hid)


def spiral_ring(edge, mid1, mid2, i):
    """Static trace of outer_sampling's spiral walk for ring i.

    Returns (dest, srcA, srcB, coefA, coefB) so that the torch update is
        x[dest] = x[dest] + (coefA*x[srcA] + coefB*x[srcB]) * ratio .
    All reads come from strictly inner rings (ring i-1), so per-ring updates
    are parallel and can be chained functionally.
    """
    a1, a2, b1, b2 = mid1 - i, mid1 + i, mid2 - i, mid2 + i
    e1, e2, e3, e4 = 0, edge, 0, edge
    E = e4 - e3
    direction = [0, 1]
    l1, l2 = a1, b1 - 1
    start = 0
    entries = []
    while True:
        l1 += direction[0]
        l2 += direction[1]
        if l1 == a1 and l2 == b1:
            if start == 1:
                break
            start = 1
        if l1 > a2:
            direction = [0, -1]; l1 -= 1; continue
        elif l2 < b1:
            direction = [-1, 0]; l2 += 1; continue
        elif l2 > b2:
            direction = [1, 0]; l2 -= 1; continue
        if l1 < e1 or l1 > e2 or l2 < e3 or l2 > e4:
            continue
        m1 = 0 if l1 == mid1 else int(-(l1 - mid1) / abs(l1 - mid1))
        m2 = 0 if l2 == mid2 else int(-(l2 - mid2) / abs(l2 - mid2))
        dest = l1 * E + l2
        if abs(l1 - mid1) > abs(l2 - mid2):
            sa, sb, ca, cb = (l1 + m1) * E + l2, (l1 + m1) * E + l2 + m2, 0.5, 0.5
        elif abs(l1 - mid1) < abs(l2 - mid2):
            sa, sb, ca, cb = l1 * E + l2 + m2, (l1 + m1) * E + l2 + m2, 0.5, 0.5
        else:  # corner
            sa, sb, ca, cb = (l1 + m1) * E + l2 + m2, (l1 + m1) * E + l2 + m2, 1.0, 0.0
        entries.append((dest, sa, sb, ca, cb))
    return entries


def build_geometry(edge, batch):
    """All constant gather / mix / mask / selector matrices (numpy, host-side)."""
    assert edge % 2 == 1 and edge >= 5
    mid = edge // 2
    S = edge * edge
    rings = {i: spiral_ring(edge, mid, mid, i) for i in range(1, mid + 1)}
    tok_idx = {1: [mid * edge + mid] + [e[0] for e in rings[1]]}   # centre + ring 1
    for i in range(2, mid + 1):
        tok_idx[i] = [e[0] for e in rings[i]]

    def block_diag_onehot(rows_idx, src_len):
        n = len(rows_idx)
        m = np.zeros((batch * n, batch * src_len), np.float32)
        for b in range(batch):
            for r, s in enumerate(rows_idx):
                m[b * n + r, b * src_len + s] = 1.0
        return m

    def batch_mask(n):
        m = np.full((batch * n, batch * n), NEG_BIG, np.float32)
        for b in range(batch):
            m[b * n:(b + 1) * n, b * n:(b + 1) * n] = 0.0
        return m

    geom = {'mid': mid, 'tok_idx': tok_idx}
    geom['G1'] = block_diag_onehot(tok_idx[1], S)                  # (B*N1, B*S)
    geom['Gd'], geom['Gmix'] = {}, {}
    for i in range(2, mid + 1):
        entries = rings[i]
        M = len(entries)
        dest = [e[0] for e in entries]
        geom['Gd'][i] = block_diag_onehot(dest, S)                 # (B*Mi, B*S)
        prev = tok_idx[i - 1]
        prev_pos = {p: j for j, p in enumerate(prev)}
        Np = len(prev)
        gm = np.zeros((batch * M, batch * Np), np.float32)
        for b in range(batch):
            for m_, (d, sa, sb, ca, cb) in enumerate(entries):
                assert sa in prev_pos and sb in prev_pos
                gm[b * M + m_, b * Np + prev_pos[sa]] += ca
                gm[b * M + m_, b * Np + prev_pos[sb]] += cb
        geom['Gmix'][i] = gm                                       # (B*Mi, B*N_{i-1})

    geom['mask'] = {i: batch_mask(len(tok_idx[i])) for i in range(1, mid)}
    geom['RS'] = {}
    for i in range(1, mid):                                        # cls-broadcast matrix
        Ni, Mn = len(tok_idx[i]), len(tok_idx[i + 1])
        rs = np.zeros((batch * Mn, batch * Ni), np.float32)
        for b in range(batch):
            rs[b * Mn:(b + 1) * Mn, b * Ni] = 1.0
        geom['RS'][i] = rs

    Mlast = len(tok_idx[mid])
    Nm = Mlast + 1
    geom['mask_main'] = batch_mask(Nm)
    selm = np.zeros((batch, batch * Nm), np.float32)
    for b in range(batch):
        selm[b, b * Nm] = 1.0
    geom['sel_main'] = selm
    ins = np.zeros((batch * Nm, batch * Mlast), np.float32)
    for b in range(batch):
        for j in range(Mlast):
            ins[b * Nm + 1 + j, b * Mlast + j] = 1.0
    geom['insert'] = ins
    return geom


# ----------------- in-kernel math helpers -----------------
def _layernorm(x, g, b):
    mu = jnp.mean(x, axis=-1, keepdims=True)
    var = jnp.mean(jnp.square(x - mu), axis=-1, keepdims=True)
    return (x - mu) * jax.lax.rsqrt(var + LN_EPS) * g + b


def _gelu(x):
    # TODO(synk): torch nn.GELU uses the exact erf form; tanh approximation is
    # used here for guaranteed Mosaic lowering (max abs diff ~1e-3 of scale).
    c = 0.7978845608028654  # sqrt(2/pi)
    return 0.5 * x * (1.0 + jnp.tanh(c * (x + 0.044715 * x * x * x)))


def _softmax_rows(s):
    s = s - jnp.max(s, axis=-1, keepdims=True)
    p = jnp.exp(s)
    return p * pl.reciprocal(jnp.sum(p, axis=-1, keepdims=True), approx=True)


def _transformer_stack(x, mask, depth, heads, dim_head,
                       g1_ref, b1_ref, wqkv_ref, wo_ref, bo_ref,
                       g2_ref, b2_ref, w1_ref, b1m_ref, w2_ref, b2m_ref):
    """depth x [x += MHSA(LN(x)); x += MLP(LN(x))] on batch-flattened (B*N, D).

    Weight refs carry a leading depth axis; the depth loop is a lax.fori_loop
    with dynamic first-axis indexing, so the whole stack is one in-kernel loop.
    `mask` is the additive block-diagonal batch mask (loop-invariant, hoisted).
    """
    inner = heads * dim_head
    scale = float(dim_head) ** -0.5

    def block(d, x):
        # ---- PreNorm + multi-head self attention ----
        h = _layernorm(x, g1_ref[d], b1_ref[d])
        qkv = jnp.dot(h.astype(jnp.bfloat16), wqkv_ref[d],
                      preferred_element_type=jnp.float32)          # (BN, 3*inner)
        wo = wo_ref[d]                                             # (inner, D) bf16
        attn = None
        for hh in range(heads):
            lo = hh * dim_head
            q = qkv[:, lo:lo + dim_head]
            k = qkv[:, inner + lo:inner + lo + dim_head]
            v = qkv[:, 2 * inner + lo:2 * inner + lo + dim_head]
            s = jax.lax.dot_general(
                q.astype(jnp.bfloat16), k.astype(jnp.bfloat16),
                (((1,), (1,)), ((), ())),
                preferred_element_type=jnp.float32) * scale + mask
            p = _softmax_rows(s)
            oh = jnp.dot(p.astype(jnp.bfloat16), v.astype(jnp.bfloat16),
                         preferred_element_type=jnp.float32)       # (BN, dh)
            # project each head through its W_o slice and accumulate:
            # identical to concat('b n (h d)') @ W_o, but no lane concatenate.
            proj = jnp.dot(oh.astype(jnp.bfloat16), wo[lo:lo + dim_head, :],
                           preferred_element_type=jnp.float32)
            attn = proj if attn is None else attn + proj
        x = x + attn + bo_ref[d]
        # ---- PreNorm + MLP ----
        h2 = _layernorm(x, g2_ref[d], b2_ref[d])
        m = _gelu(jnp.dot(h2.astype(jnp.bfloat16), w1_ref[d],
                          preferred_element_type=jnp.float32) + b1m_ref[d])
        x = x + jnp.dot(m.astype(jnp.bfloat16), w2_ref[d],
                        preferred_element_type=jnp.float32) + b2m_ref[d]
        return x

    return jax.lax.fori_loop(0, depth, block, x)


# ----------------- the single fused kernel -----------------
def make_fused_kernel(mid):
    def kernel(*refs):
        ins, o_ref = refs[:-1], refs[-1]
        it = iter(ins)

        def nxt(n=None):
            if n is None:
                return next(it)
            return [next(it) for _ in range(n)]

        # -- unpack (order must mirror build_kernel_inputs) --
        x_ref = nxt()
        mask_m_ref = nxt(); selm_ref = nxt(); insert_ref = nxt(); poscls_ref = nxt()
        main_w = nxt(11)
        ratio_w = nxt(11)
        hm_g_ref = nxt(); hm_b_ref = nxt(); hm_w_ref = nxt(); hm_bias_ref = nxt()
        gather1_ref = nxt()

        x = x_ref[...]                                             # (B*S, C) f32
        # ring 1: ratio = 0 -> spatial map unchanged; tokens = centre + ring-1 cells
        tok = jnp.dot(gather1_ref[...], x, preferred_element_type=jnp.float32)

        ratio_col = None
        for i in range(1, mid + 1):
            if i >= 2:
                gd_ref = nxt(); gmix_ref = nxt()
                # ring-i update: x[dest] += (cA*x[srcA] + cB*x[srcB]) * ratio.
                # Sources live on ring i-1 == previous token set, so the update
                # is a pair of constant one-hot matmuls, no scatter needed.
                xd = jnp.dot(gd_ref[...], x, preferred_element_type=jnp.float32)
                mix = jnp.dot(gmix_ref[...], tok, preferred_element_type=jnp.float32)
                tok = xd + mix * ratio_col
            if i < mid:
                mask_ref, rs_ref, hwt_ref, hbc_ref, hg_ref, hb_ref = nxt(6)
                y = _transformer_stack(tok, mask_ref[...], R_DEPTH, R_HEADS,
                                       DIM_HEAD, *ratio_w)
                # cls-pool (first token per batch) broadcast over the next
                # ring's rows, then LayerNorm + Linear head done row-wise so
                # the per-position ratio lands directly in column layout.
                rexp = jnp.dot(rs_ref[...], y, preferred_element_type=jnp.float32)
                rln = _layernorm(rexp, hg_ref[...], hb_ref[...])
                ratio_col = (jnp.sum(rln * hwt_ref[...], axis=-1, keepdims=True)
                             + hbc_ref[...])                       # (B*M_{i+1}, 1)
            # At i == mid the torch module still evaluates the ratio
            # transformer but discards its output -> dead compute, skipped.

        # ---- main ViT over the outermost-ring tokens ----
        seq = jnp.dot(insert_ref[...], tok,
                      preferred_element_type=jnp.float32) + poscls_ref[...]
        y = _transformer_stack(seq, mask_m_ref[...], DEPTH, HEADS, DIM_HEAD, *main_w)
        pooled = jnp.dot(selm_ref[...], y, preferred_element_type=jnp.float32)  # (B,C)
        h = _layernorm(pooled, hm_g_ref[...], hm_b_ref[...])
        o_ref[...] = (jnp.dot(h, hm_w_ref[...], preferred_element_type=jnp.float32)
                      + hm_bias_ref[...])

    return kernel


# ----------------- parameter initialization (deterministic) -----------------
def init_block(key, dim, heads, dim_head, mlp_dim):
    inner = heads * dim_head
    k0, k1, k2, k3 = jax.random.split(key, 4)
    s = INIT_SCALE
    return dict(
        g1=jnp.ones((1, dim), jnp.float32), b1=jnp.zeros((1, dim), jnp.float32),
        wqkv=(jax.random.normal(k0, (dim, 3 * inner)) * s).astype(jnp.float32),
        wo=(jax.random.normal(k1, (inner, dim)) * s).astype(jnp.float32),
        bo=jnp.zeros((1, dim), jnp.float32),
        g2=jnp.ones((1, dim), jnp.float32), b2=jnp.zeros((1, dim), jnp.float32),
        w1=(jax.random.normal(k2, (dim, mlp_dim)) * s).astype(jnp.float32),
        b1m=jnp.zeros((1, mlp_dim), jnp.float32),
        w2=(jax.random.normal(k3, (mlp_dim, dim)) * s).astype(jnp.float32),
        b2m=jnp.zeros((1, dim), jnp.float32),
    )


def init_params(key):
    k_main, k_ratio, k_heads, k_head = jax.random.split(key, 4)
    params = {}
    params['main_blocks'] = [init_block(k, DIM, HEADS, DIM_HEAD, MLP_DIM)
                             for k in jax.random.split(k_main, DEPTH)]
    params['ratio_blocks'] = [init_block(k, DIM, R_HEADS, DIM_HEAD, MLP_DIM)
                              for k in jax.random.split(k_ratio, R_DEPTH)]
    # ratio_mlp_head: for edge in 5,7,...,img_size -> LayerNorm + Linear(dim, 4*(edge-1))
    ratio_heads = []
    hkeys = jax.random.split(k_heads, max(1, (IMG_SIZE - 3) // 2))
    j = 0
    for edge in range(3, IMG_SIZE + 1, 2):
        if edge == 3:
            continue
        out_dim = (edge - 1) * 4
        ratio_heads.append(dict(
            g=jnp.ones((1, DIM), jnp.float32), b=jnp.zeros((1, DIM), jnp.float32),
            w=(jax.random.normal(hkeys[j], (DIM, out_dim)) * INIT_SCALE).astype(jnp.float32),
            bias=jnp.zeros((1, out_dim), jnp.float32)))
        j += 1
    params['ratio_heads'] = ratio_heads
    params['mlp_head'] = dict(
        g=jnp.ones((1, DIM), jnp.float32), b=jnp.zeros((1, DIM), jnp.float32),
        w=(jax.random.normal(k_head, (DIM, NUM_CLASSES)) * INIT_SCALE).astype(jnp.float32),
        bias=jnp.zeros((1, NUM_CLASSES), jnp.float32))
    # pos_embed = 'sin'  ->  sinusoid table (frozen) and a zero cls token
    params['cls_token'] = jnp.zeros((1, 1, DIM), jnp.float32)
    params['pos_embedding'] = get_sinusoid_encoding(IMG_SIZE ** 2 + 1, DIM)
    return params


# ----------------- wrapper: build kernel inputs and call the fused kernel -----------------
def stack_blocks(blocks):
    """Stack per-block weights along a leading depth axis; big matrices -> bf16."""
    def st(name, dtype=jnp.float32):
        return jnp.stack([blk[name] for blk in blocks]).astype(dtype)
    return [st('g1'), st('b1'),
            st('wqkv', jnp.bfloat16), st('wo', jnp.bfloat16), st('bo'),
            st('g2'), st('b2'),
            st('w1', jnp.bfloat16), st('b1m'), st('w2', jnp.bfloat16), st('b2m')]


def build_kernel_inputs(x_nchw, params, geom):
    B, C, H, W = x_nchw.shape
    S = H * W
    mid = geom['mid']
    # Rearrange 'b c h w -> b c (h w)', then batch-flattened channel-last (B*S, C)
    x2d = x_nchw.reshape(B, C, S).transpose(0, 2, 1).reshape(B * S, C)

    Mlast = len(geom['tok_idx'][mid])
    Nm = Mlast + 1
    pos = params['pos_embedding'][0]                       # (S+1, C)
    cls = params['cls_token'][0]                           # (1, C)
    poscls = jnp.concatenate([cls + pos[0:1], pos[1:Nm]], axis=0)   # (Nm, C)
    poscls = jnp.tile(poscls, (B, 1))                      # (B*Nm, C)

    inputs = [x2d,
              jnp.asarray(geom['mask_main']),
              jnp.asarray(geom['sel_main']),
              jnp.asarray(geom['insert']),
              poscls]
    inputs += stack_blocks(params['main_blocks'])
    inputs += stack_blocks(params['ratio_blocks'])
    mh = params['mlp_head']
    inputs += [mh['g'], mh['b'], mh['w'], mh['bias']]
    inputs += [jnp.asarray(geom['G1'])]
    for i in range(1, mid + 1):
        if i >= 2:
            inputs += [jnp.asarray(geom['Gd'][i]), jnp.asarray(geom['Gmix'][i])]
        if i < mid:
            hp = params['ratio_heads'][i - 1]
            Mn = hp['w'].shape[1]
            hwt = jnp.tile(hp['w'].T, (B, 1))              # (B*Mn, C)
            hbc = jnp.tile(hp['bias'].reshape(Mn, 1), (B, 1))   # (B*Mn, 1)
            inputs += [jnp.asarray(geom['mask'][i]), jnp.asarray(geom['RS'][i]),
                       hwt, hbc, hp['g'], hp['b']]
    return inputs


def hs_cw_vit_forward(x_nchw, params, geom):
    B = x_nchw.shape[0]
    inputs = build_kernel_inputs(x_nchw, params, geom)
    kernel = make_fused_kernel(geom['mid'])
    # No grid / no BlockSpecs: every operand is a single whole-array VMEM block
    # ("no tiling, everything resident" -- total state ~1 MB), single invocation.
    return pl.pallas_call(
        kernel,
        out_shape=jax.ShapeDtypeStruct((B, NUM_CLASSES), jnp.float32),
    )(*inputs)


# ----------------- main -----------------
if __name__ == "__main__":
    assert IMG_SIZE % 2 == 1 and IMG_SIZE >= 5
    key = jax.random.PRNGKey(0)
    k_params, k_input = jax.random.split(key)
    params = init_params(k_params)
    geom = build_geometry(IMG_SIZE, BATCH)
    x = jax.random.normal(k_input, (BATCH, IN_CHANS, IMG_SIZE, IMG_SIZE),
                          dtype=jnp.float32)

    fwd = jax.jit(lambda inp: hs_cw_vit_forward(inp, params, geom))
    out = jax.block_until_ready(fwd(x))
    assert out.shape == (BATCH, NUM_CLASSES)
    assert bool(jnp.all(jnp.isfinite(out)))
    print("KERNEL_OK")
</pallas_src>

<mosaic_0001>
module attributes {stable_mosaic.version = 11 : i64} {
  func.func @kernel(%arg0: memref<98x32xf32, #tpu.memory_space<vmem>>, %arg1: memref<50x50xf32, #tpu.memory_space<vmem>>, %arg2: memref<2x50xf32, #tpu.memory_space<vmem>>, %arg3: memref<50x48xf32, #tpu.memory_space<vmem>>, %arg4: memref<50x32xf32, #tpu.memory_space<vmem>>, %arg5: memref<2x1x32xf32, #tpu.memory_space<vmem>>, %arg6: memref<2x1x32xf32, #tpu.memory_space<vmem>>, %arg7: memref<2x32x768xbf16, #tpu.memory_space<vmem>>, %arg8: memref<2x256x32xbf16, #tpu.memory_space<vmem>>, %arg9: memref<2x1x32xf32, #tpu.memory_space<vmem>>, %arg10: memref<2x1x32xf32, #tpu.memory_space<vmem>>, %arg11: memref<2x1x32xf32, #tpu.memory_space<vmem>>, %arg12: memref<2x32x64xbf16, #tpu.memory_space<vmem>>, %arg13: memref<2x1x64xf32, #tpu.memory_space<vmem>>, %arg14: memref<2x64x32xbf16, #tpu.memory_space<vmem>>, %arg15: memref<2x1x32xf32, #tpu.memory_space<vmem>>, %arg16: memref<7x1x32xf32, #tpu.memory_space<vmem>>, %arg17: memref<7x1x32xf32, #tpu.memory_space<vmem>>, %arg18: memref<7x32x576xbf16, #tpu.memory_space<vmem>>, %arg19: memref<7x192x32xbf16, #tpu.memory_space<vmem>>, %arg20: memref<7x1x32xf32, #tpu.memory_space<vmem>>, %arg21: memref<7x1x32xf32, #tpu.memory_space<vmem>>, %arg22: memref<7x1x32xf32, #tpu.memory_space<vmem>>, %arg23: memref<7x32x64xbf16, #tpu.memory_space<vmem>>, %arg24: memref<7x1x64xf32, #tpu.memory_space<vmem>>, %arg25: memref<7x64x32xbf16, #tpu.memory_space<vmem>>, %arg26: memref<7x1x32xf32, #tpu.memory_space<vmem>>, %arg27: memref<1x32xf32, #tpu.memory_space<vmem>>, %arg28: memref<1x32xf32, #tpu.memory_space<vmem>>, %arg29: memref<32x10xf32, #tpu.memory_space<vmem>>, %arg30: memref<1x10xf32, #tpu.memory_space<vmem>>, %arg31: memref<18x98xf32, #tpu.memory_space<vmem>>, %arg32: memref<18x18xf32, #tpu.memory_space<vmem>>, %arg33: memref<32x18xf32, #tpu.memory_space<vmem>>, %arg34: memref<32x32xf32, #tpu.memory_space<vmem>>, %arg35: memref<32x1xf32, #tpu.memory_space<vmem>>, %arg36: memref<1x32xf32, #tpu.memory_space<vmem>>, %arg37: memref<1x32xf32, #tpu.memory_space<vmem>>, %arg38: memref<32x98xf32, #tpu.memory_space<vmem>>, %arg39: memref<32x18xf32, #tpu.memory_space<vmem>>, %arg40: memref<32x32xf32, #tpu.memory_space<vmem>>, %arg41: memref<48x32xf32, #tpu.memory_space<vmem>>, %arg42: memref<48x32xf32, #tpu.memory_space<vmem>>, %arg43: memref<48x1xf32, #tpu.memory_space<vmem>>, %arg44: memref<1x32xf32, #tpu.memory_space<vmem>>, %arg45: memref<1x32xf32, #tpu.memory_space<vmem>>, %arg46: memref<48x98xf32, #tpu.memory_space<vmem>>, %arg47: memref<48x32xf32, #tpu.memory_space<vmem>>, %arg48: memref<2x10xf32, #tpu.memory_space<vmem>>) attributes {dimension_semantics = [], scalar_prefetch = 0 : i64, scratch_operands = 0 : i64, tpu.core_type = #tpu.core_type<tc>} {
    %c0 = arith.constant 0 : index
    %c0_0 = arith.constant 0 : index
    %0 = vector.load %arg0[%c0, %c0_0] : memref<98x32xf32, #tpu.memory_space<vmem>>, vector<98x32xf32>
    %c0_1 = arith.constant 0 : index
    %c0_2 = arith.constant 0 : index
    %1 = vector.load %arg31[%c0_1, %c0_2] : memref<18x98xf32, #tpu.memory_space<vmem>>, vector<18x98xf32>
    %cst = arith.constant dense<0.000000e+00> : vector<18x32xf32>
    %2 = tpu.matmul %1, %0, %cst {dimension_numbers = #tpu.dot_dimension_numbers<[1], [0], [0], [1], [0, 0, 1, 1], [], []>} : vector<18x98xf32>, vector<98x32xf32>, vector<18x32xf32> -> vector<18x32xf32>
    %c0_3 = arith.constant 0 : index
    %c0_4 = arith.constant 0 : index
    %3 = vector.load %arg32[%c0_3, %c0_4] : memref<18x18xf32, #tpu.memory_space<vmem>>, vector<18x18xf32>
    %c0_i32 = arith.constant 0 : i32
    %c7_i32 = arith.constant 7 : i32
    %4 = arith.addi %c0_i32, %c7_i32 : i32
    %c1_i32 = arith.constant 1 : i32
    %5 = scf.for %arg49 = %c0_i32 to %4 step %c1_i32 iter_args(%arg50 = %2) -> (vector<18x32xf32>)  : i32 {
      %126 = arith.index_cast %arg49 : i32 to index
      %c0_87 = arith.constant 0 : index
      %c0_88 = arith.constant 0 : index
      %127 = vector.load %arg16[%126, %c0_87, %c0_88] : memref<7x1x32xf32, #tpu.memory_space<vmem>>, vector<1x1x32xf32>
      %128 = vector.shape_cast %127 : vector<1x1x32xf32> to vector<1x32xf32>
      %129 = arith.index_cast %arg49 : i32 to index
      %c0_89 = arith.constant 0 : index
      %c0_90 = arith.constant 0 : index
      %130 = vector.load %arg17[%129, %c0_89, %c0_90] : memref<7x1x32xf32, #tpu.memory_space<vmem>>, vector<1x1x32xf32>
      %131 = vector.shape_cast %130 : vector<1x1x32xf32> to vector<1x32xf32>
      %cst_91 = arith.constant dense<0.000000e+00> : vector<18xf32>
      %132 = vector.multi_reduction <add>, %arg50, %cst_91 [1] : vector<18x32xf32> to vector<18xf32>
      %133 = vector.shape_cast %132 : vector<18xf32> to vector<18x1xf32>
      %cst_92 = arith.constant 3.200000e+01 : f32
      %134 = vector.broadcast %cst_92 : f32 to vector<18x1xf32>
      %135 = arith.divf %133, %134 : vector<18x1xf32>
      %136 = vector.broadcast %135 : vector<18x1xf32> to vector<18x32xf32>
      %137 = arith.subf %arg50, %136 : vector<18x32xf32>
      %138 = arith.mulf %137, %137 : vector<18x32xf32>
      %cst_93 = arith.constant dense<0.000000e+00> : vector<18xf32>
      %139 = vector.multi_reduction <add>, %138, %cst_93 [1] : vector<18x32xf32> to vector<18xf32>
      %140 = vector.shape_cast %139 : vector<18xf32> to vector<18x1xf32>
      %cst_94 = arith.constant 3.200000e+01 : f32
      %141 = vector.broadcast %cst_94 : f32 to vector<18x1xf32>
      %142 = arith.divf %140, %141 : vector<18x1xf32>
      %143 = vector.broadcast %135 : vector<18x1xf32> to vector<18x32xf32>
      %144 = arith.subf %arg50, %143 : vector<18x32xf32>
      %cst_95 = arith.constant 9.99999974E-6 : f32
      %145 = vector.broadcast %cst_95 : f32 to vector<18x1xf32>
      %146 = arith.addf %142, %145 : vector<18x1xf32>
      %147 = math.rsqrt %146 : vector<18x1xf32>
      %148 = vector.broadcast %147 : vector<18x1xf32> to vector<18x32xf32>
      %149 = arith.mulf %144, %148 : vector<18x32xf32>
      %150 = vector.broadcast %128 : vector<1x32xf32> to vector<18x32xf32>
      %151 = arith.mulf %149, %150 : vector<18x32xf32>
      %152 = vector.broadcast %131 : vector<1x32xf32> to vector<18x32xf32>
      %153 = arith.addf %151, %152 : vector<18x32xf32>
      %154 = arith.truncf %153 : vector<18x32xf32> to vector<18x32xbf16>
      %155 = arith.index_cast %arg49 : i32 to index
      %c0_96 = arith.constant 0 : index
      %c0_97 = arith.constant 0 : index
      %156 = vector.load %arg18[%155, %c0_96, %c0_97] : memref<7x32x576xbf16, #tpu.memory_space<vmem>>, vector<1x32x576xbf16>
      %157 = vector.shape_cast %156 : vector<1x32x576xbf16> to vector<32x576xbf16>
      %cst_98 = arith.constant dense<0.000000e+00> : vector<18x576xf32>
      %158 = tpu.matmul %154, %157, %cst_98 {dimension_numbers = #tpu.dot_dimension_numbers<[1], [0], [0], [1], [0, 0, 1, 1], [], []>} : vector<18x32xbf16>, vector<32x576xbf16>, vector<18x576xf32> -> vector<18x576xf32>
      %159 = arith.index_cast %arg49 : i32 to index
      %c0_99 = arith.constant 0 : index
      %c0_100 = arith.constant 0 : index
      %160 = vector.load %arg19[%159, %c0_99, %c0_100] : memref<7x192x32xbf16, #tpu.memory_space<vmem>>, vector<1x192x32xbf16>
      %161 = vector.shape_cast %160 : vector<1x192x32xbf16> to vector<192x32xbf16>
      %162 = vector.extract_strided_slice %158 {offsets = [0, 0], sizes = [18, 64], strides = [1, 1]} : vector<18x576xf32> to vector<18x64xf32>
      %163 = vector.extract_strided_slice %158 {offsets = [0, 192], sizes = [18, 64], strides = [1, 1]} : vector<18x576xf32> to vector<18x64xf32>
      %164 = vector.extract_strided_slice %158 {offsets = [0, 384], sizes = [18, 64], strides = [1, 1]} : vector<18x576xf32> to vector<18x64xf32>
      %165 = arith.truncf %162 : vector<18x64xf32> to vector<18x64xbf16>
      %166 = arith.truncf %163 : vector<18x64xf32> to vector<18x64xbf16>
      %cst_101 = arith.constant dense<0.000000e+00> : vector<18x18xf32>
      %167 = tpu.matmul %165, %166, %cst_101 {dimension_numbers = #tpu.dot_dimension_numbers<[1], [1], [0], [0], [0, 0, 1, 0], [], []>} : vector<18x64xbf16>, vector<18x64xbf16>, vector<18x18xf32> -> vector<18x18xf32>
      %cst_102 = arith.constant 1.250000e-01 : f32
      %168 = vector.broadcast %cst_102 : f32 to vector<18x18xf32>
      %169 = arith.mulf %167, %168 : vector<18x18xf32>
      %170 = arith.addf %169, %3 : vector<18x18xf32>
      %cst_103 = arith.constant dense<0xFF800000> : vector<18xf32>
      %171 = vector.multi_reduction <maximumf>, %170, %cst_103 [1] : vector<18x18xf32> to vector<18xf32>
      %172 = vector.shape_cast %171 : vector<18xf32> to vector<18x1xf32>
      %173 = vector.broadcast %172 : vector<18x1xf32> to vector<18x18xf32>
      %174 = arith.subf %170, %173 : vector<18x18xf32>
      %175 = math.exp %174 : vector<18x18xf32>
      %cst_104 = arith.constant dense<0.000000e+00> : vector<18xf32>
      %176 = vector.multi_reduction <add>, %175, %cst_104 [1] : vector<18x18xf32> to vector<18xf32>
      %177 = vector.shape_cast %176 : vector<18xf32> to vector<18x1xf32>
      %178 = tpu.reciprocal %177 {approx = true} : vector<18x1xf32> -> vector<18x1xf32>
      %179 = vector.broadcast %178 : vector<18x1xf32> to vector<18x18xf32>
      %180 = arith.mulf %175, %179 : vector<18x18xf32>
      %181 = arith.truncf %180 : vector<18x18xf32> to vector<18x18xbf16>
      %182 = arith.truncf %164 : vector<18x64xf32> to vector<18x64xbf16>
      %cst_105 = arith.constant dense<0.000000e+00> : vector<18x64xf32>
      %183 = tpu.matmul %181, %182, %cst_105 {dimension_numbers = #tpu.dot_dimension_numbers<[1], [0], [0], [1], [0, 0, 1, 1], [], []>} : vector<18x18xbf16>, vector<18x64xbf16>, vector<18x64xf32> -> vector<18x64xf32>
      %184 = arith.truncf %183 : vector<18x64xf32> to vector<18x64xbf16>
      %185 = vector.extract_strided_slice %161 {offsets = [0, 0], sizes = [64, 32], strides = [1, 1]} : vector<192x32xbf16> to vector<64x32xbf16>
      %cst_106 = arith.constant dense<0.000000e+00> : vector<18x32xf32>
      %186 = tpu.matmul %184, %185, %cst_106 {dimension_numbers = #tpu.dot_dimension_numbers<[1], [0], [0], [1], [0, 0, 1, 1], [], []>} : vector<18x64xbf16>, vector<64x32xbf16>, vector<18x32xf32> -> vector<18x32xf32>
      %187 = vector.extract_strided_slice %158 {offsets = [0, 64], sizes = [18, 64], strides = [1, 1]} : vector<18x576xf32> to vector<18x64xf32>
      %188 = vector.extract_strided_slice %158 {offsets = [0, 256], sizes = [18, 64], strides = [1, 1]} : vector<18x576xf32> to vector<18x64xf32>
      %189 = vector.extract_strided_slice %158 {offsets = [0, 448], sizes = [18, 64], strides = [1, 1]} : vector<18x576xf32> to vector<18x64xf32>
      %190 = arith.truncf %187 : vector<18x64xf32> to vector<18x64xbf16>
      %191 = arith.truncf %188 : vector<18x64xf32> to vector<18x64xbf16>
      %cst_107 = arith.constant dense<0.000000e+00> : vector<18x18xf32>
      %192 = tpu.matmul %190, %191, %cst_107 {dimension_numbers = #tpu.dot_dimension_numbers<[1], [1], [0], [0], [0, 0, 1, 0], [], []>} : vector<18x64xbf16>, vector<18x64xbf16>, vector<18x18xf32> -> vector<18x18xf32>
      %cst_108 = arith.constant 1.250000e-01 : f32
      %193 = vector.broadcast %cst_108 : f32 to vector<18x18xf32>
      %194 = arith.mulf %192, %193 : vector<18x18xf32>
      %195 = arith.addf %194, %3 : vector<18x18xf32>
      %cst_109 = arith.constant dense<0xFF800000> : vector<18xf32>
      %196 = vector.multi_reduction <maximumf>, %195, %cst_109 [1] : vector<18x18xf32> to vector<18xf32>
      %197 = vector.shape_cast %196 : vector<18xf32> to vector<18x1xf32>
      %198 = vector.broadcast %197 : vector<18x1xf32> to vector<18x18xf32>
      %199 = arith.subf %195, %198 : vector<18x18xf32>
      %200 = math.exp %199 : vector<18x18xf32>
      %cst_110 = arith.constant dense<0.000000e+00> : vector<18xf32>
      %201 = vector.multi_reduction <add>, %200, %cst_110 [1] : vector<18x18xf32> to vector<18xf32>
      %202 = vector.shape_cast %201 : vector<18xf32> to vector<18x1xf32>
      %203 = tpu.reciprocal %202 {approx = true} : vector<18x1xf32> -> vector<18x1xf32>
      %204 = vector.broadcast %203 : vector<18x1xf32> to vector<18x18xf32>
      %205 = arith.mulf %200, %204 : vector<18x18xf32>
      %206 = arith.truncf %205 : vector<18x18xf32> to vector<18x18xbf16>
      %207 = arith.truncf %189 : vector<18x64xf32> to vector<18x64xbf16>
      %cst_111 = arith.constant dense<0.000000e+00> : vector<18x64xf32>
      %208 = tpu.matmul %206, %207, %cst_111 {dimension_numbers = #tpu.dot_dimension_numbers<[1], [0], [0], [1], [0, 0, 1, 1], [], []>} : vector<18x18xbf16>, vector<18x64xbf16>, vector<18x64xf32> -> vector<18x64xf32>
      %209 = arith.truncf %208 : vector<18x64xf32> to vector<18x64xbf16>
      %210 = vector.extract_strided_slice %161 {offsets = [64, 0], sizes = [64, 32], strides = [1, 1]} : vector<192x32xbf16> to vector<64x32xbf16>
      %cst_112 = arith.constant dense<0.000000e+00> : vector<18x32xf32>
      %211 = tpu.matmul %209, %210, %cst_112 {dimension_numbers = #tpu.dot_dimension_numbers<[1], [0], [0], [1], [0, 0, 1, 1], [], []>} : vector<18x64xbf16>, vector<64x32xbf16>, vector<18x32xf32> -> vector<18x32xf32>
      %212 = arith.addf %186, %211 : vector<18x32xf32>
      %213 = vector.extract_strided_slice %158 {offsets = [0, 128], sizes = [18, 64], strides = [1, 1]} : vector<18x576xf32> to vector<18x64xf32>
      %214 = vector.extract_strided_slice %158 {offsets = [0, 320], sizes = [18, 64], strides = [1, 1]} : vector<18x576xf32> to vector<18x64xf32>
      %215 = vector.extract_strided_slice %158 {offsets = [0, 512], sizes = [18, 64], strides = [1, 1]} : vector<18x576xf32> to vector<18x64xf32>
      %216 = arith.truncf %213 : vector<18x64xf32> to vector<18x64xbf16>
      %217 = arith.truncf %214 : vector<18x64xf32> to vector<18x64xbf16>
      %cst_113 = arith.constant dense<0.000000e+00> : vector<18x18xf32>
      %218 = tpu.matmul %216, %217, %cst_113 {dimension_numbers = #tpu.dot_dimension_numbers<[1], [1], [0], [0], [0, 0, 1, 0], [], []>} : vector<18x64xbf16>, vector<18x64xbf16>, vector<18x18xf32> -> vector<18x18xf32>
      %cst_114 = arith.constant 1.250000e-01 : f32
      %219 = vector.broadcast %cst_114 : f32 to vector<18x18xf32>
      %220 = arith.mulf %218, %219 : vector<18x18xf32>
      %221 = arith.addf %220, %3 : vector<18x18xf32>
      %cst_115 = arith.constant dense<0xFF800000> : vector<18xf32>
      %222 = vector.multi_reduction <maximumf>, %221, %cst_115 [1] : vector<18x18xf32> to vector<18xf32>
      %223 = vector.shape_cast %222 : vector<18xf32> to vector<18x1xf32>
      %224 = vector.broadcast %223 : vector<18x1xf32> to vector<18x18xf32>
      %225 = arith.subf %221, %224 : vector<18x18xf32>
      %226 = math.exp %225 : vector<18x18xf32>
      %cst_116 = arith.constant dense<0.000000e+00> : vector<18xf32>
      %227 = vector.multi_reduction <add>, %226, %cst_116 [1] : vector<18x18xf32> to vector<18xf32>
      %228 = vector.shape_cast %227 : vector<18xf32> to vector<18x1xf32>
      %229 = tpu.reciprocal %228 {approx = true} : vector<18x1xf32> -> vector<18x1xf32>
      %230 = vector.broadcast %229 : vector<18x1xf32> to vector<18x18xf32>
      %231 = arith.mulf %226, %230 : vector<18x18xf32>
      %232 = arith.truncf %231 : vector<18x18xf32> to vector<18x18xbf16>
      %233 = arith.truncf %215 : vector<18x64xf32> to vector<18x64xbf16>
      %cst_117 = arith.constant dense<0.000000e+00> : vector<18x64xf32>
      %234 = tpu.matmul %232, %233, %cst_117 {dimension_numbers = #tpu.dot_dimension_numbers<[1], [0], [0], [1], [0, 0, 1, 1], [], []>} : vector<18x18xbf16>, vector<18x64xbf16>, vector<18x64xf32> -> vector<18x64xf32>
      %235 = arith.truncf %234 : vector<18x64xf32> to vector<18x64xbf16>
      %236 = vector.extract_strided_slice %161 {offsets = [128, 0], sizes = [64, 32], strides = [1, 1]} : vector<192x32xbf16> to vector<64x32xbf16>
      %cst_118 = arith.constant dense<0.000000e+00> : vector<18x32xf32>
      %237 = tpu.matmul %235, %236, %cst_118 {dimension_numbers = #tpu.dot_dimension_numbers<[1], [0], [0], [1], [0, 0, 1, 1], [], []>} : vector<18x64xbf16>, vector<64x32xbf16>, vector<18x32xf32> -> vector<18x32xf32>
      %238 = arith.addf %212, %237 : vector<18x32xf32>
      %239 = arith.addf %arg50, %238 : vector<18x32xf32>
      %240 = arith.index_cast %arg49 : i32 to index
      %c0_119 = arith.constant 0 : index
      %c0_120 = arith.constant 0 : index
      %241 = vector.load %arg20[%240, %c0_119, %c0_120] : memref<7x1x32xf32, #tpu.memory_space<vmem>>, vector<1x1x32xf32>
      %242 = vector.shape_cast %241 : vector<1x1x32xf32> to vector<1x32xf32>
      %243 = vector.broadcast %242 : vector<1x32xf32> to vector<18x32xf32>
      %244 = arith.addf %239, %243 : vector<18x32xf32>
      %245 = arith.index_cast %arg49 : i32 to index
      %c0_121 = arith.constant 0 : index
      %c0_122 = arith.constant 0 : index
      %246 = vector.load %arg21[%245, %c0_121, %c0_122] : memref<7x1x32xf32, #tpu.memory_space<vmem>>, vector<1x1x32xf32>
      %247 = vector.shape_cast %246 : vector<1x1x32xf32> to vector<1x32xf32>
      %248 = arith.index_cast %arg49 : i32 to index
      %c0_123 = arith.constant 0 : index
      %c0_124 = arith.constant 0 : index
      %249 = vector.load %arg22[%248, %c0_123, %c0_124] : memref<7x1x32xf32, #tpu.memory_space<vmem>>, vector<1x1x32xf32>
      %250 = vector.shape_cast %249 : vector<1x1x32xf32> to vector<1x32xf32>
      %cst_125 = arith.constant dense<0.000000e+00> : vector<18xf32>
      %251 = vector.multi_reduction <add>, %244, %cst_125 [1] : vector<18x32xf32> to vector<18xf32>
      %252 = vector.shape_cast %251 : vector<18xf32> to vector<18x1xf32>
      %cst_126 = arith.constant 3.200000e+01 : f32
      %253 = vector.broadcast %cst_126 : f32 to vector<18x1xf32>
      %254 = arith.divf %252, %253 : vector<18x1xf32>
      %255 = vector.broadcast %254 : vector<18x1xf32> to vector<18x32xf32>
      %256 = arith.subf %244, %255 : vector<18x32xf32>
      %257 = arith.mulf %256, %256 : vector<18x32xf32>
      %cst_127 = arith.constant dense<0.000000e+00> : vector<18xf32>
      %258 = vector.multi_reduction <add>, %257, %cst_127 [1] : vector<18x32xf32> to vector<18xf32>
      %259 = vector.shape_cast %258 : vector<18xf32> to vector<18x1xf32>
      %cst_128 = arith.constant 3.200000e+01 : f32
      %260 = vector.broadcast %cst_128 : f32 to vector<18x1xf32>
      %261 = arith.divf %259, %260 : vector<18x1xf32>
      %262 = vector.broadcast %254 : vector<18x1xf32> to vector<18x32xf32>
      %263 = arith.subf %244, %262 : vector<18x32xf32>
      %cst_129 = arith.constant 9.99999974E-6 : f32
      %264 = vector.broadcast %cst_129 : f32 to vector<18x1xf32>
      %265 = arith.addf %261, %264 : vector<18x1xf32>
      %266 = math.rsqrt %265 : vector<18x1xf32>
      %267 = vector.broadcast %266 : vector<18x1xf32> to vector<18x32xf32>
      %268 = arith.mulf %263, %267 : vector<18x32xf32>
      %269 = vector.broadcast %247 : vector<1x32xf32> to vector<18x32xf32>
      %270 = arith.mulf %268, %269 : vector<18x32xf32>
      %271 = vector.broadcast %250 : vector<1x32xf32> to vector<18x32xf32>
      %272 = arith.addf %270, %271 : vector<18x32xf32>
      %273 = arith.truncf %272 : vector<18x32xf32> to vector<18x32xbf16>
      %274 = arith.index_cast %arg49 : i32 to index
      %c0_130 = arith.constant 0 : index
      %c0_131 = arith.constant 0 : index
      %275 = vector.load %arg23[%274, %c0_130, %c0_131] : memref<7x32x64xbf16, #tpu.memory_space<vmem>>, vector<1x32x64xbf16>
      %276 = vector.shape_cast %275 : vector<1x32x64xbf16> to vector<32x64xbf16>
      %cst_132 = arith.constant dense<0.000000e+00> : vector<18x64xf32>
      %277 = tpu.matmul %273, %276, %cst_132 {dimension_numbers = #tpu.dot_dimension_numbers<[1], [0], [0], [1], [0, 0, 1, 1], [], []>} : vector<18x32xbf16>, vector<32x64xbf16>, vector<18x64xf32> -> vector<18x64xf32>
      %278 = arith.index_cast %arg49 : i32 to index
      %c0_133 = arith.constant 0 : index
      %c0_134 = arith.constant 0 : index
      %279 = vector.load %arg24[%278, %c0_133, %c0_134] : memref<7x1x64xf32, #tpu.memory_space<vmem>>, vector<1x1x64xf32>
      %280 = vector.shape_cast %279 : vector<1x1x64xf32> to vector<1x64xf32>
      %281 = vector.broadcast %280 : vector<1x64xf32> to vector<18x64xf32>
      %282 = arith.addf %277, %281 : vector<18x64xf32>
      %cst_135 = arith.constant 5.000000e-01 : f32
      %283 = vector.broadcast %cst_135 : f32 to vector<18x64xf32>
      %284 = arith.mulf %283, %282 : vector<18x64xf32>
      %cst_136 = arith.constant 4.471500e-02 : f32
      %285 = vector.broadcast %cst_136 : f32 to vector<18x64xf32>
      %286 = arith.mulf %285, %282 : vector<18x64xf32>
      %287 = arith.mulf %286, %282 : vector<18x64xf32>
      %288 = arith.mulf %287, %282 : vector<18x64xf32>
      %289 = arith.addf %282, %288 : vector<18x64xf32>
      %cst_137 = arith.constant 0.797884583 : f32
      %290 = vector.broadcast %cst_137 : f32 to vector<18x64xf32>
      %291 = arith.mulf %290, %289 : vector<18x64xf32>
      %292 = math.tanh %291 : vector<18x64xf32>
      %cst_138 = arith.constant 1.000000e+00 : f32
      %293 = vector.broadcast %cst_138 : f32 to vector<18x64xf32>
      %294 = arith.addf %293, %292 : vector<18x64xf32>
      %295 = arith.mulf %284, %294 : vector<18x64xf32>
      %296 = arith.truncf %295 : vector<18x64xf32> to vector<18x64xbf16>
      %297 = arith.index_cast %arg49 : i32 to index
      %c0_139 = arith.constant 0 : index
      %c0_140 = arith.constant 0 : index
      %298 = vector.load %arg25[%297, %c0_139, %c0_140] : memref<7x64x32xbf16, #tpu.memory_space<vmem>>, vector<1x64x32xbf16>
      %299 = vector.shape_cast %298 : vector<1x64x32xbf16> to vector<64x32xbf16>
      %cst_141 = arith.constant dense<0.000000e+00> : vector<18x32xf32>
      %300 = tpu.matmul %296, %299, %cst_141 {dimension_numbers = #tpu.dot_dimension_numbers<[1], [0], [0], [1], [0, 0, 1, 1], [], []>} : vector<18x64xbf16>, vector<64x32xbf16>, vector<18x32xf32> -> vector<18x32xf32>
      %301 = arith.addf %244, %300 : vector<18x32xf32>
      %302 = arith.index_cast %arg49 : i32 to index
      %c0_142 = arith.constant 0 : index
      %c0_143 = arith.constant 0 : index
      %303 = vector.load %arg26[%302, %c0_142, %c0_143] : memref<7x1x32xf32, #tpu.memory_space<vmem>>, vector<1x1x32xf32>
      %304 = vector.shape_cast %303 : vector<1x1x32xf32> to vector<1x32xf32>
      %305 = vector.broadcast %304 : vector<1x32xf32> to vector<18x32xf32>
      %306 = arith.addf %301, %305 : vector<18x32xf32>
      scf.yield %306 : vector<18x32xf32>
    }
    %c7_i32_5 = arith.constant 7 : i32
    %c0_6 = arith.constant 0 : index
    %c0_7 = arith.constant 0 : index
    %6 = vector.load %arg33[%c0_6, %c0_7] : memref<32x18xf32, #tpu.memory_space<vmem>>, vector<32x18xf32>
    %cst_8 = arith.constant dense<0.000000e+00> : vector<32x32xf32>
    %7 = tpu.matmul %6, %5, %cst_8 {dimension_numbers = #tpu.dot_dimension_numbers<[1], [0], [0], [1], [0, 0, 1, 1], [], []>} : vector<32x18xf32>, vector<18x32xf32>, vector<32x32xf32> -> vector<32x32xf32>
    %c0_9 = arith.constant 0 : index
    %c0_10 = arith.constant 0 : index
    %8 = vector.load %arg36[%c0_9, %c0_10] : memref<1x32xf32, #tpu.memory_space<vmem>>, vector<1x32xf32>
    %c0_11 = arith.constant 0 : index
    %c0_12 = arith.constant 0 : index
    %9 = vector.load %arg37[%c0_11, %c0_12] : memref<1x32xf32, #tpu.memory_space<vmem>>, vector<1x32xf32>
    %cst_13 = arith.constant dense<0.000000e+00> : vector<32xf32>
    %10 = vector.multi_reduction <add>, %7, %cst_13 [1] : vector<32x32xf32> to vector<32xf32>
    %11 = vector.shape_cast %10 : vector<32xf32> to vector<32x1xf32>
    %cst_14 = arith.constant 3.200000e+01 : f32
    %12 = vector.broadcast %cst_14 : f32 to vector<32x1xf32>
    %13 = arith.divf %11, %12 : vector<32x1xf32>
    %14 = vector.broadcast %13 : vector<32x1xf32> to vector<32x32xf32>
    %15 = arith.subf %7, %14 : vector<32x32xf32>
    %16 = arith.mulf %15, %15 : vector<32x32xf32>
    %cst_15 = arith.constant dense<0.000000e+00> : vector<32xf32>
    %17 = vector.multi_reduction <add>, %16, %cst_15 [1] : vector<32x32xf32> to vector<32xf32>
    %18 = vector.shape_cast %17 : vector<32xf32> to vector<32x1xf32>
    %cst_16 = arith.constant 3.200000e+01 : f32
    %19 = vector.broadcast %cst_16 : f32 to vector<32x1xf32>
    %20 = arith.divf %18, %19 : vector<32x1xf32>
    %21 = vector.broadcast %13 : vector<32x1xf32> to vector<32x32xf32>
    %22 = arith.subf %7, %21 : vector<32x32xf32>
    %cst_17 = arith.constant 9.99999974E-6 : f32
    %23 = vector.broadcast %cst_17 : f32 to vector<32x1xf32>
    %24 = arith.addf %20, %23 : vector<32x1xf32>
    %25 = math.rsqrt %24 : vector<32x1xf32>
    %26 = vector.broadcast %25 : vector<32x1xf32> to vector<32x32xf32>
    %27 = arith.mulf %22, %26 : vector<32x32xf32>
    %28 = vector.broadcast %8 : vector<1x32xf32> to vector<32x32xf32>
    %29 = arith.mulf %27, %28 : vector<32x32xf32>
    %30 = vector.broadcast %9 : vector<1x32xf32> to vector<32x32xf32>
    %31 = arith.addf %29, %30 : vector<32x32xf32>
    %c0_18 = arith.constant 0 : index
    %c0_19 = arith.constant 0 : index
    %32 = vector.load %arg34[%c0_18, %c0_19] : memref<32x32xf32, #tpu.memory_space<vmem>>, vector<32x32xf32>
    %33 = arith.mulf %31, %32 : vector<32x32xf32>
    %cst_20 = arith.constant dense<0.000000e+00> : vector<32xf32>
    %34 = vector.multi_reduction <add>, %33, %cst_20 [1] : vector<32x32xf32> to vector<32xf32>
    %35 = vector.shape_cast %34 : vector<32xf32> to vector<32x1xf32>
    %c0_21 = arith.constant 0 : index
    %c0_22 = arith.constant 0 : index
    %36 = vector.load %arg35[%c0_21, %c0_22] : memref<32x1xf32, #tpu.memory_space<vmem>>, vector<32x1xf32>
    %37 = arith.addf %35, %36 : vector<32x1xf32>
    %c0_23 = arith.constant 0 : index
    %c0_24 = arith.constant 0 : index
    %38 = vector.load %arg38[%c0_23, %c0_24] : memref<32x98xf32, #tpu.memory_space<vmem>>, vector<32x98xf32>
    %cst_25 = arith.constant dense<0.000000e+00> : vector<32x32xf32>
    %39 = tpu.matmul %38, %0, %cst_25 {dimension_numbers = #tpu.dot_dimension_numbers<[1], [0], [0], [1], [0, 0, 1, 1], [], []>} : vector<32x98xf32>, vector<98x32xf32>, vector<32x32xf32> -> vector<32x32xf32>
    %c0_26 = arith.constant 0 : index
    %c0_27 = arith.constant 0 : index
    %40 = vector.load %arg39[%c0_26, %c0_27] : memref<32x18xf32, #tpu.memory_space<vmem>>, vector<32x18xf32>
    %cst_28 = arith.constant dense<0.000000e+00> : vector<32x32xf32>
    %41 = tpu.matmul %40, %2, %cst_28 {dimension_numbers = #tpu.dot_dimension_numbers<[1], [0], [0], [1], [0, 0, 1, 1], [], []>} : vector<32x18xf32>, vector<18x32xf32>, vector<32x32xf32> -> vector<32x32xf32>
    %42 = vector.broadcast %37 : vector<32x1xf32> to vector<32x32xf32>
    %43 = arith.mulf %41, %42 : vector<32x32xf32>
    %44 = arith.addf %39, %43 : vector<32x32xf32>
    %c0_29 = arith.constant 0 : index
    %c0_30 = arith.constant 0 : index
    %45 = vector.load %arg40[%c0_29, %c0_30] : memref<32x32xf32, #tpu.memory_space<vmem>>, vector<32x32xf32>
    %c0_i32_31 = arith.constant 0 : i32
    %c7_i32_32 = arith.constant 7 : i32
    %46 = arith.addi %c0_i32_31, %c7_i32_32 : i32
    %c1_i32_33 = arith.constant 1 : i32
    %47 = scf.for %arg49 = %c0_i32_31 to %46 step %c1_i32_33 iter_args(%arg50 = %44) -> (vector<32x32xf32>)  : i32 {
      %126 = arith.index_cast %arg49 : i32 to index
      %c0_87 = arith.constant 0 : index
      %c0_88 = arith.constant 0 : index
      %127 = vector.load %arg16[%126, %c0_87, %c0_88] : memref<7x1x32xf32, #tpu.memory_space<vmem>>, vector<1x1x32xf32>
      %128 = vector.shape_cast %127 : vector<1x1x32xf32> to vector<1x32xf32>
      %129 = arith.index_cast %arg49 : i32 to index
      %c0_89 = arith.constant 0 : index
      %c0_90 = arith.constant 0 : index
      %130 = vector.load %arg17[%129, %c0_89, %c0_90] : memref<7x1x32xf32, #tpu.memory_space<vmem>>, vector<1x1x32xf32>
      %131 = vector.shape_cast %130 : vector<1x1x32xf32> to vector<1x32xf32>
      %cst_91 = arith.constant dense<0.000000e+00> : vector<32xf32>
      %132 = vector.multi_reduction <add>, %arg50, %cst_91 [1] : vector<32x32xf32> to vector<32xf32>
      %133 = vector.shape_cast %132 : vector<32xf32> to vector<32x1xf32>
      %cst_92 = arith.constant 3.200000e+01 : f32
      %134 = vector.broadcast %cst_92 : f32 to vector<32x1xf32>
      %135 = arith.divf %133, %134 : vector<32x1xf32>
      %136 = vector.broadcast %135 : vector<32x1xf32> to vector<32x32xf32>
      %137 = arith.subf %arg50, %136 : vector<32x32xf32>
      %138 = arith.mulf %137, %137 : vector<32x32xf32>
      %cst_93 = arith.constant dense<0.000000e+00> : vector<32xf32>
      %139 = vector.multi_reduction <add>, %138, %cst_93 [1] : vector<32x32xf32> to vector<32xf32>
      %140 = vector.shape_cast %139 : vector<32xf32> to vector<32x1xf32>
      %cst_94 = arith.constant 3.200000e+01 : f32
      %141 = vector.broadcast %cst_94 : f32 to vector<32x1xf32>
      %142 = arith.divf %140, %141 : vector<32x1xf32>
      %143 = vector.broadcast %135 : vector<32x1xf32> to vector<32x32xf32>
      %144 = arith.subf %arg50, %143 : vector<32x32xf32>
      %cst_95 = arith.constant 9.99999974E-6 : f32
      %145 = vector.broadcast %cst_95 : f32 to vector<32x1xf32>
      %146 = arith.addf %142, %145 : vector<32x1xf32>
      %147 = math.rsqrt %146 : vector<32x1xf32>
      %148 = vector.broadcast %147 : vector<32x1xf32> to vector<32x32xf32>
      %149 = arith.mulf %144, %148 : vector<32x32xf32>
      %150 = vector.broadcast %128 : vector<1x32xf32> to vector<32x32xf32>
      %151 = arith.mulf %149, %150 : vector<32x32xf32>
      %152 = vector.broadcast %131 : vector<1x32xf32> to vector<32x32xf32>
      %153 = arith.addf %151, %152 : vector<32x32xf32>
      %154 = arith.truncf %153 : vector<32x32xf32> to vector<32x32xbf16>
      %155 = arith.index_cast %arg49 : i32 to index
      %c0_96 = arith.constant 0 : index
      %c0_97 = arith.constant 0 : index
      %156 = vector.load %arg18[%155, %c0_96, %c0_97] : memref<7x32x576xbf16, #tpu.memory_space<vmem>>, vector<1x32x576xbf16>
      %157 = vector.shape_cast %156 : vector<1x32x576xbf16> to vector<32x576xbf16>
      %cst_98 = arith.constant dense<0.000000e+00> : vector<32x576xf32>
      %158 = tpu.matmul %154, %157, %cst_98 {dimension_numbers = #tpu.dot_dimension_numbers<[1], [0], [0], [1], [0, 0, 1, 1], [], []>} : vector<32x32xbf16>, vector<32x576xbf16>, vector<32x576xf32> -> vector<32x576xf32>
      %159 = arith.index_cast %arg49 : i32 to index
      %c0_99 = arith.constant 0 : index
      %c0_100 = arith.constant 0 : index
      %160 = vector.load %arg19[%159, %c0_99, %c0_100] : memref<7x192x32xbf16, #tpu.memory_space<vmem>>, vector<1x192x32xbf16>
      %161 = vector.shape_cast %160 : vector<1x192x32xbf16> to vector<192x32xbf16>
      %162 = vector.extract_strided_slice %158 {offsets = [0, 0], sizes = [32, 64], strides = [1, 1]} : vector<32x576xf32> to vector<32x64xf32>
      %163 = vector.extract_strided_slice %158 {offsets = [0, 192], sizes = [32, 64], strides = [1, 1]} : vector<32x576xf32> to vector<32x64xf32>
      %164 = vector.extract_strided_slice %158 {offsets = [0, 384], sizes = [32, 64], strides = [1, 1]} : vector<32x576xf32> to vector<32x64xf32>
      %165 = arith.truncf %162 : vector<32x64xf32> to vector<32x64xbf16>
      %166 = arith.truncf %163 : vector<32x64xf32> to vector<32x64xbf16>
      %cst_101 = arith.constant dense<0.000000e+00> : vector<32x32xf32>
      %167 = tpu.matmul %165, %166, %cst_101 {dimension_numbers = #tpu.dot_dimension_numbers<[1], [1], [0], [0], [0, 0, 1, 0], [], []>} : vector<32x64xbf16>, vector<32x64xbf16>, vector<32x32xf32> -> vector<32x32xf32>
      %cst_102 = arith.constant 1.250000e-01 : f32
      %168 = vector.broadcast %cst_102 : f32 to vector<32x32xf32>
      %169 = arith.mulf %167, %168 : vector<32x32xf32>
      %170 = arith.addf %169, %45 : vector<32x32xf32>
      %cst_103 = arith.constant dense<0xFF800000> : vector<32xf32>
      %171 = vector.multi_reduction <maximumf>, %170, %cst_103 [1] : vector<32x32xf32> to vector<32xf32>
      %172 = vector.shape_cast %171 : vector<32xf32> to vector<32x1xf32>
      %173 = vector.broadcast %172 : vector<32x1xf32> to vector<32x32xf32>
      %174 = arith.subf %170, %173 : vector<32x32xf32>
      %175 = math.exp %174 : vector<32x32xf32>
      %cst_104 = arith.constant dense<0.000000e+00> : vector<32xf32>
      %176 = vector.multi_reduction <add>, %175, %cst_104 [1] : vector<32x32xf32> to vector<32xf32>
      %177 = vector.shape_cast %176 : vector<32xf32> to vector<32x1xf32>
      %178 = tpu.reciprocal %177 {approx = true} : vector<32x1xf32> -> vector<32x1xf32>
      %179 = vector.broadcast %178 : vector<32x1xf32> to vector<32x32xf32>
      %180 = arith.mulf %175, %179 : vector<32x32xf32>
      %181 = arith.truncf %180 : vector<32x32xf32> to vector<32x32xbf16>
      %182 = arith.truncf %164 : vector<32x64xf32> to vector<32x64xbf16>
      %cst_105 = arith.constant dense<0.000000e+00> : vector<32x64xf32>
      %183 = tpu.matmul %181, %182, %cst_105 {dimension_numbers = #tpu.dot_dimension_numbers<[1], [0], [0], [1], [0, 0, 1, 1], [], []>} : vector<32x32xbf16>, vector<32x64xbf16>, vector<32x64xf32> -> vector<32x64xf32>
      %184 = arith.truncf %183 : vector<32x64xf32> to vector<32x64xbf16>
      %185 = vector.extract_strided_slice %161 {offsets = [0, 0], sizes = [64, 32], strides = [1, 1]} : vector<192x32xbf16> to vector<64x32xbf16>
      %cst_106 = arith.constant dense<0.000000e+00> : vector<32x32xf32>
      %186 = tpu.matmul %184, %185, %cst_106 {dimension_numbers = #tpu.dot_dimension_numbers<[1], [0], [0], [1], [0, 0, 1, 1], [], []>} : vector<32x64xbf16>, vector<64x32xbf16>, vector<32x32xf32> -> vector<32x32xf32>
      %187 = vector.extract_strided_slice %158 {offsets = [0, 64], sizes = [32, 64], strides = [1, 1]} : vector<32x576xf32> to vector<32x64xf32>
      %188 = vector.extract_strided_slice %158 {offsets = [0, 256], sizes = [32, 64], strides = [1, 1]} : vector<32x576xf32> to vector<32x64xf32>
      %189 = vector.extract_strided_slice %158 {offsets = [0, 448], sizes = [32, 64], strides = [1, 1]} : vector<32x576xf32> to vector<32x64xf32>
      %190 = arith.truncf %187 : vector<32x64xf32> to vector<32x64xbf16>
      %191 = arith.truncf %188 : vector<32x64xf32> to vector<32x64xbf16>
      %cst_107 = arith.constant dense<0.000000e+00> : vector<32x32xf32>
      %192 = tpu.matmul %190, %191, %cst_107 {dimension_numbers = #tpu.dot_dimension_numbers<[1], [1], [0], [0], [0, 0, 1, 0], [], []>} : vector<32x64xbf16>, vector<32x64xbf16>, vector<32x32xf32> -> vector<32x32xf32>
      %cst_108 = arith.constant 1.250000e-01 : f32
      %193 = vector.broadcast %cst_108 : f32 to vector<32x32xf32>
      %194 = arith.mulf %192, %193 : vector<32x32xf32>
      %195 = arith.addf %194, %45 : vector<32x32xf32>
      %cst_109 = arith.constant dense<0xFF800000> : vector<32xf32>
      %196 = vector.multi_reduction <maximumf>, %195, %cst_109 [1] : vector<32x32xf32> to vector<32xf32>
      %197 = vector.shape_cast %196 : vector<32xf32> to vector<32x1xf32>
      %198 = vector.broadcast %197 : vector<32x1xf32> to vector<32x32xf32>
      %199 = arith.subf %195, %198 : vector<32x32xf32>
      %200 = math.exp %199 : vector<32x32xf32>
      %cst_110 = arith.constant dense<0.000000e+00> : vector<32xf32>
      %201 = vector.multi_reduction <add>, %200, %cst_110 [1] : vector<32x32xf32> to vector<32xf32>
      %202 = vector.shape_cast %201 : vector<32xf32> to vector<32x1xf32>
      %203 = tpu.reciprocal %202 {approx = true} : vector<32x1xf32> -> vector<32x1xf32>
      %204 = vector.broadcast %203 : vector<32x1xf32> to vector<32x32xf32>
      %205 = arith.mulf %200, %204 : vector<32x32xf32>
      %206 = arith.truncf %205 : vector<32x32xf32> to vector<32x32xbf16>
      %207 = arith.truncf %189 : vector<32x64xf32> to vector<32x64xbf16>
      %cst_111 = arith.constant dense<0.000000e+00> : vector<32x64xf32>
      %208 = tpu.matmul %206, %207, %cst_111 {dimension_numbers = #tpu.dot_dimension_numbers<[1], [0], [0], [1], [0, 0, 1, 1], [], []>} : vector<32x32xbf16>, vector<32x64xbf16>, vector<32x64xf32> -> vector<32x64xf32>
      %209 = arith.truncf %208 : vector<32x64xf32> to vector<32x64xbf16>
      %210 = vector.extract_strided_slice %161 {offsets = [64, 0], sizes = [64, 32], strides = [1, 1]} : vector<192x32xbf16> to vector<64x32xbf16>
      %cst_112 = arith.constant dense<0.000000e+00> : vector<32x32xf32>
      %211 = tpu.matmul %209, %210, %cst_112 {dimension_numbers = #tpu.dot_dimension_numbers<[1], [0], [0], [1], [0, 0, 1, 1], [], []>} : vector<32x64xbf16>, vector<64x32xbf16>, vector<32x32xf32> -> vector<32x32xf32>
      %212 = arith.addf %186, %211 : vector<32x32xf32>
      %213 = vector.extract_strided_slice %158 {offsets = [0, 128], sizes = [32, 64], strides = [1, 1]} : vector<32x576xf32> to vector<32x64xf32>
      %214 = vector.extract_strided_slice %158 {offsets = [0, 320], sizes = [32, 64], strides = [1, 1]} : vector<32x576xf32> to vector<32x64xf32>
      %215 = vector.extract_strided_slice %158 {offsets = [0, 512], sizes = [32, 64], strides = [1, 1]} : vector<32x576xf32> to vector<32x64xf32>
      %216 = arith.truncf %213 : vector<32x64xf32> to vector<32x64xbf16>
      %217 = arith.truncf %214 : vector<32x64xf32> to vector<32x64xbf16>
      %cst_113 = arith.constant dense<0.000000e+00> : vector<32x32xf32>
      %218 = tpu.matmul %216, %217, %cst_113 {dimension_numbers = #tpu.dot_dimension_numbers<[1], [1], [0], [0], [0, 0, 1, 0], [], []>} : vector<32x64xbf16>, vector<32x64xbf16>, vector<32x32xf32> -> vector<32x32xf32>
      %cst_114 = arith.constant 1.250000e-01 : f32
      %219 = vector.broadcast %cst_114 : f32 to vector<32x32xf32>
      %220 = arith.mulf %218, %219 : vector<32x32xf32>
      %221 = arith.addf %220, %45 : vector<32x32xf32>
      %cst_115 = arith.constant dense<0xFF800000> : vector<32xf32>
      %222 = vector.multi_reduction <maximumf>, %221, %cst_115 [1] : vector<32x32xf32> to vector<32xf32>
      %223 = vector.shape_cast %222 : vector<32xf32> to vector<32x1xf32>
      %224 = vector.broadcast %223 : vector<32x1xf32> to vector<32x32xf32>
      %225 = arith.subf %221, %224 : vector<32x32xf32>
      %226 = math.exp %225 : vector<32x32xf32>
      %cst_116 = arith.constant dense<0.000000e+00> : vector<32xf32>
      %227 = vector.multi_reduction <add>, %226, %cst_116 [1] : vector<32x32xf32> to vector<32xf32>
      %228 = vector.shape_cast %227 : vector<32xf32> to vector<32x1xf32>
      %229 = tpu.reciprocal %228 {approx = true} : vector<32x1xf32> -> vector<32x1xf32>
      %230 = vector.broadcast %229 : vector<32x1xf32> to vector<32x32xf32>
      %231 = arith.mulf %226, %230 : vector<32x32xf32>
      %232 = arith.truncf %231 : vector<32x32xf32> to vector<32x32xbf16>
      %233 = arith.truncf %215 : vector<32x64xf32> to vector<32x64xbf16>
      %cst_117 = arith.constant dense<0.000000e+00> : vector<32x64xf32>
      %234 = tpu.matmul %232, %233, %cst_117 {dimension_numbers = #tpu.dot_dimension_numbers<[1], [0], [0], [1], [0, 0, 1, 1], [], []>} : vector<32x32xbf16>, vector<32x64xbf16>, vector<32x64xf32> -> vector<32x64xf32>
      %235 = arith.truncf %234 : vector<32x64xf32> to vector<32x64xbf16>
      %236 = vector.extract_strided_slice %161 {offsets = [128, 0], sizes = [64, 32], strides = [1, 1]} : vector<192x32xbf16> to vector<64x32xbf16>
      %cst_118 = arith.constant dense<0.000000e+00> : vector<32x32xf32>
      %237 = tpu.matmul %235, %236, %cst_118 {dimension_numbers = #tpu.dot_dimension_numbers<[1], [0], [0], [1], [0, 0, 1, 1], [], []>} : vector<32x64xbf16>, vector<64x32xbf16>, vector<32x32xf32> -> vector<32x32xf32>
      %238 = arith.addf %212, %237 : vector<32x32xf32>
      %239 = arith.addf %arg50, %238 : vector<32x32xf32>
      %240 = arith.index_cast %arg49 : i32 to index
      %c0_119 = arith.constant 0 : index
      %c0_120 = arith.constant 0 : index
      %241 = vector.load %arg20[%240, %c0_119, %c0_120] : memref<7x1x32xf32, #tpu.memory_space<vmem>>, vector<1x1x32xf32>
      %242 = vector.shape_cast %241 : vector<1x1x32xf32> to vector<1x32xf32>
      %243 = vector.broadcast %242 : vector<1x32xf32> to vector<32x32xf32>
      %244 = arith.addf %239, %243 : vector<32x32xf32>
      %245 = arith.index_cast %arg49 : i32 to index
      %c0_121 = arith.constant 0 : index
      %c0_122 = arith.constant 0 : index
      %246 = vector.load %arg21[%245, %c0_121, %c0_122] : memref<7x1x32xf32, #tpu.memory_space<vmem>>, vector<1x1x32xf32>
      %247 = vector.shape_cast %246 : vector<1x1x32xf32> to vector<1x32xf32>
      %248 = arith.index_cast %arg49 : i32 to index
      %c0_123 = arith.constant 0 : index
      %c0_124 = arith.constant 0 : index
      %249 = vector.load %arg22[%248, %c0_123, %c0_124] : memref<7x1x32xf32, #tpu.memory_space<vmem>>, vector<1x1x32xf32>
      %250 = vector.shape_cast %249 : vector<1x1x32xf32> to vector<1x32xf32>
      %cst_125 = arith.constant dense<0.000000e+00> : vector<32xf32>
      %251 = vector.multi_reduction <add>, %244, %cst_125 [1] : vector<32x32xf32> to vector<32xf32>
      %252 = vector.shape_cast %251 : vector<32xf32> to vector<32x1xf32>
      %cst_126 = arith.constant 3.200000e+01 : f32
      %253 = vector.broadcast %cst_126 : f32 to vector<32x1xf32>
      %254 = arith.divf %252, %253 : vector<32x1xf32>
      %255 = vector.broadcast %254 : vector<32x1xf32> to vector<32x32xf32>
      %256 = arith.subf %244, %255 : vector<32x32xf32>
      %257 = arith.mulf %256, %256 : vector<32x32xf32>
      %cst_127 = arith.constant dense<0.000000e+00> : vector<32xf32>
      %258 = vector.multi_reduction <add>, %257, %cst_127 [1] : vector<32x32xf32> to vector<32xf32>
      %259 = vector.shape_cast %258 : vector<32xf32> to vector<32x1xf32>
      %cst_128 = arith.constant 3.200000e+01 : f32
      %260 = vector.broadcast %cst_128 : f32 to vector<32x1xf32>
      %261 = arith.divf %259, %260 : vector<32x1xf32>
      %262 = vector.broadcast %254 : vector<32x1xf32> to vector<32x32xf32>
      %263 = arith.subf %244, %262 : vector<32x32xf32>
      %cst_129 = arith.constant 9.99999974E-6 : f32
      %264 = vector.broadcast %cst_129 : f32 to vector<32x1xf32>
      %265 = arith.addf %261, %264 : vector<32x1xf32>
      %266 = math.rsqrt %265 : vector<32x1xf32>
      %267 = vector.broadcast %266 : vector<32x1xf32> to vector<32x32xf32>
      %268 = arith.mulf %263, %267 : vector<32x32xf32>
      %269 = vector.broadcast %247 : vector<1x32xf32> to vector<32x32xf32>
      %270 = arith.mulf %268, %269 : vector<32x32xf32>
      %271 = vector.broadcast %250 : vector<1x32xf32> to vector<32x32xf32>
      %272 = arith.addf %270, %271 : vector<32x32xf32>
      %273 = arith.truncf %272 : vector<32x32xf32> to vector<32x32xbf16>
      %274 = arith.index_cast %arg49 : i32 to index
      %c0_130 = arith.constant 0 : index
      %c0_131 = arith.constant 0 : index
      %275 = vector.load %arg23[%274, %c0_130, %c0_131] : memref<7x32x64xbf16, #tpu.memory_space<vmem>>, vector<1x32x64xbf16>
      %276 = vector.shape_cast %275 : vector<1x32x64xbf16> to vector<32x64xbf16>
      %cst_132 = arith.constant dense<0.000000e+00> : vector<32x64xf32>
      %277 = tpu.matmul %273, %276, %cst_132 {dimension_numbers = #tpu.dot_dimension_numbers<[1], [0], [0], [1], [0, 0, 1, 1], [], []>} : vector<32x32xbf16>, vector<32x64xbf16>, vector<32x64xf32> -> vector<32x64xf32>
      %278 = arith.index_cast %arg49 : i32 to index
      %c0_133 = arith.constant 0 : index
      %c0_134 = arith.constant 0 : index
      %279 = vector.load %arg24[%278, %c0_133, %c0_134] : memref<7x1x64xf32, #tpu.memory_space<vmem>>, vector<1x1x64xf32>
      %280 = vector.shape_cast %279 : vector<1x1x64xf32> to vector<1x64xf32>
      %281 = vector.broadcast %280 : vector<1x64xf32> to vector<32x64xf32>
      %282 = arith.addf %277, %281 : vector<32x64xf32>
      %cst_135 = arith.constant 5.000000e-01 : f32
      %283 = vector.broadcast %cst_135 : f32 to vector<32x64xf32>
      %284 = arith.mulf %283, %282 : vector<32x64xf32>
      %cst_136 = arith.constant 4.471500e-02 : f32
      %285 = vector.broadcast %cst_136 : f32 to vector<32x64xf32>
      %286 = arith.mulf %285, %282 : vector<32x64xf32>
      %287 = arith.mulf %286, %282 : vector<32x64xf32>
      %288 = arith.mulf %287, %282 : vector<32x64xf32>
      %289 = arith.addf %282, %288 : vector<32x64xf32>
      %cst_137 = arith.constant 0.797884583 : f32
      %290 = vector.broadcast %cst_137 : f32 to vector<32x64xf32>
      %291 = arith.mulf %290, %289 : vector<32x64xf32>
      %292 = math.tanh %291 : vector<32x64xf32>
      %cst_138 = arith.constant 1.000000e+00 : f32
      %293 = vector.broadcast %cst_138 : f32 to vector<32x64xf32>
      %294 = arith.addf %293, %292 : vector<32x64xf32>
      %295 = arith.mulf %284, %294 : vector<32x64xf32>
      %296 = arith.truncf %295 : vector<32x64xf32> to vector<32x64xbf16>
      %297 = arith.index_cast %arg49 : i32 to index
      %c0_139 = arith.constant 0 : index
      %c0_140 = arith.constant 0 : index
      %298 = vector.load %arg25[%297, %c0_139, %c0_140] : memref<7x64x32xbf16, #tpu.memory_space<vmem>>, vector<1x64x32xbf16>
      %299 = vector.shape_cast %298 : vector<1x64x32xbf16> to vector<64x32xbf16>
      %cst_141 = arith.constant dense<0.000000e+00> : vector<32x32xf32>
      %300 = tpu.matmul %296, %299, %cst_141 {dimension_numbers = #tpu.dot_dimension_numbers<[1], [0], [0], [1], [0, 0, 1, 1], [], []>} : vector<32x64xbf16>, vector<64x32xbf16>, vector<32x32xf32> -> vector<32x32xf32>
      %301 = arith.addf %244, %300 : vector<32x32xf32>
      %302 = arith.index_cast %arg49 : i32 to index
      %c0_142 = arith.constant 0 : index
      %c0_143 = arith.constant 0 : index
      %303 = vector.load %arg26[%302, %c0_142, %c0_143] : memref<7x1x32xf32, #tpu.memory_space<vmem>>, vector<1x1x32xf32>
      %304 = vector.shape_cast %303 : vector<1x1x32xf32> to vector<1x32xf32>
      %305 = vector.broadcast %304 : vector<1x32xf32> to vector<32x32xf32>
      %306 = arith.addf %301, %305 : vector<32x32xf32>
      scf.yield %306 : vector<32x32xf32>
    }
    %c7_i32_34 = arith.constant 7 : i32
    %c0_35 = arith.constant 0 : index
    %c0_36 = arith.constant 0 : index
    %48 = vector.load %arg41[%c0_35, %c0_36] : memref<48x32xf32, #tpu.memory_space<vmem>>, vector<48x32xf32>
    %cst_37 = arith.constant dense<0.000000e+00> : vector<48x32xf32>
    %49 = tpu.matmul %48, %47, %cst_37 {dimension_numbers = #tpu.dot_dimension_numbers<[1], [0], [0], [1], [0, 0, 1, 1], [], []>} : vector<48x32xf32>, vector<32x32xf32>, vector<48x32xf32> -> vector<48x32xf32>
    %c0_38 = arith.constant 0 : index
    %c0_39 = arith.constant 0 : index
    %50 = vector.load %arg44[%c0_38, %c0_39] : memref<1x32xf32, #tpu.memory_space<vmem>>, vector<1x32xf32>
    %c0_40 = arith.constant 0 : index
    %c0_41 = arith.constant 0 : index
    %51 = vector.load %arg45[%c0_40, %c0_41] : memref<1x32xf32, #tpu.memory_space<vmem>>, vector<1x32xf32>
    %cst_42 = arith.constant dense<0.000000e+00> : vector<48xf32>
    %52 = vector.multi_reduction <add>, %49, %cst_42 [1] : vector<48x32xf32> to vector<48xf32>
    %53 = vector.shape_cast %52 : vector<48xf32> to vector<48x1xf32>
    %cst_43 = arith.constant 3.200000e+01 : f32
    %54 = vector.broadcast %cst_43 : f32 to vector<48x1xf32>
    %55 = arith.divf %53, %54 : vector<48x1xf32>
    %56 = vector.broadcast %55 : vector<48x1xf32> to vector<48x32xf32>
    %57 = arith.subf %49, %56 : vector<48x32xf32>
    %58 = arith.mulf %57, %57 : vector<48x32xf32>
    %cst_44 = arith.constant dense<0.000000e+00> : vector<48xf32>
    %59 = vector.multi_reduction <add>, %58, %cst_44 [1] : vector<48x32xf32> to vector<48xf32>
    %60 = vector.shape_cast %59 : vector<48xf32> to vector<48x1xf32>
    %cst_45 = arith.constant 3.200000e+01 : f32
    %61 = vector.broadcast %cst_45 : f32 to vector<48x1xf32>
    %62 = arith.divf %60, %61 : vector<48x1xf32>
    %63 = vector.broadcast %55 : vector<48x1xf32> to vector<48x32xf32>
    %64 = arith.subf %49, %63 : vector<48x32xf32>
    %cst_46 = arith.constant 9.99999974E-6 : f32
    %65 = vector.broadcast %cst_46 : f32 to vector<48x1xf32>
    %66 = arith.addf %62, %65 : vector<48x1xf32>
    %67 = math.rsqrt %66 : vector<48x1xf32>
    %68 = vector.broadcast %67 : vector<48x1xf32> to vector<48x32xf32>
    %69 = arith.mulf %64, %68 : vector<48x32xf32>
    %70 = vector.broadcast %50 : vector<1x32xf32> to vector<48x32xf32>
    %71 = arith.mulf %69, %70 : vector<48x32xf32>
    %72 = vector.broadcast %51 : vector<1x32xf32> to vector<48x32xf32>
    %73 = arith.addf %71, %72 : vector<48x32xf32>
    %c0_47 = arith.constant 0 : index
    %c0_48 = arith.constant 0 : index
    %74 = vector.load %arg42[%c0_47, %c0_48] : memref<48x32xf32, #tpu.memory_space<vmem>>, vector<48x32xf32>
    %75 = arith.mulf %73, %74 : vector<48x32xf32>
    %cst_49 = arith.constant dense<0.000000e+00> : vector<48xf32>
    %76 = vector.multi_reduction <add>, %75, %cst_49 [1] : vector<48x32xf32> to vector<48xf32>
    %77 = vector.shape_cast %76 : vector<48xf32> to vector<48x1xf32>
    %c0_50 = arith.constant 0 : index
    %c0_51 = arith.constant 0 : index
    %78 = vector.load %arg43[%c0_50, %c0_51] : memref<48x1xf32, #tpu.memory_space<vmem>>, vector<48x1xf32>
    %79 = arith.addf %77, %78 : vector<48x1xf32>
    %c0_52 = arith.constant 0 : index
    %c0_53 = arith.constant 0 : index
    %80 = vector.load %arg46[%c0_52, %c0_53] : memref<48x98xf32, #tpu.memory_space<vmem>>, vector<48x98xf32>
    %cst_54 = arith.constant dense<0.000000e+00> : vector<48x32xf32>
    %81 = tpu.matmul %80, %0, %cst_54 {dimension_numbers = #tpu.dot_dimension_numbers<[1], [0], [0], [1], [0, 0, 1, 1], [], []>} : vector<48x98xf32>, vector<98x32xf32>, vector<48x32xf32> -> vector<48x32xf32>
    %c0_55 = arith.constant 0 : index
    %c0_56 = arith.constant 0 : index
    %82 = vector.load %arg47[%c0_55, %c0_56] : memref<48x32xf32, #tpu.memory_space<vmem>>, vector<48x32xf32>
    %cst_57 = arith.constant dense<0.000000e+00> : vector<48x32xf32>
    %83 = tpu.matmul %82, %44, %cst_57 {dimension_numbers = #tpu.dot_dimension_numbers<[1], [0], [0], [1], [0, 0, 1, 1], [], []>} : vector<48x32xf32>, vector<32x32xf32>, vector<48x32xf32> -> vector<48x32xf32>
    %84 = vector.broadcast %79 : vector<48x1xf32> to vector<48x32xf32>
    %85 = arith.mulf %83, %84 : vector<48x32xf32>
    %86 = arith.addf %81, %85 : vector<48x32xf32>
    %c0_58 = arith.constant 0 : index
    %c0_59 = arith.constant 0 : index
    %87 = vector.load %arg3[%c0_58, %c0_59] : memref<50x48xf32, #tpu.memory_space<vmem>>, vector<50x48xf32>
    %cst_60 = arith.constant dense<0.000000e+00> : vector<50x32xf32>
    %88 = tpu.matmul %87, %86, %cst_60 {dimension_numbers = #tpu.dot_dimension_numbers<[1], [0], [0], [1], [0, 0, 1, 1], [], []>} : vector<50x48xf32>, vector<48x32xf32>, vector<50x32xf32> -> vector<50x32xf32>
    %c0_61 = arith.constant 0 : index
    %c0_62 = arith.constant 0 : index
    %89 = vector.load %arg4[%c0_61, %c0_62] : memref<50x32xf32, #tpu.memory_space<vmem>>, vector<50x32xf32>
    %90 = arith.addf %88, %89 : vector<50x32xf32>
    %c0_63 = arith.constant 0 : index
    %c0_64 = arith.constant 0 : index
    %91 = vector.load %arg1[%c0_63, %c0_64] : memref<50x50xf32, #tpu.memory_space<vmem>>, vector<50x50xf32>
    %c0_i32_65 = arith.constant 0 : i32
    %c2_i32 = arith.constant 2 : i32
    %92 = arith.addi %c0_i32_65, %c2_i32 : i32
    %c1_i32_66 = arith.constant 1 : i32
    %93 = scf.for %arg49 = %c0_i32_65 to %92 step %c1_i32_66 iter_args(%arg50 = %90) -> (vector<50x32xf32>)  : i32 {
      %126 = arith.index_cast %arg49 : i32 to index
      %c0_87 = arith.constant 0 : index
      %c0_88 = arith.constant 0 : index
      %127 = vector.load %arg5[%126, %c0_87, %c0_88] : memref<2x1x32xf32, #tpu.memory_space<vmem>>, vector<1x1x32xf32>
      %128 = vector.shape_cast %127 : vector<1x1x32xf32> to vector<1x32xf32>
      %129 = arith.index_cast %arg49 : i32 to index
      %c0_89 = arith.constant 0 : index
      %c0_90 = arith.constant 0 : index
      %130 = vector.load %arg6[%129, %c0_89, %c0_90] : memref<2x1x32xf32, #tpu.memory_space<vmem>>, vector<1x1x32xf32>
      %131 = vector.shape_cast %130 : vector<1x1x32xf32> to vector<1x32xf32>
      %cst_91 = arith.constant dense<0.000000e+00> : vector<50xf32>
      %132 = vector.multi_reduction <add>, %arg50, %cst_91 [1] : vector<50x32xf32> to vector<50xf32>
      %133 = vector.shape_cast %132 : vector<50xf32> to vector<50x1xf32>
      %cst_92 = arith.constant 3.200000e+01 : f32
      %134 = vector.broadcast %cst_92 : f32 to vector<50x1xf32>
      %135 = arith.divf %133, %134 : vector<50x1xf32>
      %136 = vector.broadcast %135 : vector<50x1xf32> to vector<50x32xf32>
      %137 = arith.subf %arg50, %136 : vector<50x32xf32>
      %138 = arith.mulf %137, %137 : vector<50x32xf32>
      %cst_93 = arith.constant dense<0.000000e+00> : vector<50xf32>
      %139 = vector.multi_reduction <add>, %138, %cst_93 [1] : vector<50x32xf32> to vector<50xf32>
      %140 = vector.shape_cast %139 : vector<50xf32> to vector<50x1xf32>
      %cst_94 = arith.constant 3.200000e+01 : f32
      %141 = vector.broadcast %cst_94 : f32 to vector<50x1xf32>
      %142 = arith.divf %140, %141 : vector<50x1xf32>
      %143 = vector.broadcast %135 : vector<50x1xf32> to vector<50x32xf32>
      %144 = arith.subf %arg50, %143 : vector<50x32xf32>
      %cst_95 = arith.constant 9.99999974E-6 : f32
      %145 = vector.broadcast %cst_95 : f32 to vector<50x1xf32>
      %146 = arith.addf %142, %145 : vector<50x1xf32>
      %147 = math.rsqrt %146 : vector<50x1xf32>
      %148 = vector.broadcast %147 : vector<50x1xf32> to vector<50x32xf32>
      %149 = arith.mulf %144, %148 : vector<50x32xf32>
      %150 = vector.broadcast %128 : vector<1x32xf32> to vector<50x32xf32>
      %151 = arith.mulf %149, %150 : vector<50x32xf32>
      %152 = vector.broadcast %131 : vector<1x32xf32> to vector<50x32xf32>
      %153 = arith.addf %151, %152 : vector<50x32xf32>
      %154 = arith.truncf %153 : vector<50x32xf32> to vector<50x32xbf16>
      %155 = arith.index_cast %arg49 : i32 to index
      %c0_96 = arith.constant 0 : index
      %c0_97 = arith.constant 0 : index
      %156 = vector.load %arg7[%155, %c0_96, %c0_97] : memref<2x32x768xbf16, #tpu.memory_space<vmem>>, vector<1x32x768xbf16>
      %157 = vector.shape_cast %156 : vector<1x32x768xbf16> to vector<32x768xbf16>
      %cst_98 = arith.constant dense<0.000000e+00> : vector<50x768xf32>
      %158 = tpu.matmul %154, %157, %cst_98 {dimension_numbers = #tpu.dot_dimension_numbers<[1], [0], [0], [1], [0, 0, 1, 1], [], []>} : vector<50x32xbf16>, vector<32x768xbf16>, vector<50x768xf32> -> vector<50x768xf32>
      %159 = arith.index_cast %arg49 : i32 to index
      %c0_99 = arith.constant 0 : index
      %c0_100 = arith.constant 0 : index
      %160 = vector.load %arg8[%159, %c0_99, %c0_100] : memref<2x256x32xbf16, #tpu.memory_space<vmem>>, vector<1x256x32xbf16>
      %161 = vector.shape_cast %160 : vector<1x256x32xbf16> to vector<256x32xbf16>
      %162 = vector.extract_strided_slice %158 {offsets = [0, 0], sizes = [50, 64], strides = [1, 1]} : vector<50x768xf32> to vector<50x64xf32>
      %163 = vector.extract_strided_slice %158 {offsets = [0, 256], sizes = [50, 64], strides = [1, 1]} : vector<50x768xf32> to vector<50x64xf32>
      %164 = vector.extract_strided_slice %158 {offsets = [0, 512], sizes = [50, 64], strides = [1, 1]} : vector<50x768xf32> to vector<50x64xf32>
      %165 = arith.truncf %162 : vector<50x64xf32> to vector<50x64xbf16>
      %166 = arith.truncf %163 : vector<50x64xf32> to vector<50x64xbf16>
      %cst_101 = arith.constant dense<0.000000e+00> : vector<50x50xf32>
      %167 = tpu.matmul %165, %166, %cst_101 {dimension_numbers = #tpu.dot_dimension_numbers<[1], [1], [0], [0], [0, 0, 1, 0], [], []>} : vector<50x64xbf16>, vector<50x64xbf16>, vector<50x50xf32> -> vector<50x50xf32>
      %cst_102 = arith.constant 1.250000e-01 : f32
      %168 = vector.broadcast %cst_102 : f32 to vector<50x50xf32>
      %169 = arith.mulf %167, %168 : vector<50x50xf32>
      %170 = arith.addf %169, %91 : vector<50x50xf32>
      %cst_103 = arith.constant dense<0xFF800000> : vector<50xf32>
      %171 = vector.multi_reduction <maximumf>, %170, %cst_103 [1] : vector<50x50xf32> to vector<50xf32>
      %172 = vector.shape_cast %171 : vector<50xf32> to vector<50x1xf32>
      %173 = vector.broadcast %172 : vector<50x1xf32> to vector<50x50xf32>
      %174 = arith.subf %170, %173 : vector<50x50xf32>
      %175 = math.exp %174 : vector<50x50xf32>
      %cst_104 = arith.constant dense<0.000000e+00> : vector<50xf32>
      %176 = vector.multi_reduction <add>, %175, %cst_104 [1] : vector<50x50xf32> to vector<50xf32>
      %177 = vector.shape_cast %176 : vector<50xf32> to vector<50x1xf32>
      %178 = tpu.reciprocal %177 {approx = true} : vector<50x1xf32> -> vector<50x1xf32>
      %179 = vector.broadcast %178 : vector<50x1xf32> to vector<50x50xf32>
      %180 = arith.mulf %175, %179 : vector<50x50xf32>
      %181 = arith.truncf %180 : vector<50x50xf32> to vector<50x50xbf16>
      %182 = arith.truncf %164 : vector<50x64xf32> to vector<50x64xbf16>
      %cst_105 = arith.constant dense<0.000000e+00> : vector<50x64xf32>
      %183 = tpu.matmul %181, %182, %cst_105 {dimension_numbers = #tpu.dot_dimension_numbers<[1], [0], [0], [1], [0, 0, 1, 1], [], []>} : vector<50x50xbf16>, vector<50x64xbf16>, vector<50x64xf32> -> vector<50x64xf32>
      %184 = arith.truncf %183 : vector<50x64xf32> to vector<50x64xbf16>
      %185 = vector.extract_strided_slice %161 {offsets = [0, 0], sizes = [64, 32], strides = [1, 1]} : vector<256x32xbf16> to vector<64x32xbf16>
      %cst_106 = arith.constant dense<0.000000e+00> : vector<50x32xf32>
      %186 = tpu.matmul %184, %185, %cst_106 {dimension_numbers = #tpu.dot_dimension_numbers<[1], [0], [0], [1], [0, 0, 1, 1], [], []>} : vector<50x64xbf16>, vector<64x32xbf16>, vector<50x32xf32> -> vector<50x32xf32>
      %187 = vector.extract_strided_slice %158 {offsets = [0, 64], sizes = [50, 64], strides = [1, 1]} : vector<50x768xf32> to vector<50x64xf32>
      %188 = vector.extract_strided_slice %158 {offsets = [0, 320], sizes = [50, 64], strides = [1, 1]} : vector<50x768xf32> to vector<50x64xf32>
      %189 = vector.extract_strided_slice %158 {offsets = [0, 576], sizes = [50, 64], strides = [1, 1]} : vector<50x768xf32> to vector<50x64xf32>
      %190 = arith.truncf %187 : vector<50x64xf32> to vector<50x64xbf16>
      %191 = arith.truncf %188 : vector<50x64xf32> to vector<50x64xbf16>
      %cst_107 = arith.constant dense<0.000000e+00> : vector<50x50xf32>
      %192 = tpu.matmul %190, %191, %cst_107 {dimension_numbers = #tpu.dot_dimension_numbers<[1], [1], [0], [0], [0, 0, 1, 0], [], []>} : vector<50x64xbf16>, vector<50x64xbf16>, vector<50x50xf32> -> vector<50x50xf32>
      %cst_108 = arith.constant 1.250000e-01 : f32
      %193 = vector.broadcast %cst_108 : f32 to vector<50x50xf32>
      %194 = arith.mulf %192, %193 : vector<50x50xf32>
      %195 = arith.addf %194, %91 : vector<50x50xf32>
      %cst_109 = arith.constant dense<0xFF800000> : vector<50xf32>
      %196 = vector.multi_reduction <maximumf>, %195, %cst_109 [1] : vector<50x50xf32> to vector<50xf32>
      %197 = vector.shape_cast %196 : vector<50xf32> to vector<50x1xf32>
      %198 = vector.broadcast %197 : vector<50x1xf32> to vector<50x50xf32>
      %199 = arith.subf %195, %198 : vector<50x50xf32>
      %200 = math.exp %199 : vector<50x50xf32>
      %cst_110 = arith.constant dense<0.000000e+00> : vector<50xf32>
      %201 = vector.multi_reduction <add>, %200, %cst_110 [1] : vector<50x50xf32> to vector<50xf32>
      %202 = vector.shape_cast %201 : vector<50xf32> to vector<50x1xf32>
      %203 = tpu.reciprocal %202 {approx = true} : vector<50x1xf32> -> vector<50x1xf32>
      %204 = vector.broadcast %203 : vector<50x1xf32> to vector<50x50xf32>
      %205 = arith.mulf %200, %204 : vector<50x50xf32>
      %206 = arith.truncf %205 : vector<50x50xf32> to vector<50x50xbf16>
      %207 = arith.truncf %189 : vector<50x64xf32> to vector<50x64xbf16>
      %cst_111 = arith.constant dense<0.000000e+00> : vector<50x64xf32>
      %208 = tpu.matmul %206, %207, %cst_111 {dimension_numbers = #tpu.dot_dimension_numbers<[1], [0], [0], [1], [0, 0, 1, 1], [], []>} : vector<50x50xbf16>, vector<50x64xbf16>, vector<50x64xf32> -> vector<50x64xf32>
      %209 = arith.truncf %208 : vector<50x64xf32> to vector<50x64xbf16>
      %210 = vector.extract_strided_slice %161 {offsets = [64, 0], sizes = [64, 32], strides = [1, 1]} : vector<256x32xbf16> to vector<64x32xbf16>
      %cst_112 = arith.constant dense<0.000000e+00> : vector<50x32xf32>
      %211 = tpu.matmul %209, %210, %cst_112 {dimension_numbers = #tpu.dot_dimension_numbers<[1], [0], [0], [1], [0, 0, 1, 1], [], []>} : vector<50x64xbf16>, vector<64x32xbf16>, vector<50x32xf32> -> vector<50x32xf32>
      %212 = arith.addf %186, %211 : vector<50x32xf32>
      %213 = vector.extract_strided_slice %158 {offsets = [0, 128], sizes = [50, 64], strides = [1, 1]} : vector<50x768xf32> to vector<50x64xf32>
      %214 = vector.extract_strided_slice %158 {offsets = [0, 384], sizes = [50, 64], strides = [1, 1]} : vector<50x768xf32> to vector<50x64xf32>
      %215 = vector.extract_strided_slice %158 {offsets = [0, 640], sizes = [50, 64], strides = [1, 1]} : vector<50x768xf32> to vector<50x64xf32>
      %216 = arith.truncf %213 : vector<50x64xf32> to vector<50x64xbf16>
      %217 = arith.truncf %214 : vector<50x64xf32> to vector<50x64xbf16>
      %cst_113 = arith.constant dense<0.000000e+00> : vector<50x50xf32>
      %218 = tpu.matmul %216, %217, %cst_113 {dimension_numbers = #tpu.dot_dimension_numbers<[1], [1], [0], [0], [0, 0, 1, 0], [], []>} : vector<50x64xbf16>, vector<50x64xbf16>, vector<50x50xf32> -> vector<50x50xf32>
      %cst_114 = arith.constant 1.250000e-01 : f32
      %219 = vector.broadcast %cst_114 : f32 to vector<50x50xf32>
      %220 = arith.mulf %218, %219 : vector<50x50xf32>
      %221 = arith.addf %220, %91 : vector<50x50xf32>
      %cst_115 = arith.constant dense<0xFF800000> : vector<50xf32>
      %222 = vector.multi_reduction <maximumf>, %221, %cst_115 [1] : vector<50x50xf32> to vector<50xf32>
      %223 = vector.shape_cast %222 : vector<50xf32> to vector<50x1xf32>
      %224 = vector.broadcast %223 : vector<50x1xf32> to vector<50x50xf32>
      %225 = arith.subf %221, %224 : vector<50x50xf32>
      %226 = math.exp %225 : vector<50x50xf32>
      %cst_116 = arith.constant dense<0.000000e+00> : vector<50xf32>
      %227 = vector.multi_reduction <add>, %226, %cst_116 [1] : vector<50x50xf32> to vector<50xf32>
      %228 = vector.shape_cast %227 : vector<50xf32> to vector<50x1xf32>
      %229 = tpu.reciprocal %228 {approx = true} : vector<50x1xf32> -> vector<50x1xf32>
      %230 = vector.broadcast %229 : vector<50x1xf32> to vector<50x50xf32>
      %231 = arith.mulf %226, %230 : vector<50x50xf32>
      %232 = arith.truncf %231 : vector<50x50xf32> to vector<50x50xbf16>
      %233 = arith.truncf %215 : vector<50x64xf32> to vector<50x64xbf16>
      %cst_117 = arith.constant dense<0.000000e+00> : vector<50x64xf32>
      %234 = tpu.matmul %232, %233, %cst_117 {dimension_numbers = #tpu.dot_dimension_numbers<[1], [0], [0], [1], [0, 0, 1, 1], [], []>} : vector<50x50xbf16>, vector<50x64xbf16>, vector<50x64xf32> -> vector<50x64xf32>
      %235 = arith.truncf %234 : vector<50x64xf32> to vector<50x64xbf16>
      %236 = vector.extract_strided_slice %161 {offsets = [128, 0], sizes = [64, 32], strides = [1, 1]} : vector<256x32xbf16> to vector<64x32xbf16>
      %cst_118 = arith.constant dense<0.000000e+00> : vector<50x32xf32>
      %237 = tpu.matmul %235, %236, %cst_118 {dimension_numbers = #tpu.dot_dimension_numbers<[1], [0], [0], [1], [0, 0, 1, 1], [], []>} : vector<50x64xbf16>, vector<64x32xbf16>, vector<50x32xf32> -> vector<50x32xf32>
      %238 = arith.addf %212, %237 : vector<50x32xf32>
      %239 = vector.extract_strided_slice %158 {offsets = [0, 192], sizes = [50, 64], strides = [1, 1]} : vector<50x768xf32> to vector<50x64xf32>
      %240 = vector.extract_strided_slice %158 {offsets = [0, 448], sizes = [50, 64], strides = [1, 1]} : vector<50x768xf32> to vector<50x64xf32>
      %241 = vector.extract_strided_slice %158 {offsets = [0, 704], sizes = [50, 64], strides = [1, 1]} : vector<50x768xf32> to vector<50x64xf32>
      %242 = arith.truncf %239 : vector<50x64xf32> to vector<50x64xbf16>
      %243 = arith.truncf %240 : vector<50x64xf32> to vector<50x64xbf16>
      %cst_119 = arith.constant dense<0.000000e+00> : vector<50x50xf32>
      %244 = tpu.matmul %242, %243, %cst_119 {dimension_numbers = #tpu.dot_dimension_numbers<[1], [1], [0], [0], [0, 0, 1, 0], [], []>} : vector<50x64xbf16>, vector<50x64xbf16>, vector<50x50xf32> -> vector<50x50xf32>
      %cst_120 = arith.constant 1.250000e-01 : f32
      %245 = vector.broadcast %cst_120 : f32 to vector<50x50xf32>
      %246 = arith.mulf %244, %245 : vector<50x50xf32>
      %247 = arith.addf %246, %91 : vector<50x50xf32>
      %cst_121 = arith.constant dense<0xFF800000> : vector<50xf32>
      %248 = vector.multi_reduction <maximumf>, %247, %cst_121 [1] : vector<50x50xf32> to vector<50xf32>
      %249 = vector.shape_cast %248 : vector<50xf32> to vector<50x1xf32>
      %250 = vector.broadcast %249 : vector<50x1xf32> to vector<50x50xf32>
      %251 = arith.subf %247, %250 : vector<50x50xf32>
      %252 = math.exp %251 : vector<50x50xf32>
      %cst_122 = arith.constant dense<0.000000e+00> : vector<50xf32>
      %253 = vector.multi_reduction <add>, %252, %cst_122 [1] : vector<50x50xf32> to vector<50xf32>
      %254 = vector.shape_cast %253 : vector<50xf32> to vector<50x1xf32>
      %255 = tpu.reciprocal %254 {approx = true} : vector<50x1xf32> -> vector<50x1xf32>
      %256 = vector.broadcast %255 : vector<50x1xf32> to vector<50x50xf32>
      %257 = arith.mulf %252, %256 : vector<50x50xf32>
      %258 = arith.truncf %257 : vector<50x50xf32> to vector<50x50xbf16>
      %259 = arith.truncf %241 : vector<50x64xf32> to vector<50x64xbf16>
      %cst_123 = arith.constant dense<0.000000e+00> : vector<50x64xf32>
      %260 = tpu.matmul %258, %259, %cst_123 {dimension_numbers = #tpu.dot_dimension_numbers<[1], [0], [0], [1], [0, 0, 1, 1], [], []>} : vector<50x50xbf16>, vector<50x64xbf16>, vector<50x64xf32> -> vector<50x64xf32>
      %261 = arith.truncf %260 : vector<50x64xf32> to vector<50x64xbf16>
      %262 = vector.extract_strided_slice %161 {offsets = [192, 0], sizes = [64, 32], strides = [1, 1]} : vector<256x32xbf16> to vector<64x32xbf16>
      %cst_124 = arith.constant dense<0.000000e+00> : vector<50x32xf32>
      %263 = tpu.matmul %261, %262, %cst_124 {dimension_numbers = #tpu.dot_dimension_numbers<[1], [0], [0], [1], [0, 0, 1, 1], [], []>} : vector<50x64xbf16>, vector<64x32xbf16>, vector<50x32xf32> -> vector<50x32xf32>
      %264 = arith.addf %238, %263 : vector<50x32xf32>
      %265 = arith.addf %arg50, %264 : vector<50x32xf32>
      %266 = arith.index_cast %arg49 : i32 to index
      %c0_125 = arith.constant 0 : index
      %c0_126 = arith.constant 0 : index
      %267 = vector.load %arg9[%266, %c0_125, %c0_126] : memref<2x1x32xf32, #tpu.memory_space<vmem>>, vector<1x1x32xf32>
      %268 = vector.shape_cast %267 : vector<1x1x32xf32> to vector<1x32xf32>
      %269 = vector.broadcast %268 : vector<1x32xf32> to vector<50x32xf32>
      %270 = arith.addf %265, %269 : vector<50x32xf32>
      %271 = arith.index_cast %arg49 : i32 to index
      %c0_127 = arith.constant 0 : index
      %c0_128 = arith.constant 0 : index
      %272 = vector.load %arg10[%271, %c0_127, %c0_128] : memref<2x1x32xf32, #tpu.memory_space<vmem>>, vector<1x1x32xf32>
      %273 = vector.shape_cast %272 : vector<1x1x32xf32> to vector<1x32xf32>
      %274 = arith.index_cast %arg49 : i32 to index
      %c0_129 = arith.constant 0 : index
      %c0_130 = arith.constant 0 : index
      %275 = vector.load %arg11[%274, %c0_129, %c0_130] : memref<2x1x32xf32, #tpu.memory_space<vmem>>, vector<1x1x32xf32>
      %276 = vector.shape_cast %275 : vector<1x1x32xf32> to vector<1x32xf32>
      %cst_131 = arith.constant dense<0.000000e+00> : vector<50xf32>
      %277 = vector.multi_reduction <add>, %270, %cst_131 [1] : vector<50x32xf32> to vector<50xf32>
      %278 = vector.shape_cast %277 : vector<50xf32> to vector<50x1xf32>
      %cst_132 = arith.constant 3.200000e+01 : f32
      %279 = vector.broadcast %cst_132 : f32 to vector<50x1xf32>
      %280 = arith.divf %278, %279 : vector<50x1xf32>
      %281 = vector.broadcast %280 : vector<50x1xf32> to vector<50x32xf32>
      %282 = arith.subf %270, %281 : vector<50x32xf32>
      %283 = arith.mulf %282, %282 : vector<50x32xf32>
      %cst_133 = arith.constant dense<0.000000e+00> : vector<50xf32>
      %284 = vector.multi_reduction <add>, %283, %cst_133 [1] : vector<50x32xf32> to vector<50xf32>
      %285 = vector.shape_cast %284 : vector<50xf32> to vector<50x1xf32>
      %cst_134 = arith.constant 3.200000e+01 : f32
      %286 = vector.broadcast %cst_134 : f32 to vector<50x1xf32>
      %287 = arith.divf %285, %286 : vector<50x1xf32>
      %288 = vector.broadcast %280 : vector<50x1xf32> to vector<50x32xf32>
      %289 = arith.subf %270, %288 : vector<50x32xf32>
      %cst_135 = arith.constant 9.99999974E-6 : f32
      %290 = vector.broadcast %cst_135 : f32 to vector<50x1xf32>
      %291 = arith.addf %287, %290 : vector<50x1xf32>
      %292 = math.rsqrt %291 : vector<50x1xf32>
      %293 = vector.broadcast %292 : vector<50x1xf32> to vector<50x32xf32>
      %294 = arith.mulf %289, %293 : vector<50x32xf32>
      %295 = vector.broadcast %273 : vector<1x32xf32> to vector<50x32xf32>
      %296 = arith.mulf %294, %295 : vector<50x32xf32>
      %297 = vector.broadcast %276 : vector<1x32xf32> to vector<50x32xf32>
      %298 = arith.addf %296, %297 : vector<50x32xf32>
      %299 = arith.truncf %298 : vector<50x32xf32> to vector<50x32xbf16>
      %300 = arith.index_cast %arg49 : i32 to index
      %c0_136 = arith.constant 0 : index
      %c0_137 = arith.constant 0 : index
      %301 = vector.load %arg12[%300, %c0_136, %c0_137] : memref<2x32x64xbf16, #tpu.memory_space<vmem>>, vector<1x32x64xbf16>
      %302 = vector.shape_cast %301 : vector<1x32x64xbf16> to vector<32x64xbf16>
      %cst_138 = arith.constant dense<0.000000e+00> : vector<50x64xf32>
      %303 = tpu.matmul %299, %302, %cst_138 {dimension_numbers = #tpu.dot_dimension_numbers<[1], [0], [0], [1], [0, 0, 1, 1], [], []>} : vector<50x32xbf16>, vector<32x64xbf16>, vector<50x64xf32> -> vector<50x64xf32>
      %304 = arith.index_cast %arg49 : i32 to index
      %c0_139 = arith.constant 0 : index
      %c0_140 = arith.constant 0 : index
      %305 = vector.load %arg13[%304, %c0_139, %c0_140] : memref<2x1x64xf32, #tpu.memory_space<vmem>>, vector<1x1x64xf32>
      %306 = vector.shape_cast %305 : vector<1x1x64xf32> to vector<1x64xf32>
      %307 = vector.broadcast %306 : vector<1x64xf32> to vector<50x64xf32>
      %308 = arith.addf %303, %307 : vector<50x64xf32>
      %cst_141 = arith.constant 5.000000e-01 : f32
      %309 = vector.broadcast %cst_141 : f32 to vector<50x64xf32>
      %310 = arith.mulf %309, %308 : vector<50x64xf32>
      %cst_142 = arith.constant 4.471500e-02 : f32
      %311 = vector.broadcast %cst_142 : f32 to vector<50x64xf32>
      %312 = arith.mulf %311, %308 : vector<50x64xf32>
      %313 = arith.mulf %312, %308 : vector<50x64xf32>
      %314 = arith.mulf %313, %308 : vector<50x64xf32>
      %315 = arith.addf %308, %314 : vector<50x64xf32>
      %cst_143 = arith.constant 0.797884583 : f32
      %316 = vector.broadcast %cst_143 : f32 to vector<50x64xf32>
      %317 = arith.mulf %316, %315 : vector<50x64xf32>
      %318 = math.tanh %317 : vector<50x64xf32>
      %cst_144 = arith.constant 1.000000e+00 : f32
      %319 = vector.broadcast %cst_144 : f32 to vector<50x64xf32>
      %320 = arith.addf %319, %318 : vector<50x64xf32>
      %321 = arith.mulf %310, %320 : vector<50x64xf32>
      %322 = arith.truncf %321 : vector<50x64xf32> to vector<50x64xbf16>
      %323 = arith.index_cast %arg49 : i32 to index
      %c0_145 = arith.constant 0 : index
      %c0_146 = arith.constant 0 : index
      %324 = vector.load %arg14[%323, %c0_145, %c0_146] : memref<2x64x32xbf16, #tpu.memory_space<vmem>>, vector<1x64x32xbf16>
      %325 = vector.shape_cast %324 : vector<1x64x32xbf16> to vector<64x32xbf16>
      %cst_147 = arith.constant dense<0.000000e+00> : vector<50x32xf32>
      %326 = tpu.matmul %322, %325, %cst_147 {dimension_numbers = #tpu.dot_dimension_numbers<[1], [0], [0], [1], [0, 0, 1, 1], [], []>} : vector<50x64xbf16>, vector<64x32xbf16>, vector<50x32xf32> -> vector<50x32xf32>
      %327 = arith.addf %270, %326 : vector<50x32xf32>
      %328 = arith.index_cast %arg49 : i32 to index
      %c0_148 = arith.constant 0 : index
      %c0_149 = arith.constant 0 : index
      %329 = vector.load %arg15[%328, %c0_148, %c0_149] : memref<2x1x32xf32, #tpu.memory_space<vmem>>, vector<1x1x32xf32>
      %330 = vector.shape_cast %329 : vector<1x1x32xf32> to vector<1x32xf32>
      %331 = vector.broadcast %330 : vector<1x32xf32> to vector<50x32xf32>
      %332 = arith.addf %327, %331 : vector<50x32xf32>
      scf.yield %332 : vector<50x32xf32>
    }
    %c2_i32_67 = arith.constant 2 : i32
    %c0_68 = arith.constant 0 : index
    %c0_69 = arith.constant 0 : index
    %94 = vector.load %arg2[%c0_68, %c0_69] : memref<2x50xf32, #tpu.memory_space<vmem>>, vector<2x50xf32>
    %cst_70 = arith.constant dense<0.000000e+00> : vector<2x32xf32>
    %95 = tpu.matmul %94, %93, %cst_70 {dimension_numbers = #tpu.dot_dimension_numbers<[1], [0], [0], [1], [0, 0, 1, 1], [], []>} : vector<2x50xf32>, vector<50x32xf32>, vector<2x32xf32> -> vector<2x32xf32>
    %c0_71 = arith.constant 0 : index
    %c0_72 = arith.constant 0 : index
    %96 = vector.load %arg27[%c0_71, %c0_72] : memref<1x32xf32, #tpu.memory_space<vmem>>, vector<1x32xf32>
    %c0_73 = arith.constant 0 : index
    %c0_74 = arith.constant 0 : index
    %97 = vector.load %arg28[%c0_73, %c0_74] : memref<1x32xf32, #tpu.memory_space<vmem>>, vector<1x32xf32>
    %cst_75 = arith.constant dense<0.000000e+00> : vector<2xf32>
    %98 = vector.multi_reduction <add>, %95, %cst_75 [1] : vector<2x32xf32> to vector<2xf32>
    %99 = vector.shape_cast %98 : vector<2xf32> to vector<2x1xf32>
    %cst_76 = arith.constant 3.200000e+01 : f32
    %100 = vector.broadcast %cst_76 : f32 to vector<2x1xf32>
    %101 = arith.divf %99, %100 : vector<2x1xf32>
    %102 = vector.broadcast %101 : vector<2x1xf32> to vector<2x32xf32>
    %103 = arith.subf %95, %102 : vector<2x32xf32>
    %104 = arith.mulf %103, %103 : vector<2x32xf32>
    %cst_77 = arith.constant dense<0.000000e+00> : vector<2xf32>
    %105 = vector.multi_reduction <add>, %104, %cst_77 [1] : vector<2x32xf32> to vector<2xf32>
    %106 = vector.shape_cast %105 : vector<2xf32> to vector<2x1xf32>
    %cst_78 = arith.constant 3.200000e+01 : f32
    %107 = vector.broadcast %cst_78 : f32 to vector<2x1xf32>
    %108 = arith.divf %106, %107 : vector<2x1xf32>
    %109 = vector.broadcast %101 : vector<2x1xf32> to vector<2x32xf32>
    %110 = arith.subf %95, %109 : vector<2x32xf32>
    %cst_79 = arith.constant 9.99999974E-6 : f32
    %111 = vector.broadcast %cst_79 : f32 to vector<2x1xf32>
    %112 = arith.addf %108, %111 : vector<2x1xf32>
    %113 = math.rsqrt %112 : vector<2x1xf32>
    %114 = vector.broadcast %113 : vector<2x1xf32> to vector<2x32xf32>
    %115 = arith.mulf %110, %114 : vector<2x32xf32>
    %116 = vector.broadcast %96 : vector<1x32xf32> to vector<2x32xf32>
    %117 = arith.mulf %115, %116 : vector<2x32xf32>
    %118 = vector.broadcast %97 : vector<1x32xf32> to vector<2x32xf32>
    %119 = arith.addf %117, %118 : vector<2x32xf32>
    %c0_80 = arith.constant 0 : index
    %c0_81 = arith.constant 0 : index
    %120 = vector.load %arg29[%c0_80, %c0_81] : memref<32x10xf32, #tpu.memory_space<vmem>>, vector<32x10xf32>
    %cst_82 = arith.constant dense<0.000000e+00> : vector<2x10xf32>
    %121 = tpu.matmul %119, %120, %cst_82 {dimension_numbers = #tpu.dot_dimension_numbers<[1], [0], [0], [1], [0, 0, 1, 1], [], []>} : vector<2x32xf32>, vector<32x10xf32>, vector<2x10xf32> -> vector<2x10xf32>
    %c0_83 = arith.constant 0 : index
    %c0_84 = arith.constant 0 : index
    %122 = vector.load %arg30[%c0_83, %c0_84] : memref<1x10xf32, #tpu.memory_space<vmem>>, vector<1x10xf32>
    %123 = vector.broadcast %122 : vector<1x10xf32> to vector<2x10xf32>
    %124 = arith.addf %121, %123 : vector<2x10xf32>
    %c0_85 = arith.constant 0 : index
    %c0_86 = arith.constant 0 : index
    %125 = vector.load %arg48[%c0_85, %c0_86] : memref<2x10xf32, #tpu.memory_space<vmem>>, vector<2x10xf32>
    tpu.vector_store %arg48[%c0_85, %c0_86], %124 {strides = array<i32>} : memref<2x10xf32, #tpu.memory_space<vmem>>, vector<2x10xf32>,
    return
  }
}

</mosaic_0001>

<llo_original>
// kernel: tile.19
$region0: #{tile.19}
  %s0 = inlined_call_operand.vmem [shape: f32[2,25,32], index: 0, kind: input, shape index: {}]
  %s1 = inlined_call_operand.vmem [shape: f32[50,32], index: 1, kind: output, shape index: {}]
  $region1: #{tile.19} parent=0
    #allocation0 [shape = 'u8[131072]{0}', space=vmem, size = 0x20000, scoped, tag = 'scoped mem for input reshape']
    %s3 = sshll.u32 1, 2
    %s4 = ssub.s32 %s3, 1
    %s5 = smul.addr 2, 31
    %s6 = scalar_lea.vmem %s0, %s5
    %v7 = vld [vmem:[%s6] sm:%s4]
    %s8 = scalar_lea.vmem [#allocation0], 248
    %9 = vst [vmem:[%s8] sm:%s4] %v7
    %s10 = smul.addr 2, 30
    %s11 = scalar_lea.vmem %s0, %s10
    %v12 = vld [vmem:[%s11] sm:%s4]
    %s13 = scalar_lea.vmem [#allocation0], 240
    %14 = vst [vmem:[%s13] sm:%s4] %v12
    %s15 = smul.addr 2, 29
    %s16 = scalar_lea.vmem %s0, %s15
    %v17 = vld [vmem:[%s16] sm:%s4]
    %s18 = scalar_lea.vmem [#allocation0], 232
    %19 = vst [vmem:[%s18] sm:%s4] %v17
    %s20 = smul.addr 2, 28
    %s21 = scalar_lea.vmem %s0, %s20
    %v22 = vld [vmem:[%s21] sm:%s4]
    %s23 = scalar_lea.vmem [#allocation0], 224
    %24 = vst [vmem:[%s23] sm:%s4] %v22
    %s25 = smul.addr 2, 27
    %s26 = scalar_lea.vmem %s0, %s25
    %v27 = vld [vmem:[%s26] sm:%s4]
    %s28 = scalar_lea.vmem [#allocation0], 216
    %29 = vst [vmem:[%s28] sm:%s4] %v27
    %s30 = smul.addr 2, 26
    %s31 = scalar_lea.vmem %s0, %s30
    %v32 = vld [vmem:[%s31] sm:%s4]
    %s33 = scalar_lea.vmem [#allocation0], 208
    %34 = vst [vmem:[%s33] sm:%s4] %v32
    %s35 = smul.addr 2, 25
    %s36 = scalar_lea.vmem %s0, %s35
    %v37 = vld [vmem:[%s36] sm:%s4]
    %s38 = scalar_lea.vmem [#allocation0], 200
    %39 = vst [vmem:[%s38] sm:%s4] %v37
    %s40 = smul.addr 2, 24
    %s41 = scalar_lea.vmem %s0, %s40
    %v42 = vld [vmem:[%s41] sm:%s4]
    %s43 = scalar_lea.vmem [#allocation0], 192
    %44 = vst [vmem:[%s43] sm:%s4] %v42
    %s45 = smul.addr 2, 23
    %s46 = scalar_lea.vmem %s0, %s45
    %v47 = vld [vmem:[%s46] sm:%s4]
    %s48 = scalar_lea.vmem [#allocation0], 184
    %49 = vst [vmem:[%s48] sm:%s4] %v47
    %s50 = smul.addr 2, 22
    %s51 = scalar_lea.vmem %s0, %s50
    %v52 = vld [vmem:[%s51] sm:%s4]
    %s53 = scalar_lea.vmem [#allocation0], 176
    %54 = vst [vmem:[%s53] sm:%s4] %v52
    %s55 = smul.addr 2, 21
    %s56 = scalar_lea.vmem %s0, %s55
    %v57 = vld [vmem:[%s56] sm:%s4]
    %s58 = scalar_lea.vmem [#allocation0], 168
    %59 = vst [vmem:[%s58] sm:%s4] %v57
    %s60 = smul.addr 2, 20
    %s61 = scalar_lea.vmem %s0, %s60
    %v62 = vld [vmem:[%s61] sm:%s4]
    %s63 = scalar_lea.vmem [#allocation0], 160
    %64 = vst [vmem:[%s63] sm:%s4] %v62
    %s65 = smul.addr 2, 19
    %s66 = scalar_lea.vmem %s0, %s65
    %v67 = vld [vmem:[%s66] sm:%s4]
    %s68 = scalar_lea.vmem [#allocation0], 152
    %69 = vst [vmem:[%s68] sm:%s4] %v67
    %s70 = smul.addr 2, 18
    %s71 = scalar_lea.vmem %s0, %s70
    %v72 = vld [vmem:[%s71] sm:%s4]
    %s73 = scalar_lea.vmem [#allocation0], 144
    %74 = vst [vmem:[%s73] sm:%s4] %v72
    %s75 = smul.addr 2, 17
    %s76 = scalar_lea.vmem %s0, %s75
    %v77 = vld [vmem:[%s76] sm:%s4]
    %s78 = scalar_lea.vmem [#allocation0], 136
    %79 = vst [vmem:[%s78] sm:%s4] %v77
    %s80 = smul.addr 2, 16
    %s81 = scalar_lea.vmem %s0, %s80
    %v82 = vld [vmem:[%s81] sm:%s4]
    %s83 = scalar_lea.vmem [#allocation0], 128
    %84 = vst [vmem:[%s83] sm:%s4] %v82
    %s85 = smul.addr 2, 15
    %s86 = scalar_lea.vmem %s0, %s85
    %v87 = vld [vmem:[%s86] sm:%s4]
    %s88 = scalar_lea.vmem [#allocation0], 120
    %89 = vst [vmem:[%s88] sm:%s4] %v87
    %s90 = smul.addr 2, 14
    %s91 = scalar_lea.vmem %s0, %s90
    %v92 = vld [vmem:[%s91] sm:%s4]
    %s93 = scalar_lea.vmem [#allocation0], 112
    %94 = vst [vmem:[%s93] sm:%s4] %v92
    %s95 = smul.addr 2, 13
    %s96 = scalar_lea.vmem %s0, %s95
    %v97 = vld [vmem:[%s96] sm:%s4]
    %s98 = scalar_lea.vmem [#allocation0], 104
    %99 = vst [vmem:[%s98] sm:%s4] %v97
    %s100 = smul.addr 2, 12
    %s101 = scalar_lea.vmem %s0, %s100
    %v102 = vld [vmem:[%s101] sm:%s4]
    %s103 = scalar_lea.vmem [#allocation0], 96
    %104 = vst [vmem:[%s103] sm:%s4] %v102
    %s105 = smul.addr 2, 11
    %s106 = scalar_lea.vmem %s0, %s105
    %v107 = vld [vmem:[%s106] sm:%s4]
    %s108 = scalar_lea.vmem [#allocation0], 88
    %109 = vst [vmem:[%s108] sm:%s4] %v107
    %s110 = smul.addr 2, 10
    %s111 = scalar_lea.vmem %s0, %s110
    %v112 = vld [vmem:[%s111] sm:%s4]
    %s113 = scalar_lea.vmem [#allocation0], 80
    %114 = vst [vmem:[%s113] sm:%s4] %v112
    %s115 = smul.addr 2, 9
    %s116 = scalar_lea.vmem %s0, %s115
    %v117 = vld [vmem:[%s116] sm:%s4]
    %s118 = scalar_lea.vmem [#allocation0], 72
    %119 = vst [vmem:[%s118] sm:%s4] %v117
    %s120 = smul.addr 2, 8
    %s121 = scalar_lea.vmem %s0, %s120
    %v122 = vld [vmem:[%s121] sm:%s4]
    %s123 = scalar_lea.vmem [#allocation0], 64
    %124 = vst [vmem:[%s123] sm:%s4] %v122
    %s125 = smul.addr 2, 7
    %s126 = scalar_lea.vmem %s0, %s125
    %v127 = vld [vmem:[%s126] sm:%s4]
    %s128 = scalar_lea.vmem [#allocation0], 56
    %129 = vst [vmem:[%s128] sm:%s4] %v127
    %s130 = smul.addr 2, 6
    %s131 = scalar_lea.vmem %s0, %s130
    %v132 = vld [vmem:[%s131] sm:%s4]
    %s133 = scalar_lea.vmem [#allocation0], 48
    %134 = vst [vmem:[%s133] sm:%s4] %v132
    %s135 = smul.addr 2, 5
    %s136 = scalar_lea.vmem %s0, %s135
    %v137 = vld [vmem:[%s136] sm:%s4]
    %s138 = scalar_lea.vmem [#allocation0], 40
    %139 = vst [vmem:[%s138] sm:%s4] %v137
    %s140 = smul.addr 2, 4
    %s141 = scalar_lea.vmem %s0, %s140
    %v142 = vld [vmem:[%s141] sm:%s4]
    %s143 = scalar_lea.vmem [#allocation0], 32
    %144 = vst [vmem:[%s143] sm:%s4] %v142
    %s145 = smul.addr 2, 3
    %s146 = scalar_lea.vmem %s0, %s145
    %v147 = vld [vmem:[%s146] sm:%s4]
    %s148 = scalar_lea.vmem [#allocation0], 24
    %149 = vst [vmem:[%s148] sm:%s4] %v147
    %s150 = smul.addr 2, 2
    %s151 = scalar_lea.vmem %s0, %s150
    %v152 = vld [vmem:[%s151] sm:%s4]
    %s153 = scalar_lea.vmem [#allocation0], 16
    %154 = vst [vmem:[%s153] sm:%s4] %v152
    %s155 = scalar_lea.vmem %s0, 2
    %v156 = vld [vmem:[%s155] sm:%s4]
    %s157 = scalar_lea.vmem [#allocation0], 8
    %158 = vst [vmem:[%s157] sm:%s4] %v156
    %v159 = vld [vmem:[%s0] sm:%s4]
    %160 = vst [vmem:[#allocation0] sm:%s4] %v159
    %v161 = vld [vmem:[#allocation0] ss:$8 sm:$0xf]
    %v162 = vld [vmem:[#allocation0] ss:$8 sm:$0xf0]
    %vm163 = vcmask 1047556
    %v164 = vsel %vm163, %v162, %v161
    %vm165 = vcmask 203776
    %166 = vst.msk [vmem:[%s1] sm:$0xff] %vm165, %v164
    %s167 = scalar_lea.vmem [#allocation0], 64
    %v168 = vld [vmem:[%s167] ss:$8 sm:$0xf]
    %s169 = scalar_lea.vmem [#allocation0], 64
    %v170 = vld [vmem:[%s169] ss:$8 sm:$0xf0]
    %vm171 = vcmask 1047556
    %v172 = vsel %vm171, %v170, %v168
    %vm173 = vcmask 203776
    %s174 = scalar_lea.vmem %s1, 8
    %175 = vst.msk [vmem:[%s174] sm:$0xff] %vm173, %v172
    %s176 = scalar_lea.vmem [#allocation0], 128
    %v177 = vld [vmem:[%s176] ss:$8 sm:$0xf]
    %s178 = scalar_lea.vmem [#allocation0], 128
    %v179 = vld [vmem:[%s178] ss:$8 sm:$0xf0]
    %vm180 = vcmask 1047556
    %v181 = vsel %vm180, %v179, %v177
    %vm182 = vcmask 203776
    %s183 = scalar_lea.vmem %s1, 16
    %184 = vst.msk [vmem:[%s183] sm:$0xff] %vm182, %v181
    %s185 = scalar_lea.vmem [#allocation0], 192
    %v186 = vld [vmem:[%s185] ss:$8 sm:$0xf]
    %s187 = scalar_lea.vmem [#allocation0], 192
    %v188 = vld [vmem:[%s187] ss:$8 sm:$0xf0]
    %vm189 = vcmask 1047556
    %v190 = vsel %vm189, %v188, %v186
    %vm191 = vcmask 203776
    %s192 = scalar_lea.vmem %s1, 24
    %193 = vst.msk [vmem:[%s192] sm:$0xff] %vm191, %v190
    %s194 = scalar_lea.vmem [#allocation0], 1
    %v195 = vld [vmem:[%s194] ss:$8 sm:$0xf]
    %s196 = scalar_lea.vmem [#allocation0], 1
    %v197 = vld [vmem:[%s196] ss:$8 sm:$0xf0]
    %vm198 = vcmask 1047556
    %v199 = vsel %vm198, %v197, %v195
    %200 = vrot.lane.b32.xlu0 %v199, 25
    %v201 = vpop.permute.xlu0 %200
    %vm202 = vcmask 408776
    %203 = vst.msk [vmem:[%s1] sm:$0xff] %vm202, %v201
    %s204 = scalar_lea.vmem [#allocation0], 65
    %v205 = vld [vmem:[%s204] ss:$8 sm:$0xf]
    %s206 = scalar_lea.vmem [#allocation0], 65
    %v207 = vld [vmem:[%s206] ss:$8 sm:$0xf0]
    %vm208 = vcmask 1047556
    %v209 = vsel %vm208, %v207, %v205
    %210 = vrot.lane.b32.xlu0 %v209, 25
    %v211 = vpop.permute.xlu0 %210
    %vm212 = vcmask 408776
    %s213 = scalar_lea.vmem %s1, 8
    %214 = vst.msk [vmem:[%s213] sm:$0xff] %vm212, %v211
    %s215 = scalar_lea.vmem [#allocation0], 129
    %v216 = vld [vmem:[%s215] ss:$8 sm:$0xf]
    %s217 = scalar_lea.vmem [#allocation0], 129
    %v218 = vld [vmem:[%s217] ss:$8 sm:$0xf0]
    %vm219 = vcmask 1047556
    %v220 = vsel %vm219, %v218, %v216
    %221 = vrot.lane.b32.xlu0 %v220, 25
    %v222 = vpop.permute.xlu0 %221
    %vm223 = vcmask 408776
    %s224 = scalar_lea.vmem %s1, 16
    %225 = vst.msk [vmem:[%s224] sm:$0xff] %vm223, %v222
    %s226 = scalar_lea.vmem [#allocation0], 193
    %v227 = vld [vmem:[%s226] ss:$8 sm:$0xf]
    %s228 = scalar_lea.vmem [#allocation0], 193
    %v229 = vld [vmem:[%s228] ss:$8 sm:$0xf0]
    %vm230 = vcmask 1047556
    %v231 = vsel %vm230, %v229, %v227
    %232 = vrot.lane.b32.xlu0 %v231, 25
    %v233 = vpop.permute.xlu0 %232
    %vm234 = vcmask 408776
    %s235 = scalar_lea.vmem %s1, 24
    %236 = vst.msk [vmem:[%s235] sm:$0xff] %vm234, %v233

// kernel: tile.14
$region0: #{tile.14}
  #allocation0 [shape = 's32[1]{0}', space=sflag, size = 0x4, scoped, tag = 'scoped memory for tile.14']
  %s0 = inlined_call_operand.<no memory space> [shape: f32[], index: 0, kind: input, shape index: {}]
  %s1 = inlined_call_operand.vmem [shape: f32[48,1], index: 1, kind: output, shape index: {}]
  %v2 = vstv %s0
  %3 = vst [vmem:[%s1] sm:$0xff] %v2
  %s4 = scalar_lea.vmem %s1, 8
  %5 = vst [vmem:[%s4] sm:$0xff] %v2
  %s6 = scalar_lea.vmem %s1, 16
  %7 = vst [vmem:[%s6] sm:$0xff] %v2
  %s8 = scalar_lea.vmem %s1, 24
  %9 = vst [vmem:[%s8] sm:$0xff] %v2
  %s10 = scalar_lea.vmem %s1, 32
  %11 = vst [vmem:[%s10] sm:$0xff] %v2
  %s12 = scalar_lea.vmem %s1, 40
  %13 = vst [vmem:[%s12] sm:$0xff] %v2

// kernel: tile.15
$region0: #{tile.15}
  #allocation0 [shape = 's32[1]{0}', space=sflag, size = 0x4, scoped, tag = 'scoped memory for tile.15']
  %s0 = inlined_call_operand.<no memory space> [shape: f32[], index: 0, kind: input, shape index: {}]
  %s1 = inlined_call_operand.vmem [shape: f32[32,1], index: 1, kind: output, shape index: {}]
  %v2 = vstv %s0
  %3 = vst [vmem:[%s1] sm:$0xff] %v2
  %s4 = scalar_lea.vmem %s1, 8
  %5 = vst [vmem:[%s4] sm:$0xff] %v2
  %s6 = scalar_lea.vmem %s1, 16
  %7 = vst [vmem:[%s6] sm:$0xff] %v2
  %s8 = scalar_lea.vmem %s1, 24
  %9 = vst [vmem:[%s8] sm:$0xff] %v2

// kernel: _lambda_.1
$region0: #{_lambda_.1}
  #allocation0 [shape = 'u32[]', space=smem, size = 0x4, offset = 0x4, fixed_abs, tag = 'smem constant byte address 0x4 - core index']
  #allocation1 [shape = 'u32[144,128]{1,0:T(1,128)}', space=vmem, size = 0x12000, scoped, tag = 'internal scratch']
  %s0 = inlined_call_operand.smem [shape: u32[49], index: -1, kind: input, shape index: {}]
  %s1 = sld [smem:[%s0]]
  %s2 = scalar_lea.smem %s0, 1
  %s3 = sld [smem:[%s2]]
  %s4 = scalar_lea.smem %s0, 2
  %s5 = sld [smem:[%s4]]
  %s6 = scalar_lea.smem %s0, 3
  %s7 = sld [smem:[%s6]]
  %s8 = scalar_lea.smem %s0, 4
  %s9 = sld [smem:[%s8]]
  %s10 = scalar_lea.smem %s0, 5
  %s11 = sld [smem:[%s10]]
  %s12 = scalar_lea.smem %s0, 6
  %s13 = sld [smem:[%s12]]
  %s14 = scalar_lea.smem %s0, 7
  %s15 = sld [smem:[%s14]]
  %s16 = scalar_lea.smem %s0, 8
  %s17 = sld [smem:[%s16]]
  %s18 = scalar_lea.smem %s0, 9
  %s19 = sld [smem:[%s18]]
  %s20 = scalar_lea.smem %s0, 10
  %s21 = sld [smem:[%s20]]
  %s22 = scalar_lea.smem %s0, 11
  %s23 = sld [smem:[%s22]]
  %s24 = scalar_lea.smem %s0, 12
  %s25 = sld [smem:[%s24]]
  %s26 = scalar_lea.smem %s0, 13
  %s27 = sld [smem:[%s26]]
  %s28 = scalar_lea.smem %s0, 14
  %s29 = sld [smem:[%s28]]
  %s30 = scalar_lea.smem %s0, 15
  %s31 = sld [smem:[%s30]]
  %s32 = scalar_lea.smem %s0, 16
  %s33 = sld [smem:[%s32]]
  %s34 = scalar_lea.smem %s0, 17
  %s35 = sld [smem:[%s34]]
  %s36 = scalar_lea.smem %s0, 18
  %s37 = sld [smem:[%s36]]
  %s38 = scalar_lea.smem %s0, 19
  %s39 = sld [smem:[%s38]]
  %s40 = scalar_lea.smem %s0, 20
  %s41 = sld [smem:[%s40]]
  %s42 = scalar_lea.smem %s0, 21
  %s43 = sld [smem:[%s42]]
  %s44 = scalar_lea.smem %s0, 22
  %s45 = sld [smem:[%s44]]
  %s46 = scalar_lea.smem %s0, 23
  %s47 = sld [smem:[%s46]]
  %s48 = scalar_lea.smem %s0, 24
  %s49 = sld [smem:[%s48]]
  %s50 = scalar_lea.smem %s0, 25
  %s51 = sld [smem:[%s50]]
  %s52 = scalar_lea.smem %s0, 26
  %s53 = sld [smem:[%s52]]
  %s54 = scalar_lea.smem %s0, 27
  %s55 = sld [smem:[%s54]]
  %s56 = scalar_lea.smem %s0, 28
  %s57 = sld [smem:[%s56]]
  %s58 = scalar_lea.smem %s0, 29
  %s59 = sld [smem:[%s58]]
  %s60 = scalar_lea.smem %s0, 30
  %s61 = sld [smem:[%s60]]
  %s62 = scalar_lea.smem %s0, 31
  %s63 = sld [smem:[%s62]]
  %s64 = scalar_lea.smem %s0, 32
  %s65 = sld [smem:[%s64]]
  %s66 = scalar_lea.smem %s0, 33
  %s67 = sld [smem:[%s66]]
  %s68 = scalar_lea.smem %s0, 34
  %s69 = sld [smem:[%s68]]
  %s70 = scalar_lea.smem %s0, 35
  %s71 = sld [smem:[%s70]]
  %s72 = scalar_lea.smem %s0, 36
  %s73 = sld [smem:[%s72]]
  %s74 = scalar_lea.smem %s0, 37
  %s75 = sld [smem:[%s74]]
  %s76 = scalar_lea.smem %s0, 38
  %s77 = sld [smem:[%s76]]
  %s78 = scalar_lea.smem %s0, 39
  %s79 = sld [smem:[%s78]]
  %s80 = scalar_lea.smem %s0, 40
  %s81 = sld [smem:[%s80]]
  %s82 = scalar_lea.smem %s0, 41
  %s83 = sld [smem:[%s82]]
  %s84 = scalar_lea.smem %s0, 42
  %s85 = sld [smem:[%s84]]
  %s86 = scalar_lea.smem %s0, 43
  %s87 = sld [smem:[%s86]]
  %s88 = scalar_lea.smem %s0, 44
  %s89 = sld [smem:[%s88]]
  %s90 = scalar_lea.smem %s0, 45
  %s91 = sld [smem:[%s90]]
  %s92 = scalar_lea.smem %s0, 46
  %s93 = sld [smem:[%s92]]
  %s94 = scalar_lea.smem %s0, 47
  %s95 = sld [smem:[%s94]]
  %s96 = scalar_lea.smem %s0, 48
  %s97 = sld [smem:[%s96]]
  %s98 = sld [smem:[#allocation0]]
  $region295: #{_lambda_.1} parent=0
    _
  %s100 = ssub.s32 1, %s98
  %s101 = scalar_select 0, %s100, %s98
  $region1: #{_lambda_.1} parent=0
    #allocation2 [shape = 'u8[28672]{0}', space=vmem, size = 0x7000, scoped, tag = 'input window, operand 1, single buffered']
    #allocation3 [shape = 's32[1]{0}', space=sflag, size = 0x4, scoped, tag = 'scoped memory for _lambda_.1']
    #allocation4 [shape = 's32[1]{0}', space=sflag, size = 0x4, scoped, tag = 'scoped memory for _lambda_.1']
    #allocation5 [shape = 'u8[28672]{0}', space=vmem, size = 0x7000, scoped, tag = 'input window, operand 3, single buffered']
    #allocation6 [shape = 's32[1]{0}', space=sflag, size = 0x4, scoped, tag = 'scoped memory for _lambda_.1']
    #allocation7 [shape = 'u8[98304]{0}', space=vmem, size = 0x18000, scoped, tag = 'input window, operand 7, single buffered']
    #allocation8 [shape = 'u8[16384]{0}', space=vmem, size = 0x4000, scoped, tag = 'input window, operand 12, single buffered']
    #allocation9 [shape = 's32[1]{0}', space=sflag, size = 0x4, scoped, tag = 'scoped memory for _lambda_.1']
    #allocation10 [shape = 'u8[32768]{0}', space=vmem, size = 0x8000, scoped, tag = 'input window, operand 14, single buffered']
    #allocation11 [shape = 'u8[286720]{0}', space=vmem, size = 0x46000, scoped, tag = 'input window, operand 18, single buffered']
    #allocation12 [shape = 's32[1]{0}', space=sflag, size = 0x4, scoped, tag = 'scoped memory for _lambda_.1']
    #allocation13 [shape = 'u8[57344]{0}', space=vmem, size = 0xe000, scoped, tag = 'input window, operand 23, single buffered']
    #allocation14 [shape = 'u8[114688]{0}', space=vmem, size = 0x1c000, scoped, tag = 'input window, operand 25, single buffered']
    #allocation15 [shape = 's32[1]{0}', space=sflag, size = 0x4, scoped, tag = 'scoped memory for _lambda_.1']
    #allocation16 [shape = 'u8[16384]{0}', space=vmem, size = 0x4000, scoped, tag = 'input window, operand 29, single buffered']
    #allocation17 [shape = 'u8[12288]{0}', space=vmem, size = 0x3000, scoped, tag = 'input window, operand 31, single buffered']
    #allocation18 [shape = 's32[1]{0}', space=sflag, size = 0x4, scoped, tag = 'scoped memory for _lambda_.1']
    #allocation19 [shape = 'u8[12288]{0}', space=vmem, size = 0x3000, scoped, tag = 'input window, operand 32, single buffered']
    #allocation20 [shape = 'u8[16384]{0}', space=vmem, size = 0x4000, scoped, tag = 'input window, operand 33, single buffered']
    #allocation21 [shape = 's32[1]{0}', space=sflag, size = 0x4, scoped, tag = 'scoped memory for _lambda_.1']
    #allocation22 [shape = 'u8[16384]{0}', space=vmem, size = 0x4000, scoped, tag = 'input window, operand 38, single buffered']
    #allocation23 [shape = 'u8[16384]{0}', space=vmem, size = 0x4000, scoped, tag = 'input window, operand 39, single buffered']
    #allocation24 [shape = 's32[1]{0}', space=sflag, size = 0x4, scoped, tag = 'scoped memory for _lambda_.1']
    #allocation25 [shape = 'u8[16384]{0}', space=vmem, size = 0x4000, scoped, tag = 'input window, operand 40, single buffered']
    #allocation26 [shape = 'u8[24576]{0}', space=vmem, size = 0x6000, scoped, tag = 'input window, operand 41, single buffered']
    #allocation27 [shape = 's32[1]{0}', space=sflag, size = 0x4, scoped, tag = 'scoped memory for _lambda_.1']
    #allocation28 [shape = 'u8[24576]{0}', space=vmem, size = 0x6000, scoped, tag = 'input window, operand 46, single buffered']
    #allocation29 [shape = 'u8[24576]{0}', space=vmem, size = 0x6000, scoped, tag = 'input window, operand 47, single buffered']
    #allocation30 [shape = 's32[1]{0}', space=sflag, size = 0x4, scoped, tag = 'scoped memory for _lambda_.1']
    #allocation31 [shape = 'u8[1024]{0}', space=vmem, size = 0x400, scoped, tag = 'output window, operand 0, single buffered']
    %102 = vsyncpa [#allocation3], 0
    %103 = vsyncpa [#allocation6], 0
    %104 = vsyncpa [#allocation9], 0
    %105 = vsyncpa [#allocation12], 0
    %106 = vsyncpa [#allocation15], 0
    %107 = vsyncpa [#allocation18], 0
    %108 = vsyncpa [#allocation21], 0
    %109 = vsyncpa [#allocation24], 0
    %110 = vsyncpa [#allocation27], 0
    %111 = vsyncpa [#allocation30], 0
    %112 = vsyncpa [#allocation4], 0
    // Predicated region
    $region2: #{_lambda_.1} parent=1 // pred_check
      _
    $region3: #{_lambda_.1} parent=1 // pred_check_branch
      %114 = sbr.rel (0) target = $region5
    $region4: #{_lambda_.1} parent=1 // pred_region
      _
    $region5: #{_lambda_.1} parent=1 // pred_fallthru
      _
    // Predicated region
    $region6: #{_lambda_.1} parent=1 // pred_check
      _
    $region7: #{_lambda_.1} parent=1 // pred_check_branch
      %116 = sbr.rel (0) target = $region9
    $region8: #{_lambda_.1} parent=1 // pred_region
      %s118 = ssub.s32 896, 896
      %119 = vsyncadd [#allocation3], %s118
      %s120 = sshll.u32 [#allocation2], 4
      %s121 = int_to_ptr.vmem [resolvable:$true] %s120
      %126 = dma.hbm_to_vmem [thread:$0]  %s3, 896, %s121, [#allocation3], 128, 128, 8
    $region9: #{_lambda_.1} parent=1 // pred_fallthru
      _
    // Predicated region
    $region10: #{_lambda_.1} parent=1 // pred_check
      _
    $region11: #{_lambda_.1} parent=1 // pred_check_branch
      %128 = sbr.rel (0) target = $region13
    $region12: #{_lambda_.1} parent=1 // pred_region
      _
    $region13: #{_lambda_.1} parent=1 // pred_fallthru
      _
    // Predicated region
    $region14: #{_lambda_.1} parent=1 // pred_check
      _
    $region15: #{_lambda_.1} parent=1 // pred_check_branch
      %130 = sbr.rel (0) target = $region17
    $region16: #{_lambda_.1} parent=1 // pred_region
      %s132 = ssub.s32 896, 896
      %133 = vsyncadd [#allocation6], %s132
      %s134 = sshll.u32 [#allocation5], 4
      %s135 = int_to_ptr.vmem [resolvable:$true] %s134
      %140 = dma.hbm_to_vmem [thread:$0]  %s7, 896, %s135, [#allocation6], 128, 128, 8
    $region17: #{_lambda_.1} parent=1 // pred_fallthru
      _
    // Predicated region
    $region18: #{_lambda_.1} parent=1 // pred_check
      _
    $region19: #{_lambda_.1} parent=1 // pred_check_branch
      %142 = sbr.rel (0) target = $region21
    $region20: #{_lambda_.1} parent=1 // pred_region
      _
    $region21: #{_lambda_.1} parent=1 // pred_fallthru
      _
    // Predicated region
    $region22: #{_lambda_.1} parent=1 // pred_check
      _
    $region23: #{_lambda_.1} parent=1 // pred_check_branch
      %144 = sbr.rel (0) target = $region25
    $region24: #{_lambda_.1} parent=1 // pred_region
      _
    $region25: #{_lambda_.1} parent=1 // pred_fallthru
      _
    // Predicated region
    $region26: #{_lambda_.1} parent=1 // pred_check
      _
    $region27: #{_lambda_.1} parent=1 // pred_check_branch
      %146 = sbr.rel (0) target = $region29
    $region28: #{_lambda_.1} parent=1 // pred_region
      _
    $region29: #{_lambda_.1} parent=1 // pred_fallthru
      _
    // Predicated region
    $region30: #{_lambda_.1} parent=1 // pred_check
      _
    $region31: #{_lambda_.1} parent=1 // pred_check_branch
      %148 = sbr.rel (0) target = $region33
    $region32: #{_lambda_.1} parent=1 // pred_region
      %s150 = ssub.s32 3072, 3072
      %151 = vsyncadd [#allocation6], %s150
      %s152 = sshll.u32 [#allocation7], 4
      %s153 = int_to_ptr.vmem [resolvable:$true] %s152
      %158 = dma.hbm_to_vmem [thread:$0]  %s15, 3072, %s153, [#allocation6], 384, 384, 24
    $region33: #{_lambda_.1} parent=1 // pred_fallthru
      _
    // Predicated region
    $region34: #{_lambda_.1} parent=1 // pred_check
      _
    $region35: #{_lambda_.1} parent=1 // pred_check_branch
      %160 = sbr.rel (0) target = $region37
    $region36: #{_lambda_.1} parent=1 // pred_region
      _
    $region37: #{_lambda_.1} parent=1 // pred_fallthru
      _
    // Predicated region
    $region38: #{_lambda_.1} parent=1 // pred_check
      _
    $region39: #{_lambda_.1} parent=1 // pred_check_branch
      %162 = sbr.rel (0) target = $region41
    $region40: #{_lambda_.1} parent=1 // pred_region
      _
    $region41: #{_lambda_.1} parent=1 // pred_fallthru
      _
    // Predicated region
    $region42: #{_lambda_.1} parent=1 // pred_check
      _
    $region43: #{_lambda_.1} parent=1 // pred_check_branch
      %164 = sbr.rel (0) target = $region45
    $region44: #{_lambda_.1} parent=1 // pred_region
      _
    $region45: #{_lambda_.1} parent=1 // pred_fallthru
      _
    // Predicated region
    $region46: #{_lambda_.1} parent=1 // pred_check
      _
    $region47: #{_lambda_.1} parent=1 // pred_check_branch
      %166 = sbr.rel (0) target = $region49
    $region48: #{_lambda_.1} parent=1 // pred_region
      _
    $region49: #{_lambda_.1} parent=1 // pred_fallthru
      _
    // Predicated region
    $region50: #{_lambda_.1} parent=1 // pred_check
      _
    $region51: #{_lambda_.1} parent=1 // pred_check_branch
      %168 = sbr.rel (0) target = $region53
    $region52: #{_lambda_.1} parent=1 // pred_region
      %s170 = ssub.s32 512, 512
      %171 = vsyncadd [#allocation9], %s170
      %s172 = sshll.u32 [#allocation8], 4
      %s173 = int_to_ptr.vmem [resolvable:$true] %s172
      %178 = dma.hbm_to_vmem [thread:$0]  %s25, 512, %s173, [#allocation9], 64, 64, 4
    $region53: #{_lambda_.1} parent=1 // pred_fallthru
      _
    // Predicated region
    $region54: #{_lambda_.1} parent=1 // pred_check
      _
    $region55: #{_lambda_.1} parent=1 // pred_check_branch
      %180 = sbr.rel (0) target = $region57
    $region56: #{_lambda_.1} parent=1 // pred_region
      _
    $region57: #{_lambda_.1} parent=1 // pred_fallthru
      _
    // Predicated region
    $region58: #{_lambda_.1} parent=1 // pred_check
      _
    $region59: #{_lambda_.1} parent=1 // pred_check_branch
      %182 = sbr.rel (0) target = $region61
    $region60: #{_lambda_.1} parent=1 // pred_region
      %s184 = ssub.s32 1024, 1024
      %185 = vsyncadd [#allocation9], %s184
      %s186 = sshll.u32 [#allocation10], 4
      %s187 = int_to_ptr.vmem [resolvable:$true] %s186
      %192 = dma.hbm_to_vmem [thread:$0]  %s29, 1024, %s187, [#allocation9], 64, 64, 4
    $region61: #{_lambda_.1} parent=1 // pred_fallthru
      _
    // Predicated region
    $region62: #{_lambda_.1} parent=1 // pred_check
      _
    $region63: #{_lambda_.1} parent=1 // pred_check_branch
      %194 = sbr.rel (0) target = $region65
    $region64: #{_lambda_.1} parent=1 // pred_region
      _
    $region65: #{_lambda_.1} parent=1 // pred_fallthru
      _
    // Predicated region
    $region66: #{_lambda_.1} parent=1 // pred_check
      _
    $region67: #{_lambda_.1} parent=1 // pred_check_branch
      %196 = sbr.rel (0) target = $region69
    $region68: #{_lambda_.1} parent=1 // pred_region
      _
    $region69: #{_lambda_.1} parent=1 // pred_fallthru
      _
    // Predicated region
    $region70: #{_lambda_.1} parent=1 // pred_check
      _
    $region71: #{_lambda_.1} parent=1 // pred_check_branch
      %198 = sbr.rel (0) target = $region73
    $region72: #{_lambda_.1} parent=1 // pred_region
      _
    $region73: #{_lambda_.1} parent=1 // pred_fallthru
      _
    // Predicated region
    $region74: #{_lambda_.1} parent=1 // pred_check
      _
    $region75: #{_lambda_.1} parent=1 // pred_check_branch
      %200 = sbr.rel (0) target = $region77
    $region76: #{_lambda_.1} parent=1 // pred_region
      %s202 = ssub.s32 8960, 8960
      %203 = vsyncadd [#allocation12], %s202
      %s204 = sshll.u32 [#allocation11], 4
      %s205 = int_to_ptr.vmem [resolvable:$true] %s204
      %210 = dma.hbm_to_vmem [thread:$0]  %s37, 8960, %s205, [#allocation12], 320, 320, 20
    $region77: #{_lambda_.1} parent=1 // pred_fallthru
      _
    // Predicated region
    $region78: #{_lambda_.1} parent=1 // pred_check
      _
    $region79: #{_lambda_.1} parent=1 // pred_check_branch
      %212 = sbr.rel (0) target = $region81
    $region80: #{_lambda_.1} parent=1 // pred_region
      _
    $region81: #{_lambda_.1} parent=1 // pred_fallthru
      _
    // Predicated region
    $region82: #{_lambda_.1} parent=1 // pred_check
      _
    $region83: #{_lambda_.1} parent=1 // pred_check_branch
      %214 = sbr.rel (0) target = $region85
    $region84: #{_lambda_.1} parent=1 // pred_region
      _
    $region85: #{_lambda_.1} parent=1 // pred_fallthru
      _
    // Predicated region
    $region86: #{_lambda_.1} parent=1 // pred_check
      _
    $region87: #{_lambda_.1} parent=1 // pred_check_branch
      %216 = sbr.rel (0) target = $region89
    $region88: #{_lambda_.1} parent=1 // pred_region
      _
    $region89: #{_lambda_.1} parent=1 // pred_fallthru
      _
    // Predicated region
    $region90: #{_lambda_.1} parent=1 // pred_check
      _
    $region91: #{_lambda_.1} parent=1 // pred_check_branch
      %218 = sbr.rel (0) target = $region93
    $region92: #{_lambda_.1} parent=1 // pred_region
      _
    $region93: #{_lambda_.1} parent=1 // pred_fallthru
      _
    // Predicated region
    $region94: #{_lambda_.1} parent=1 // pred_check
      _
    $region95: #{_lambda_.1} parent=1 // pred_check_branch
      %220 = sbr.rel (0) target = $region97
    $region96: #{_lambda_.1} parent=1 // pred_region
      %s222 = ssub.s32 1792, 1792
      %223 = vsyncadd [#allocation12], %s222
      %s224 = sshll.u32 [#allocation13], 4
      %s225 = int_to_ptr.vmem [resolvable:$true] %s224
      %230 = dma.hbm_to_vmem [thread:$0]  %s47, 1792, %s225, [#allocation12], 64, 64, 4
    $region97: #{_lambda_.1} parent=1 // pred_fallthru
      _
    // Predicated region
    $region98: #{_lambda_.1} parent=1 // pred_check
      _
    $region99: #{_lambda_.1} parent=1 // pred_check_branch
      %232 = sbr.rel (0) target = $region101
    $region100: #{_lambda_.1} parent=1 // pred_region
      _
    $region101: #{_lambda_.1} parent=1 // pred_fallthru
      _
    // Predicated region
    $region102: #{_lambda_.1} parent=1 // pred_check
      _
    $region103: #{_lambda_.1} parent=1 // pred_check_branch
      %234 = sbr.rel (0) target = $region105
    $region104: #{_lambda_.1} parent=1 // pred_region
      %s236 = ssub.s32 3584, 3584
      %237 = vsyncadd [#allocation15], %s236
      %s238 = sshll.u32 [#allocation14], 4
      %s239 = int_to_ptr.vmem [resolvable:$true] %s238
      %244 = dma.hbm_to_vmem [thread:$0]  %s51, 3584, %s239, [#allocation15], 64, 64, 4
    $region105: #{_lambda_.1} parent=1 // pred_fallthru
      _
    // Predicated region
    $region106: #{_lambda_.1} parent=1 // pred_check
      _
    $region107: #{_lambda_.1} parent=1 // pred_check_branch
      %246 = sbr.rel (0) target = $region109
    $region108: #{_lambda_.1} parent=1 // pred_region
      _
    $region109: #{_lambda_.1} parent=1 // pred_fallthru
      _
    // Predicated region
    $region110: #{_lambda_.1} parent=1 // pred_check
      _
    $region111: #{_lambda_.1} parent=1 // pred_check_branch
      %248 = sbr.rel (0) target = $region113
    $region112: #{_lambda_.1} parent=1 // pred_region
      _
    $region113: #{_lambda_.1} parent=1 // pred_fallthru
      _
    // Predicated region
    $region114: #{_lambda_.1} parent=1 // pred_check
      _
    $region115: #{_lambda_.1} parent=1 // pred_check_branch
      %250 = sbr.rel (0) target = $region117
    $region116: #{_lambda_.1} parent=1 // pred_region
      _
    $region117: #{_lambda_.1} parent=1 // pred_fallthru
      _
    // Predicated region
    $region118: #{_lambda_.1} parent=1 // pred_check
      _
    $region119: #{_lambda_.1} parent=1 // pred_check_branch
      %252 = sbr.rel (0) target = $region121
    $region120: #{_lambda_.1} parent=1 // pred_region
      %s254 = ssub.s32 512, 512
      %255 = vsyncadd [#allocation15], %s254
      %s256 = sshll.u32 [#allocation16], 4
      %s257 = int_to_ptr.vmem [resolvable:$true] %s256
      %262 = dma.hbm_to_vmem [thread:$0]  %s59, 512, %s257, [#allocation15], 128, 128, 8
    $region121: #{_lambda_.1} parent=1 // pred_fallthru
      _
    // Predicated region
    $region122: #{_lambda_.1} parent=1 // pred_check
      _
    $region123: #{_lambda_.1} parent=1 // pred_check_branch
      %264 = sbr.rel (0) target = $region125
    $region124: #{_lambda_.1} parent=1 // pred_region
      _
    $region125: #{_lambda_.1} parent=1 // pred_fallthru
      _
    // Predicated region
    $region126: #{_lambda_.1} parent=1 // pred_check
      _
    $region127: #{_lambda_.1} parent=1 // pred_check_branch
      %266 = sbr.rel (0) target = $region129
    $region128: #{_lambda_.1} parent=1 // pred_region
      %s268 = ssub.s32 384, 384
      %269 = vsyncadd [#allocation18], %s268
      %s270 = sshll.u32 [#allocation17], 4
      %s271 = int_to_ptr.vmem [resolvable:$true] %s270
      %276 = dma.hbm_to_vmem [thread:$0]  %s63, 384, %s271, [#allocation18], 128, 128, 8
    $region129: #{_lambda_.1} parent=1 // pred_fallthru
      _
    // Predicated region
    $region130: #{_lambda_.1} parent=1 // pred_check
      _
    $region131: #{_lambda_.1} parent=1 // pred_check_branch
      %278 = sbr.rel (0) target = $region133
    $region132: #{_lambda_.1} parent=1 // pred_region
      %s280 = ssub.s32 384, 384
      %281 = vsyncadd [#allocation18], %s280
      %s282 = sshll.u32 [#allocation19], 4
      %s283 = int_to_ptr.vmem [resolvable:$true] %s282
      %288 = dma.hbm_to_vmem [thread:$0]  %s65, 384, %s283, [#allocation18], 128, 128, 8
    $region133: #{_lambda_.1} parent=1 // pred_fallthru
      _
    // Predicated region
    $region134: #{_lambda_.1} parent=1 // pred_check
      _
    $region135: #{_lambda_.1} parent=1 // pred_check_branch
      %290 = sbr.rel (0) target = $region137
    $region136: #{_lambda_.1} parent=1 // pred_region
      %s292 = ssub.s32 512, 512
      %293 = vsyncadd [#allocation21], %s292
      %s294 = sshll.u32 [#allocation20], 4
      %s295 = int_to_ptr.vmem [resolvable:$true] %s294
      %300 = dma.hbm_to_vmem [thread:$0]  %s67, 512, %s295, [#allocation21], 128, 128, 8
    $region137: #{_lambda_.1} parent=1 // pred_fallthru
      _
    // Predicated region
    $region138: #{_lambda_.1} parent=1 // pred_check
      _
    $region139: #{_lambda_.1} parent=1 // pred_check_branch
      %302 = sbr.rel (0) target = $region141
    $region140: #{_lambda_.1} parent=1 // pred_region
      _
    $region141: #{_lambda_.1} parent=1 // pred_fallthru
      _
    // Predicated region
    $region142: #{_lambda_.1} parent=1 // pred_check
      _
    $region143: #{_lambda_.1} parent=1 // pred_check_branch
      %304 = sbr.rel (0) target = $region145
    $region144: #{_lambda_.1} parent=1 // pred_region
      _
    $region145: #{_lambda_.1} parent=1 // pred_fallthru
      _
    // Predicated region
    $region146: #{_lambda_.1} parent=1 // pred_check
      _
    $region147: #{_lambda_.1} parent=1 // pred_check_branch
      %306 = sbr.rel (0) target = $region149
    $region148: #{_lambda_.1} parent=1 // pred_region
      _
    $region149: #{_lambda_.1} parent=1 // pred_fallthru
      _
    // Predicated region
    $region150: #{_lambda_.1} parent=1 // pred_check
      _
    $region151: #{_lambda_.1} parent=1 // pred_check_branch
      %308 = sbr.rel (0) target = $region153
    $region152: #{_lambda_.1} parent=1 // pred_region
      _
    $region153: #{_lambda_.1} parent=1 // pred_fallthru
      _
    // Predicated region
    $region154: #{_lambda_.1} parent=1 // pred_check
      _
    $region155: #{_lambda_.1} parent=1 // pred_check_branch
      %310 = sbr.rel (0) target = $region157
    $region156: #{_lambda_.1} parent=1 // pred_region
      %s312 = ssub.s32 512, 512
      %313 = vsyncadd [#allocation21], %s312
      %s314 = sshll.u32 [#allocation22], 4
      %s315 = int_to_ptr.vmem [resolvable:$true] %s314
      %320 = dma.hbm_to_vmem [thread:$0]  %s77, 512, %s315, [#allocation21], 128, 128, 8
    $region157: #{_lambda_.1} parent=1 // pred_fallthru
      _
    // Predicated region
    $region158: #{_lambda_.1} parent=1 // pred_check
      _
    $region159: #{_lambda_.1} parent=1 // pred_check_branch
      %322 = sbr.rel (0) target = $region161
    $region160: #{_lambda_.1} parent=1 // pred_region
      %s324 = ssub.s32 512, 512
      %325 = vsyncadd [#allocation24], %s324
      %s326 = sshll.u32 [#allocation23], 4
      %s327 = int_to_ptr.vmem [resolvable:$true] %s326
      %332 = dma.hbm_to_vmem [thread:$0]  %s79, 512, %s327, [#allocation24], 128, 128, 8
    $region161: #{_lambda_.1} parent=1 // pred_fallthru
      _
    // Predicated region
    $region162: #{_lambda_.1} parent=1 // pred_check
      _
    $region163: #{_lambda_.1} parent=1 // pred_check_branch
      %334 = sbr.rel (0) target = $region165
    $region164: #{_lambda_.1} parent=1 // pred_region
      %s336 = ssub.s32 512, 512
      %337 = vsyncadd [#allocation24], %s336
      %s338 = sshll.u32 [#allocation25], 4
      %s339 = int_to_ptr.vmem [resolvable:$true] %s338
      %344 = dma.hbm_to_vmem [thread:$0]  %s81, 512, %s339, [#allocation24], 128, 128, 8
    $region165: #{_lambda_.1} parent=1 // pred_fallthru
      _
    // Predicated region
    $region166: #{_lambda_.1} parent=1 // pred_check
      _
    $region167: #{_lambda_.1} parent=1 // pred_check_branch
      %346 = sbr.rel (0) target = $region169
    $region168: #{_lambda_.1} parent=1 // pred_region
      %s348 = ssub.s32 768, 768
      %349 = vsyncadd [#allocation27], %s348
      %s350 = sshll.u32 [#allocation26], 4
      %s351 = int_to_ptr.vmem [resolvable:$true] %s350
      %356 = dma.hbm_to_vmem [thread:$0]  %s83, 768, %s351, [#allocation27], 128, 128, 8
    $region169: #{_lambda_.1} parent=1 // pred_fallthru
      _
    // Predicated region
    $region170: #{_lambda_.1} parent=1 // pred_check
      _
    $region171: #{_lambda_.1} parent=1 // pred_check_branch
      %358 = sbr.rel (0) target = $region173
    $region172: #{_lambda_.1} parent=1 // pred_region
      _
    $region173: #{_lambda_.1} parent=1 // pred_fallthru
      _
    // Predicated region
    $region174: #{_lambda_.1} parent=1 // pred_check
      _
    $region175: #{_lambda_.1} parent=1 // pred_check_branch
      %360 = sbr.rel (0) target = $region177
    $region176: #{_lambda_.1} parent=1 // pred_region
      _
    $region177: #{_lambda_.1} parent=1 // pred_fallthru
      _
    // Predicated region
    $region178: #{_lambda_.1} parent=1 // pred_check
      _
    $region179: #{_lambda_.1} parent=1 // pred_check_branch
      %362 = sbr.rel (0) target = $region181
    $region180: #{_lambda_.1} parent=1 // pred_region
      _
    $region181: #{_lambda_.1} parent=1 // pred_fallthru
      _
    // Predicated region
    $region182: #{_lambda_.1} parent=1 // pred_check
      _
    $region183: #{_lambda_.1} parent=1 // pred_check_branch
      %364 = sbr.rel (0) target = $region185
    $region184: #{_lambda_.1} parent=1 // pred_region
      _
    $region185: #{_lambda_.1} parent=1 // pred_fallthru
      _
    // Predicated region
    $region186: #{_lambda_.1} parent=1 // pred_check
      _
    $region187: #{_lambda_.1} parent=1 // pred_check_branch
      %366 = sbr.rel (0) target = $region189
    $region188: #{_lambda_.1} parent=1 // pred_region
      %s368 = ssub.s32 768, 768
      %369 = vsyncadd [#allocation27], %s368
      %s370 = sshll.u32 [#allocation28], 4
      %s371 = int_to_ptr.vmem [resolvable:$true] %s370
      %376 = dma.hbm_to_vmem [thread:$0]  %s93, 768, %s371, [#allocation27], 128, 128, 8
    $region189: #{_lambda_.1} parent=1 // pred_fallthru
      _
    // Predicated region
    $region190: #{_lambda_.1} parent=1 // pred_check
      _
    $region191: #{_lambda_.1} parent=1 // pred_check_branch
      %378 = sbr.rel (0) target = $region193
    $region192: #{_lambda_.1} parent=1 // pred_region
      %s380 = ssub.s32 768, 768
      %381 = vsyncadd [#allocation30], %s380
      %s382 = sshll.u32 [#allocation29], 4
      %s383 = int_to_ptr.vmem [resolvable:$true] %s382
      %388 = dma.hbm_to_vmem [thread:$0]  %s95, 768, %s383, [#allocation30], 128, 128, 8
    $region193: #{_lambda_.1} parent=1 // pred_fallthru
      _
    // Predicated region
    $region194: #{_lambda_.1} parent=1 // pred_check
      _
    $region195: #{_lambda_.1} parent=1 // pred_check_branch
      %390 = sbr.rel (0) target = $region197
    $region196: #{_lambda_.1} parent=1 // pred_region
      %391 = dma.done [#allocation3], 896
    $region197: #{_lambda_.1} parent=1 // pred_fallthru
      _
    // Predicated region
    $region198: #{_lambda_.1} parent=1 // pred_check
      _
    $region199: #{_lambda_.1} parent=1 // pred_check_branch
      %393 = sbr.rel (0) target = $region201
    $region200: #{_lambda_.1} parent=1 // pred_region
      %394 = dma.done [#allocation6], 896
    $region201: #{_lambda_.1} parent=1 // pred_fallthru
      _
    // Predicated region
    $region202: #{_lambda_.1} parent=1 // pred_check
      _
    $region203: #{_lambda_.1} parent=1 // pred_check_branch
      %396 = sbr.rel (0) target = $region205
    $region204: #{_lambda_.1} parent=1 // pred_region
      %397 = dma.done [#allocation6], 3072
    $region205: #{_lambda_.1} parent=1 // pred_fallthru
      _
    // Predicated region
    $region206: #{_lambda_.1} parent=1 // pred_check
      _
    $region207: #{_lambda_.1} parent=1 // pred_check_branch
      %399 = sbr.rel (0) target = $region209
    $region208: #{_lambda_.1} parent=1 // pred_region
      %400 = dma.done [#allocation9], 512
    $region209: #{_lambda_.1} parent=1 // pred_fallthru
      _
    // Predicated region
    $region210: #{_lambda_.1} parent=1 // pred_check
      _
    $region211: #{_lambda_.1} parent=1 // pred_check_branch
      %402 = sbr.rel (0) target = $region213
    $region212: #{_lambda_.1} parent=1 // pred_region
      %403 = dma.done [#allocation9], 1024
    $region213: #{_lambda_.1} parent=1 // pred_fallthru
      _
    // Predicated region
    $region214: #{_lambda_.1} parent=1 // pred_check
      _
    $region215: #{_lambda_.1} parent=1 // pred_check_branch
      %405 = sbr.rel (0) target = $region217
    $region216: #{_lambda_.1} parent=1 // pred_region
      %406 = dma.done [#allocation12], 8960
    $region217: #{_lambda_.1} parent=1 // pred_fallthru
      _
    // Predicated region
    $region218: #{_lambda_.1} parent=1 // pred_check
      _
    $region219: #{_lambda_.1} parent=1 // pred_check_branch
      %408 = sbr.rel (0) target = $region221
    $region220: #{_lambda_.1} parent=1 // pred_region
      %409 = dma.done [#allocation12], 1792
    $region221: #{_lambda_.1} parent=1 // pred_fallthru
      _
    // Predicated region
    $region222: #{_lambda_.1} parent=1 // pred_check
      _
    $region223: #{_lambda_.1} parent=1 // pred_check_branch
      %411 = sbr.rel (0) target = $region225
    $region224: #{_lambda_.1} parent=1 // pred_region
      %412 = dma.done [#allocation15], 3584
    $region225: #{_lambda_.1} parent=1 // pred_fallthru
      _
    // Predicated region
    $region226: #{_lambda_.1} parent=1 // pred_check
      _
    $region227: #{_lambda_.1} parent=1 // pred_check_branch
      %414 = sbr.rel (0) target = $region229
    $region228: #{_lambda_.1} parent=1 // pred_region
      %415 = dma.done [#allocation15], 512
    $region229: #{_lambda_.1} parent=1 // pred_fallthru
      _
    // Predicated region
    $region230: #{_lambda_.1} parent=1 // pred_check
      _
    $region231: #{_lambda_.1} parent=1 // pred_check_branch
      %417 = sbr.rel (0) target = $region233
    $region232: #{_lambda_.1} parent=1 // pred_region
      %418 = dma.done [#allocation18], 384
    $region233: #{_lambda_.1} parent=1 // pred_fallthru
      _
    // Predicated region
    $region234: #{_lambda_.1} parent=1 // pred_check
      _
    $region235: #{_lambda_.1} parent=1 // pred_check_branch
      %420 = sbr.rel (0) target = $region237
    $region236: #{_lambda_.1} parent=1 // pred_region
      %421 = dma.done [#allocation18], 384
    $region237: #{_lambda_.1} parent=1 // pred_fallthru
      _
    // Predicated region
    $region238: #{_lambda_.1} parent=1 // pred_check
      _
    $region239: #{_lambda_.1} parent=1 // pred_check_branch
      %423 = sbr.rel (0) target = $region241
    $region240: #{_lambda_.1} parent=1 // pred_region
      %424 = dma.done [#allocation21], 512
    $region241: #{_lambda_.1} parent=1 // pred_fallthru
      _
    // Predicated region
    $region242: #{_lambda_.1} parent=1 // pred_check
      _
    $region243: #{_lambda_.1} parent=1 // pred_check_branch
      %426 = sbr.rel (0) target = $region245
    $region244: #{_lambda_.1} parent=1 // pred_region
      %427 = dma.done [#allocation21], 512
    $region245: #{_lambda_.1} parent=1 // pred_fallthru
      _
    // Predicated region
    $region246: #{_lambda_.1} parent=1 // pred_check
      _
    $region247: #{_lambda_.1} parent=1 // pred_check_branch
      %429 = sbr.rel (0) target = $region249
    $region248: #{_lambda_.1} parent=1 // pred_region
      %430 = dma.done [#allocation24], 512
    $region249: #{_lambda_.1} parent=1 // pred_fallthru
      _
    // Predicated region
    $region250: #{_lambda_.1} parent=1 // pred_check
      _
    $region251: #{_lambda_.1} parent=1 // pred_check_branch
      %432 = sbr.rel (0) target = $region253
    $region252: #{_lambda_.1} parent=1 // pred_region
      %433 = dma.done [#allocation24], 512
    $region253: #{_lambda_.1} parent=1 // pred_fallthru
      _
    // Predicated region
    $region254: #{_lambda_.1} parent=1 // pred_check
      _
    $region255: #{_lambda_.1} parent=1 // pred_check_branch
      %435 = sbr.rel (0) target = $region257
    $region256: #{_lambda_.1} parent=1 // pred_region
      %436 = dma.done [#allocation27], 768
    $region257: #{_lambda_.1} parent=1 // pred_fallthru
      _
    // Predicated region
    $region258: #{_lambda_.1} parent=1 // pred_check
      _
    $region259: #{_lambda_.1} parent=1 // pred_check_branch
      %438 = sbr.rel (0) target = $region261
    $region260: #{_lambda_.1} parent=1 // pred_region
      %439 = dma.done [#allocation27], 768
    $region261: #{_lambda_.1} parent=1 // pred_fallthru
      _
    // Predicated region
    $region262: #{_lambda_.1} parent=1 // pred_check
      _
    $region263: #{_lambda_.1} parent=1 // pred_check_branch
      %441 = sbr.rel (0) target = $region265
    $region264: #{_lambda_.1} parent=1 // pred_region
      %442 = dma.done [#allocation30], 768
    $region265: #{_lambda_.1} parent=1 // pred_fallthru
      _
    %v444 = vld [vmem:[%s1] sm:$0xff]
    %v445 = vld [vmem:[%s1 + $0x8] sm:$0xff]
    %v446 = vld [vmem:[%s1 + $0x10] sm:$0xff]
    %v447 = vld [vmem:[%s1 + $0x18] sm:$0xff]
    %v448 = vld [vmem:[%s1 + $0x20] sm:$0xff]
    %v449 = vld [vmem:[%s1 + $0x28] sm:$0xff]
    %v450 = vld [vmem:[%s1 + $0x30] sm:$0xff]
    %v451 = vld [vmem:[%s1 + $0x38] sm:$0xff]
    %v452 = vld [vmem:[%s1 + $0x40] sm:$0xff]
    %v453 = vld [vmem:[%s1 + $0x48] sm:$0xff]
    %v454 = vld [vmem:[%s1 + $0x50] sm:$0xff]
    %v455 = vld [vmem:[%s1 + $0x58] sm:$0xff]
    %v456 = vld [vmem:[%s1 + $0x60] sm:$0x3]
    %v457 = vld [vmem:[#allocation17] sm:$0xff]
    %v458 = vld [vmem:[#allocation17 + $0x8] sm:$0xff]
    %v459 = vld [vmem:[#allocation17 + $0x10] sm:$0x3]
    %vm460 = vcmask 801792
    %v462 = vsel %vm460, %v457, 0
    %v465 = vsel %vm460, %v458, 0
    %v468 = vsel %vm460, %v459, 0
    %vm470 = vcmask 1041408
    %v472 = vsel %vm470, %v456, 0
    %474 = vmatprep.subr.mxu0 0.0
    %475 = vmatpush1.msra.mxu0 0.0
    %476 = vmatprep.subr.mxu0 0.0
    %477 = vmatpush1.msra.mxu0 0.0
    %478 = vmatprep.subr.mxu0 0.0
    %479 = vmatpush1.msra.mxu0 0.0
    %480 = vmatprep.subr.mxu0 0.0
    %481 = vmatpush1.msra.mxu0 %v472
    %482 = vmatprep.subr.mxu0 0.0
    %483 = vmatpush1.msra.mxu0 %v455
    %484 = vmatprep.subr.mxu0 0.0
    %485 = vmatpush1.msra.mxu0 %v454
    %486 = vmatprep.subr.mxu0 0.0
    %487 = vmatpush1.msra.mxu0 %v453
    %488 = vmatprep.subr.mxu0 0.0
    %489 = vmatpush1.msra.mxu0 %v452
    %490 = vmatprep.subr.mxu0 0.0
    %491 = vmatpush1.msra.mxu0 %v451
    %492 = vmatprep.subr.mxu0 0.0
    %493 = vmatpush1.msra.mxu0 %v450
    %494 = vmatprep.subr.mxu0 0.0
    %495 = vmatpush1.msra.mxu0 %v449
    %496 = vmatprep.subr.mxu0 0.0
    %497 = vmatpush1.msra.mxu0 %v448
    %498 = vmatprep.subr.mxu0 0.0
    %499 = vmatpush1.msra.mxu0 %v447
    %500 = vmatprep.subr.mxu0 0.0
    %501 = vmatpush1.msra.mxu0 %v446
    %502 = vmatprep.subr.mxu0 0.0
    %503 = vmatpush1.msra.mxu0 %v445
    %504 = vmatprep.subr.mxu0 0.0
    %505 = vmatpush1.msra.mxu0 %v444
    %506 = vmatprep.subr.mxu0 0.0
    %507 = vmatpush2.msra.mxu0 0.0
    %508 = vmatprep.subr.mxu0 0.0
    %509 = vmatpush2.msra.mxu0 0.0
    %510 = vmatprep.subr.mxu0 0.0
    %511 = vmatpush2.msra.mxu0 0.0
    %512 = vmatprep.subr.mxu0 0.0
    %513 = vmatpush2.msra.mxu0 0.0
    %514 = vmatprep.subr.mxu0 0.0
    %515 = vmatpush2.msra.mxu0 0.0
    %516 = vmatprep.subr.mxu0 0.0
    %517 = vmatpush2.msra.mxu0 0.0
    %518 = vmatprep.subr.mxu0 0.0
    %519 = vmatpush2.msra.mxu0 0.0
    %520 = vmatprep.subr.mxu0 0.0
    %521 = vmatpush2.msra.mxu0 0.0
    %522 = vmatprep.subr.mxu0 0.0
    %523 = vmatpush2.msra.mxu0 0.0
    %524 = vmatprep.subr.mxu0 0.0
    %525 = vmatpush2.msra.mxu0 0.0
    %526 = vmatprep.subr.mxu0 0.0
    %527 = vmatpush2.msra.mxu0 0.0
    %528 = vmatprep.subr.mxu0 0.0
    %529 = vmatpush2.msra.mxu0 0.0
    %530 = vmatprep.subr.mxu0 0.0
    %531 = vmatpush2.msra.mxu0 0.0
    %532 = vmatprep.subr.mxu0 0.0
    %533 = vmatpush2.msra.mxu0 0.0
    %534 = vmatprep.subr.mxu0 0.0
    %535 = vmatpush2.msra.mxu0 0.0
    %536 = vmatprep.subr.mxu0 0.0
    %537 = vmatpush2.msra.mxu0 0.0
    %538 = vmatprep.mubr.f32.mxu0 0.0
    %539 = vmatmul.mubr.f32.gmra.mxu0 %v462
    %v540 = vpop.f32.mrf.mxu0
    %v541 = vadd.f32 0.0, %v540
    %v542 = vpop.f32.mrf.mxu0
    %543 = vmatprep.mubr.f32.mxu0 0.0
    %544 = vmatmul.mubr.f32.gmra.mxu0 %v465
    %v545 = vpop.f32.mrf.mxu0
    %v546 = vadd.f32 0.0, %v545
    %v547 = vpop.f32.mrf.mxu0
    %548 = vmatprep.mubr.f32.mxu0 0.0
    %549 = vmatmul.mubr.f32.gmra.mxu0 %v468
    %v550 = vpop.f32.mrf.mxu0
    %v551 = vadd.f32 0.0, %v550
    %v552 = vpop.f32.mrf.mxu0
    %553 = vdwg.mxu0
    %v554 = vld [vmem:[#allocation19] sm:$0xff]
    %v555 = vld [vmem:[#allocation19 + $0x8] sm:$0xff]
    %v556 = vld [vmem:[#allocation19 + $0x10] sm:$0x3]
    loop: start=0, step=1, limit=7
    $region266: #{_lambda_.1} parent=1 // loop_pre_header
      _
    $region267: #{_lambda_.1} parent=1 // loop_header
      %s558 = sphi 0, %s562
      %p559 = scmp.ge.s32.totalorder %s558, 7
      %v563 = vphi %v541, %v1925
      %v564 = vphi %v546, %v1926
      %v565 = vphi %v551, %v1927
    $region268: #{_lambda_.1} parent=1 // loop_header_branch
      %561 = sbr.rel (%p559) target = $region272
    $region269: #{_lambda_.1} parent=1 // loop_body
      %s566 = scalar_lea.vmem %s33, %s558
      %v567 = vld [vmem:[%s566] sm:$0x1]
      %s568 = scalar_lea.vmem %s35, %s558
      %v569 = vld [vmem:[%s568] sm:$0x1]
      %vm570 = vcmask 261120
      %v571 = vsel %vm570, %v563, 0.0
      %572 = vadd.xlane.f32.xlu0 %v571
      %v573 = vpop.xlane.xlu0 %572
      %v574 = vsel %vm570, %v564, 0.0
      %575 = vadd.xlane.f32.xlu0 %v574
      %v576 = vpop.xlane.xlu0 %575
      %vm577 = vcmask 254976
      %v578 = vsel %vm577, %v565, 0.0
      %579 = vadd.xlane.f32.xlu0 %v578
      %v580 = vpop.xlane.xlu0 %579
      %v581 = vrcp.pop 32.0
      %v582 = vmul.f32 %v573, %v581
      %v583 = vmul.f32 %v576, %v581
      %v584 = vmul.f32 %v580, %v581
      %v585 = vsub.f32 %v563, %v582
      %v586 = vsub.f32 %v564, %v583
      %v587 = vsub.f32 %v565, %v584
      %v588 = vmul.f32 %v585, %v585
      %v589 = vmul.f32 %v586, %v586
      %v590 = vmul.f32 %v587, %v587
      %v591 = vsel %vm570, %v588, 0.0
      %592 = vadd.xlane.f32.xlu0 %v591
      %v593 = vpop.xlane.xlu0 %592
      %v594 = vsel %vm570, %v589, 0.0
      %595 = vadd.xlane.f32.xlu0 %v594
      %v596 = vpop.xlane.xlu0 %595
      %v597 = vsel %vm577, %v590, 0.0
      %598 = vadd.xlane.f32.xlu0 %v597
      %v599 = vpop.xlane.xlu0 %598
      %v600 = vmul.f32 %v593, %v581
      %v601 = vmul.f32 %v596, %v581
      %v602 = vmul.f32 %v599, %v581
      %v603 = vadd.f32 %v600, 1e-05
      %v604 = vadd.f32 %v601, 1e-05
      %v605 = vadd.f32 %v602, 1e-05
      %v606 = vrsqrt.pop %v603
      %v607 = vrsqrt.pop %v604
      %v608 = vrsqrt.pop %v605
      %v609 = vmul.f32 %v585, %v606
      %v610 = vmul.f32 %v586, %v607
      %v611 = vmul.f32 %v587, %v608
      %v613 = vlaneseq
      %v614 = vshrl.u32 %v613, 7
      %v615 = vsub.s32 0, %v614
      %v616 = vrot.slane %v567, %v615
      %v618 = vmul.f32 %v609, %v616
      %v619 = vmul.f32 %v610, %v616
      %v620 = vmul.f32 %v611, %v616
      %v622 = vlaneseq
      %v623 = vshrl.u32 %v622, 7
      %v624 = vsub.s32 0, %v623
      %v625 = vrot.slane %v569, %v624
      %v627 = vadd.f32 %v618, %v625
      %v628 = vadd.f32 %v619, %v625
      %v629 = vadd.f32 %v620, %v625
      %v630 = vpack.c.bf16 %v628, %v627
      %v631 = vpack.c.bf16 %v629, %v629
      %s632 = smul.u32 %s558, 20
      %s633 = smul.addr %s632, 4
      %s634 = scalar_lea.vmem [#allocation11], %s633
      %v635 = vld [vmem:[%s634] sm:$0xff]
      %v636 = vld [vmem:[%s634 + $0x8] sm:$0xff]
      %v637 = vld [vmem:[%s634 + $0x10] sm:$0xf]
      %v638 = vld [vmem:[%s634 + $0x14] sm:$0xff]
      %v639 = vld [vmem:[%s634 + $0x1c] sm:$0xff]
      %v640 = vld [vmem:[%s634 + $0x24] sm:$0xf]
      %v641 = vld [vmem:[%s634 + $0x28] sm:$0xff]
      %v642 = vld [vmem:[%s634 + $0x30] sm:$0xff]
      %v643 = vld [vmem:[%s634 + $0x38] sm:$0xf]
      %v644 = vld [vmem:[%s634 + $0x3c] sm:$0xff]
      %v645 = vld [vmem:[%s634 + $0x44] sm:$0xff]
      %v646 = vld [vmem:[%s634 + $0x4c] sm:$0xf]
      %v659 = vunpack.c.l.b16 %v635
      %v660 = vunpack.c.h.b16 %v635
      %v661 = vunpack.c.l.b16 %v636
      %v662 = vunpack.c.h.b16 %v636
      %v663 = vunpack.c.l.b16 %v637
      %v664 = vunpack.c.l.b16 %v638
      %v665 = vunpack.c.h.b16 %v638
      %v666 = vunpack.c.l.b16 %v639
      %v667 = vunpack.c.h.b16 %v639
      %v668 = vunpack.c.l.b16 %v640
      %v669 = vunpack.c.l.b16 %v641
      %v670 = vunpack.c.h.b16 %v641
      %v671 = vunpack.c.l.b16 %v642
      %v672 = vunpack.c.h.b16 %v642
      %v673 = vunpack.c.l.b16 %v643
      %v674 = vunpack.c.l.b16 %v644
      %v675 = vunpack.c.h.b16 %v644
      %v676 = vunpack.c.l.b16 %v645
      %v677 = vunpack.c.h.b16 %v645
      %v678 = vunpack.c.l.b16 %v646
      %v679 = vpack.c.b16 %v664, %v659
      %v680 = vpack.c.b16 %v665, %v660
      %v681 = vpack.c.b16 %v666, %v661
      %v682 = vpack.c.b16 %v667, %v662
      %v683 = vpack.c.b16 %v668, %v663
      %v684 = vpack.c.b16 %v674, %v669
      %v685 = vpack.c.b16 %v675, %v670
      %v686 = vpack.c.b16 %v676, %v671
      %v687 = vpack.c.b16 %v677, %v672
      %v688 = vpack.c.b16 %v678, %v673
      %v700 = vsel %vm570, %v630, 0
      %v703 = vsel %vm570, %v631, 0
      %705 = vmatprep.subr.bf16.mxu0 0
      %706 = vmatpush1.bf16.msra.mxu0 0
      %707 = vmatprep.subr.bf16.mxu0 0
      %708 = vmatpush1.bf16.msra.mxu0 0
      %709 = vmatprep.subr.bf16.mxu0 0
      %710 = vmatpush1.bf16.msra.mxu0 0
      %711 = vmatprep.subr.bf16.mxu0 0
      %712 = vmatpush1.bf16.msra.mxu0 0
      %713 = vmatprep.subr.bf16.mxu0 0
      %714 = vmatpush1.bf16.msra.mxu0 0
      %715 = vmatprep.subr.bf16.mxu0 0
      %716 = vmatpush1.bf16.msra.mxu0 0
      %717 = vmatprep.subr.bf16.mxu0 %v685
      %718 = vmatpush1.bf16.msra.mxu0 %v684
      %719 = vmatprep.subr.bf16.mxu0 %v680
      %720 = vmatpush1.bf16.msra.mxu0 %v679
      %721 = vmatprep.subr.bf16.mxu0 0
      %722 = vmatpush2.bf16.msra.mxu0 0
      %723 = vmatprep.subr.bf16.mxu0 0
      %724 = vmatpush2.bf16.msra.mxu0 0
      %725 = vmatprep.subr.bf16.mxu0 0
      %726 = vmatpush2.bf16.msra.mxu0 0
      %727 = vmatprep.subr.bf16.mxu0 0
      %728 = vmatpush2.bf16.msra.mxu0 0
      %729 = vmatprep.subr.bf16.mxu0 0
      %730 = vmatpush2.bf16.msra.mxu0 0
      %731 = vmatprep.subr.bf16.mxu0 0
      %732 = vmatpush2.bf16.msra.mxu0 0
      %733 = vmatprep.subr.bf16.mxu0 0
      %734 = vmatpush2.bf16.msra.mxu0 0
      %735 = vmatprep.subr.bf16.mxu0 0
      %736 = vmatpush2.bf16.msra.mxu0 0
      %737 = vmatprep.mubr.bf16.mxu0 0
      %738 = vmatmul.mubr.bf16.gmra.mxu0 %v700
      %v739 = vpop.f32.mrf.mxu0
      %v740 = vadd.f32 0.0, %v739
      %v741 = vpop.f32.mrf.mxu0
      %v742 = vadd.f32 0.0, %v741
      %v743 = vpop.f32.mrf.mxu0
      %v744 = vadd.f32 0.0, %v743
      %v745 = vpop.f32.mrf.mxu0
      %v746 = vadd.f32 0.0, %v745
      %747 = vmatprep.mubr.bf16.mxu0 0
      %748 = vmatmul.mubr.bf16.gmra.mxu0 %v703
      %v749 = vpop.f32.mrf.mxu0
      %v750 = vadd.f32 0.0, %v749
      %v751 = vpop.f32.mrf.mxu0
      %v752 = vadd.f32 0.0, %v751
      %v753 = vpop.f32.mrf.mxu0
      %v754 = vpop.f32.mrf.mxu0
      %755 = vdwg.mxu0
      %756 = vmatprep.subr.bf16.mxu0 0
      %757 = vmatpush1.bf16.msra.mxu0 0
      %758 = vmatprep.subr.bf16.mxu0 0
      %759 = vmatpush1.bf16.msra.mxu0 0
      %760 = vmatprep.subr.bf16.mxu0 0
      %761 = vmatpush1.bf16.msra.mxu0 0
      %762 = vmatprep.subr.bf16.mxu0 0
      %763 = vmatpush1.bf16.msra.mxu0 0
      %764 = vmatprep.subr.bf16.mxu0 0
      %765 = vmatpush1.bf16.msra.mxu0 0
      %766 = vmatprep.subr.bf16.mxu0 0
      %767 = vmatpush1.bf16.msra.mxu0 0
      %768 = vmatprep.subr.bf16.mxu0 %v687
      %769 = vmatpush1.bf16.msra.mxu0 %v686
      %770 = vmatprep.subr.bf16.mxu0 %v682
      %771 = vmatpush1.bf16.msra.mxu0 %v681
      %772 = vmatprep.subr.bf16.mxu0 0
      %773 = vmatpush2.bf16.msra.mxu0 0
      %774 = vmatprep.subr.bf16.mxu0 0
      %775 = vmatpush2.bf16.msra.mxu0 0
      %776 = vmatprep.subr.bf16.mxu0 0
      %777 = vmatpush2.bf16.msra.mxu0 0
      %778 = vmatprep.subr.bf16.mxu0 0
      %779 = vmatpush2.bf16.msra.mxu0 0
      %780 = vmatprep.subr.bf16.mxu0 0
      %781 = vmatpush2.bf16.msra.mxu0 0
      %782 = vmatprep.subr.bf16.mxu0 0
      %783 = vmatpush2.bf16.msra.mxu0 0
      %784 = vmatprep.subr.bf16.mxu0 0
      %785 = vmatpush2.bf16.msra.mxu0 0
      %786 = vmatprep.subr.bf16.mxu0 0
      %787 = vmatpush2.bf16.msra.mxu0 0
      %788 = vmatprep.mubr.bf16.mxu0 0
      %789 = vmatmul.mubr.bf16.gmra.mxu0 %v700
      %v790 = vpop.f32.mrf.mxu0
      %v791 = vadd.f32 0.0, %v790
      %v792 = vpop.f32.mrf.mxu0
      %v793 = vadd.f32 0.0, %v792
      %v794 = vpop.f32.mrf.mxu0
      %v795 = vadd.f32 0.0, %v794
      %v796 = vpop.f32.mrf.mxu0
      %v797 = vadd.f32 0.0, %v796
      %798 = vmatprep.mubr.bf16.mxu0 0
      %799 = vmatmul.mubr.bf16.gmra.mxu0 %v703
      %v800 = vpop.f32.mrf.mxu0
      %v801 = vadd.f32 0.0, %v800
      %v802 = vpop.f32.mrf.mxu0
      %v803 = vadd.f32 0.0, %v802
      %v804 = vpop.f32.mrf.mxu0
      %v805 = vpop.f32.mrf.mxu0
      %806 = vdwg.mxu0
      %807 = vmatprep.subr.bf16.mxu0 0
      %808 = vmatpush1.bf16.msra.mxu0 0
      %809 = vmatprep.subr.bf16.mxu0 0
      %810 = vmatpush1.bf16.msra.mxu0 0
      %811 = vmatprep.subr.bf16.mxu0 0
      %812 = vmatpush1.bf16.msra.mxu0 0
      %813 = vmatprep.subr.bf16.mxu0 0
      %814 = vmatpush1.bf16.msra.mxu0 0
      %815 = vmatprep.subr.bf16.mxu0 0
      %816 = vmatpush1.bf16.msra.mxu0 0
      %817 = vmatprep.subr.bf16.mxu0 0
      %818 = vmatpush1.bf16.msra.mxu0 0
      %819 = vmatprep.subr.bf16.mxu0 0
      %820 = vmatpush1.bf16.msra.mxu0 %v688
      %821 = vmatprep.subr.bf16.mxu0 0
      %822 = vmatpush1.bf16.msra.mxu0 %v683
      %823 = vmatprep.subr.bf16.mxu0 0
      %824 = vmatpush2.bf16.msra.mxu0 0
      %825 = vmatprep.subr.bf16.mxu0 0
      %826 = vmatpush2.bf16.msra.mxu0 0
      %827 = vmatprep.subr.bf16.mxu0 0
      %828 = vmatpush2.bf16.msra.mxu0 0
      %829 = vmatprep.subr.bf16.mxu0 0
      %830 = vmatpush2.bf16.msra.mxu0 0
      %831 = vmatprep.subr.bf16.mxu0 0
      %832 = vmatpush2.bf16.msra.mxu0 0
      %833 = vmatprep.subr.bf16.mxu0 0
      %834 = vmatpush2.bf16.msra.mxu0 0
      %835 = vmatprep.subr.bf16.mxu0 0
      %836 = vmatpush2.bf16.msra.mxu0 0
      %837 = vmatprep.subr.bf16.mxu0 0
      %838 = vmatpush2.bf16.msra.mxu0 0
      %839 = vmatprep.mubr.bf16.mxu0 0
      %840 = vmatmul.mubr.bf16.gmra.mxu0 %v700
      %v841 = vpop.f32.mrf.mxu0
      %v842 = vadd.f32 0.0, %v841
      %v843 = vpop.f32.mrf.mxu0
      %v844 = vpop.f32.mrf.mxu0
      %v845 = vadd.f32 0.0, %v844
      %v846 = vpop.f32.mrf.mxu0
      %847 = vmatprep.mubr.bf16.mxu0 0
      %848 = vmatmul.mubr.bf16.gmra.mxu0 %v703
      %v849 = vpop.f32.mrf.mxu0
      %v850 = vadd.f32 0.0, %v849
      %v851 = vpop.f32.mrf.mxu0
      %v852 = vpop.f32.mrf.mxu0
      %v853 = vpop.f32.mrf.mxu0
      %854 = vdwg.mxu0
      %s855 = smul.u32 %s558, 24
      %s856 = smul.addr %s855, 4
      %s857 = scalar_lea.vmem %s39, %s856
      %v858 = vld [vmem:[%s857] sm:$0xf]
      %v859 = vld [vmem:[%s857 + $0x4] sm:$0xf]
      %v860 = vld [vmem:[%s857 + $0x8] sm:$0xf]
      %v861 = vld [vmem:[%s857 + $0xc] sm:$0xf]
      %v862 = vld [vmem:[%s857 + $0x10] sm:$0xf]
      %v863 = vld [vmem:[%s857 + $0x14] sm:$0xf]
      %v864 = vld [vmem:[%s857 + $0x18] sm:$0xf]
      %v865 = vld [vmem:[%s857 + $0x1c] sm:$0xf]
      %v866 = vld [vmem:[%s857 + $0x20] sm:$0xf]
      %v867 = vld [vmem:[%s857 + $0x24] sm:$0xf]
      %v868 = vld [vmem:[%s857 + $0x28] sm:$0xf]
      %v869 = vld [vmem:[%s857 + $0x2c] sm:$0xf]
      %v870 = vld [vmem:[%s857 + $0x30] sm:$0xf]
      %v871 = vld [vmem:[%s857 + $0x34] sm:$0xf]
      %v872 = vld [vmem:[%s857 + $0x38] sm:$0xf]
      %v873 = vld [vmem:[%s857 + $0x3c] sm:$0xf]
      %v874 = vld [vmem:[%s857 + $0x40] sm:$0xf]
      %v875 = vld [vmem:[%s857 + $0x44] sm:$0xf]
      %v876 = vld [vmem:[%s857 + $0x48] sm:$0xf]
      %v877 = vld [vmem:[%s857 + $0x4c] sm:$0xf]
      %v878 = vld [vmem:[%s857 + $0x50] sm:$0xf]
      %v879 = vld [vmem:[%s857 + $0x54] sm:$0xf]
      %v880 = vld [vmem:[%s857 + $0x58] sm:$0xf]
      %v881 = vld [vmem:[%s857 + $0x5c] sm:$0xf]
      %v882 = vpack.c.bf16 %v744, %v740
      %v883 = vpack.c.bf16 %v750, %v750
      %v884 = vpack.c.bf16 %v746, %v742
      %v885 = vpack.c.bf16 %v752, %v752
      %888 = vrot.lane.b32.xlu0 %v884, 64
      %v889 = vpop.permute.xlu0 %888
      %890 = vrot.lane.b32.xlu0 %v885, 64
      %v891 = vpop.permute.xlu0 %890
      %vm892 = vcmask 523264
      %v894 = vsel %vm892, %v882, 0
      %v897 = vsel %vm892, %v883, 0
      %v900 = vsel %vm892, %v889, 0
      %v903 = vsel %vm892, %v891, 0
      %905 = vmatprep.subr.bf16.mxu0 0
      %906 = vmatpush1.bf16.xpose.msra.mxu0 0
      %907 = vmatprep.subr.bf16.mxu0 0
      %908 = vmatpush1.bf16.xpose.msra.mxu0 0
      %909 = vmatprep.subr.bf16.mxu0 0
      %910 = vmatpush1.bf16.xpose.msra.mxu0 0
      %911 = vmatprep.subr.bf16.mxu0 0
      %912 = vmatpush1.bf16.xpose.msra.mxu0 0
      %913 = vmatprep.subr.bf16.mxu0 0
      %914 = vmatpush1.bf16.xpose.msra.mxu0 0
      %915 = vmatprep.subr.bf16.mxu0 0
      %916 = vmatpush1.bf16.xpose.msra.mxu0 0
      %917 = vmatprep.subr.bf16.mxu0 0
      %918 = vmatpush1.bf16.xpose.msra.mxu0 %v903
      %919 = vmatprep.subr.bf16.mxu0 0
      %920 = vmatpush1.bf16.xpose.msra.mxu0 %v900
      %921 = vmatprep.subr.bf16.mxu0 0
      %922 = vmatpush2.bf16.xpose.msra.mxu0 0
      %923 = vmatprep.subr.bf16.mxu0 0
      %924 = vmatpush2.bf16.xpose.msra.mxu0 0
      %925 = vmatprep.subr.bf16.mxu0 0
      %926 = vmatpush2.bf16.xpose.msra.mxu0 0
      %927 = vmatprep.subr.bf16.mxu0 0
      %928 = vmatpush2.bf16.xpose.msra.mxu0 0
      %929 = vmatprep.subr.bf16.mxu0 0
      %930 = vmatpush2.bf16.xpose.msra.mxu0 0
      %931 = vmatprep.subr.bf16.mxu0 0
      %932 = vmatpush2.bf16.xpose.msra.mxu0 0
      %933 = vmatprep.subr.bf16.mxu0 0
      %934 = vmatpush2.bf16.xpose.msra.mxu0 0
      %935 = vmatprep.subr.bf16.mxu0 0
      %936 = vmatpush2.bf16.xpose.msra.mxu0 0
      %937 = vmatprep.mubr.bf16.mxu0 0
      %938 = vmatmul.mubr.bf16.gmra.mxu0 %v894
      %v939 = vpop.f32.mrf.mxu0
      %v940 = vadd.f32 0.0, %v939
      %v941 = vpop.f32.mrf.mxu0
      %v942 = vpop.f32.mrf.mxu0
      %v943 = vadd.f32 0.0, %v942
      %v944 = vpop.f32.mrf.mxu0
      %945 = vmatprep.mubr.bf16.mxu0 0
      %946 = vmatmul.mubr.bf16.gmra.mxu0 %v897
      %v947 = vpop.f32.mrf.mxu0
      %v948 = vadd.f32 0.0, %v947
      %v949 = vpop.f32.mrf.mxu0
      %v950 = vpop.f32.mrf.mxu0
      %v951 = vpop.f32.mrf.mxu0
      %952 = vdwg.mxu0
      %v953 = vmul.f32 %v940, 0.125
      %v954 = vmul.f32 %v943, 0.125
      %v955 = vmul.f32 %v948, 0.125
      %v956 = vadd.f32 %v953, %v554
      %v957 = vadd.f32 %v954, %v555
      %v958 = vadd.f32 %v955, %v556
      %vm959 = vcmask 146432
      %v960 = vsel %vm959, %v956, -inf
      %961 = vmax.xlane.f32.xlu0 %v960
      %v962 = vpop.xlane.xlu0 %961
      %v963 = vsel %vm959, %v957, -inf
      %964 = vmax.xlane.f32.xlu0 %v963
      %v965 = vpop.xlane.xlu0 %964
      %vm966 = vcmask 140288
      %v967 = vsel %vm966, %v958, -inf
      %968 = vmax.xlane.f32.xlu0 %v967
      %v969 = vpop.xlane.xlu0 %968
      %v970 = vsub.f32 %v956, %v962
      %v971 = vsub.f32 %v957, %v965
      %v972 = vsub.f32 %v958, %v969
      %v973 = vmul.f32 %v970, 1.442695
      %v974 = vpow.pop %v973
      %v975 = vmul.f32 %v971, 1.442695
      %v976 = vpow.pop %v975
      %v977 = vmul.f32 %v972, 1.442695
      %v978 = vpow.pop %v977
      %v979 = vsel %vm959, %v974, 0.0
      %980 = vadd.xlane.f32.xlu0 %v979
      %v981 = vpop.xlane.xlu0 %980
      %v982 = vsel %vm959, %v976, 0.0
      %983 = vadd.xlane.f32.xlu0 %v982
      %v984 = vpop.xlane.xlu0 %983
      %v985 = vsel %vm966, %v978, 0.0
      %986 = vadd.xlane.f32.xlu0 %v985
      %v987 = vpop.xlane.xlu0 %986
      %v988 = vrcp.pop %v981
      %v989 = vrcp.pop %v984
      %v990 = vrcp.pop %v987
      %v991 = vmul.f32 %v974, %v988
      %v992 = vmul.f32 %v976, %v989
      %v993 = vmul.f32 %v978, %v990
      %v994 = vpack.c.bf16 %v992, %v991
      %v995 = vpack.c.bf16 %v993, %v993
      %v996 = vpack.c.bf16 %v797, %v793
      %v997 = vpack.c.bf16 %v803, %v803
      %v999 = vsel %vm959, %v994, 0
      %v1002 = vsel %vm959, %v995, 0
      %vm1004 = vcmask 1040384
      %v1006 = vsel %vm1004, %v997, 0
      %1008 = vmatprep.subr.bf16.mxu0 0
      %1009 = vmatpush1.bf16.msra.mxu0 0
      %1010 = vmatprep.subr.bf16.mxu0 0
      %1011 = vmatpush1.bf16.msra.mxu0 0
      %1012 = vmatprep.subr.bf16.mxu0 0
      %1013 = vmatpush1.bf16.msra.mxu0 0
      %1014 = vmatprep.subr.bf16.mxu0 0
      %1015 = vmatpush1.bf16.msra.mxu0 0
      %1016 = vmatprep.subr.bf16.mxu0 0
      %1017 = vmatpush1.bf16.msra.mxu0 0
      %1018 = vmatprep.subr.bf16.mxu0 0
      %1019 = vmatpush1.bf16.msra.mxu0 0
      %1020 = vmatprep.subr.bf16.mxu0 0
      %1021 = vmatpush1.bf16.msra.mxu0 %v1006
      %1022 = vmatprep.subr.bf16.mxu0 0
      %1023 = vmatpush1.bf16.msra.mxu0 %v996
      %1024 = vmatprep.subr.bf16.mxu0 0
      %1025 = vmatpush2.bf16.msra.mxu0 0
      %1026 = vmatprep.subr.bf16.mxu0 0
      %1027 = vmatpush2.bf16.msra.mxu0 0
      %1028 = vmatprep.subr.bf16.mxu0 0
      %1029 = vmatpush2.bf16.msra.mxu0 0
      %1030 = vmatprep.subr.bf16.mxu0 0
      %1031 = vmatpush2.bf16.msra.mxu0 0
      %1032 = vmatprep.subr.bf16.mxu0 0
      %1033 = vmatpush2.bf16.msra.mxu0 0
      %1034 = vmatprep.subr.bf16.mxu0 0
      %1035 = vmatpush2.bf16.msra.mxu0 0
      %1036 = vmatprep.subr.bf16.mxu0 0
      %1037 = vmatpush2.bf16.msra.mxu0 0
      %1038 = vmatprep.subr.bf16.mxu0 0
      %1039 = vmatpush2.bf16.msra.mxu0 0
      %1040 = vmatprep.mubr.bf16.mxu0 0
      %1041 = vmatmul.mubr.bf16.gmra.mxu0 %v999
      %v1042 = vpop.f32.mrf.mxu0
      %v1043 = vadd.f32 0.0, %v1042
      %v1044 = vpop.f32.mrf.mxu0
      %v1045 = vpop.f32.mrf.mxu0
      %v1046 = vadd.f32 0.0, %v1045
      %v1047 = vpop.f32.mrf.mxu0
      %1048 = vmatprep.mubr.bf16.mxu0 0
      %1049 = vmatmul.mubr.bf16.gmra.mxu0 %v1002
      %v1050 = vpop.f32.mrf.mxu0
      %v1051 = vadd.f32 0.0, %v1050
      %v1052 = vpop.f32.mrf.mxu0
      %v1053 = vpop.f32.mrf.mxu0
      %v1054 = vpop.f32.mrf.mxu0
      %1055 = vdwg.mxu0
      %v1056 = vpack.c.bf16 %v1046, %v1043
      %v1057 = vpack.c.bf16 %v1051, %v1051
      %v1058 = vpack.c.bf16 %v795, %v791
      %v1059 = vpack.c.bf16 %v801, %v801
      %1062 = vrot.lane.b32.xlu0 %v882, 64
      %v1063 = vpop.permute.xlu0 %1062
      %1064 = vrot.lane.b32.xlu0 %v883, 64
      %v1065 = vpop.permute.xlu0 %1064
      %v1067 = vsel %vm892, %v1063, 0
      %v1070 = vsel %vm892, %v1065, 0
      %v1073 = vsel %vm892, %v1058, 0
      %v1076 = vsel %vm892, %v1059, 0
      %1078 = vmatprep.subr.bf16.mxu0 0
      %1079 = vmatpush1.bf16.xpose.msra.mxu0 0
      %1080 = vmatprep.subr.bf16.mxu0 0
      %1081 = vmatpush1.bf16.xpose.msra.mxu0 0
      %1082 = vmatprep.subr.bf16.mxu0 0
      %1083 = vmatpush1.bf16.xpose.msra.mxu0 0
      %1084 = vmatprep.subr.bf16.mxu0 0
      %1085 = vmatpush1.bf16.xpose.msra.mxu0 0
      %1086 = vmatprep.subr.bf16.mxu0 0
      %1087 = vmatpush1.bf16.xpose.msra.mxu0 0
      %1088 = vmatprep.subr.bf16.mxu0 0
      %1089 = vmatpush1.bf16.xpose.msra.mxu0 0
      %1090 = vmatprep.subr.bf16.mxu0 0
      %1091 = vmatpush1.bf16.xpose.msra.mxu0 %v1076
      %1092 = vmatprep.subr.bf16.mxu0 0
      %1093 = vmatpush1.bf16.xpose.msra.mxu0 %v1073
      %1094 = vmatprep.subr.bf16.mxu0 0
      %1095 = vmatpush2.bf16.xpose.msra.mxu0 0
      %1096 = vmatprep.subr.bf16.mxu0 0
      %1097 = vmatpush2.bf16.xpose.msra.mxu0 0
      %1098 = vmatprep.subr.bf16.mxu0 0
      %1099 = vmatpush2.bf16.xpose.msra.mxu0 0
      %1100 = vmatprep.subr.bf16.mxu0 0
      %1101 = vmatpush2.bf16.xpose.msra.mxu0 0
      %1102 = vmatprep.subr.bf16.mxu0 0
      %1103 = vmatpush2.bf16.xpose.msra.mxu0 0
      %1104 = vmatprep.subr.bf16.mxu0 0
      %1105 = vmatpush2.bf16.xpose.msra.mxu0 0
      %1106 = vmatprep.subr.bf16.mxu0 0
      %1107 = vmatpush2.bf16.xpose.msra.mxu0 0
      %1108 = vmatprep.subr.bf16.mxu0 0
      %1109 = vmatpush2.bf16.xpose.msra.mxu0 0
      %1110 = vmatprep.mubr.bf16.mxu0 0
      %1111 = vmatmul.mubr.bf16.gmra.mxu0 %v1067
      %v1112 = vpop.f32.mrf.mxu0
      %v1113 = vadd.f32 0.0, %v1112
      %v1114 = vpop.f32.mrf.mxu0
      %v1115 = vpop.f32.mrf.mxu0
      %v1116 = vadd.f32 0.0, %v1115
      %v1117 = vpop.f32.mrf.mxu0
      %1118 = vmatprep.mubr.bf16.mxu0 0
      %1119 = vmatmul.mubr.bf16.gmra.mxu0 %v1070
      %v1120 = vpop.f32.mrf.mxu0
      %v1121 = vadd.f32 0.0, %v1120
      %v1122 = vpop.f32.mrf.mxu0
      %v1123 = vpop.f32.mrf.mxu0
      %v1124 = vpop.f32.mrf.mxu0
      %1125 = vdwg.mxu0
      %v1126 = vmul.f32 %v1113, 0.125
      %v1127 = vmul.f32 %v1116, 0.125
      %v1128 = vmul.f32 %v1121, 0.125
      %v1129 = vadd.f32 %v1126, %v554
      %v1130 = vadd.f32 %v1127, %v555
      %v1131 = vadd.f32 %v1128, %v556
      %v1132 = vsel %vm959, %v1129, -inf
      %1133 = vmax.xlane.f32.xlu0 %v1132
      %v1134 = vpop.xlane.xlu0 %1133
      %v1135 = vsel %vm959, %v1130, -inf
      %1136 = vmax.xlane.f32.xlu0 %v1135
      %v1137 = vpop.xlane.xlu0 %1136
      %v1138 = vsel %vm966, %v1131, -inf
      %1139 = vmax.xlane.f32.xlu0 %v1138
      %v1140 = vpop.xlane.xlu0 %1139
      %v1141 = vsub.f32 %v1129, %v1134
      %v1142 = vsub.f32 %v1130, %v1137
      %v1143 = vsub.f32 %v1131, %v1140
      %v1144 = vmul.f32 %v1141, 1.442695
      %v1145 = vpow.pop %v1144
      %v1146 = vmul.f32 %v1142, 1.442695
      %v1147 = vpow.pop %v1146
      %v1148 = vmul.f32 %v1143, 1.442695
      %v1149 = vpow.pop %v1148
      %v1150 = vsel %vm959, %v1145, 0.0
      %1151 = vadd.xlane.f32.xlu0 %v1150
      %v1152 = vpop.xlane.xlu0 %1151
      %v1153 = vsel %vm959, %v1147, 0.0
      %1154 = vadd.xlane.f32.xlu0 %v1153
      %v1155 = vpop.xlane.xlu0 %1154
      %v1156 = vsel %vm966, %v1149, 0.0
      %1157 = vadd.xlane.f32.xlu0 %v1156
      %v1158 = vpop.xlane.xlu0 %1157
      %v1159 = vrcp.pop %v1152
      %v1160 = vrcp.pop %v1155
      %v1161 = vrcp.pop %v1158
      %v1162 = vmul.f32 %v1145, %v1159
      %v1163 = vmul.f32 %v1147, %v1160
      %v1164 = vmul.f32 %v1149, %v1161
      %v1165 = vpack.c.bf16 %v1163, %v1162
      %v1166 = vpack.c.bf16 %v1164, %v1164
      %1169 = vrot.lane.b32.xlu0 %v996, 64
      %v1170 = vpop.permute.xlu0 %1169
      %1171 = vrot.lane.b32.xlu0 %v997, 64
      %v1172 = vpop.permute.xlu0 %1171
      %v1175 = vsel %vm959, %v1165, 0
      %v1178 = vsel %vm959, %v1166, 0
      %v1181 = vsel %vm1004, %v1172, 0
      %1183 = vmatprep.subr.bf16.mxu0 0
      %1184 = vmatpush1.bf16.msra.mxu0 0
      %1185 = vmatprep.subr.bf16.mxu0 0
      %1186 = vmatpush1.bf16.msra.mxu0 0
      %1187 = vmatprep.subr.bf16.mxu0 0
      %1188 = vmatpush1.bf16.msra.mxu0 0
      %1189 = vmatprep.subr.bf16.mxu0 0
      %1190 = vmatpush1.bf16.msra.mxu0 0
      %1191 = vmatprep.subr.bf16.mxu0 0
      %1192 = vmatpush1.bf16.msra.mxu0 0
      %1193 = vmatprep.subr.bf16.mxu0 0
      %1194 = vmatpush1.bf16.msra.mxu0 0
      %1195 = vmatprep.subr.bf16.mxu0 0
      %1196 = vmatpush1.bf16.msra.mxu0 %v1181
      %1197 = vmatprep.subr.bf16.mxu0 0
      %1198 = vmatpush1.bf16.msra.mxu0 %v1170
      %1199 = vmatprep.subr.bf16.mxu0 0
      %1200 = vmatpush2.bf16.msra.mxu0 0
      %1201 = vmatprep.subr.bf16.mxu0 0
      %1202 = vmatpush2.bf16.msra.mxu0 0
      %1203 = vmatprep.subr.bf16.mxu0 0
      %1204 = vmatpush2.bf16.msra.mxu0 0
      %1205 = vmatprep.subr.bf16.mxu0 0
      %1206 = vmatpush2.bf16.msra.mxu0 0
      %1207 = vmatprep.subr.bf16.mxu0 0
      %1208 = vmatpush2.bf16.msra.mxu0 0
      %1209 = vmatprep.subr.bf16.mxu0 0
      %1210 = vmatpush2.bf16.msra.mxu0 0
      %1211 = vmatprep.subr.bf16.mxu0 0
      %1212 = vmatpush2.bf16.msra.mxu0 0
      %1213 = vmatprep.subr.bf16.mxu0 0
      %1214 = vmatpush2.bf16.msra.mxu0 0
      %1215 = vmatprep.mubr.bf16.mxu0 0
      %1216 = vmatmul.mubr.bf16.gmra.mxu0 %v1175
      %v1217 = vpop.f32.mrf.mxu0
      %v1218 = vadd.f32 0.0, %v1217
      %v1219 = vpop.f32.mrf.mxu0
      %v1220 = vpop.f32.mrf.mxu0
      %v1221 = vadd.f32 0.0, %v1220
      %v1222 = vpop.f32.mrf.mxu0
      %1223 = vmatprep.mubr.bf16.mxu0 0
      %1224 = vmatmul.mubr.bf16.gmra.mxu0 %v1178
      %v1225 = vpop.f32.mrf.mxu0
      %v1226 = vadd.f32 0.0, %v1225
      %v1227 = vpop.f32.mrf.mxu0
      %v1228 = vpop.f32.mrf.mxu0
      %v1229 = vpop.f32.mrf.mxu0
      %1230 = vdwg.mxu0
      %v1231 = vpack.c.bf16 %v1221, %v1218
      %v1232 = vpack.c.bf16 %v1226, %v1226
      %v1241 = vunpack.c.l.b16 %v866
      %v1242 = vunpack.c.l.b16 %v867
      %v1243 = vunpack.c.l.b16 %v868
      %v1244 = vunpack.c.l.b16 %v869
      %v1245 = vunpack.c.l.b16 %v870
      %v1246 = vunpack.c.l.b16 %v871
      %v1247 = vunpack.c.l.b16 %v872
      %v1248 = vunpack.c.l.b16 %v873
      %v1249 = vpack.c.b16 %v1242, %v1241
      %v1250 = vpack.c.b16 %v1244, %v1243
      %v1251 = vpack.c.b16 %v1246, %v1245
      %v1252 = vpack.c.b16 %v1248, %v1247
      %v1258 = vsel %vm892, %v1231, 0
      %v1261 = vsel %vm892, %v1232, 0
      %1263 = vmatprep.subr.bf16.mxu0 0
      %1264 = vmatpush1.bf16.msra.mxu0 0
      %1265 = vmatprep.subr.bf16.mxu0 0
      %1266 = vmatpush1.bf16.msra.mxu0 0
      %1267 = vmatprep.subr.bf16.mxu0 0
      %1268 = vmatpush1.bf16.msra.mxu0 0
      %1269 = vmatprep.subr.bf16.mxu0 0
      %1270 = vmatpush1.bf16.msra.mxu0 0
      %1271 = vmatprep.subr.bf16.mxu0 0
      %1272 = vmatpush1.bf16.msra.mxu0 %v1252
      %1273 = vmatprep.subr.bf16.mxu0 0
      %1274 = vmatpush1.bf16.msra.mxu0 %v1251
      %1275 = vmatprep.subr.bf16.mxu0 0
      %1276 = vmatpush1.bf16.msra.mxu0 %v1250
      %1277 = vmatprep.subr.bf16.mxu0 0
      %1278 = vmatpush1.bf16.msra.mxu0 %v1249
      %1279 = vmatprep.subr.bf16.mxu0 0
      %1280 = vmatpush2.bf16.msra.mxu0 0
      %1281 = vmatprep.subr.bf16.mxu0 0
      %1282 = vmatpush2.bf16.msra.mxu0 0
      %1283 = vmatprep.subr.bf16.mxu0 0
      %1284 = vmatpush2.bf16.msra.mxu0 0
      %1285 = vmatprep.subr.bf16.mxu0 0
      %1286 = vmatpush2.bf16.msra.mxu0 0
      %1287 = vmatprep.subr.bf16.mxu0 0
      %1288 = vmatpush2.bf16.msra.mxu0 0
      %1289 = vmatprep.subr.bf16.mxu0 0
      %1290 = vmatpush2.bf16.msra.mxu0 0
      %1291 = vmatprep.subr.bf16.mxu0 0
      %1292 = vmatpush2.bf16.msra.mxu0 0
      %1293 = vmatprep.subr.bf16.mxu0 0
      %1294 = vmatpush2.bf16.msra.mxu0 0
      %1295 = vmatprep.mubr.bf16.mxu0 0
      %1296 = vmatmul.mubr.bf16.gmra.mxu0 %v1258
      %v1297 = vpop.f32.mrf.mxu0
      %v1298 = vadd.f32 0.0, %v1297
      %v1299 = vpop.f32.mrf.mxu0
      %v1300 = vpop.f32.mrf.mxu0
      %v1301 = vadd.f32 0.0, %v1300
      %v1302 = vpop.f32.mrf.mxu0
      %1303 = vmatprep.mubr.bf16.mxu0 0
      %1304 = vmatmul.mubr.bf16.gmra.mxu0 %v1261
      %v1305 = vpop.f32.mrf.mxu0
      %v1306 = vadd.f32 0.0, %v1305
      %v1307 = vpop.f32.mrf.mxu0
      %v1308 = vpop.f32.mrf.mxu0
      %v1309 = vpop.f32.mrf.mxu0
      %1310 = vdwg.mxu0
      %v1319 = vunpack.c.l.b16 %v858
      %v1320 = vunpack.c.l.b16 %v859
      %v1321 = vunpack.c.l.b16 %v860
      %v1322 = vunpack.c.l.b16 %v861
      %v1323 = vunpack.c.l.b16 %v862
      %v1324 = vunpack.c.l.b16 %v863
      %v1325 = vunpack.c.l.b16 %v864
      %v1326 = vunpack.c.l.b16 %v865
      %v1327 = vpack.c.b16 %v1320, %v1319
      %v1328 = vpack.c.b16 %v1322, %v1321
      %v1329 = vpack.c.b16 %v1324, %v1323
      %v1330 = vpack.c.b16 %v1326, %v1325
      %v1336 = vsel %vm892, %v1056, 0
      %v1339 = vsel %vm892, %v1057, 0
      %1341 = vmatprep.subr.bf16.mxu0 0
      %1342 = vmatpush1.bf16.msra.mxu0 0
      %1343 = vmatprep.subr.bf16.mxu0 0
      %1344 = vmatpush1.bf16.msra.mxu0 0
      %1345 = vmatprep.subr.bf16.mxu0 0
      %1346 = vmatpush1.bf16.msra.mxu0 0
      %1347 = vmatprep.subr.bf16.mxu0 0
      %1348 = vmatpush1.bf16.msra.mxu0 0
      %1349 = vmatprep.subr.bf16.mxu0 0
      %1350 = vmatpush1.bf16.msra.mxu0 %v1330
      %1351 = vmatprep.subr.bf16.mxu0 0
      %1352 = vmatpush1.bf16.msra.mxu0 %v1329
      %1353 = vmatprep.subr.bf16.mxu0 0
      %1354 = vmatpush1.bf16.msra.mxu0 %v1328
      %1355 = vmatprep.subr.bf16.mxu0 0
      %1356 = vmatpush1.bf16.msra.mxu0 %v1327
      %1357 = vmatprep.subr.bf16.mxu0 0
      %1358 = vmatpush2.bf16.msra.mxu0 0
      %1359 = vmatprep.subr.bf16.mxu0 0
      %1360 = vmatpush2.bf16.msra.mxu0 0
      %1361 = vmatprep.subr.bf16.mxu0 0
      %1362 = vmatpush2.bf16.msra.mxu0 0
      %1363 = vmatprep.subr.bf16.mxu0 0
      %1364 = vmatpush2.bf16.msra.mxu0 0
      %1365 = vmatprep.subr.bf16.mxu0 0
      %1366 = vmatpush2.bf16.msra.mxu0 0
      %1367 = vmatprep.subr.bf16.mxu0 0
      %1368 = vmatpush2.bf16.msra.mxu0 0
      %1369 = vmatprep.subr.bf16.mxu0 0
      %1370 = vmatpush2.bf16.msra.mxu0 0
      %1371 = vmatprep.subr.bf16.mxu0 0
      %1372 = vmatpush2.bf16.msra.mxu0 0
      %1373 = vmatprep.mubr.bf16.mxu0 0
      %1374 = vmatmul.mubr.bf16.gmra.mxu0 %v1336
      %v1375 = vpop.f32.mrf.mxu0
      %v1376 = vadd.f32 %v1298, %v1375
      %v1377 = vpop.f32.mrf.mxu0
      %v1378 = vpop.f32.mrf.mxu0
      %v1379 = vadd.f32 %v1301, %v1378
      %v1380 = vpop.f32.mrf.mxu0
      %1381 = vmatprep.mubr.bf16.mxu0 0
      %1382 = vmatmul.mubr.bf16.gmra.mxu0 %v1339
      %v1383 = vpop.f32.mrf.mxu0
      %v1384 = vadd.f32 %v1306, %v1383
      %v1385 = vpop.f32.mrf.mxu0
      %v1386 = vpop.f32.mrf.mxu0
      %v1387 = vpop.f32.mrf.mxu0
      %1388 = vdwg.mxu0
      %1391 = vrot.lane.b32.xlu0 %v1058, 64
      %v1392 = vpop.permute.xlu0 %1391
      %1393 = vrot.lane.b32.xlu0 %v1059, 64
      %v1394 = vpop.permute.xlu0 %1393
      %v1396 = vsel %vm892, %v884, 0
      %v1399 = vsel %vm892, %v885, 0
      %v1402 = vsel %vm892, %v1392, 0
      %v1405 = vsel %vm892, %v1394, 0
      %1407 = vmatprep.subr.bf16.mxu0 0
      %1408 = vmatpush1.bf16.xpose.msra.mxu0 0
      %1409 = vmatprep.subr.bf16.mxu0 0
      %1410 = vmatpush1.bf16.xpose.msra.mxu0 0
      %1411 = vmatprep.subr.bf16.mxu0 0
      %1412 = vmatpush1.bf16.xpose.msra.mxu0 0
      %1413 = vmatprep.subr.bf16.mxu0 0
      %1414 = vmatpush1.bf16.xpose.msra.mxu0 0
      %1415 = vmatprep.subr.bf16.mxu0 0
      %1416 = vmatpush1.bf16.xpose.msra.mxu0 0
      %1417 = vmatprep.subr.bf16.mxu0 0
      %1418 = vmatpush1.bf16.xpose.msra.mxu0 0
      %1419 = vmatprep.subr.bf16.mxu0 0
      %1420 = vmatpush1.bf16.xpose.msra.mxu0 %v1405
      %1421 = vmatprep.subr.bf16.mxu0 0
      %1422 = vmatpush1.bf16.xpose.msra.mxu0 %v1402
      %1423 = vmatprep.subr.bf16.mxu0 0
      %1424 = vmatpush2.bf16.xpose.msra.mxu0 0
      %1425 = vmatprep.subr.bf16.mxu0 0
      %1426 = vmatpush2.bf16.xpose.msra.mxu0 0
      %1427 = vmatprep.subr.bf16.mxu0 0
      %1428 = vmatpush2.bf16.xpose.msra.mxu0 0
      %1429 = vmatprep.subr.bf16.mxu0 0
      %1430 = vmatpush2.bf16.xpose.msra.mxu0 0
      %1431 = vmatprep.subr.bf16.mxu0 0
      %1432 = vmatpush2.bf16.xpose.msra.mxu0 0
      %1433 = vmatprep.subr.bf16.mxu0 0
      %1434 = vmatpush2.bf16.xpose.msra.mxu0 0
      %1435 = vmatprep.subr.bf16.mxu0 0
      %1436 = vmatpush2.bf16.xpose.msra.mxu0 0
      %1437 = vmatprep.subr.bf16.mxu0 0
      %1438 = vmatpush2.bf16.xpose.msra.mxu0 0
      %1439 = vmatprep.mubr.bf16.mxu0 0
      %1440 = vmatmul.mubr.bf16.gmra.mxu0 %v1396
      %v1441 = vpop.f32.mrf.mxu0
      %v1442 = vadd.f32 0.0, %v1441
      %v1443 = vpop.f32.mrf.mxu0
      %v1444 = vpop.f32.mrf.mxu0
      %v1445 = vadd.f32 0.0, %v1444
      %v1446 = vpop.f32.mrf.mxu0
      %1447 = vmatprep.mubr.bf16.mxu0 0
      %1448 = vmatmul.mubr.bf16.gmra.mxu0 %v1399
      %v1449 = vpop.f32.mrf.mxu0
      %v1450 = vadd.f32 0.0, %v1449
      %v1451 = vpop.f32.mrf.mxu0
      %v1452 = vpop.f32.mrf.mxu0
      %v1453 = vpop.f32.mrf.mxu0
      %1454 = vdwg.mxu0
      %v1455 = vmul.f32 %v1442, 0.125
      %v1456 = vmul.f32 %v1445, 0.125
      %v1457 = vmul.f32 %v1450, 0.125
      %v1458 = vadd.f32 %v1455, %v554
      %v1459 = vadd.f32 %v1456, %v555
      %v1460 = vadd.f32 %v1457, %v556
      %v1461 = vsel %vm959, %v1458, -inf
      %1462 = vmax.xlane.f32.xlu0 %v1461
      %v1463 = vpop.xlane.xlu0 %1462
      %v1464 = vsel %vm959, %v1459, -inf
      %1465 = vmax.xlane.f32.xlu0 %v1464
      %v1466 = vpop.xlane.xlu0 %1465
      %v1467 = vsel %vm966, %v1460, -inf
      %1468 = vmax.xlane.f32.xlu0 %v1467
      %v1469 = vpop.xlane.xlu0 %1468
      %v1470 = vsub.f32 %v1458, %v1463
      %v1471 = vsub.f32 %v1459, %v1466
      %v1472 = vsub.f32 %v1460, %v1469
      %v1473 = vmul.f32 %v1470, 1.442695
      %v1474 = vpow.pop %v1473
      %v1475 = vmul.f32 %v1471, 1.442695
      %v1476 = vpow.pop %v1475
      %v1477 = vmul.f32 %v1472, 1.442695
      %v1478 = vpow.pop %v1477
      %v1479 = vsel %vm959, %v1474, 0.0
      %1480 = vadd.xlane.f32.xlu0 %v1479
      %v1481 = vpop.xlane.xlu0 %1480
      %v1482 = vsel %vm959, %v1476, 0.0
      %1483 = vadd.xlane.f32.xlu0 %v1482
      %v1484 = vpop.xlane.xlu0 %1483
      %v1485 = vsel %vm966, %v1478, 0.0
      %1486 = vadd.xlane.f32.xlu0 %v1485
      %v1487 = vpop.xlane.xlu0 %1486
      %v1488 = vrcp.pop %v1481
      %v1489 = vrcp.pop %v1484
      %v1490 = vrcp.pop %v1487
      %v1491 = vmul.f32 %v1474, %v1488
      %v1492 = vmul.f32 %v1476, %v1489
      %v1493 = vmul.f32 %v1478, %v1490
      %v1494 = vpack.c.bf16 %v1492, %v1491
      %v1495 = vpack.c.bf16 %v1493, %v1493
      %v1496 = vpack.c.bf16 %v845, %v842
      %v1497 = vpack.c.bf16 %v850, %v850
      %v1499 = vsel %vm959, %v1494, 0
      %v1502 = vsel %vm959, %v1495, 0
      %v1505 = vsel %vm1004, %v1497, 0
      %1507 = vmatprep.subr.bf16.mxu0 0
      %1508 = vmatpush1.bf16.msra.mxu0 0
      %1509 = vmatprep.subr.bf16.mxu0 0
      %1510 = vmatpush1.bf16.msra.mxu0 0
      %1511 = vmatprep.subr.bf16.mxu0 0
      %1512 = vmatpush1.bf16.msra.mxu0 0
      %1513 = vmatprep.subr.bf16.mxu0 0
      %1514 = vmatpush1.bf16.msra.mxu0 0
      %1515 = vmatprep.subr.bf16.mxu0 0
      %1516 = vmatpush1.bf16.msra.mxu0 0
      %1517 = vmatprep.subr.bf16.mxu0 0
      %1518 = vmatpush1.bf16.msra.mxu0 0
      %1519 = vmatprep.subr.bf16.mxu0 0
      %1520 = vmatpush1.bf16.msra.mxu0 %v1505
      %1521 = vmatprep.subr.bf16.mxu0 0
      %1522 = vmatpush1.bf16.msra.mxu0 %v1496
      %1523 = vmatprep.subr.bf16.mxu0 0
      %1524 = vmatpush2.bf16.msra.mxu0 0
      %1525 = vmatprep.subr.bf16.mxu0 0
      %1526 = vmatpush2.bf16.msra.mxu0 0
      %1527 = vmatprep.subr.bf16.mxu0 0
      %1528 = vmatpush2.bf16.msra.mxu0 0
      %1529 = vmatprep.subr.bf16.mxu0 0
      %1530 = vmatpush2.bf16.msra.mxu0 0
      %1531 = vmatprep.subr.bf16.mxu0 0
      %1532 = vmatpush2.bf16.msra.mxu0 0
      %1533 = vmatprep.subr.bf16.mxu0 0
      %1534 = vmatpush2.bf16.msra.mxu0 0
      %1535 = vmatprep.subr.bf16.mxu0 0
      %1536 = vmatpush2.bf16.msra.mxu0 0
      %1537 = vmatprep.subr.bf16.mxu0 0
      %1538 = vmatpush2.bf16.msra.mxu0 0
      %1539 = vmatprep.mubr.bf16.mxu0 0
      %1540 = vmatmul.mubr.bf16.gmra.mxu0 %v1499
      %v1541 = vpop.f32.mrf.mxu0
      %v1542 = vadd.f32 0.0, %v1541
      %v1543 = vpop.f32.mrf.mxu0
      %v1544 = vpop.f32.mrf.mxu0
      %v1545 = vadd.f32 0.0, %v1544
      %v1546 = vpop.f32.mrf.mxu0
      %1547 = vmatprep.mubr.bf16.mxu0 0
      %1548 = vmatmul.mubr.bf16.gmra.mxu0 %v1502
      %v1549 = vpop.f32.mrf.mxu0
      %v1550 = vadd.f32 0.0, %v1549
      %v1551 = vpop.f32.mrf.mxu0
      %v1552 = vpop.f32.mrf.mxu0
      %v1553 = vpop.f32.mrf.mxu0
      %1554 = vdwg.mxu0
      %v1555 = vpack.c.bf16 %v1545, %v1542
      %v1556 = vpack.c.bf16 %v1550, %v1550
      %v1565 = vunpack.c.l.b16 %v874
      %v1566 = vunpack.c.l.b16 %v875
      %v1567 = vunpack.c.l.b16 %v876
      %v1568 = vunpack.c.l.b16 %v877
      %v1569 = vunpack.c.l.b16 %v878
      %v1570 = vunpack.c.l.b16 %v879
      %v1571 = vunpack.c.l.b16 %v880
      %v1572 = vunpack.c.l.b16 %v881
      %v1573 = vpack.c.b16 %v1566, %v1565
      %v1574 = vpack.c.b16 %v1568, %v1567
      %v1575 = vpack.c.b16 %v1570, %v1569
      %v1576 = vpack.c.b16 %v1572, %v1571
      %v1582 = vsel %vm892, %v1555, 0
      %v1585 = vsel %vm892, %v1556, 0
      %1587 = vmatprep.subr.bf16.mxu0 0
      %1588 = vmatpush1.bf16.msra.mxu0 0
      %1589 = vmatprep.subr.bf16.mxu0 0
      %1590 = vmatpush1.bf16.msra.mxu0 0
      %1591 = vmatprep.subr.bf16.mxu0 0
      %1592 = vmatpush1.bf16.msra.mxu0 0
      %1593 = vmatprep.subr.bf16.mxu0 0
      %1594 = vmatpush1.bf16.msra.mxu0 0
      %1595 = vmatprep.subr.bf16.mxu0 0
      %1596 = vmatpush1.bf16.msra.mxu0 %v1576
      %1597 = vmatprep.subr.bf16.mxu0 0
      %1598 = vmatpush1.bf16.msra.mxu0 %v1575
      %1599 = vmatprep.subr.bf16.mxu0 0
      %1600 = vmatpush1.bf16.msra.mxu0 %v1574
      %1601 = vmatprep.subr.bf16.mxu0 0
      %1602 = vmatpush1.bf16.msra.mxu0 %v1573
      %1603 = vmatprep.subr.bf16.mxu0 0
      %1604 = vmatpush2.bf16.msra.mxu0 0
      %1605 = vmatprep.subr.bf16.mxu0 0
      %1606 = vmatpush2.bf16.msra.mxu0 0
      %1607 = vmatprep.subr.bf16.mxu0 0
      %1608 = vmatpush2.bf16.msra.mxu0 0
      %1609 = vmatprep.subr.bf16.mxu0 0
      %1610 = vmatpush2.bf16.msra.mxu0 0
      %1611 = vmatprep.subr.bf16.mxu0 0
      %1612 = vmatpush2.bf16.msra.mxu0 0
      %1613 = vmatprep.subr.bf16.mxu0 0
      %1614 = vmatpush2.bf16.msra.mxu0 0
      %1615 = vmatprep.subr.bf16.mxu0 0
      %1616 = vmatpush2.bf16.msra.mxu0 0
      %1617 = vmatprep.subr.bf16.mxu0 0
      %1618 = vmatpush2.bf16.msra.mxu0 0
      %1619 = vmatprep.mubr.bf16.mxu0 0
      %1620 = vmatmul.mubr.bf16.gmra.mxu0 %v1582
      %v1621 = vpop.f32.mrf.mxu0
      %v1622 = vadd.f32 0.0, %v1621
      %v1623 = vpop.f32.mrf.mxu0
      %v1624 = vpop.f32.mrf.mxu0
      %v1625 = vadd.f32 0.0, %v1624
      %v1626 = vpop.f32.mrf.mxu0
      %1627 = vmatprep.mubr.bf16.mxu0 0
      %1628 = vmatmul.mubr.bf16.gmra.mxu0 %v1585
      %v1629 = vpop.f32.mrf.mxu0
      %v1630 = vadd.f32 0.0, %v1629
      %v1631 = vpop.f32.mrf.mxu0
      %v1632 = vpop.f32.mrf.mxu0
      %v1633 = vpop.f32.mrf.mxu0
      %1634 = vdwg.mxu0
      %v1635 = vadd.f32 %v1376, %v1622
      %v1636 = vadd.f32 %v1379, %v1625
      %v1637 = vadd.f32 %v1384, %v1630
      %v1638 = vadd.f32 %v563, %v1635
      %v1639 = vadd.f32 %v564, %v1636
      %v1640 = vadd.f32 %v565, %v1637
      %s1641 = scalar_lea.vmem %s41, %s558
      %v1642 = vld [vmem:[%s1641] sm:$0x1]
      %v1644 = vlaneseq
      %v1645 = vshrl.u32 %v1644, 7
      %v1646 = vsub.s32 0, %v1645
      %v1647 = vrot.slane %v1642, %v1646
      %v1649 = vadd.f32 %v1638, %v1647
      %v1650 = vadd.f32 %v1639, %v1647
      %v1651 = vadd.f32 %v1640, %v1647
      %s1652 = scalar_lea.vmem %s43, %s558
      %v1653 = vld [vmem:[%s1652] sm:$0x1]
      %s1654 = scalar_lea.vmem %s45, %s558
      %v1655 = vld [vmem:[%s1654] sm:$0x1]
      %v1656 = vsel %vm570, %v1649, 0.0
      %1657 = vadd.xlane.f32.xlu0 %v1656
      %v1658 = vpop.xlane.xlu0 %1657
      %v1659 = vsel %vm570, %v1650, 0.0
      %1660 = vadd.xlane.f32.xlu0 %v1659
      %v1661 = vpop.xlane.xlu0 %1660
      %v1662 = vsel %vm577, %v1651, 0.0
      %1663 = vadd.xlane.f32.xlu0 %v1662
      %v1664 = vpop.xlane.xlu0 %1663
      %v1665 = vmul.f32 %v1658, %v581
      %v1666 = vmul.f32 %v1661, %v581
      %v1667 = vmul.f32 %v1664, %v581
      %v1668 = vsub.f32 %v1649, %v1665
      %v1669 = vsub.f32 %v1650, %v1666
      %v1670 = vsub.f32 %v1651, %v1667
      %v1671 = vmul.f32 %v1668, %v1668
      %v1672 = vmul.f32 %v1669, %v1669
      %v1673 = vmul.f32 %v1670, %v1670
      %v1674 = vsel %vm570, %v1671, 0.0
      %1675 = vadd.xlane.f32.xlu0 %v1674
      %v1676 = vpop.xlane.xlu0 %1675
      %v1677 = vsel %vm570, %v1672, 0.0
      %1678 = vadd.xlane.f32.xlu0 %v1677
      %v1679 = vpop.xlane.xlu0 %1678
      %v1680 = vsel %vm577, %v1673, 0.0
      %1681 = vadd.xlane.f32.xlu0 %v1680
      %v1682 = vpop.xlane.xlu0 %1681
      %v1683 = vmul.f32 %v1676, %v581
      %v1684 = vmul.f32 %v1679, %v581
      %v1685 = vmul.f32 %v1682, %v581
      %v1686 = vadd.f32 %v1683, 1e-05
      %v1687 = vadd.f32 %v1684, 1e-05
      %v1688 = vadd.f32 %v1685, 1e-05
      %v1689 = vrsqrt.pop %v1686
      %v1690 = vrsqrt.pop %v1687
      %v1691 = vrsqrt.pop %v1688
      %v1692 = vmul.f32 %v1668, %v1689
      %v1693 = vmul.f32 %v1669, %v1690
      %v1694 = vmul.f32 %v1670, %v1691
      %v1696 = vlaneseq
      %v1697 = vshrl.u32 %v1696, 7
      %v1698 = vsub.s32 0, %v1697
      %v1699 = vrot.slane %v1653, %v1698
      %v1701 = vmul.f32 %v1692, %v1699
      %v1702 = vmul.f32 %v1693, %v1699
      %v1703 = vmul.f32 %v1694, %v1699
      %v1705 = vlaneseq
      %v1706 = vshrl.u32 %v1705, 7
      %v1707 = vsub.s32 0, %v1706
      %v1708 = vrot.slane %v1655, %v1707
      %v1710 = vadd.f32 %v1701, %v1708
      %v1711 = vadd.f32 %v1702, %v1708
      %v1712 = vadd.f32 %v1703, %v1708
      %v1713 = vpack.c.bf16 %v1711, %v1710
      %v1714 = vpack.c.bf16 %v1712, %v1712
      %s1715 = smul.u32 %s558, 4
      %s1716 = smul.addr %s1715, 4
      %s1717 = scalar_lea.vmem [#allocation13], %s1716
      %v1718 = vld [vmem:[%s1717] sm:$0xf]
      %v1719 = vld [vmem:[%s1717 + $0x4] sm:$0xf]
      %v1720 = vld [vmem:[%s1717 + $0x8] sm:$0xf]
      %v1721 = vld [vmem:[%s1717 + $0xc] sm:$0xf]
      %s1722 = scalar_lea.vmem %s49, %s558
      %v1723 = vld [vmem:[%s1722] sm:$0x1]
      %v1725 = vlaneseq
      %v1726 = vshrl.u32 %v1725, 7
      %v1727 = vsub.s32 0, %v1726
      %v1728 = vrot.slane %v1723, %v1727
      %v1734 = vunpack.c.l.b16 %v1718
      %v1735 = vunpack.c.l.b16 %v1719
      %v1736 = vunpack.c.l.b16 %v1720
      %v1737 = vunpack.c.l.b16 %v1721
      %v1738 = vpack.c.b16 %v1735, %v1734
      %v1739 = vpack.c.b16 %v1737, %v1736
      %v1743 = vsel %vm570, %v1713, 0
      %v1746 = vsel %vm570, %v1714, 0
      %1748 = vmatprep.subr.bf16.mxu0 0
      %1749 = vmatpush1.bf16.msra.mxu0 0
      %1750 = vmatprep.subr.bf16.mxu0 0
      %1751 = vmatpush1.bf16.msra.mxu0 0
      %1752 = vmatprep.subr.bf16.mxu0 0
      %1753 = vmatpush1.bf16.msra.mxu0 0
      %1754 = vmatprep.subr.bf16.mxu0 0
      %1755 = vmatpush1.bf16.msra.mxu0 0
      %1756 = vmatprep.subr.bf16.mxu0 0
      %1757 = vmatpush1.bf16.msra.mxu0 0
      %1758 = vmatprep.subr.bf16.mxu0 0
      %1759 = vmatpush1.bf16.msra.mxu0 0
      %1760 = vmatprep.subr.bf16.mxu0 0
      %1761 = vmatpush1.bf16.msra.mxu0 %v1739
      %1762 = vmatprep.subr.bf16.mxu0 0
      %1763 = vmatpush1.bf16.msra.mxu0 %v1738
      %1764 = vmatprep.subr.bf16.mxu0 0
      %1765 = vmatpush2.bf16.msra.mxu0 0
      %1766 = vmatprep.subr.bf16.mxu0 0
      %1767 = vmatpush2.bf16.msra.mxu0 0
      %1768 = vmatprep.subr.bf16.mxu0 0
      %1769 = vmatpush2.bf16.msra.mxu0 0
      %1770 = vmatprep.subr.bf16.mxu0 0
      %1771 = vmatpush2.bf16.msra.mxu0 0
      %1772 = vmatprep.subr.bf16.mxu0 0
      %1773 = vmatpush2.bf16.msra.mxu0 0
      %1774 = vmatprep.subr.bf16.mxu0 0
      %1775 = vmatpush2.bf16.msra.mxu0 0
      %1776 = vmatprep.subr.bf16.mxu0 0
      %1777 = vmatpush2.bf16.msra.mxu0 0
      %1778 = vmatprep.subr.bf16.mxu0 0
      %1779 = vmatpush2.bf16.msra.mxu0 0
      %1780 = vmatprep.mubr.bf16.mxu0 0
      %1781 = vmatmul.mubr.bf16.gmra.mxu0 %v1743
      %v1782 = vpop.f32.mrf.mxu0
      %v1783 = vadd.f32 %v1728, %v1782
      %v1784 = vpop.f32.mrf.mxu0
      %v1785 = vpop.f32.mrf.mxu0
      %v1786 = vadd.f32 %v1728, %v1785
      %v1787 = vpop.f32.mrf.mxu0
      %1788 = vmatprep.mubr.bf16.mxu0 0
      %1789 = vmatmul.mubr.bf16.gmra.mxu0 %v1746
      %v1790 = vpop.f32.mrf.mxu0
      %v1791 = vadd.f32 %v1728, %v1790
      %v1792 = vpop.f32.mrf.mxu0
      %v1793 = vpop.f32.mrf.mxu0
      %v1794 = vpop.f32.mrf.mxu0
      %1795 = vdwg.mxu0
      %v1796 = vmul.f32 %v1783, 0.5
      %v1797 = vmul.f32 %v1786, 0.5
      %v1798 = vmul.f32 %v1791, 0.5
      %v1799 = vmul.f32 %v1783, 0.044715
      %v1800 = vmul.f32 %v1786, 0.044715
      %v1801 = vmul.f32 %v1791, 0.044715
      %v1802 = vmul.f32 %v1799, %v1783
      %v1803 = vmul.f32 %v1800, %v1786
      %v1804 = vmul.f32 %v1801, %v1791
      %v1805 = vmul.f32 %v1802, %v1783
      %v1806 = vmul.f32 %v1803, %v1786
      %v1807 = vmul.f32 %v1804, %v1791
      %v1808 = vadd.f32 %v1783, %v1805
      %v1809 = vadd.f32 %v1786, %v1806
      %v1810 = vadd.f32 %v1791, %v1807
      %v1811 = vmul.f32 %v1808, 0.7978846
      %v1812 = vmul.f32 %v1809, 0.7978846
      %v1813 = vmul.f32 %v1810, 0.7978846
      %v1814 = vtanh.pop %v1811
      %v1815 = vtanh.pop %v1812
      %v1816 = vtanh.pop %v1813
      %v1817 = vadd.f32 %v1814, 1.0
      %v1818 = vadd.f32 %v1815, 1.0
      %v1819 = vadd.f32 %v1816, 1.0
      %v1820 = vmul.f32 %v1796, %v1817
      %v1821 = vmul.f32 %v1797, %v1818
      %v1822 = vmul.f32 %v1798, %v1819
      %v1823 = vpack.c.bf16 %v1821, %v1820
      %v1824 = vpack.c.bf16 %v1822, %v1822
      %s1825 = smul.u32 %s558, 8
      %s1826 = smul.addr %s1825, 4
      %s1827 = scalar_lea.vmem [#allocation14], %s1826
      %v1828 = vld [vmem:[%s1827] sm:$0xf]
      %v1829 = vld [vmem:[%s1827 + $0x4] sm:$0xf]
      %v1830 = vld [vmem:[%s1827 + $0x8] sm:$0xf]
      %v1831 = vld [vmem:[%s1827 + $0xc] sm:$0xf]
      %v1832 = vld [vmem:[%s1827 + $0x10] sm:$0xf]
      %v1833 = vld [vmem:[%s1827 + $0x14] sm:$0xf]
      %v1834 = vld [vmem:[%s1827 + $0x18] sm:$0xf]
      %v1835 = vld [vmem:[%s1827 + $0x1c] sm:$0xf]
      %v1844 = vunpack.c.l.b16 %v1828
      %v1845 = vunpack.c.l.b16 %v1829
      %v1846 = vunpack.c.l.b16 %v1830
      %v1847 = vunpack.c.l.b16 %v1831
      %v1848 = vunpack.c.l.b16 %v1832
      %v1849 = vunpack.c.l.b16 %v1833
      %v1850 = vunpack.c.l.b16 %v1834
      %v1851 = vunpack.c.l.b16 %v1835
      %v1852 = vpack.c.b16 %v1845, %v1844
      %v1853 = vpack.c.b16 %v1847, %v1846
      %v1854 = vpack.c.b16 %v1849, %v1848
      %v1855 = vpack.c.b16 %v1851, %v1850
      %v1861 = vsel %vm892, %v1823, 0
      %v1864 = vsel %vm892, %v1824, 0
      %1866 = vmatprep.subr.bf16.mxu0 0
      %1867 = vmatpush1.bf16.msra.mxu0 0
      %1868 = vmatprep.subr.bf16.mxu0 0
      %1869 = vmatpush1.bf16.msra.mxu0 0
      %1870 = vmatprep.subr.bf16.mxu0 0
      %1871 = vmatpush1.bf16.msra.mxu0 0
      %1872 = vmatprep.subr.bf16.mxu0 0
      %1873 = vmatpush1.bf16.msra.mxu0 0
      %1874 = vmatprep.subr.bf16.mxu0 0
      %1875 = vmatpush1.bf16.msra.mxu0 %v1855
      %1876 = vmatprep.subr.bf16.mxu0 0
      %1877 = vmatpush1.bf16.msra.mxu0 %v1854
      %1878 = vmatprep.subr.bf16.mxu0 0
      %1879 = vmatpush1.bf16.msra.mxu0 %v1853
      %1880 = vmatprep.subr.bf16.mxu0 0
      %1881 = vmatpush1.bf16.msra.mxu0 %v1852
      %1882 = vmatprep.subr.bf16.mxu0 0
      %1883 = vmatpush2.bf16.msra.mxu0 0
      %1884 = vmatprep.subr.bf16.mxu0 0
      %1885 = vmatpush2.bf16.msra.mxu0 0
      %1886 = vmatprep.subr.bf16.mxu0 0
      %1887 = vmatpush2.bf16.msra.mxu0 0
      %1888 = vmatprep.subr.bf16.mxu0 0
      %1889 = vmatpush2.bf16.msra.mxu0 0
      %1890 = vmatprep.subr.bf16.mxu0 0
      %1891 = vmatpush2.bf16.msra.mxu0 0
      %1892 = vmatprep.subr.bf16.mxu0 0
      %1893 = vmatpush2.bf16.msra.mxu0 0
      %1894 = vmatprep.subr.bf16.mxu0 0
      %1895 = vmatpush2.bf16.msra.mxu0 0
      %1896 = vmatprep.subr.bf16.mxu0 0
      %1897 = vmatpush2.bf16.msra.mxu0 0
      %1898 = vmatprep.mubr.bf16.mxu0 0
      %1899 = vmatmul.mubr.bf16.gmra.mxu0 %v1861
      %v1900 = vpop.f32.mrf.mxu0
      %v1901 = vadd.f32 0.0, %v1900
      %v1902 = vpop.f32.mrf.mxu0
      %v1903 = vpop.f32.mrf.mxu0
      %v1904 = vadd.f32 0.0, %v1903
      %v1905 = vpop.f32.mrf.mxu0
      %1906 = vmatprep.mubr.bf16.mxu0 0
      %1907 = vmatmul.mubr.bf16.gmra.mxu0 %v1864
      %v1908 = vpop.f32.mrf.mxu0
      %v1909 = vadd.f32 0.0, %v1908
      %v1910 = vpop.f32.mrf.mxu0
      %v1911 = vpop.f32.mrf.mxu0
      %v1912 = vpop.f32.mrf.mxu0
      %1913 = vdwg.mxu0
      %v1914 = vadd.f32 %v1649, %v1901
      %v1915 = vadd.f32 %v1650, %v1904
      %v1916 = vadd.f32 %v1651, %v1909
      %s1917 = scalar_lea.vmem %s53, %s558
      %v1918 = vld [vmem:[%s1917] sm:$0x1]
      %v1920 = vlaneseq
      %v1921 = vshrl.u32 %v1920, 7
      %v1922 = vsub.s32 0, %v1921
      %v1923 = vrot.slane %v1918, %v1922
      %v1925 = vadd.f32 %v1914, %v1923
      %v1926 = vadd.f32 %v1915, %v1923
      %v1927 = vadd.f32 %v1916, %v1923
    $region270: #{_lambda_.1} parent=1 // loop_footer
      %s562 = sadd.s32 1, %s558
    $region271: #{_lambda_.1} parent=1 // loop_footer_branch
      %557 = sbr.rel target = $region267
    $region272: #{_lambda_.1} parent=1 // loop_exit
      _
    %v1928 = vld [vmem:[#allocation20] sm:$0xff]
    %v1929 = vld [vmem:[#allocation20 + $0x8] sm:$0xff]
    %v1930 = vld [vmem:[#allocation20 + $0x10] sm:$0xff]
    %v1931 = vld [vmem:[#allocation20 + $0x18] sm:$0xff]
    %vm1932 = vcmask 146432
    %v1934 = vsel %vm1932, %v1928, 0
    %v1937 = vsel %vm1932, %v1929, 0
    %v1940 = vsel %vm1932, %v1930, 0
    %v1943 = vsel %vm1932, %v1931, 0
    %v1946 = vsel %vm470, %v565, 0
    %1948 = vmatprep.subr.mxu0 0.0
    %1949 = vmatpush1.msra.mxu0 0.0
    %1950 = vmatprep.subr.mxu0 0.0
    %1951 = vmatpush1.msra.mxu0 0.0
    %1952 = vmatprep.subr.mxu0 0.0
    %1953 = vmatpush1.msra.mxu0 0.0
    %1954 = vmatprep.subr.mxu0 0.0
    %1955 = vmatpush1.msra.mxu0 0.0
    %1956 = vmatprep.subr.mxu0 0.0
    %1957 = vmatpush1.msra.mxu0 0.0
    %1958 = vmatprep.subr.mxu0 0.0
    %1959 = vmatpush1.msra.mxu0 0.0
    %1960 = vmatprep.subr.mxu0 0.0
    %1961 = vmatpush1.msra.mxu0 0.0
    %1962 = vmatprep.subr.mxu0 0.0
    %1963 = vmatpush1.msra.mxu0 0.0
    %1964 = vmatprep.subr.mxu0 0.0
    %1965 = vmatpush1.msra.mxu0 0.0
    %1966 = vmatprep.subr.mxu0 0.0
    %1967 = vmatpush1.msra.mxu0 0.0
    %1968 = vmatprep.subr.mxu0 0.0
    %1969 = vmatpush1.msra.mxu0 0.0
    %1970 = vmatprep.subr.mxu0 0.0
    %1971 = vmatpush1.msra.mxu0 0.0
    %1972 = vmatprep.subr.mxu0 0.0
    %1973 = vmatpush1.msra.mxu0 0.0
    %1974 = vmatprep.subr.mxu0 0.0
    %1975 = vmatpush1.msra.mxu0 %v1946
    %1976 = vmatprep.subr.mxu0 0.0
    %1977 = vmatpush1.msra.mxu0 %v564
    %1978 = vmatprep.subr.mxu0 0.0
    %1979 = vmatpush1.msra.mxu0 %v563
    %1980 = vmatprep.subr.mxu0 0.0
    %1981 = vmatpush2.msra.mxu0 0.0
    %1982 = vmatprep.subr.mxu0 0.0
    %1983 = vmatpush2.msra.mxu0 0.0
    %1984 = vmatprep.subr.mxu0 0.0
    %1985 = vmatpush2.msra.mxu0 0.0
    %1986 = vmatprep.subr.mxu0 0.0
    %1987 = vmatpush2.msra.mxu0 0.0
    %1988 = vmatprep.subr.mxu0 0.0
    %1989 = vmatpush2.msra.mxu0 0.0
    %1990 = vmatprep.subr.mxu0 0.0
    %1991 = vmatpush2.msra.mxu0 0.0
    %1992 = vmatprep.subr.mxu0 0.0
    %1993 = vmatpush2.msra.mxu0 0.0
    %1994 = vmatprep.subr.mxu0 0.0
    %1995 = vmatpush2.msra.mxu0 0.0
    %1996 = vmatprep.subr.mxu0 0.0
    %1997 = vmatpush2.msra.mxu0 0.0
    %1998 = vmatprep.subr.mxu0 0.0
    %1999 = vmatpush2.msra.mxu0 0.0
    %2000 = vmatprep.subr.mxu0 0.0
    %2001 = vmatpush2.msra.mxu0 0.0
    %2002 = vmatprep.subr.mxu0 0.0
    %2003 = vmatpush2.msra.mxu0 0.0
    %2004 = vmatprep.subr.mxu0 0.0
    %2005 = vmatpush2.msra.mxu0 0.0
    %2006 = vmatprep.subr.mxu0 0.0
    %2007 = vmatpush2.msra.mxu0 0.0
    %2008 = vmatprep.subr.mxu0 0.0
    %2009 = vmatpush2.msra.mxu0 0.0
    %2010 = vmatprep.subr.mxu0 0.0
    %2011 = vmatpush2.msra.mxu0 0.0
    %2012 = vmatprep.mubr.f32.mxu0 0.0
    %2013 = vmatmul.mubr.f32.gmra.mxu0 %v1934
    %v2014 = vpop.f32.mrf.mxu0
    %v2015 = vadd.f32 0.0, %v2014
    %v2016 = vpop.f32.mrf.mxu0
    %2017 = vmatprep.mubr.f32.mxu0 0.0
    %2018 = vmatmul.mubr.f32.gmra.mxu0 %v1937
    %v2019 = vpop.f32.mrf.mxu0
    %v2020 = vadd.f32 0.0, %v2019
    %v2021 = vpop.f32.mrf.mxu0
    %2022 = vmatprep.mubr.f32.mxu0 0.0
    %2023 = vmatmul.mubr.f32.gmra.mxu0 %v1940
    %v2024 = vpop.f32.mrf.mxu0
    %v2025 = vadd.f32 0.0, %v2024
    %v2026 = vpop.f32.mrf.mxu0
    %2027 = vmatprep.mubr.f32.mxu0 0.0
    %2028 = vmatmul.mubr.f32.gmra.mxu0 %v1943
    %v2029 = vpop.f32.mrf.mxu0
    %v2030 = vadd.f32 0.0, %v2029
    %v2031 = vpop.f32.mrf.mxu0
    %2032 = vdwg.mxu0
    %v2033 = vld [vmem:[%s73] sm:$0x1]
    %v2034 = vld [vmem:[%s75] sm:$0x1]
    %vm2035 = vcmask 261120
    %v2036 = vsel %vm2035, %v2015, 0.0
    %2037 = vadd.xlane.f32.xlu0 %v2036
    %v2038 = vpop.xlane.xlu0 %2037
    %v2039 = vsel %vm2035, %v2020, 0.0
    %2040 = vadd.xlane.f32.xlu0 %v2039
    %v2041 = vpop.xlane.xlu0 %2040
    %v2042 = vsel %vm2035, %v2025, 0.0
    %2043 = vadd.xlane.f32.xlu0 %v2042
    %v2044 = vpop.xlane.xlu0 %2043
    %v2045 = vsel %vm2035, %v2030, 0.0
    %2046 = vadd.xlane.f32.xlu0 %v2045
    %v2047 = vpop.xlane.xlu0 %2046
    %v2048 = vrcp.pop 32.0
    %v2049 = vmul.f32 %v2038, %v2048
    %v2050 = vmul.f32 %v2041, %v2048
    %v2051 = vmul.f32 %v2044, %v2048
    %v2052 = vmul.f32 %v2047, %v2048
    %v2053 = vsub.f32 %v2015, %v2049
    %v2054 = vsub.f32 %v2020, %v2050
    %v2055 = vsub.f32 %v2025, %v2051
    %v2056 = vsub.f32 %v2030, %v2052
    %v2057 = vmul.f32 %v2053, %v2053
    %v2058 = vmul.f32 %v2054, %v2054
    %v2059 = vmul.f32 %v2055, %v2055
    %v2060 = vmul.f32 %v2056, %v2056
    %v2061 = vsel %vm2035, %v2057, 0.0
    %2062 = vadd.xlane.f32.xlu0 %v2061
    %v2063 = vpop.xlane.xlu0 %2062
    %v2064 = vsel %vm2035, %v2058, 0.0
    %2065 = vadd.xlane.f32.xlu0 %v2064
    %v2066 = vpop.xlane.xlu0 %2065
    %v2067 = vsel %vm2035, %v2059, 0.0
    %2068 = vadd.xlane.f32.xlu0 %v2067
    %v2069 = vpop.xlane.xlu0 %2068
    %v2070 = vsel %vm2035, %v2060, 0.0
    %2071 = vadd.xlane.f32.xlu0 %v2070
    %v2072 = vpop.xlane.xlu0 %2071
    %v2073 = vmul.f32 %v2063, %v2048
    %v2074 = vmul.f32 %v2066, %v2048
    %v2075 = vmul.f32 %v2069, %v2048
    %v2076 = vmul.f32 %v2072, %v2048
    %v2077 = vadd.f32 %v2073, 1e-05
    %v2078 = vadd.f32 %v2074, 1e-05
    %v2079 = vadd.f32 %v2075, 1e-05
    %v2080 = vadd.f32 %v2076, 1e-05
    %v2081 = vrsqrt.pop %v2077
    %v2082 = vrsqrt.pop %v2078
    %v2083 = vrsqrt.pop %v2079
    %v2084 = vrsqrt.pop %v2080
    %v2085 = vmul.f32 %v2053, %v2081
    %v2086 = vmul.f32 %v2054, %v2082
    %v2087 = vmul.f32 %v2055, %v2083
    %v2088 = vmul.f32 %v2056, %v2084
    %v2090 = vlaneseq
    %v2091 = vshrl.u32 %v2090, 7
    %v2092 = vsub.s32 0, %v2091
    %v2093 = vrot.slane %v2033, %v2092
    %v2095 = vmul.f32 %v2085, %v2093
    %v2096 = vmul.f32 %v2086, %v2093
    %v2097 = vmul.f32 %v2087, %v2093
    %v2098 = vmul.f32 %v2088, %v2093
    %v2100 = vlaneseq
    %v2101 = vshrl.u32 %v2100, 7
    %v2102 = vsub.s32 0, %v2101
    %v2103 = vrot.slane %v2034, %v2102
    %v2105 = vadd.f32 %v2095, %v2103
    %v2106 = vadd.f32 %v2096, %v2103
    %v2107 = vadd.f32 %v2097, %v2103
    %v2108 = vadd.f32 %v2098, %v2103
    %v2109 = vld [vmem:[%s69] sm:$0xff]
    %v2110 = vld [vmem:[%s69 + $0x8] sm:$0xff]
    %v2111 = vld [vmem:[%s69 + $0x10] sm:$0xff]
    %v2112 = vld [vmem:[%s69 + $0x18] sm:$0xff]
    %v2113 = vmul.f32 %v2105, %v2109
    %v2114 = vmul.f32 %v2106, %v2110
    %v2115 = vmul.f32 %v2107, %v2111
    %v2116 = vmul.f32 %v2108, %v2112
    %v2117 = vsel %vm2035, %v2113, 0.0
    %2118 = vadd.xlane.f32.xlu0 %v2117
    %v2119 = vpop.xlane.xlu0 %2118
    %v2120 = vsel %vm2035, %v2114, 0.0
    %2121 = vadd.xlane.f32.xlu0 %v2120
    %v2122 = vpop.xlane.xlu0 %2121
    %v2123 = vsel %vm2035, %v2115, 0.0
    %2124 = vadd.xlane.f32.xlu0 %v2123
    %v2125 = vpop.xlane.xlu0 %2124
    %v2126 = vsel %vm2035, %v2116, 0.0
    %2127 = vadd.xlane.f32.xlu0 %v2126
    %v2128 = vpop.xlane.xlu0 %2127
    %v2129 = vld [vmem:[%s71] sm:$0xff]
    %v2130 = vld [vmem:[%s71 + $0x8] sm:$0xff]
    %v2131 = vld [vmem:[%s71 + $0x10] sm:$0xff]
    %v2132 = vld [vmem:[%s71 + $0x18] sm:$0xff]
    %v2133 = vadd.f32 %v2119, %v2129
    %v2134 = vadd.f32 %v2122, %v2130
    %v2135 = vadd.f32 %v2125, %v2131
    %v2136 = vadd.f32 %v2128, %v2132
    %v2137 = vld [vmem:[#allocation22] sm:$0xff]
    %v2138 = vld [vmem:[#allocation22 + $0x8] sm:$0xff]
    %v2139 = vld [vmem:[#allocation22 + $0x10] sm:$0xff]
    %v2140 = vld [vmem:[#allocation22 + $0x18] sm:$0xff]
    %v2141 = vld [vmem:[#allocation23] sm:$0xff]
    %v2142 = vld [vmem:[#allocation23 + $0x8] sm:$0xff]
    %v2143 = vld [vmem:[#allocation23 + $0x10] sm:$0xff]
    %v2144 = vld [vmem:[#allocation23 + $0x18] sm:$0xff]
    %v2146 = vsel %vm1932, %v2141, 0
    %v2149 = vsel %vm1932, %v2142, 0
    %v2152 = vsel %vm1932, %v2143, 0
    %v2155 = vsel %vm1932, %v2144, 0
    %v2158 = vsel %vm470, %v551, 0
    %2160 = vmatprep.subr.mxu0 0.0
    %2161 = vmatpush1.msra.mxu0 0.0
    %2162 = vmatprep.subr.mxu0 0.0
    %2163 = vmatpush1.msra.mxu0 0.0
    %2164 = vmatprep.subr.mxu0 0.0
    %2165 = vmatpush1.msra.mxu0 0.0
    %2166 = vmatprep.subr.mxu0 0.0
    %2167 = vmatpush1.msra.mxu0 0.0
    %2168 = vmatprep.subr.mxu0 0.0
    %2169 = vmatpush1.msra.mxu0 0.0
    %2170 = vmatprep.subr.mxu0 0.0
    %2171 = vmatpush1.msra.mxu0 0.0
    %2172 = vmatprep.subr.mxu0 0.0
    %2173 = vmatpush1.msra.mxu0 0.0
    %2174 = vmatprep.subr.mxu0 0.0
    %2175 = vmatpush1.msra.mxu0 0.0
    %2176 = vmatprep.subr.mxu0 0.0
    %2177 = vmatpush1.msra.mxu0 0.0
    %2178 = vmatprep.subr.mxu0 0.0
    %2179 = vmatpush1.msra.mxu0 0.0
    %2180 = vmatprep.subr.mxu0 0.0
    %2181 = vmatpush1.msra.mxu0 0.0
    %2182 = vmatprep.subr.mxu0 0.0
    %2183 = vmatpush1.msra.mxu0 0.0
    %2184 = vmatprep.subr.mxu0 0.0
    %2185 = vmatpush1.msra.mxu0 0.0
    %2186 = vmatprep.subr.mxu0 0.0
    %2187 = vmatpush1.msra.mxu0 %v2158
    %2188 = vmatprep.subr.mxu0 0.0
    %2189 = vmatpush1.msra.mxu0 %v546
    %2190 = vmatprep.subr.mxu0 0.0
    %2191 = vmatpush1.msra.mxu0 %v541
    %2192 = vmatprep.subr.mxu0 0.0
    %2193 = vmatpush2.msra.mxu0 0.0
    %2194 = vmatprep.subr.mxu0 0.0
    %2195 = vmatpush2.msra.mxu0 0.0
    %2196 = vmatprep.subr.mxu0 0.0
    %2197 = vmatpush2.msra.mxu0 0.0
    %2198 = vmatprep.subr.mxu0 0.0
    %2199 = vmatpush2.msra.mxu0 0.0
    %2200 = vmatprep.subr.mxu0 0.0
    %2201 = vmatpush2.msra.mxu0 0.0
    %2202 = vmatprep.subr.mxu0 0.0
    %2203 = vmatpush2.msra.mxu0 0.0
    %2204 = vmatprep.subr.mxu0 0.0
    %2205 = vmatpush2.msra.mxu0 0.0
    %2206 = vmatprep.subr.mxu0 0.0
    %2207 = vmatpush2.msra.mxu0 0.0
    %2208 = vmatprep.subr.mxu0 0.0
    %2209 = vmatpush2.msra.mxu0 0.0
    %2210 = vmatprep.subr.mxu0 0.0
    %2211 = vmatpush2.msra.mxu0 0.0
    %2212 = vmatprep.subr.mxu0 0.0
    %2213 = vmatpush2.msra.mxu0 0.0
    %2214 = vmatprep.subr.mxu0 0.0
    %2215 = vmatpush2.msra.mxu0 0.0
    %2216 = vmatprep.subr.mxu0 0.0
    %2217 = vmatpush2.msra.mxu0 0.0
    %2218 = vmatprep.subr.mxu0 0.0
    %2219 = vmatpush2.msra.mxu0 0.0
    %2220 = vmatprep.subr.mxu0 0.0
    %2221 = vmatpush2.msra.mxu0 0.0
    %2222 = vmatprep.subr.mxu0 0.0
    %2223 = vmatpush2.msra.mxu0 0.0
    %2224 = vmatprep.mubr.f32.mxu0 0.0
    %2225 = vmatmul.mubr.f32.gmra.mxu0 %v2146
    %v2226 = vpop.f32.mrf.mxu0
    %v2227 = vadd.f32 0.0, %v2226
    %v2228 = vpop.f32.mrf.mxu0
    %2229 = vmatprep.mubr.f32.mxu0 0.0
    %2230 = vmatmul.mubr.f32.gmra.mxu0 %v2149
    %v2231 = vpop.f32.mrf.mxu0
    %v2232 = vadd.f32 0.0, %v2231
    %v2233 = vpop.f32.mrf.mxu0
    %2234 = vmatprep.mubr.f32.mxu0 0.0
    %2235 = vmatmul.mubr.f32.gmra.mxu0 %v2152
    %v2236 = vpop.f32.mrf.mxu0
    %v2237 = vadd.f32 0.0, %v2236
    %v2238 = vpop.f32.mrf.mxu0
    %2239 = vmatprep.mubr.f32.mxu0 0.0
    %2240 = vmatmul.mubr.f32.gmra.mxu0 %v2155
    %v2241 = vpop.f32.mrf.mxu0
    %v2242 = vadd.f32 0.0, %v2241
    %v2243 = vpop.f32.mrf.mxu0
    %2244 = vdwg.mxu0
    %2246 = vset.pattern.permute.xlu0 0
    %2247 = vperm.xlu0 %2246, %v2133
    %v2248 = vpop.permute.xlu0 %2247
    %2251 = vset.pattern.permute.xlu0 0
    %2252 = vperm.xlu0 %2251, %v2134
    %v2253 = vpop.permute.xlu0 %2252
    %2256 = vset.pattern.permute.xlu0 0
    %2257 = vperm.xlu0 %2256, %v2135
    %v2258 = vpop.permute.xlu0 %2257
    %2261 = vset.pattern.permute.xlu0 0
    %2262 = vperm.xlu0 %2261, %v2136
    %v2263 = vpop.permute.xlu0 %2262
    %v2265 = vmul.f32 %v2227, %v2248
    %v2266 = vmul.f32 %v2232, %v2253
    %v2267 = vmul.f32 %v2237, %v2258
    %v2268 = vmul.f32 %v2242, %v2263
    %v2270 = vsel %vm460, %v2137, 0
    %v2273 = vsel %vm460, %v2138, 0
    %v2276 = vsel %vm460, %v2139, 0
    %v2279 = vsel %vm460, %v2140, 0
    %2281 = vmatprep.subr.mxu0 0.0
    %2282 = vmatpush1.msra.mxu0 0.0
    %2283 = vmatprep.subr.mxu0 0.0
    %2284 = vmatpush1.msra.mxu0 0.0
    %2285 = vmatprep.subr.mxu0 0.0
    %2286 = vmatpush1.msra.mxu0 0.0
    %2287 = vmatprep.subr.mxu0 0.0
    %2288 = vmatpush1.msra.mxu0 %v472
    %2289 = vmatprep.subr.mxu0 0.0
    %2290 = vmatpush1.msra.mxu0 %v455
    %2291 = vmatprep.subr.mxu0 0.0
    %2292 = vmatpush1.msra.mxu0 %v454
    %2293 = vmatprep.subr.mxu0 0.0
    %2294 = vmatpush1.msra.mxu0 %v453
    %2295 = vmatprep.subr.mxu0 0.0
    %2296 = vmatpush1.msra.mxu0 %v452
    %2297 = vmatprep.subr.mxu0 0.0
    %2298 = vmatpush1.msra.mxu0 %v451
    %2299 = vmatprep.subr.mxu0 0.0
    %2300 = vmatpush1.msra.mxu0 %v450
    %2301 = vmatprep.subr.mxu0 0.0
    %2302 = vmatpush1.msra.mxu0 %v449
    %2303 = vmatprep.subr.mxu0 0.0
    %2304 = vmatpush1.msra.mxu0 %v448
    %2305 = vmatprep.subr.mxu0 0.0
    %2306 = vmatpush1.msra.mxu0 %v447
    %2307 = vmatprep.subr.mxu0 0.0
    %2308 = vmatpush1.msra.mxu0 %v446
    %2309 = vmatprep.subr.mxu0 0.0
    %2310 = vmatpush1.msra.mxu0 %v445
    %2311 = vmatprep.subr.mxu0 0.0
    %2312 = vmatpush1.msra.mxu0 %v444
    %2313 = vmatprep.subr.mxu0 0.0
    %2314 = vmatpush2.msra.mxu0 0.0
    %2315 = vmatprep.subr.mxu0 0.0
    %2316 = vmatpush2.msra.mxu0 0.0
    %2317 = vmatprep.subr.mxu0 0.0
    %2318 = vmatpush2.msra.mxu0 0.0
    %2319 = vmatprep.subr.mxu0 0.0
    %2320 = vmatpush2.msra.mxu0 0.0
    %2321 = vmatprep.subr.mxu0 0.0
    %2322 = vmatpush2.msra.mxu0 0.0
    %2323 = vmatprep.subr.mxu0 0.0
    %2324 = vmatpush2.msra.mxu0 0.0
    %2325 = vmatprep.subr.mxu0 0.0
    %2326 = vmatpush2.msra.mxu0 0.0
    %2327 = vmatprep.subr.mxu0 0.0
    %2328 = vmatpush2.msra.mxu0 0.0
    %2329 = vmatprep.subr.mxu0 0.0
    %2330 = vmatpush2.msra.mxu0 0.0
    %2331 = vmatprep.subr.mxu0 0.0
    %2332 = vmatpush2.msra.mxu0 0.0
    %2333 = vmatprep.subr.mxu0 0.0
    %2334 = vmatpush2.msra.mxu0 0.0
    %2335 = vmatprep.subr.mxu0 0.0
    %2336 = vmatpush2.msra.mxu0 0.0
    %2337 = vmatprep.subr.mxu0 0.0
    %2338 = vmatpush2.msra.mxu0 0.0
    %2339 = vmatprep.subr.mxu0 0.0
    %2340 = vmatpush2.msra.mxu0 0.0
    %2341 = vmatprep.subr.mxu0 0.0
    %2342 = vmatpush2.msra.mxu0 0.0
    %2343 = vmatprep.subr.mxu0 0.0
    %2344 = vmatpush2.msra.mxu0 0.0
    %2345 = vmatprep.mubr.f32.mxu0 0.0
    %2346 = vmatmul.mubr.f32.gmra.mxu0 %v2270
    %v2347 = vpop.f32.mrf.mxu0
    %v2348 = vadd.f32 %v2265, %v2347
    %v2349 = vpop.f32.mrf.mxu0
    %2350 = vmatprep.mubr.f32.mxu0 0.0
    %2351 = vmatmul.mubr.f32.gmra.mxu0 %v2273
    %v2352 = vpop.f32.mrf.mxu0
    %v2353 = vadd.f32 %v2266, %v2352
    %v2354 = vpop.f32.mrf.mxu0
    %2355 = vmatprep.mubr.f32.mxu0 0.0
    %2356 = vmatmul.mubr.f32.gmra.mxu0 %v2276
    %v2357 = vpop.f32.mrf.mxu0
    %v2358 = vadd.f32 %v2267, %v2357
    %v2359 = vpop.f32.mrf.mxu0
    %2360 = vmatprep.mubr.f32.mxu0 0.0
    %2361 = vmatmul.mubr.f32.gmra.mxu0 %v2279
    %v2362 = vpop.f32.mrf.mxu0
    %v2363 = vadd.f32 %v2268, %v2362
    %v2364 = vpop.f32.mrf.mxu0
    %2365 = vdwg.mxu0
    %v2366 = vld [vmem:[#allocation25] sm:$0xff]
    %v2367 = vld [vmem:[#allocation25 + $0x8] sm:$0xff]
    %v2368 = vld [vmem:[#allocation25 + $0x10] sm:$0xff]
    %v2369 = vld [vmem:[#allocation25 + $0x18] sm:$0xff]
    loop: start=0, step=1, limit=7
    $region273: #{_lambda_.1} parent=1 // loop_pre_header
      _
    $region274: #{_lambda_.1} parent=1 // loop_header
      %s2371 = sphi 0, %s2375
      %p2372 = scmp.ge.s32.totalorder %s2371, 7
      %v2376 = vphi %v2348, %v3823
      %v2377 = vphi %v2353, %v3824
      %v2378 = vphi %v2358, %v3825
      %v2379 = vphi %v2363, %v3826
    $region275: #{_lambda_.1} parent=1 // loop_header_branch
      %2374 = sbr.rel (%p2372) target = $region279
    $region276: #{_lambda_.1} parent=1 // loop_body
      %s2380 = scalar_lea.vmem %s33, %s2371
      %v2381 = vld [vmem:[%s2380] sm:$0x1]
      %s2382 = scalar_lea.vmem %s35, %s2371
      %v2383 = vld [vmem:[%s2382] sm:$0x1]
      %v2384 = vsel %vm2035, %v2376, 0.0
      %2385 = vadd.xlane.f32.xlu0 %v2384
      %v2386 = vpop.xlane.xlu0 %2385
      %v2387 = vsel %vm2035, %v2377, 0.0
      %2388 = vadd.xlane.f32.xlu0 %v2387
      %v2389 = vpop.xlane.xlu0 %2388
      %v2390 = vsel %vm2035, %v2378, 0.0
      %2391 = vadd.xlane.f32.xlu0 %v2390
      %v2392 = vpop.xlane.xlu0 %2391
      %v2393 = vsel %vm2035, %v2379, 0.0
      %2394 = vadd.xlane.f32.xlu0 %v2393
      %v2395 = vpop.xlane.xlu0 %2394
      %v2396 = vmul.f32 %v2386, %v2048
      %v2397 = vmul.f32 %v2389, %v2048
      %v2398 = vmul.f32 %v2392, %v2048
      %v2399 = vmul.f32 %v2395, %v2048
      %v2400 = vsub.f32 %v2376, %v2396
      %v2401 = vsub.f32 %v2377, %v2397
      %v2402 = vsub.f32 %v2378, %v2398
      %v2403 = vsub.f32 %v2379, %v2399
      %v2404 = vmul.f32 %v2400, %v2400
      %v2405 = vmul.f32 %v2401, %v2401
      %v2406 = vmul.f32 %v2402, %v2402
      %v2407 = vmul.f32 %v2403, %v2403
      %v2408 = vsel %vm2035, %v2404, 0.0
      %2409 = vadd.xlane.f32.xlu0 %v2408
      %v2410 = vpop.xlane.xlu0 %2409
      %v2411 = vsel %vm2035, %v2405, 0.0
      %2412 = vadd.xlane.f32.xlu0 %v2411
      %v2413 = vpop.xlane.xlu0 %2412
      %v2414 = vsel %vm2035, %v2406, 0.0
      %2415 = vadd.xlane.f32.xlu0 %v2414
      %v2416 = vpop.xlane.xlu0 %2415
      %v2417 = vsel %vm2035, %v2407, 0.0
      %2418 = vadd.xlane.f32.xlu0 %v2417
      %v2419 = vpop.xlane.xlu0 %2418
      %v2420 = vmul.f32 %v2410, %v2048
      %v2421 = vmul.f32 %v2413, %v2048
      %v2422 = vmul.f32 %v2416, %v2048
      %v2423 = vmul.f32 %v2419, %v2048
      %v2424 = vadd.f32 %v2420, 1e-05
      %v2425 = vadd.f32 %v2421, 1e-05
      %v2426 = vadd.f32 %v2422, 1e-05
      %v2427 = vadd.f32 %v2423, 1e-05
      %v2428 = vrsqrt.pop %v2424
      %v2429 = vrsqrt.pop %v2425
      %v2430 = vrsqrt.pop %v2426
      %v2431 = vrsqrt.pop %v2427
      %v2432 = vmul.f32 %v2400, %v2428
      %v2433 = vmul.f32 %v2401, %v2429
      %v2434 = vmul.f32 %v2402, %v2430
      %v2435 = vmul.f32 %v2403, %v2431
      %v2437 = vlaneseq
      %v2438 = vshrl.u32 %v2437, 7
      %v2439 = vsub.s32 0, %v2438
      %v2440 = vrot.slane %v2381, %v2439
      %v2442 = vmul.f32 %v2432, %v2440
      %v2443 = vmul.f32 %v2433, %v2440
      %v2444 = vmul.f32 %v2434, %v2440
      %v2445 = vmul.f32 %v2435, %v2440
      %v2447 = vlaneseq
      %v2448 = vshrl.u32 %v2447, 7
      %v2449 = vsub.s32 0, %v2448
      %v2450 = vrot.slane %v2383, %v2449
      %v2452 = vadd.f32 %v2442, %v2450
      %v2453 = vadd.f32 %v2443, %v2450
      %v2454 = vadd.f32 %v2444, %v2450
      %v2455 = vadd.f32 %v2445, %v2450
      %v2456 = vpack.c.bf16 %v2453, %v2452
      %v2457 = vpack.c.bf16 %v2455, %v2454
      %s2458 = smul.u32 %s2371, 20
      %s2459 = smul.addr %s2458, 4
      %s2460 = scalar_lea.vmem [#allocation11], %s2459
      %v2461 = vld [vmem:[%s2460] sm:$0xff]
      %v2462 = vld [vmem:[%s2460 + $0x8] sm:$0xff]
      %v2463 = vld [vmem:[%s2460 + $0x10] sm:$0xf]
      %v2464 = vld [vmem:[%s2460 + $0x14] sm:$0xff]
      %v2465 = vld [vmem:[%s2460 + $0x1c] sm:$0xff]
      %v2466 = vld [vmem:[%s2460 + $0x24] sm:$0xf]
      %v2467 = vld [vmem:[%s2460 + $0x28] sm:$0xff]
      %v2468 = vld [vmem:[%s2460 + $0x30] sm:$0xff]
      %v2469 = vld [vmem:[%s2460 + $0x38] sm:$0xf]
      %v2470 = vld [vmem:[%s2460 + $0x3c] sm:$0xff]
      %v2471 = vld [vmem:[%s2460 + $0x44] sm:$0xff]
      %v2472 = vld [vmem:[%s2460 + $0x4c] sm:$0xf]
      %v2485 = vunpack.c.l.b16 %v2461
      %v2486 = vunpack.c.h.b16 %v2461
      %v2487 = vunpack.c.l.b16 %v2462
      %v2488 = vunpack.c.h.b16 %v2462
      %v2489 = vunpack.c.l.b16 %v2463
      %v2490 = vunpack.c.l.b16 %v2464
      %v2491 = vunpack.c.h.b16 %v2464
      %v2492 = vunpack.c.l.b16 %v2465
      %v2493 = vunpack.c.h.b16 %v2465
      %v2494 = vunpack.c.l.b16 %v2466
      %v2495 = vunpack.c.l.b16 %v2467
      %v2496 = vunpack.c.h.b16 %v2467
      %v2497 = vunpack.c.l.b16 %v2468
      %v2498 = vunpack.c.h.b16 %v2468
      %v2499 = vunpack.c.l.b16 %v2469
      %v2500 = vunpack.c.l.b16 %v2470
      %v2501 = vunpack.c.h.b16 %v2470
      %v2502 = vunpack.c.l.b16 %v2471
      %v2503 = vunpack.c.h.b16 %v2471
      %v2504 = vunpack.c.l.b16 %v2472
      %v2505 = vpack.c.b16 %v2490, %v2485
      %v2506 = vpack.c.b16 %v2491, %v2486
      %v2507 = vpack.c.b16 %v2492, %v2487
      %v2508 = vpack.c.b16 %v2493, %v2488
      %v2509 = vpack.c.b16 %v2494, %v2489
      %v2510 = vpack.c.b16 %v2500, %v2495
      %v2511 = vpack.c.b16 %v2501, %v2496
      %v2512 = vpack.c.b16 %v2502, %v2497
      %v2513 = vpack.c.b16 %v2503, %v2498
      %v2514 = vpack.c.b16 %v2504, %v2499
      %v2526 = vsel %vm2035, %v2456, 0
      %v2529 = vsel %vm2035, %v2457, 0
      %2531 = vmatprep.subr.bf16.mxu0 0
      %2532 = vmatpush1.bf16.msra.mxu0 0
      %2533 = vmatprep.subr.bf16.mxu0 0
      %2534 = vmatpush1.bf16.msra.mxu0 0
      %2535 = vmatprep.subr.bf16.mxu0 0
      %2536 = vmatpush1.bf16.msra.mxu0 0
      %2537 = vmatprep.subr.bf16.mxu0 0
      %2538 = vmatpush1.bf16.msra.mxu0 0
      %2539 = vmatprep.subr.bf16.mxu0 0
      %2540 = vmatpush1.bf16.msra.mxu0 0
      %2541 = vmatprep.subr.bf16.mxu0 0
      %2542 = vmatpush1.bf16.msra.mxu0 0
      %2543 = vmatprep.subr.bf16.mxu0 %v2511
      %2544 = vmatpush1.bf16.msra.mxu0 %v2510
      %2545 = vmatprep.subr.bf16.mxu0 %v2506
      %2546 = vmatpush1.bf16.msra.mxu0 %v2505
      %2547 = vmatprep.subr.bf16.mxu0 0
      %2548 = vmatpush2.bf16.msra.mxu0 0
      %2549 = vmatprep.subr.bf16.mxu0 0
      %2550 = vmatpush2.bf16.msra.mxu0 0
      %2551 = vmatprep.subr.bf16.mxu0 0
      %2552 = vmatpush2.bf16.msra.mxu0 0
      %2553 = vmatprep.subr.bf16.mxu0 0
      %2554 = vmatpush2.bf16.msra.mxu0 0
      %2555 = vmatprep.subr.bf16.mxu0 0
      %2556 = vmatpush2.bf16.msra.mxu0 0
      %2557 = vmatprep.subr.bf16.mxu0 0
      %2558 = vmatpush2.bf16.msra.mxu0 0
      %2559 = vmatprep.subr.bf16.mxu0 0
      %2560 = vmatpush2.bf16.msra.mxu0 0
      %2561 = vmatprep.subr.bf16.mxu0 0
      %2562 = vmatpush2.bf16.msra.mxu0 0
      %2563 = vmatprep.mubr.bf16.mxu0 0
      %2564 = vmatmul.mubr.bf16.gmra.mxu0 %v2526
      %v2565 = vpop.f32.mrf.mxu0
      %v2566 = vadd.f32 0.0, %v2565
      %v2567 = vpop.f32.mrf.mxu0
      %v2568 = vadd.f32 0.0, %v2567
      %v2569 = vpop.f32.mrf.mxu0
      %v2570 = vadd.f32 0.0, %v2569
      %v2571 = vpop.f32.mrf.mxu0
      %v2572 = vadd.f32 0.0, %v2571
      %2573 = vmatprep.mubr.bf16.mxu0 0
      %2574 = vmatmul.mubr.bf16.gmra.mxu0 %v2529
      %v2575 = vpop.f32.mrf.mxu0
      %v2576 = vadd.f32 0.0, %v2575
      %v2577 = vpop.f32.mrf.mxu0
      %v2578 = vadd.f32 0.0, %v2577
      %v2579 = vpop.f32.mrf.mxu0
      %v2580 = vadd.f32 0.0, %v2579
      %v2581 = vpop.f32.mrf.mxu0
      %v2582 = vadd.f32 0.0, %v2581
      %2583 = vdwg.mxu0
      %2584 = vmatprep.subr.bf16.mxu0 0
      %2585 = vmatpush1.bf16.msra.mxu0 0
      %2586 = vmatprep.subr.bf16.mxu0 0
      %2587 = vmatpush1.bf16.msra.mxu0 0
      %2588 = vmatprep.subr.bf16.mxu0 0
      %2589 = vmatpush1.bf16.msra.mxu0 0
      %2590 = vmatprep.subr.bf16.mxu0 0
      %2591 = vmatpush1.bf16.msra.mxu0 0
      %2592 = vmatprep.subr.bf16.mxu0 0
      %2593 = vmatpush1.bf16.msra.mxu0 0
      %2594 = vmatprep.subr.bf16.mxu0 0
      %2595 = vmatpush1.bf16.msra.mxu0 0
      %2596 = vmatprep.subr.bf16.mxu0 %v2513
      %2597 = vmatpush1.bf16.msra.mxu0 %v2512
      %2598 = vmatprep.subr.bf16.mxu0 %v2508
      %2599 = vmatpush1.bf16.msra.mxu0 %v2507
      %2600 = vmatprep.subr.bf16.mxu0 0
      %2601 = vmatpush2.bf16.msra.mxu0 0
      %2602 = vmatprep.subr.bf16.mxu0 0
      %2603 = vmatpush2.bf16.msra.mxu0 0
      %2604 = vmatprep.subr.bf16.mxu0 0
      %2605 = vmatpush2.bf16.msra.mxu0 0
      %2606 = vmatprep.subr.bf16.mxu0 0
      %2607 = vmatpush2.bf16.msra.mxu0 0
      %2608 = vmatprep.subr.bf16.mxu0 0
      %2609 = vmatpush2.bf16.msra.mxu0 0
      %2610 = vmatprep.subr.bf16.mxu0 0
      %2611 = vmatpush2.bf16.msra.mxu0 0
      %2612 = vmatprep.subr.bf16.mxu0 0
      %2613 = vmatpush2.bf16.msra.mxu0 0
      %2614 = vmatprep.subr.bf16.mxu0 0
      %2615 = vmatpush2.bf16.msra.mxu0 0
      %2616 = vmatprep.mubr.bf16.mxu0 0
      %2617 = vmatmul.mubr.bf16.gmra.mxu0 %v2526
      %v2618 = vpop.f32.mrf.mxu0
      %v2619 = vadd.f32 0.0, %v2618
      %v2620 = vpop.f32.mrf.mxu0
      %v2621 = vadd.f32 0.0, %v2620
      %v2622 = vpop.f32.mrf.mxu0
      %v2623 = vadd.f32 0.0, %v2622
      %v2624 = vpop.f32.mrf.mxu0
      %v2625 = vadd.f32 0.0, %v2624
      %2626 = vmatprep.mubr.bf16.mxu0 0
      %2627 = vmatmul.mubr.bf16.gmra.mxu0 %v2529
      %v2628 = vpop.f32.mrf.mxu0
      %v2629 = vadd.f32 0.0, %v2628
      %v2630 = vpop.f32.mrf.mxu0
      %v2631 = vadd.f32 0.0, %v2630
      %v2632 = vpop.f32.mrf.mxu0
      %v2633 = vadd.f32 0.0, %v2632
      %v2634 = vpop.f32.mrf.mxu0
      %v2635 = vadd.f32 0.0, %v2634
      %2636 = vdwg.mxu0
      %2637 = vmatprep.subr.bf16.mxu0 0
      %2638 = vmatpush1.bf16.msra.mxu0 0
      %2639 = vmatprep.subr.bf16.mxu0 0
      %2640 = vmatpush1.bf16.msra.mxu0 0
      %2641 = vmatprep.subr.bf16.mxu0 0
      %2642 = vmatpush1.bf16.msra.mxu0 0
      %2643 = vmatprep.subr.bf16.mxu0 0
      %2644 = vmatpush1.bf16.msra.mxu0 0
      %2645 = vmatprep.subr.bf16.mxu0 0
      %2646 = vmatpush1.bf16.msra.mxu0 0
      %2647 = vmatprep.subr.bf16.mxu0 0
      %2648 = vmatpush1.bf16.msra.mxu0 0
      %2649 = vmatprep.subr.bf16.mxu0 0
      %2650 = vmatpush1.bf16.msra.mxu0 %v2514
      %2651 = vmatprep.subr.bf16.mxu0 0
      %2652 = vmatpush1.bf16.msra.mxu0 %v2509
      %2653 = vmatprep.subr.bf16.mxu0 0
      %2654 = vmatpush2.bf16.msra.mxu0 0
      %2655 = vmatprep.subr.bf16.mxu0 0
      %2656 = vmatpush2.bf16.msra.mxu0 0
      %2657 = vmatprep.subr.bf16.mxu0 0
      %2658 = vmatpush2.bf16.msra.mxu0 0
      %2659 = vmatprep.subr.bf16.mxu0 0
      %2660 = vmatpush2.bf16.msra.mxu0 0
      %2661 = vmatprep.subr.bf16.mxu0 0
      %2662 = vmatpush2.bf16.msra.mxu0 0
      %2663 = vmatprep.subr.bf16.mxu0 0
      %2664 = vmatpush2.bf16.msra.mxu0 0
      %2665 = vmatprep.subr.bf16.mxu0 0
      %2666 = vmatpush2.bf16.msra.mxu0 0
      %2667 = vmatprep.subr.bf16.mxu0 0
      %2668 = vmatpush2.bf16.msra.mxu0 0
      %2669 = vmatprep.mubr.bf16.mxu0 0
      %2670 = vmatmul.mubr.bf16.gmra.mxu0 %v2526
      %v2671 = vpop.f32.mrf.mxu0
      %v2672 = vadd.f32 0.0, %v2671
      %v2673 = vpop.f32.mrf.mxu0
      %v2674 = vpop.f32.mrf.mxu0
      %v2675 = vadd.f32 0.0, %v2674
      %v2676 = vpop.f32.mrf.mxu0
      %2677 = vmatprep.mubr.bf16.mxu0 0
      %2678 = vmatmul.mubr.bf16.gmra.mxu0 %v2529
      %v2679 = vpop.f32.mrf.mxu0
      %v2680 = vadd.f32 0.0, %v2679
      %v2681 = vpop.f32.mrf.mxu0
      %v2682 = vpop.f32.mrf.mxu0
      %v2683 = vadd.f32 0.0, %v2682
      %v2684 = vpop.f32.mrf.mxu0
      %2685 = vdwg.mxu0
      %s2686 = smul.u32 %s2371, 24
      %s2687 = smul.addr %s2686, 4
      %s2688 = scalar_lea.vmem %s39, %s2687
      %v2689 = vld [vmem:[%s2688] sm:$0xf]
      %v2690 = vld [vmem:[%s2688 + $0x4] sm:$0xf]
      %v2691 = vld [vmem:[%s2688 + $0x8] sm:$0xf]
      %v2692 = vld [vmem:[%s2688 + $0xc] sm:$0xf]
      %v2693 = vld [vmem:[%s2688 + $0x10] sm:$0xf]
      %v2694 = vld [vmem:[%s2688 + $0x14] sm:$0xf]
      %v2695 = vld [vmem:[%s2688 + $0x18] sm:$0xf]
      %v2696 = vld [vmem:[%s2688 + $0x1c] sm:$0xf]
      %v2697 = vld [vmem:[%s2688 + $0x20] sm:$0xf]
      %v2698 = vld [vmem:[%s2688 + $0x24] sm:$0xf]
      %v2699 = vld [vmem:[%s2688 + $0x28] sm:$0xf]
      %v2700 = vld [vmem:[%s2688 + $0x2c] sm:$0xf]
      %v2701 = vld [vmem:[%s2688 + $0x30] sm:$0xf]
      %v2702 = vld [vmem:[%s2688 + $0x34] sm:$0xf]
      %v2703 = vld [vmem:[%s2688 + $0x38] sm:$0xf]
      %v2704 = vld [vmem:[%s2688 + $0x3c] sm:$0xf]
      %v2705 = vld [vmem:[%s2688 + $0x40] sm:$0xf]
      %v2706 = vld [vmem:[%s2688 + $0x44] sm:$0xf]
      %v2707 = vld [vmem:[%s2688 + $0x48] sm:$0xf]
      %v2708 = vld [vmem:[%s2688 + $0x4c] sm:$0xf]
      %v2709 = vld [vmem:[%s2688 + $0x50] sm:$0xf]
      %v2710 = vld [vmem:[%s2688 + $0x54] sm:$0xf]
      %v2711 = vld [vmem:[%s2688 + $0x58] sm:$0xf]
      %v2712 = vld [vmem:[%s2688 + $0x5c] sm:$0xf]
      %v2713 = vpack.c.bf16 %v2570, %v2566
      %v2714 = vpack.c.bf16 %v2580, %v2576
      %v2715 = vpack.c.bf16 %v2572, %v2568
      %v2716 = vpack.c.bf16 %v2582, %v2578
      %2719 = vrot.lane.b32.xlu0 %v2715, 64
      %v2720 = vpop.permute.xlu0 %2719
      %2721 = vrot.lane.b32.xlu0 %v2716, 64
      %v2722 = vpop.permute.xlu0 %2721
      %vm2723 = vcmask 523264
      %v2725 = vsel %vm2723, %v2713, 0
      %v2728 = vsel %vm2723, %v2714, 0
      %v2731 = vsel %vm2723, %v2720, 0
      %v2734 = vsel %vm2723, %v2722, 0
      %2736 = vmatprep.subr.bf16.mxu0 0
      %2737 = vmatpush1.bf16.xpose.msra.mxu0 0
      %2738 = vmatprep.subr.bf16.mxu0 0
      %2739 = vmatpush1.bf16.xpose.msra.mxu0 0
      %2740 = vmatprep.subr.bf16.mxu0 0
      %2741 = vmatpush1.bf16.xpose.msra.mxu0 0
      %2742 = vmatprep.subr.bf16.mxu0 0
      %2743 = vmatpush1.bf16.xpose.msra.mxu0 0
      %2744 = vmatprep.subr.bf16.mxu0 0
      %2745 = vmatpush1.bf16.xpose.msra.mxu0 0
      %2746 = vmatprep.subr.bf16.mxu0 0
      %2747 = vmatpush1.bf16.xpose.msra.mxu0 0
      %2748 = vmatprep.subr.bf16.mxu0 0
      %2749 = vmatpush1.bf16.xpose.msra.mxu0 %v2734
      %2750 = vmatprep.subr.bf16.mxu0 0
      %2751 = vmatpush1.bf16.xpose.msra.mxu0 %v2731
      %2752 = vmatprep.subr.bf16.mxu0 0
      %2753 = vmatpush2.bf16.xpose.msra.mxu0 0
      %2754 = vmatprep.subr.bf16.mxu0 0
      %2755 = vmatpush2.bf16.xpose.msra.mxu0 0
      %2756 = vmatprep.subr.bf16.mxu0 0
      %2757 = vmatpush2.bf16.xpose.msra.mxu0 0
      %2758 = vmatprep.subr.bf16.mxu0 0
      %2759 = vmatpush2.bf16.xpose.msra.mxu0 0
      %2760 = vmatprep.subr.bf16.mxu0 0
      %2761 = vmatpush2.bf16.xpose.msra.mxu0 0
      %2762 = vmatprep.subr.bf16.mxu0 0
      %2763 = vmatpush2.bf16.xpose.msra.mxu0 0
      %2764 = vmatprep.subr.bf16.mxu0 0
      %2765 = vmatpush2.bf16.xpose.msra.mxu0 0
      %2766 = vmatprep.subr.bf16.mxu0 0
      %2767 = vmatpush2.bf16.xpose.msra.mxu0 0
      %2768 = vmatprep.mubr.bf16.mxu0 0
      %2769 = vmatmul.mubr.bf16.gmra.mxu0 %v2725
      %v2770 = vpop.f32.mrf.mxu0
      %v2771 = vadd.f32 0.0, %v2770
      %v2772 = vpop.f32.mrf.mxu0
      %v2773 = vpop.f32.mrf.mxu0
      %v2774 = vadd.f32 0.0, %v2773
      %v2775 = vpop.f32.mrf.mxu0
      %2776 = vmatprep.mubr.bf16.mxu0 0
      %2777 = vmatmul.mubr.bf16.gmra.mxu0 %v2728
      %v2778 = vpop.f32.mrf.mxu0
      %v2779 = vadd.f32 0.0, %v2778
      %v2780 = vpop.f32.mrf.mxu0
      %v2781 = vpop.f32.mrf.mxu0
      %v2782 = vadd.f32 0.0, %v2781
      %v2783 = vpop.f32.mrf.mxu0
      %2784 = vdwg.mxu0
      %v2785 = vmul.f32 %v2771, 0.125
      %v2786 = vmul.f32 %v2774, 0.125
      %v2787 = vmul.f32 %v2779, 0.125
      %v2788 = vmul.f32 %v2782, 0.125
      %v2789 = vadd.f32 %v2785, %v2366
      %v2790 = vadd.f32 %v2786, %v2367
      %v2791 = vadd.f32 %v2787, %v2368
      %v2792 = vadd.f32 %v2788, %v2369
      %v2793 = vsel %vm2035, %v2789, -inf
      %2794 = vmax.xlane.f32.xlu0 %v2793
      %v2795 = vpop.xlane.xlu0 %2794
      %v2796 = vsel %vm2035, %v2790, -inf
      %2797 = vmax.xlane.f32.xlu0 %v2796
      %v2798 = vpop.xlane.xlu0 %2797
      %v2799 = vsel %vm2035, %v2791, -inf
      %2800 = vmax.xlane.f32.xlu0 %v2799
      %v2801 = vpop.xlane.xlu0 %2800
      %v2802 = vsel %vm2035, %v2792, -inf
      %2803 = vmax.xlane.f32.xlu0 %v2802
      %v2804 = vpop.xlane.xlu0 %2803
      %v2805 = vsub.f32 %v2789, %v2795
      %v2806 = vsub.f32 %v2790, %v2798
      %v2807 = vsub.f32 %v2791, %v2801
      %v2808 = vsub.f32 %v2792, %v2804
      %v2809 = vmul.f32 %v2805, 1.442695
      %v2810 = vpow.pop %v2809
      %v2811 = vmul.f32 %v2806, 1.442695
      %v2812 = vpow.pop %v2811
      %v2813 = vmul.f32 %v2807, 1.442695
      %v2814 = vpow.pop %v2813
      %v2815 = vmul.f32 %v2808, 1.442695
      %v2816 = vpow.pop %v2815
      %v2817 = vsel %vm2035, %v2810, 0.0
      %2818 = vadd.xlane.f32.xlu0 %v2817
      %v2819 = vpop.xlane.xlu0 %2818
      %v2820 = vsel %vm2035, %v2812, 0.0
      %2821 = vadd.xlane.f32.xlu0 %v2820
      %v2822 = vpop.xlane.xlu0 %2821
      %v2823 = vsel %vm2035, %v2814, 0.0
      %2824 = vadd.xlane.f32.xlu0 %v2823
      %v2825 = vpop.xlane.xlu0 %2824
      %v2826 = vsel %vm2035, %v2816, 0.0
      %2827 = vadd.xlane.f32.xlu0 %v2826
      %v2828 = vpop.xlane.xlu0 %2827
      %v2829 = vrcp.pop %v2819
      %v2830 = vrcp.pop %v2822
      %v2831 = vrcp.pop %v2825
      %v2832 = vrcp.pop %v2828
      %v2833 = vmul.f32 %v2810, %v2829
      %v2834 = vmul.f32 %v2812, %v2830
      %v2835 = vmul.f32 %v2814, %v2831
      %v2836 = vmul.f32 %v2816, %v2832
      %v2837 = vpack.c.bf16 %v2834, %v2833
      %v2838 = vpack.c.bf16 %v2836, %v2835
      %v2839 = vpack.c.bf16 %v2625, %v2621
      %v2840 = vpack.c.bf16 %v2635, %v2631
      %v2842 = vsel %vm2035, %v2837, 0
      %v2845 = vsel %vm2035, %v2838, 0
      %2847 = vmatprep.subr.bf16.mxu0 0
      %2848 = vmatpush1.bf16.msra.mxu0 0
      %2849 = vmatprep.subr.bf16.mxu0 0
      %2850 = vmatpush1.bf16.msra.mxu0 0
      %2851 = vmatprep.subr.bf16.mxu0 0
      %2852 = vmatpush1.bf16.msra.mxu0 0
      %2853 = vmatprep.subr.bf16.mxu0 0
      %2854 = vmatpush1.bf16.msra.mxu0 0
      %2855 = vmatprep.subr.bf16.mxu0 0
      %2856 = vmatpush1.bf16.msra.mxu0 0
      %2857 = vmatprep.subr.bf16.mxu0 0
      %2858 = vmatpush1.bf16.msra.mxu0 0
      %2859 = vmatprep.subr.bf16.mxu0 0
      %2860 = vmatpush1.bf16.msra.mxu0 %v2840
      %2861 = vmatprep.subr.bf16.mxu0 0
      %2862 = vmatpush1.bf16.msra.mxu0 %v2839
      %2863 = vmatprep.subr.bf16.mxu0 0
      %2864 = vmatpush2.bf16.msra.mxu0 0
      %2865 = vmatprep.subr.bf16.mxu0 0
      %2866 = vmatpush2.bf16.msra.mxu0 0
      %2867 = vmatprep.subr.bf16.mxu0 0
      %2868 = vmatpush2.bf16.msra.mxu0 0
      %2869 = vmatprep.subr.bf16.mxu0 0
      %2870 = vmatpush2.bf16.msra.mxu0 0
      %2871 = vmatprep.subr.bf16.mxu0 0
      %2872 = vmatpush2.bf16.msra.mxu0 0
      %2873 = vmatprep.subr.bf16.mxu0 0
      %2874 = vmatpush2.bf16.msra.mxu0 0
      %2875 = vmatprep.subr.bf16.mxu0 0
      %2876 = vmatpush2.bf16.msra.mxu0 0
      %2877 = vmatprep.subr.bf16.mxu0 0
      %2878 = vmatpush2.bf16.msra.mxu0 0
      %2879 = vmatprep.mubr.bf16.mxu0 0
      %2880 = vmatmul.mubr.bf16.gmra.mxu0 %v2842
      %v2881 = vpop.f32.mrf.mxu0
      %v2882 = vadd.f32 0.0, %v2881
      %v2883 = vpop.f32.mrf.mxu0
      %v2884 = vpop.f32.mrf.mxu0
      %v2885 = vadd.f32 0.0, %v2884
      %v2886 = vpop.f32.mrf.mxu0
      %2887 = vmatprep.mubr.bf16.mxu0 0
      %2888 = vmatmul.mubr.bf16.gmra.mxu0 %v2845
      %v2889 = vpop.f32.mrf.mxu0
      %v2890 = vadd.f32 0.0, %v2889
      %v2891 = vpop.f32.mrf.mxu0
      %v2892 = vpop.f32.mrf.mxu0
      %v2893 = vadd.f32 0.0, %v2892
      %v2894 = vpop.f32.mrf.mxu0
      %2895 = vdwg.mxu0
      %v2896 = vpack.c.bf16 %v2885, %v2882
      %v2897 = vpack.c.bf16 %v2893, %v2890
      %v2898 = vpack.c.bf16 %v2623, %v2619
      %v2899 = vpack.c.bf16 %v2633, %v2629
      %2902 = vrot.lane.b32.xlu0 %v2713, 64
      %v2903 = vpop.permute.xlu0 %2902
      %2904 = vrot.lane.b32.xlu0 %v2714, 64
      %v2905 = vpop.permute.xlu0 %2904
      %v2907 = vsel %vm2723, %v2903, 0
      %v2910 = vsel %vm2723, %v2905, 0
      %v2913 = vsel %vm2723, %v2898, 0
      %v2916 = vsel %vm2723, %v2899, 0
      %2918 = vmatprep.subr.bf16.mxu0 0
      %2919 = vmatpush1.bf16.xpose.msra.mxu0 0
      %2920 = vmatprep.subr.bf16.mxu0 0
      %2921 = vmatpush1.bf16.xpose.msra.mxu0 0
      %2922 = vmatprep.subr.bf16.mxu0 0
      %2923 = vmatpush1.bf16.xpose.msra.mxu0 0
      %2924 = vmatprep.subr.bf16.mxu0 0
      %2925 = vmatpush1.bf16.xpose.msra.mxu0 0
      %2926 = vmatprep.subr.bf16.mxu0 0
      %2927 = vmatpush1.bf16.xpose.msra.mxu0 0
      %2928 = vmatprep.subr.bf16.mxu0 0
      %2929 = vmatpush1.bf16.xpose.msra.mxu0 0
      %2930 = vmatprep.subr.bf16.mxu0 0
      %2931 = vmatpush1.bf16.xpose.msra.mxu0 %v2916
      %2932 = vmatprep.subr.bf16.mxu0 0
      %2933 = vmatpush1.bf16.xpose.msra.mxu0 %v2913
      %2934 = vmatprep.subr.bf16.mxu0 0
      %2935 = vmatpush2.bf16.xpose.msra.mxu0 0
      %2936 = vmatprep.subr.bf16.mxu0 0
      %2937 = vmatpush2.bf16.xpose.msra.mxu0 0
      %2938 = vmatprep.subr.bf16.mxu0 0
      %2939 = vmatpush2.bf16.xpose.msra.mxu0 0
      %2940 = vmatprep.subr.bf16.mxu0 0
      %2941 = vmatpush2.bf16.xpose.msra.mxu0 0
      %2942 = vmatprep.subr.bf16.mxu0 0
      %2943 = vmatpush2.bf16.xpose.msra.mxu0 0
      %2944 = vmatprep.subr.bf16.mxu0 0
      %2945 = vmatpush2.bf16.xpose.msra.mxu0 0
      %2946 = vmatprep.subr.bf16.mxu0 0
      %2947 = vmatpush2.bf16.xpose.msra.mxu0 0
      %2948 = vmatprep.subr.bf16.mxu0 0
      %2949 = vmatpush2.bf16.xpose.msra.mxu0 0
      %2950 = vmatprep.mubr.bf16.mxu0 0
      %2951 = vmatmul.mubr.bf16.gmra.mxu0 %v2907
      %v2952 = vpop.f32.mrf.mxu0
      %v2953 = vadd.f32 0.0, %v2952
      %v2954 = vpop.f32.mrf.mxu0
      %v2955 = vpop.f32.mrf.mxu0
      %v2956 = vadd.f32 0.0, %v2955
      %v2957 = vpop.f32.mrf.mxu0
      %2958 = vmatprep.mubr.bf16.mxu0 0
      %2959 = vmatmul.mubr.bf16.gmra.mxu0 %v2910
      %v2960 = vpop.f32.mrf.mxu0
      %v2961 = vadd.f32 0.0, %v2960
      %v2962 = vpop.f32.mrf.mxu0
      %v2963 = vpop.f32.mrf.mxu0
      %v2964 = vadd.f32 0.0, %v2963
      %v2965 = vpop.f32.mrf.mxu0
      %2966 = vdwg.mxu0
      %v2967 = vmul.f32 %v2953, 0.125
      %v2968 = vmul.f32 %v2956, 0.125
      %v2969 = vmul.f32 %v2961, 0.125
      %v2970 = vmul.f32 %v2964, 0.125
      %v2971 = vadd.f32 %v2967, %v2366
      %v2972 = vadd.f32 %v2968, %v2367
      %v2973 = vadd.f32 %v2969, %v2368
      %v2974 = vadd.f32 %v2970, %v2369
      %v2975 = vsel %vm2035, %v2971, -inf
      %2976 = vmax.xlane.f32.xlu0 %v2975
      %v2977 = vpop.xlane.xlu0 %2976
      %v2978 = vsel %vm2035, %v2972, -inf
      %2979 = vmax.xlane.f32.xlu0 %v2978
      %v2980 = vpop.xlane.xlu0 %2979
      %v2981 = vsel %vm2035, %v2973, -inf
      %2982 = vmax.xlane.f32.xlu0 %v2981
      %v2983 = vpop.xlane.xlu0 %2982
      %v2984 = vsel %vm2035, %v2974, -inf
      %2985 = vmax.xlane.f32.xlu0 %v2984
      %v2986 = vpop.xlane.xlu0 %2985
      %v2987 = vsub.f32 %v2971, %v2977
      %v2988 = vsub.f32 %v2972, %v2980
      %v2989 = vsub.f32 %v2973, %v2983
      %v2990 = vsub.f32 %v2974, %v2986
      %v2991 = vmul.f32 %v2987, 1.442695
      %v2992 = vpow.pop %v2991
      %v2993 = vmul.f32 %v2988, 1.442695
      %v2994 = vpow.pop %v2993
      %v2995 = vmul.f32 %v2989, 1.442695
      %v2996 = vpow.pop %v2995
      %v2997 = vmul.f32 %v2990, 1.442695
      %v2998 = vpow.pop %v2997
      %v2999 = vsel %vm2035, %v2992, 0.0
      %3000 = vadd.xlane.f32.xlu0 %v2999
      %v3001 = vpop.xlane.xlu0 %3000
      %v3002 = vsel %vm2035, %v2994, 0.0
      %3003 = vadd.xlane.f32.xlu0 %v3002
      %v3004 = vpop.xlane.xlu0 %3003
      %v3005 = vsel %vm2035, %v2996, 0.0
      %3006 = vadd.xlane.f32.xlu0 %v3005
      %v3007 = vpop.xlane.xlu0 %3006
      %v3008 = vsel %vm2035, %v2998, 0.0
      %3009 = vadd.xlane.f32.xlu0 %v3008
      %v3010 = vpop.xlane.xlu0 %3009
      %v3011 = vrcp.pop %v3001
      %v3012 = vrcp.pop %v3004
      %v3013 = vrcp.pop %v3007
      %v3014 = vrcp.pop %v3010
      %v3015 = vmul.f32 %v2992, %v3011
      %v3016 = vmul.f32 %v2994, %v3012
      %v3017 = vmul.f32 %v2996, %v3013
      %v3018 = vmul.f32 %v2998, %v3014
      %v3019 = vpack.c.bf16 %v3016, %v3015
      %v3020 = vpack.c.bf16 %v3018, %v3017
      %3023 = vrot.lane.b32.xlu0 %v2839, 64
      %v3024 = vpop.permute.xlu0 %3023
      %3025 = vrot.lane.b32.xlu0 %v2840, 64
      %v3026 = vpop.permute.xlu0 %3025
      %v3030 = vsel %vm2035, %v3019, 0
      %v3033 = vsel %vm2035, %v3020, 0
      %3035 = vmatprep.subr.bf16.mxu0 0
      %3036 = vmatpush1.bf16.msra.mxu0 0
      %3037 = vmatprep.subr.bf16.mxu0 0
      %3038 = vmatpush1.bf16.msra.mxu0 0
      %3039 = vmatprep.subr.bf16.mxu0 0
      %3040 = vmatpush1.bf16.msra.mxu0 0
      %3041 = vmatprep.subr.bf16.mxu0 0
      %3042 = vmatpush1.bf16.msra.mxu0 0
      %3043 = vmatprep.subr.bf16.mxu0 0
      %3044 = vmatpush1.bf16.msra.mxu0 0
      %3045 = vmatprep.subr.bf16.mxu0 0
      %3046 = vmatpush1.bf16.msra.mxu0 0
      %3047 = vmatprep.subr.bf16.mxu0 0
      %3048 = vmatpush1.bf16.msra.mxu0 %v3026
      %3049 = vmatprep.subr.bf16.mxu0 0
      %3050 = vmatpush1.bf16.msra.mxu0 %v3024
      %3051 = vmatprep.subr.bf16.mxu0 0
      %3052 = vmatpush2.bf16.msra.mxu0 0
      %3053 = vmatprep.subr.bf16.mxu0 0
      %3054 = vmatpush2.bf16.msra.mxu0 0
      %3055 = vmatprep.subr.bf16.mxu0 0
      %3056 = vmatpush2.bf16.msra.mxu0 0
      %3057 = vmatprep.subr.bf16.mxu0 0
      %3058 = vmatpush2.bf16.msra.mxu0 0
      %3059 = vmatprep.subr.bf16.mxu0 0
      %3060 = vmatpush2.bf16.msra.mxu0 0
      %3061 = vmatprep.subr.bf16.mxu0 0
      %3062 = vmatpush2.bf16.msra.mxu0 0
      %3063 = vmatprep.subr.bf16.mxu0 0
      %3064 = vmatpush2.bf16.msra.mxu0 0
      %3065 = vmatprep.subr.bf16.mxu0 0
      %3066 = vmatpush2.bf16.msra.mxu0 0
      %3067 = vmatprep.mubr.bf16.mxu0 0
      %3068 = vmatmul.mubr.bf16.gmra.mxu0 %v3030
      %v3069 = vpop.f32.mrf.mxu0
      %v3070 = vadd.f32 0.0, %v3069
      %v3071 = vpop.f32.mrf.mxu0
      %v3072 = vpop.f32.mrf.mxu0
      %v3073 = vadd.f32 0.0, %v3072
      %v3074 = vpop.f32.mrf.mxu0
      %3075 = vmatprep.mubr.bf16.mxu0 0
      %3076 = vmatmul.mubr.bf16.gmra.mxu0 %v3033
      %v3077 = vpop.f32.mrf.mxu0
      %v3078 = vadd.f32 0.0, %v3077
      %v3079 = vpop.f32.mrf.mxu0
      %v3080 = vpop.f32.mrf.mxu0
      %v3081 = vadd.f32 0.0, %v3080
      %v3082 = vpop.f32.mrf.mxu0
      %3083 = vdwg.mxu0
      %v3084 = vpack.c.bf16 %v3073, %v3070
      %v3085 = vpack.c.bf16 %v3081, %v3078
      %v3094 = vunpack.c.l.b16 %v2697
      %v3095 = vunpack.c.l.b16 %v2698
      %v3096 = vunpack.c.l.b16 %v2699
      %v3097 = vunpack.c.l.b16 %v2700
      %v3098 = vunpack.c.l.b16 %v2701
      %v3099 = vunpack.c.l.b16 %v2702
      %v3100 = vunpack.c.l.b16 %v2703
      %v3101 = vunpack.c.l.b16 %v2704
      %v3102 = vpack.c.b16 %v3095, %v3094
      %v3103 = vpack.c.b16 %v3097, %v3096
      %v3104 = vpack.c.b16 %v3099, %v3098
      %v3105 = vpack.c.b16 %v3101, %v3100
      %v3111 = vsel %vm2723, %v3084, 0
      %v3114 = vsel %vm2723, %v3085, 0
      %3116 = vmatprep.subr.bf16.mxu0 0
      %3117 = vmatpush1.bf16.msra.mxu0 0
      %3118 = vmatprep.subr.bf16.mxu0 0
      %3119 = vmatpush1.bf16.msra.mxu0 0
      %3120 = vmatprep.subr.bf16.mxu0 0
      %3121 = vmatpush1.bf16.msra.mxu0 0
      %3122 = vmatprep.subr.bf16.mxu0 0
      %3123 = vmatpush1.bf16.msra.mxu0 0
      %3124 = vmatprep.subr.bf16.mxu0 0
      %3125 = vmatpush1.bf16.msra.mxu0 %v3105
      %3126 = vmatprep.subr.bf16.mxu0 0
      %3127 = vmatpush1.bf16.msra.mxu0 %v3104
      %3128 = vmatprep.subr.bf16.mxu0 0
      %3129 = vmatpush1.bf16.msra.mxu0 %v3103
      %3130 = vmatprep.subr.bf16.mxu0 0
      %3131 = vmatpush1.bf16.msra.mxu0 %v3102
      %3132 = vmatprep.subr.bf16.mxu0 0
      %3133 = vmatpush2.bf16.msra.mxu0 0
      %3134 = vmatprep.subr.bf16.mxu0 0
      %3135 = vmatpush2.bf16.msra.mxu0 0
      %3136 = vmatprep.subr.bf16.mxu0 0
      %3137 = vmatpush2.bf16.msra.mxu0 0
      %3138 = vmatprep.subr.bf16.mxu0 0
      %3139 = vmatpush2.bf16.msra.mxu0 0
      %3140 = vmatprep.subr.bf16.mxu0 0
      %3141 = vmatpush2.bf16.msra.mxu0 0
      %3142 = vmatprep.subr.bf16.mxu0 0
      %3143 = vmatpush2.bf16.msra.mxu0 0
      %3144 = vmatprep.subr.bf16.mxu0 0
      %3145 = vmatpush2.bf16.msra.mxu0 0
      %3146 = vmatprep.subr.bf16.mxu0 0
      %3147 = vmatpush2.bf16.msra.mxu0 0
      %3148 = vmatprep.mubr.bf16.mxu0 0
      %3149 = vmatmul.mubr.bf16.gmra.mxu0 %v3111
      %v3150 = vpop.f32.mrf.mxu0
      %v3151 = vadd.f32 0.0, %v3150
      %v3152 = vpop.f32.mrf.mxu0
      %v3153 = vpop.f32.mrf.mxu0
      %v3154 = vadd.f32 0.0, %v3153
      %v3155 = vpop.f32.mrf.mxu0
      %3156 = vmatprep.mubr.bf16.mxu0 0
      %3157 = vmatmul.mubr.bf16.gmra.mxu0 %v3114
      %v3158 = vpop.f32.mrf.mxu0
      %v3159 = vadd.f32 0.0, %v3158
      %v3160 = vpop.f32.mrf.mxu0
      %v3161 = vpop.f32.mrf.mxu0
      %v3162 = vadd.f32 0.0, %v3161
      %v3163 = vpop.f32.mrf.mxu0
      %3164 = vdwg.mxu0
      %v3173 = vunpack.c.l.b16 %v2689
      %v3174 = vunpack.c.l.b16 %v2690
      %v3175 = vunpack.c.l.b16 %v2691
      %v3176 = vunpack.c.l.b16 %v2692
      %v3177 = vunpack.c.l.b16 %v2693
      %v3178 = vunpack.c.l.b16 %v2694
      %v3179 = vunpack.c.l.b16 %v2695
      %v3180 = vunpack.c.l.b16 %v2696
      %v3181 = vpack.c.b16 %v3174, %v3173
      %v3182 = vpack.c.b16 %v3176, %v3175
      %v3183 = vpack.c.b16 %v3178, %v3177
      %v3184 = vpack.c.b16 %v3180, %v3179
      %v3190 = vsel %vm2723, %v2896, 0
      %v3193 = vsel %vm2723, %v2897, 0
      %3195 = vmatprep.subr.bf16.mxu0 0
      %3196 = vmatpush1.bf16.msra.mxu0 0
      %3197 = vmatprep.subr.bf16.mxu0 0
      %3198 = vmatpush1.bf16.msra.mxu0 0
      %3199 = vmatprep.subr.bf16.mxu0 0
      %3200 = vmatpush1.bf16.msra.mxu0 0
      %3201 = vmatprep.subr.bf16.mxu0 0
      %3202 = vmatpush1.bf16.msra.mxu0 0
      %3203 = vmatprep.subr.bf16.mxu0 0
      %3204 = vmatpush1.bf16.msra.mxu0 %v3184
      %3205 = vmatprep.subr.bf16.mxu0 0
      %3206 = vmatpush1.bf16.msra.mxu0 %v3183
      %3207 = vmatprep.subr.bf16.mxu0 0
      %3208 = vmatpush1.bf16.msra.mxu0 %v3182
      %3209 = vmatprep.subr.bf16.mxu0 0
      %3210 = vmatpush1.bf16.msra.mxu0 %v3181
      %3211 = vmatprep.subr.bf16.mxu0 0
      %3212 = vmatpush2.bf16.msra.mxu0 0
      %3213 = vmatprep.subr.bf16.mxu0 0
      %3214 = vmatpush2.bf16.msra.mxu0 0
      %3215 = vmatprep.subr.bf16.mxu0 0
      %3216 = vmatpush2.bf16.msra.mxu0 0
      %3217 = vmatprep.subr.bf16.mxu0 0
      %3218 = vmatpush2.bf16.msra.mxu0 0
      %3219 = vmatprep.subr.bf16.mxu0 0
      %3220 = vmatpush2.bf16.msra.mxu0 0
      %3221 = vmatprep.subr.bf16.mxu0 0
      %3222 = vmatpush2.bf16.msra.mxu0 0
      %3223 = vmatprep.subr.bf16.mxu0 0
      %3224 = vmatpush2.bf16.msra.mxu0 0
      %3225 = vmatprep.subr.bf16.mxu0 0
      %3226 = vmatpush2.bf16.msra.mxu0 0
      %3227 = vmatprep.mubr.bf16.mxu0 0
      %3228 = vmatmul.mubr.bf16.gmra.mxu0 %v3190
      %v3229 = vpop.f32.mrf.mxu0
      %v3230 = vadd.f32 %v3151, %v3229
      %v3231 = vpop.f32.mrf.mxu0
      %v3232 = vpop.f32.mrf.mxu0
      %v3233 = vadd.f32 %v3154, %v3232
      %v3234 = vpop.f32.mrf.mxu0
      %3235 = vmatprep.mubr.bf16.mxu0 0
      %3236 = vmatmul.mubr.bf16.gmra.mxu0 %v3193
      %v3237 = vpop.f32.mrf.mxu0
      %v3238 = vadd.f32 %v3159, %v3237
      %v3239 = vpop.f32.mrf.mxu0
      %v3240 = vpop.f32.mrf.mxu0
      %v3241 = vadd.f32 %v3162, %v3240
      %v3242 = vpop.f32.mrf.mxu0
      %3243 = vdwg.mxu0
      %3246 = vrot.lane.b32.xlu0 %v2898, 64
      %v3247 = vpop.permute.xlu0 %3246
      %3248 = vrot.lane.b32.xlu0 %v2899, 64
      %v3249 = vpop.permute.xlu0 %3248
      %v3251 = vsel %vm2723, %v2715, 0
      %v3254 = vsel %vm2723, %v2716, 0
      %v3257 = vsel %vm2723, %v3247, 0
      %v3260 = vsel %vm2723, %v3249, 0
      %3262 = vmatprep.subr.bf16.mxu0 0
      %3263 = vmatpush1.bf16.xpose.msra.mxu0 0
      %3264 = vmatprep.subr.bf16.mxu0 0
      %3265 = vmatpush1.bf16.xpose.msra.mxu0 0
      %3266 = vmatprep.subr.bf16.mxu0 0
      %3267 = vmatpush1.bf16.xpose.msra.mxu0 0
      %3268 = vmatprep.subr.bf16.mxu0 0
      %3269 = vmatpush1.bf16.xpose.msra.mxu0 0
      %3270 = vmatprep.subr.bf16.mxu0 0
      %3271 = vmatpush1.bf16.xpose.msra.mxu0 0
      %3272 = vmatprep.subr.bf16.mxu0 0
      %3273 = vmatpush1.bf16.xpose.msra.mxu0 0
      %3274 = vmatprep.subr.bf16.mxu0 0
      %3275 = vmatpush1.bf16.xpose.msra.mxu0 %v3260
      %3276 = vmatprep.subr.bf16.mxu0 0
      %3277 = vmatpush1.bf16.xpose.msra.mxu0 %v3257
      %3278 = vmatprep.subr.bf16.mxu0 0
      %3279 = vmatpush2.bf16.xpose.msra.mxu0 0
      %3280 = vmatprep.subr.bf16.mxu0 0
      %3281 = vmatpush2.bf16.xpose.msra.mxu0 0
      %3282 = vmatprep.subr.bf16.mxu0 0
      %3283 = vmatpush2.bf16.xpose.msra.mxu0 0
      %3284 = vmatprep.subr.bf16.mxu0 0
      %3285 = vmatpush2.bf16.xpose.msra.mxu0 0
      %3286 = vmatprep.subr.bf16.mxu0 0
      %3287 = vmatpush2.bf16.xpose.msra.mxu0 0
      %3288 = vmatprep.subr.bf16.mxu0 0
      %3289 = vmatpush2.bf16.xpose.msra.mxu0 0
      %3290 = vmatprep.subr.bf16.mxu0 0
      %3291 = vmatpush2.bf16.xpose.msra.mxu0 0
      %3292 = vmatprep.subr.bf16.mxu0 0
      %3293 = vmatpush2.bf16.xpose.msra.mxu0 0
      %3294 = vmatprep.mubr.bf16.mxu0 0
      %3295 = vmatmul.mubr.bf16.gmra.mxu0 %v3251
      %v3296 = vpop.f32.mrf.mxu0
      %v3297 = vadd.f32 0.0, %v3296
      %v3298 = vpop.f32.mrf.mxu0
      %v3299 = vpop.f32.mrf.mxu0
      %v3300 = vadd.f32 0.0, %v3299
      %v3301 = vpop.f32.mrf.mxu0
      %3302 = vmatprep.mubr.bf16.mxu0 0
      %3303 = vmatmul.mubr.bf16.gmra.mxu0 %v3254
      %v3304 = vpop.f32.mrf.mxu0
      %v3305 = vadd.f32 0.0, %v3304
      %v3306 = vpop.f32.mrf.mxu0
      %v3307 = vpop.f32.mrf.mxu0
      %v3308 = vadd.f32 0.0, %v3307
      %v3309 = vpop.f32.mrf.mxu0
      %3310 = vdwg.mxu0
      %v3311 = vmul.f32 %v3297, 0.125
      %v3312 = vmul.f32 %v3300, 0.125
      %v3313 = vmul.f32 %v3305, 0.125
      %v3314 = vmul.f32 %v3308, 0.125
      %v3315 = vadd.f32 %v3311, %v2366
      %v3316 = vadd.f32 %v3312, %v2367
      %v3317 = vadd.f32 %v3313, %v2368
      %v3318 = vadd.f32 %v3314, %v2369
      %v3319 = vsel %vm2035, %v3315, -inf
      %3320 = vmax.xlane.f32.xlu0 %v3319
      %v3321 = vpop.xlane.xlu0 %3320
      %v3322 = vsel %vm2035, %v3316, -inf
      %3323 = vmax.xlane.f32.xlu0 %v3322
      %v3324 = vpop.xlane.xlu0 %3323
      %v3325 = vsel %vm2035, %v3317, -inf
      %3326 = vmax.xlane.f32.xlu0 %v3325
      %v3327 = vpop.xlane.xlu0 %3326
      %v3328 = vsel %vm2035, %v3318, -inf
      %3329 = vmax.xlane.f32.xlu0 %v3328
      %v3330 = vpop.xlane.xlu0 %3329
      %v3331 = vsub.f32 %v3315, %v3321
      %v3332 = vsub.f32 %v3316, %v3324
      %v3333 = vsub.f32 %v3317, %v3327
      %v3334 = vsub.f32 %v3318, %v3330
      %v3335 = vmul.f32 %v3331, 1.442695
      %v3336 = vpow.pop %v3335
      %v3337 = vmul.f32 %v3332, 1.442695
      %v3338 = vpow.pop %v3337
      %v3339 = vmul.f32 %v3333, 1.442695
      %v3340 = vpow.pop %v3339
      %v3341 = vmul.f32 %v3334, 1.442695
      %v3342 = vpow.pop %v3341
      %v3343 = vsel %vm2035, %v3336, 0.0
      %3344 = vadd.xlane.f32.xlu0 %v3343
      %v3345 = vpop.xlane.xlu0 %3344
      %v3346 = vsel %vm2035, %v3338, 0.0
      %3347 = vadd.xlane.f32.xlu0 %v3346
      %v3348 = vpop.xlane.xlu0 %3347
      %v3349 = vsel %vm2035, %v3340, 0.0
      %3350 = vadd.xlane.f32.xlu0 %v3349
      %v3351 = vpop.xlane.xlu0 %3350
      %v3352 = vsel %vm2035, %v3342, 0.0
      %3353 = vadd.xlane.f32.xlu0 %v3352
      %v3354 = vpop.xlane.xlu0 %3353
      %v3355 = vrcp.pop %v3345
      %v3356 = vrcp.pop %v3348
      %v3357 = vrcp.pop %v3351
      %v3358 = vrcp.pop %v3354
      %v3359 = vmul.f32 %v3336, %v3355
      %v3360 = vmul.f32 %v3338, %v3356
      %v3361 = vmul.f32 %v3340, %v3357
      %v3362 = vmul.f32 %v3342, %v3358
      %v3363 = vpack.c.bf16 %v3360, %v3359
      %v3364 = vpack.c.bf16 %v3362, %v3361
      %v3365 = vpack.c.bf16 %v2675, %v2672
      %v3366 = vpack.c.bf16 %v2683, %v2680
      %v3368 = vsel %vm2035, %v3363, 0
      %v3371 = vsel %vm2035, %v3364, 0
      %3373 = vmatprep.subr.bf16.mxu0 0
      %3374 = vmatpush1.bf16.msra.mxu0 0
      %3375 = vmatprep.subr.bf16.mxu0 0
      %3376 = vmatpush1.bf16.msra.mxu0 0
      %3377 = vmatprep.subr.bf16.mxu0 0
      %3378 = vmatpush1.bf16.msra.mxu0 0
      %3379 = vmatprep.subr.bf16.mxu0 0
      %3380 = vmatpush1.bf16.msra.mxu0 0
      %3381 = vmatprep.subr.bf16.mxu0 0
      %3382 = vmatpush1.bf16.msra.mxu0 0
      %3383 = vmatprep.subr.bf16.mxu0 0
      %3384 = vmatpush1.bf16.msra.mxu0 0
      %3385 = vmatprep.subr.bf16.mxu0 0
      %3386 = vmatpush1.bf16.msra.mxu0 %v3366
      %3387 = vmatprep.subr.bf16.mxu0 0
      %3388 = vmatpush1.bf16.msra.mxu0 %v3365
      %3389 = vmatprep.subr.bf16.mxu0 0
      %3390 = vmatpush2.bf16.msra.mxu0 0
      %3391 = vmatprep.subr.bf16.mxu0 0
      %3392 = vmatpush2.bf16.msra.mxu0 0
      %3393 = vmatprep.subr.bf16.mxu0 0
      %3394 = vmatpush2.bf16.msra.mxu0 0
      %3395 = vmatprep.subr.bf16.mxu0 0
      %3396 = vmatpush2.bf16.msra.mxu0 0
      %3397 = vmatprep.subr.bf16.mxu0 0
      %3398 = vmatpush2.bf16.msra.mxu0 0
      %3399 = vmatprep.subr.bf16.mxu0 0
      %3400 = vmatpush2.bf16.msra.mxu0 0
      %3401 = vmatprep.subr.bf16.mxu0 0
      %3402 = vmatpush2.bf16.msra.mxu0 0
      %3403 = vmatprep.subr.bf16.mxu0 0
      %3404 = vmatpush2.bf16.msra.mxu0 0
      %3405 = vmatprep.mubr.bf16.mxu0 0
      %3406 = vmatmul.mubr.bf16.gmra.mxu0 %v3368
      %v3407 = vpop.f32.mrf.mxu0
      %v3408 = vadd.f32 0.0, %v3407
      %v3409 = vpop.f32.mrf.mxu0
      %v3410 = vpop.f32.mrf.mxu0
      %v3411 = vadd.f32 0.0, %v3410
      %v3412 = vpop.f32.mrf.mxu0
      %3413 = vmatprep.mubr.bf16.mxu0 0
      %3414 = vmatmul.mubr.bf16.gmra.mxu0 %v3371
      %v3415 = vpop.f32.mrf.mxu0
      %v3416 = vadd.f32 0.0, %v3415
      %v3417 = vpop.f32.mrf.mxu0
      %v3418 = vpop.f32.mrf.mxu0
      %v3419 = vadd.f32 0.0, %v3418
      %v3420 = vpop.f32.mrf.mxu0
      %3421 = vdwg.mxu0
      %v3422 = vpack.c.bf16 %v3411, %v3408
      %v3423 = vpack.c.bf16 %v3419, %v3416
      %v3432 = vunpack.c.l.b16 %v2705
      %v3433 = vunpack.c.l.b16 %v2706
      %v3434 = vunpack.c.l.b16 %v2707
      %v3435 = vunpack.c.l.b16 %v2708
      %v3436 = vunpack.c.l.b16 %v2709
      %v3437 = vunpack.c.l.b16 %v2710
      %v3438 = vunpack.c.l.b16 %v2711
      %v3439 = vunpack.c.l.b16 %v2712
      %v3440 = vpack.c.b16 %v3433, %v3432
      %v3441 = vpack.c.b16 %v3435, %v3434
      %v3442 = vpack.c.b16 %v3437, %v3436
      %v3443 = vpack.c.b16 %v3439, %v3438
      %v3449 = vsel %vm2723, %v3422, 0
      %v3452 = vsel %vm2723, %v3423, 0
      %3454 = vmatprep.subr.bf16.mxu0 0
      %3455 = vmatpush1.bf16.msra.mxu0 0
      %3456 = vmatprep.subr.bf16.mxu0 0
      %3457 = vmatpush1.bf16.msra.mxu0 0
      %3458 = vmatprep.subr.bf16.mxu0 0
      %3459 = vmatpush1.bf16.msra.mxu0 0
      %3460 = vmatprep.subr.bf16.mxu0 0
      %3461 = vmatpush1.bf16.msra.mxu0 0
      %3462 = vmatprep.subr.bf16.mxu0 0
      %3463 = vmatpush1.bf16.msra.mxu0 %v3443
      %3464 = vmatprep.subr.bf16.mxu0 0
      %3465 = vmatpush1.bf16.msra.mxu0 %v3442
      %3466 = vmatprep.subr.bf16.mxu0 0
      %3467 = vmatpush1.bf16.msra.mxu0 %v3441
      %3468 = vmatprep.subr.bf16.mxu0 0
      %3469 = vmatpush1.bf16.msra.mxu0 %v3440
      %3470 = vmatprep.subr.bf16.mxu0 0
      %3471 = vmatpush2.bf16.msra.mxu0 0
      %3472 = vmatprep.subr.bf16.mxu0 0
      %3473 = vmatpush2.bf16.msra.mxu0 0
      %3474 = vmatprep.subr.bf16.mxu0 0
      %3475 = vmatpush2.bf16.msra.mxu0 0
      %3476 = vmatprep.subr.bf16.mxu0 0
      %3477 = vmatpush2.bf16.msra.mxu0 0
      %3478 = vmatprep.subr.bf16.mxu0 0
      %3479 = vmatpush2.bf16.msra.mxu0 0
      %3480 = vmatprep.subr.bf16.mxu0 0
      %3481 = vmatpush2.bf16.msra.mxu0 0
      %3482 = vmatprep.subr.bf16.mxu0 0
      %3483 = vmatpush2.bf16.msra.mxu0 0
      %3484 = vmatprep.subr.bf16.mxu0 0
      %3485 = vmatpush2.bf16.msra.mxu0 0
      %3486 = vmatprep.mubr.bf16.mxu0 0
      %3487 = vmatmul.mubr.bf16.gmra.mxu0 %v3449
      %v3488 = vpop.f32.mrf.mxu0
      %v3489 = vadd.f32 0.0, %v3488
      %v3490 = vpop.f32.mrf.mxu0
      %v3491 = vpop.f32.mrf.mxu0
      %v3492 = vadd.f32 0.0, %v3491
      %v3493 = vpop.f32.mrf.mxu0
      %3494 = vmatprep.mubr.bf16.mxu0 0
      %3495 = vmatmul.mubr.bf16.gmra.mxu0 %v3452
      %v3496 = vpop.f32.mrf.mxu0
      %v3497 = vadd.f32 0.0, %v3496
      %v3498 = vpop.f32.mrf.mxu0
      %v3499 = vpop.f32.mrf.mxu0
      %v3500 = vadd.f32 0.0, %v3499
      %v3501 = vpop.f32.mrf.mxu0
      %3502 = vdwg.mxu0
      %v3503 = vadd.f32 %v3230, %v3489
      %v3504 = vadd.f32 %v3233, %v3492
      %v3505 = vadd.f32 %v3238, %v3497
      %v3506 = vadd.f32 %v3241, %v3500
      %v3507 = vadd.f32 %v2376, %v3503
      %v3508 = vadd.f32 %v2377, %v3504
      %v3509 = vadd.f32 %v2378, %v3505
      %v3510 = vadd.f32 %v2379, %v3506
      %s3511 = scalar_lea.vmem %s41, %s2371
      %v3512 = vld [vmem:[%s3511] sm:$0x1]
      %v3514 = vlaneseq
      %v3515 = vshrl.u32 %v3514, 7
      %v3516 = vsub.s32 0, %v3515
      %v3517 = vrot.slane %v3512, %v3516
      %v3519 = vadd.f32 %v3507, %v3517
      %v3520 = vadd.f32 %v3508, %v3517
      %v3521 = vadd.f32 %v3509, %v3517
      %v3522 = vadd.f32 %v3510, %v3517
      %s3523 = scalar_lea.vmem %s43, %s2371
      %v3524 = vld [vmem:[%s3523] sm:$0x1]
      %s3525 = scalar_lea.vmem %s45, %s2371
      %v3526 = vld [vmem:[%s3525] sm:$0x1]
      %v3527 = vsel %vm2035, %v3519, 0.0
      %3528 = vadd.xlane.f32.xlu0 %v3527
      %v3529 = vpop.xlane.xlu0 %3528
      %v3530 = vsel %vm2035, %v3520, 0.0
      %3531 = vadd.xlane.f32.xlu0 %v3530
      %v3532 = vpop.xlane.xlu0 %3531
      %v3533 = vsel %vm2035, %v3521, 0.0
      %3534 = vadd.xlane.f32.xlu0 %v3533
      %v3535 = vpop.xlane.xlu0 %3534
      %v3536 = vsel %vm2035, %v3522, 0.0
      %3537 = vadd.xlane.f32.xlu0 %v3536
      %v3538 = vpop.xlane.xlu0 %3537
      %v3539 = vmul.f32 %v3529, %v2048
      %v3540 = vmul.f32 %v3532, %v2048
      %v3541 = vmul.f32 %v3535, %v2048
      %v3542 = vmul.f32 %v3538, %v2048
      %v3543 = vsub.f32 %v3519, %v3539
      %v3544 = vsub.f32 %v3520, %v3540
      %v3545 = vsub.f32 %v3521, %v3541
      %v3546 = vsub.f32 %v3522, %v3542
      %v3547 = vmul.f32 %v3543, %v3543
      %v3548 = vmul.f32 %v3544, %v3544
      %v3549 = vmul.f32 %v3545, %v3545
      %v3550 = vmul.f32 %v3546, %v3546
      %v3551 = vsel %vm2035, %v3547, 0.0
      %3552 = vadd.xlane.f32.xlu0 %v3551
      %v3553 = vpop.xlane.xlu0 %3552
      %v3554 = vsel %vm2035, %v3548, 0.0
      %3555 = vadd.xlane.f32.xlu0 %v3554
      %v3556 = vpop.xlane.xlu0 %3555
      %v3557 = vsel %vm2035, %v3549, 0.0
      %3558 = vadd.xlane.f32.xlu0 %v3557
      %v3559 = vpop.xlane.xlu0 %3558
      %v3560 = vsel %vm2035, %v3550, 0.0
      %3561 = vadd.xlane.f32.xlu0 %v3560
      %v3562 = vpop.xlane.xlu0 %3561
      %v3563 = vmul.f32 %v3553, %v2048
      %v3564 = vmul.f32 %v3556, %v2048
      %v3565 = vmul.f32 %v3559, %v2048
      %v3566 = vmul.f32 %v3562, %v2048
      %v3567 = vadd.f32 %v3563, 1e-05
      %v3568 = vadd.f32 %v3564, 1e-05
      %v3569 = vadd.f32 %v3565, 1e-05
      %v3570 = vadd.f32 %v3566, 1e-05
      %v3571 = vrsqrt.pop %v3567
      %v3572 = vrsqrt.pop %v3568
      %v3573 = vrsqrt.pop %v3569
      %v3574 = vrsqrt.pop %v3570
      %v3575 = vmul.f32 %v3543, %v3571
      %v3576 = vmul.f32 %v3544, %v3572
      %v3577 = vmul.f32 %v3545, %v3573
      %v3578 = vmul.f32 %v3546, %v3574
      %v3580 = vlaneseq
      %v3581 = vshrl.u32 %v3580, 7
      %v3582 = vsub.s32 0, %v3581
      %v3583 = vrot.slane %v3524, %v3582
      %v3585 = vmul.f32 %v3575, %v3583
      %v3586 = vmul.f32 %v3576, %v3583
      %v3587 = vmul.f32 %v3577, %v3583
      %v3588 = vmul.f32 %v3578, %v3583
      %v3590 = vlaneseq
      %v3591 = vshrl.u32 %v3590, 7
      %v3592 = vsub.s32 0, %v3591
      %v3593 = vrot.slane %v3526, %v3592
      %v3595 = vadd.f32 %v3585, %v3593
      %v3596 = vadd.f32 %v3586, %v3593
      %v3597 = vadd.f32 %v3587, %v3593
      %v3598 = vadd.f32 %v3588, %v3593
      %v3599 = vpack.c.bf16 %v3596, %v3595
      %v3600 = vpack.c.bf16 %v3598, %v3597
      %s3601 = smul.u32 %s2371, 4
      %s3602 = smul.addr %s3601, 4
      %s3603 = scalar_lea.vmem [#allocation13], %s3602
      %v3604 = vld [vmem:[%s3603] sm:$0xf]
      %v3605 = vld [vmem:[%s3603 + $0x4] sm:$0xf]
      %v3606 = vld [vmem:[%s3603 + $0x8] sm:$0xf]
      %v3607 = vld [vmem:[%s3603 + $0xc] sm:$0xf]
      %s3608 = scalar_lea.vmem %s49, %s2371
      %v3609 = vld [vmem:[%s3608] sm:$0x1]
      %v3611 = vlaneseq
      %v3612 = vshrl.u32 %v3611, 7
      %v3613 = vsub.s32 0, %v3612
      %v3614 = vrot.slane %v3609, %v3613
      %v3620 = vunpack.c.l.b16 %v3604
      %v3621 = vunpack.c.l.b16 %v3605
      %v3622 = vunpack.c.l.b16 %v3606
      %v3623 = vunpack.c.l.b16 %v3607
      %v3624 = vpack.c.b16 %v3621, %v3620
      %v3625 = vpack.c.b16 %v3623, %v3622
      %v3629 = vsel %vm2035, %v3599, 0
      %v3632 = vsel %vm2035, %v3600, 0
      %3634 = vmatprep.subr.bf16.mxu0 0
      %3635 = vmatpush1.bf16.msra.mxu0 0
      %3636 = vmatprep.subr.bf16.mxu0 0
      %3637 = vmatpush1.bf16.msra.mxu0 0
      %3638 = vmatprep.subr.bf16.mxu0 0
      %3639 = vmatpush1.bf16.msra.mxu0 0
      %3640 = vmatprep.subr.bf16.mxu0 0
      %3641 = vmatpush1.bf16.msra.mxu0 0
      %3642 = vmatprep.subr.bf16.mxu0 0
      %3643 = vmatpush1.bf16.msra.mxu0 0
      %3644 = vmatprep.subr.bf16.mxu0 0
      %3645 = vmatpush1.bf16.msra.mxu0 0
      %3646 = vmatprep.subr.bf16.mxu0 0
      %3647 = vmatpush1.bf16.msra.mxu0 %v3625
      %3648 = vmatprep.subr.bf16.mxu0 0
      %3649 = vmatpush1.bf16.msra.mxu0 %v3624
      %3650 = vmatprep.subr.bf16.mxu0 0
      %3651 = vmatpush2.bf16.msra.mxu0 0
      %3652 = vmatprep.subr.bf16.mxu0 0
      %3653 = vmatpush2.bf16.msra.mxu0 0
      %3654 = vmatprep.subr.bf16.mxu0 0
      %3655 = vmatpush2.bf16.msra.mxu0 0
      %3656 = vmatprep.subr.bf16.mxu0 0
      %3657 = vmatpush2.bf16.msra.mxu0 0
      %3658 = vmatprep.subr.bf16.mxu0 0
      %3659 = vmatpush2.bf16.msra.mxu0 0
      %3660 = vmatprep.subr.bf16.mxu0 0
      %3661 = vmatpush2.bf16.msra.mxu0 0
      %3662 = vmatprep.subr.bf16.mxu0 0
      %3663 = vmatpush2.bf16.msra.mxu0 0
      %3664 = vmatprep.subr.bf16.mxu0 0
      %3665 = vmatpush2.bf16.msra.mxu0 0
      %3666 = vmatprep.mubr.bf16.mxu0 0
      %3667 = vmatmul.mubr.bf16.gmra.mxu0 %v3629
      %v3668 = vpop.f32.mrf.mxu0
      %v3669 = vadd.f32 %v3614, %v3668
      %v3670 = vpop.f32.mrf.mxu0
      %v3671 = vpop.f32.mrf.mxu0
      %v3672 = vadd.f32 %v3614, %v3671
      %v3673 = vpop.f32.mrf.mxu0
      %3674 = vmatprep.mubr.bf16.mxu0 0
      %3675 = vmatmul.mubr.bf16.gmra.mxu0 %v3632
      %v3676 = vpop.f32.mrf.mxu0
      %v3677 = vadd.f32 %v3614, %v3676
      %v3678 = vpop.f32.mrf.mxu0
      %v3679 = vpop.f32.mrf.mxu0
      %v3680 = vadd.f32 %v3614, %v3679
      %v3681 = vpop.f32.mrf.mxu0
      %3682 = vdwg.mxu0
      %v3683 = vmul.f32 %v3669, 0.5
      %v3684 = vmul.f32 %v3672, 0.5
      %v3685 = vmul.f32 %v3677, 0.5
      %v3686 = vmul.f32 %v3680, 0.5
      %v3687 = vmul.f32 %v3669, 0.044715
      %v3688 = vmul.f32 %v3672, 0.044715
      %v3689 = vmul.f32 %v3677, 0.044715
      %v3690 = vmul.f32 %v3680, 0.044715
      %v3691 = vmul.f32 %v3687, %v3669
      %v3692 = vmul.f32 %v3688, %v3672
      %v3693 = vmul.f32 %v3689, %v3677
      %v3694 = vmul.f32 %v3690, %v3680
      %v3695 = vmul.f32 %v3691, %v3669
      %v3696 = vmul.f32 %v3692, %v3672
      %v3697 = vmul.f32 %v3693, %v3677
      %v3698 = vmul.f32 %v3694, %v3680
      %v3699 = vadd.f32 %v3669, %v3695
      %v3700 = vadd.f32 %v3672, %v3696
      %v3701 = vadd.f32 %v3677, %v3697
      %v3702 = vadd.f32 %v3680, %v3698
      %v3703 = vmul.f32 %v3699, 0.7978846
      %v3704 = vmul.f32 %v3700, 0.7978846
      %v3705 = vmul.f32 %v3701, 0.7978846
      %v3706 = vmul.f32 %v3702, 0.7978846
      %v3707 = vtanh.pop %v3703
      %v3708 = vtanh.pop %v3704
      %v3709 = vtanh.pop %v3705
      %v3710 = vtanh.pop %v3706
      %v3711 = vadd.f32 %v3707, 1.0
      %v3712 = vadd.f32 %v3708, 1.0
      %v3713 = vadd.f32 %v3709, 1.0
      %v3714 = vadd.f32 %v3710, 1.0
      %v3715 = vmul.f32 %v3683, %v3711
      %v3716 = vmul.f32 %v3684, %v3712
      %v3717 = vmul.f32 %v3685, %v3713
      %v3718 = vmul.f32 %v3686, %v3714
      %v3719 = vpack.c.bf16 %v3716, %v3715
      %v3720 = vpack.c.bf16 %v3718, %v3717
      %s3721 = smul.u32 %s2371, 8
      %s3722 = smul.addr %s3721, 4
      %s3723 = scalar_lea.vmem [#allocation14], %s3722
      %v3724 = vld [vmem:[%s3723] sm:$0xf]
      %v3725 = vld [vmem:[%s3723 + $0x4] sm:$0xf]
      %v3726 = vld [vmem:[%s3723 + $0x8] sm:$0xf]
      %v3727 = vld [vmem:[%s3723 + $0xc] sm:$0xf]
      %v3728 = vld [vmem:[%s3723 + $0x10] sm:$0xf]
      %v3729 = vld [vmem:[%s3723 + $0x14] sm:$0xf]
      %v3730 = vld [vmem:[%s3723 + $0x18] sm:$0xf]
      %v3731 = vld [vmem:[%s3723 + $0x1c] sm:$0xf]
      %v3740 = vunpack.c.l.b16 %v3724
      %v3741 = vunpack.c.l.b16 %v3725
      %v3742 = vunpack.c.l.b16 %v3726
      %v3743 = vunpack.c.l.b16 %v3727
      %v3744 = vunpack.c.l.b16 %v3728
      %v3745 = vunpack.c.l.b16 %v3729
      %v3746 = vunpack.c.l.b16 %v3730
      %v3747 = vunpack.c.l.b16 %v3731
      %v3748 = vpack.c.b16 %v3741, %v3740
      %v3749 = vpack.c.b16 %v3743, %v3742
      %v3750 = vpack.c.b16 %v3745, %v3744
      %v3751 = vpack.c.b16 %v3747, %v3746
      %v3757 = vsel %vm2723, %v3719, 0
      %v3760 = vsel %vm2723, %v3720, 0
      %3762 = vmatprep.subr.bf16.mxu0 0
      %3763 = vmatpush1.bf16.msra.mxu0 0
      %3764 = vmatprep.subr.bf16.mxu0 0
      %3765 = vmatpush1.bf16.msra.mxu0 0
      %3766 = vmatprep.subr.bf16.mxu0 0
      %3767 = vmatpush1.bf16.msra.mxu0 0
      %3768 = vmatprep.subr.bf16.mxu0 0
      %3769 = vmatpush1.bf16.msra.mxu0 0
      %3770 = vmatprep.subr.bf16.mxu0 0
      %3771 = vmatpush1.bf16.msra.mxu0 %v3751
      %3772 = vmatprep.subr.bf16.mxu0 0
      %3773 = vmatpush1.bf16.msra.mxu0 %v3750
      %3774 = vmatprep.subr.bf16.mxu0 0
      %3775 = vmatpush1.bf16.msra.mxu0 %v3749
      %3776 = vmatprep.subr.bf16.mxu0 0
      %3777 = vmatpush1.bf16.msra.mxu0 %v3748
      %3778 = vmatprep.subr.bf16.mxu0 0
      %3779 = vmatpush2.bf16.msra.mxu0 0
      %3780 = vmatprep.subr.bf16.mxu0 0
      %3781 = vmatpush2.bf16.msra.mxu0 0
      %3782 = vmatprep.subr.bf16.mxu0 0
      %3783 = vmatpush2.bf16.msra.mxu0 0
      %3784 = vmatprep.subr.bf16.mxu0 0
      %3785 = vmatpush2.bf16.msra.mxu0 0
      %3786 = vmatprep.subr.bf16.mxu0 0
      %3787 = vmatpush2.bf16.msra.mxu0 0
      %3788 = vmatprep.subr.bf16.mxu0 0
      %3789 = vmatpush2.bf16.msra.mxu0 0
      %3790 = vmatprep.subr.bf16.mxu0 0
      %3791 = vmatpush2.bf16.msra.mxu0 0
      %3792 = vmatprep.subr.bf16.mxu0 0
      %3793 = vmatpush2.bf16.msra.mxu0 0
      %3794 = vmatprep.mubr.bf16.mxu0 0
      %3795 = vmatmul.mubr.bf16.gmra.mxu0 %v3757
      %v3796 = vpop.f32.mrf.mxu0
      %v3797 = vadd.f32 0.0, %v3796
      %v3798 = vpop.f32.mrf.mxu0
      %v3799 = vpop.f32.mrf.mxu0
      %v3800 = vadd.f32 0.0, %v3799
      %v3801 = vpop.f32.mrf.mxu0
      %3802 = vmatprep.mubr.bf16.mxu0 0
      %3803 = vmatmul.mubr.bf16.gmra.mxu0 %v3760
      %v3804 = vpop.f32.mrf.mxu0
      %v3805 = vadd.f32 0.0, %v3804
      %v3806 = vpop.f32.mrf.mxu0
      %v3807 = vpop.f32.mrf.mxu0
      %v3808 = vadd.f32 0.0, %v3807
      %v3809 = vpop.f32.mrf.mxu0
      %3810 = vdwg.mxu0
      %v3811 = vadd.f32 %v3519, %v3797
      %v3812 = vadd.f32 %v3520, %v3800
      %v3813 = vadd.f32 %v3521, %v3805
      %v3814 = vadd.f32 %v3522, %v3808
      %s3815 = scalar_lea.vmem %s53, %s2371
      %v3816 = vld [vmem:[%s3815] sm:$0x1]
      %v3818 = vlaneseq
      %v3819 = vshrl.u32 %v3818, 7
      %v3820 = vsub.s32 0, %v3819
      %v3821 = vrot.slane %v3816, %v3820
      %v3823 = vadd.f32 %v3811, %v3821
      %v3824 = vadd.f32 %v3812, %v3821
      %v3825 = vadd.f32 %v3813, %v3821
      %v3826 = vadd.f32 %v3814, %v3821
    $region277: #{_lambda_.1} parent=1 // loop_footer
      %s2375 = sadd.s32 1, %s2371
    $region278: #{_lambda_.1} parent=1 // loop_footer_branch
      %2370 = sbr.rel target = $region274
    $region279: #{_lambda_.1} parent=1 // loop_exit
      _
    %v3827 = vld [vmem:[#allocation26] sm:$0xff]
    %v3828 = vld [vmem:[#allocation26 + $0x8] sm:$0xff]
    %v3829 = vld [vmem:[#allocation26 + $0x10] sm:$0xff]
    %v3830 = vld [vmem:[#allocation26 + $0x18] sm:$0xff]
    %v3831 = vld [vmem:[#allocation26 + $0x20] sm:$0xff]
    %v3832 = vld [vmem:[#allocation26 + $0x28] sm:$0xff]
    %v3834 = vsel %vm2035, %v3827, 0
    %v3837 = vsel %vm2035, %v3828, 0
    %v3840 = vsel %vm2035, %v3829, 0
    %v3843 = vsel %vm2035, %v3830, 0
    %v3846 = vsel %vm2035, %v3831, 0
    %v3849 = vsel %vm2035, %v3832, 0
    %3851 = vmatprep.subr.mxu0 0.0
    %3852 = vmatpush1.msra.mxu0 0.0
    %3853 = vmatprep.subr.mxu0 0.0
    %3854 = vmatpush1.msra.mxu0 0.0
    %3855 = vmatprep.subr.mxu0 0.0
    %3856 = vmatpush1.msra.mxu0 0.0
    %3857 = vmatprep.subr.mxu0 0.0
    %3858 = vmatpush1.msra.mxu0 0.0
    %3859 = vmatprep.subr.mxu0 0.0
    %3860 = vmatpush1.msra.mxu0 0.0
    %3861 = vmatprep.subr.mxu0 0.0
    %3862 = vmatpush1.msra.mxu0 0.0
    %3863 = vmatprep.subr.mxu0 0.0
    %3864 = vmatpush1.msra.mxu0 0.0
    %3865 = vmatprep.subr.mxu0 0.0
    %3866 = vmatpush1.msra.mxu0 0.0
    %3867 = vmatprep.subr.mxu0 0.0
    %3868 = vmatpush1.msra.mxu0 0.0
    %3869 = vmatprep.subr.mxu0 0.0
    %3870 = vmatpush1.msra.mxu0 0.0
    %3871 = vmatprep.subr.mxu0 0.0
    %3872 = vmatpush1.msra.mxu0 0.0
    %3873 = vmatprep.subr.mxu0 0.0
    %3874 = vmatpush1.msra.mxu0 0.0
    %3875 = vmatprep.subr.mxu0 0.0
    %3876 = vmatpush1.msra.mxu0 %v2379
    %3877 = vmatprep.subr.mxu0 0.0
    %3878 = vmatpush1.msra.mxu0 %v2378
    %3879 = vmatprep.subr.mxu0 0.0
    %3880 = vmatpush1.msra.mxu0 %v2377
    %3881 = vmatprep.subr.mxu0 0.0
    %3882 = vmatpush1.msra.mxu0 %v2376
    %3883 = vmatprep.subr.mxu0 0.0
    %3884 = vmatpush2.msra.mxu0 0.0
    %3885 = vmatprep.subr.mxu0 0.0
    %3886 = vmatpush2.msra.mxu0 0.0
    %3887 = vmatprep.subr.mxu0 0.0
    %3888 = vmatpush2.msra.mxu0 0.0
    %3889 = vmatprep.subr.mxu0 0.0
    %3890 = vmatpush2.msra.mxu0 0.0
    %3891 = vmatprep.subr.mxu0 0.0
    %3892 = vmatpush2.msra.mxu0 0.0
    %3893 = vmatprep.subr.mxu0 0.0
    %3894 = vmatpush2.msra.mxu0 0.0
    %3895 = vmatprep.subr.mxu0 0.0
    %3896 = vmatpush2.msra.mxu0 0.0
    %3897 = vmatprep.subr.mxu0 0.0
    %3898 = vmatpush2.msra.mxu0 0.0
    %3899 = vmatprep.subr.mxu0 0.0
    %3900 = vmatpush2.msra.mxu0 0.0
    %3901 = vmatprep.subr.mxu0 0.0
    %3902 = vmatpush2.msra.mxu0 0.0
    %3903 = vmatprep.subr.mxu0 0.0
    %3904 = vmatpush2.msra.mxu0 0.0
    %3905 = vmatprep.subr.mxu0 0.0
    %3906 = vmatpush2.msra.mxu0 0.0
    %3907 = vmatprep.subr.mxu0 0.0
    %3908 = vmatpush2.msra.mxu0 0.0
    %3909 = vmatprep.subr.mxu0 0.0
    %3910 = vmatpush2.msra.mxu0 0.0
    %3911 = vmatprep.subr.mxu0 0.0
    %3912 = vmatpush2.msra.mxu0 0.0
    %3913 = vmatprep.subr.mxu0 0.0
    %3914 = vmatpush2.msra.mxu0 0.0
    %3915 = vmatprep.mubr.f32.mxu0 0.0
    %3916 = vmatmul.mubr.f32.gmra.mxu0 %v3834
    %v3917 = vpop.f32.mrf.mxu0
    %v3918 = vadd.f32 0.0, %v3917
    %v3919 = vpop.f32.mrf.mxu0
    %3920 = vmatprep.mubr.f32.mxu0 0.0
    %3921 = vmatmul.mubr.f32.gmra.mxu0 %v3837
    %v3922 = vpop.f32.mrf.mxu0
    %v3923 = vadd.f32 0.0, %v3922
    %v3924 = vpop.f32.mrf.mxu0
    %3925 = vmatprep.mubr.f32.mxu0 0.0
    %3926 = vmatmul.mubr.f32.gmra.mxu0 %v3840
    %v3927 = vpop.f32.mrf.mxu0
    %v3928 = vadd.f32 0.0, %v3927
    %v3929 = vpop.f32.mrf.mxu0
    %3930 = vmatprep.mubr.f32.mxu0 0.0
    %3931 = vmatmul.mubr.f32.gmra.mxu0 %v3843
    %v3932 = vpop.f32.mrf.mxu0
    %v3933 = vadd.f32 0.0, %v3932
    %v3934 = vpop.f32.mrf.mxu0
    %3935 = vmatprep.mubr.f32.mxu0 0.0
    %3936 = vmatmul.mubr.f32.gmra.mxu0 %v3846
    %v3937 = vpop.f32.mrf.mxu0
    %v3938 = vadd.f32 0.0, %v3937
    %v3939 = vpop.f32.mrf.mxu0
    %3940 = vmatprep.mubr.f32.mxu0 0.0
    %3941 = vmatmul.mubr.f32.gmra.mxu0 %v3849
    %v3942 = vpop.f32.mrf.mxu0
    %v3943 = vadd.f32 0.0, %v3942
    %v3944 = vpop.f32.mrf.mxu0
    %3945 = vdwg.mxu0
    %v3946 = vld [vmem:[%s89] sm:$0x1]
    %v3947 = vld [vmem:[%s91] sm:$0x1]
    %v3948 = vsel %vm2035, %v3918, 0.0
    %3949 = vadd.xlane.f32.xlu0 %v3948
    %v3950 = vpop.xlane.xlu0 %3949
    %v3951 = vsel %vm2035, %v3923, 0.0
    %3952 = vadd.xlane.f32.xlu0 %v3951
    %v3953 = vpop.xlane.xlu0 %3952
    %v3954 = vsel %vm2035, %v3928, 0.0
    %3955 = vadd.xlane.f32.xlu0 %v3954
    %v3956 = vpop.xlane.xlu0 %3955
    %v3957 = vsel %vm2035, %v3933, 0.0
    %3958 = vadd.xlane.f32.xlu0 %v3957
    %v3959 = vpop.xlane.xlu0 %3958
    %v3960 = vsel %vm2035, %v3938, 0.0
    %3961 = vadd.xlane.f32.xlu0 %v3960
    %v3962 = vpop.xlane.xlu0 %3961
    %v3963 = vsel %vm2035, %v3943, 0.0
    %3964 = vadd.xlane.f32.xlu0 %v3963
    %v3965 = vpop.xlane.xlu0 %3964
    %v3966 = vmul.f32 %v3950, %v2048
    %v3967 = vmul.f32 %v3953, %v2048
    %v3968 = vmul.f32 %v3956, %v2048
    %v3969 = vmul.f32 %v3959, %v2048
    %v3970 = vmul.f32 %v3962, %v2048
    %v3971 = vmul.f32 %v3965, %v2048
    %v3972 = vsub.f32 %v3918, %v3966
    %v3973 = vsub.f32 %v3923, %v3967
    %v3974 = vsub.f32 %v3928, %v3968
    %v3975 = vsub.f32 %v3933, %v3969
    %v3976 = vsub.f32 %v3938, %v3970
    %v3977 = vsub.f32 %v3943, %v3971
    %v3978 = vmul.f32 %v3972, %v3972
    %v3979 = vmul.f32 %v3973, %v3973
    %v3980 = vmul.f32 %v3974, %v3974
    %v3981 = vmul.f32 %v3975, %v3975
    %v3982 = vmul.f32 %v3976, %v3976
    %v3983 = vmul.f32 %v3977, %v3977
    %v3984 = vsel %vm2035, %v3978, 0.0
    %3985 = vadd.xlane.f32.xlu0 %v3984
    %v3986 = vpop.xlane.xlu0 %3985
    %v3987 = vsel %vm2035, %v3979, 0.0
    %3988 = vadd.xlane.f32.xlu0 %v3987
    %v3989 = vpop.xlane.xlu0 %3988
    %v3990 = vsel %vm2035, %v3980, 0.0
    %3991 = vadd.xlane.f32.xlu0 %v3990
    %v3992 = vpop.xlane.xlu0 %3991
    %v3993 = vsel %vm2035, %v3981, 0.0
    %3994 = vadd.xlane.f32.xlu0 %v3993
    %v3995 = vpop.xlane.xlu0 %3994
    %v3996 = vsel %vm2035, %v3982, 0.0
    %3997 = vadd.xlane.f32.xlu0 %v3996
    %v3998 = vpop.xlane.xlu0 %3997
    %v3999 = vsel %vm2035, %v3983, 0.0
    %4000 = vadd.xlane.f32.xlu0 %v3999
    %v4001 = vpop.xlane.xlu0 %4000
    %v4002 = vmul.f32 %v3986, %v2048
    %v4003 = vmul.f32 %v3989, %v2048
    %v4004 = vmul.f32 %v3992, %v2048
    %v4005 = vmul.f32 %v3995, %v2048
    %v4006 = vmul.f32 %v3998, %v2048
    %v4007 = vmul.f32 %v4001, %v2048
    %v4008 = vadd.f32 %v4002, 1e-05
    %v4009 = vadd.f32 %v4003, 1e-05
    %v4010 = vadd.f32 %v4004, 1e-05
    %v4011 = vadd.f32 %v4005, 1e-05
    %v4012 = vadd.f32 %v4006, 1e-05
    %v4013 = vadd.f32 %v4007, 1e-05
    %v4014 = vrsqrt.pop %v4008
    %v4015 = vrsqrt.pop %v4009
    %v4016 = vrsqrt.pop %v4010
    %v4017 = vrsqrt.pop %v4011
    %v4018 = vrsqrt.pop %v4012
    %v4019 = vrsqrt.pop %v4013
    %v4020 = vmul.f32 %v3972, %v4014
    %v4021 = vmul.f32 %v3973, %v4015
    %v4022 = vmul.f32 %v3974, %v4016
    %v4023 = vmul.f32 %v3975, %v4017
    %v4024 = vmul.f32 %v3976, %v4018
    %v4025 = vmul.f32 %v3977, %v4019
    %v4027 = vlaneseq
    %v4028 = vshrl.u32 %v4027, 7
    %v4029 = vsub.s32 0, %v4028
    %v4030 = vrot.slane %v3946, %v4029
    %v4032 = vmul.f32 %v4020, %v4030
    %v4033 = vmul.f32 %v4021, %v4030
    %v4034 = vmul.f32 %v4022, %v4030
    %v4035 = vmul.f32 %v4023, %v4030
    %v4036 = vmul.f32 %v4024, %v4030
    %v4037 = vmul.f32 %v4025, %v4030
    %v4039 = vlaneseq
    %v4040 = vshrl.u32 %v4039, 7
    %v4041 = vsub.s32 0, %v4040
    %v4042 = vrot.slane %v3947, %v4041
    %v4044 = vadd.f32 %v4032, %v4042
    %v4045 = vadd.f32 %v4033, %v4042
    %v4046 = vadd.f32 %v4034, %v4042
    %v4047 = vadd.f32 %v4035, %v4042
    %v4048 = vadd.f32 %v4036, %v4042
    %v4049 = vadd.f32 %v4037, %v4042
    %v4050 = vld [vmem:[%s85] sm:$0xff]
    %v4051 = vld [vmem:[%s85 + $0x8] sm:$0xff]
    %v4052 = vld [vmem:[%s85 + $0x10] sm:$0xff]
    %v4053 = vld [vmem:[%s85 + $0x18] sm:$0xff]
    %v4054 = vld [vmem:[%s85 + $0x20] sm:$0xff]
    %v4055 = vld [vmem:[%s85 + $0x28] sm:$0xff]
    %v4056 = vmul.f32 %v4044, %v4050
    %v4057 = vmul.f32 %v4045, %v4051
    %v4058 = vmul.f32 %v4046, %v4052
    %v4059 = vmul.f32 %v4047, %v4053
    %v4060 = vmul.f32 %v4048, %v4054
    %v4061 = vmul.f32 %v4049, %v4055
    %v4062 = vsel %vm2035, %v4056, 0.0
    %4063 = vadd.xlane.f32.xlu0 %v4062
    %v4064 = vpop.xlane.xlu0 %4063
    %v4065 = vsel %vm2035, %v4057, 0.0
    %4066 = vadd.xlane.f32.xlu0 %v4065
    %v4067 = vpop.xlane.xlu0 %4066
    %v4068 = vsel %vm2035, %v4058, 0.0
    %4069 = vadd.xlane.f32.xlu0 %v4068
    %v4070 = vpop.xlane.xlu0 %4069
    %v4071 = vsel %vm2035, %v4059, 0.0
    %4072 = vadd.xlane.f32.xlu0 %v4071
    %v4073 = vpop.xlane.xlu0 %4072
    %v4074 = vsel %vm2035, %v4060, 0.0
    %4075 = vadd.xlane.f32.xlu0 %v4074
    %v4076 = vpop.xlane.xlu0 %4075
    %v4077 = vsel %vm2035, %v4061, 0.0
    %4078 = vadd.xlane.f32.xlu0 %v4077
    %v4079 = vpop.xlane.xlu0 %4078
    %v4080 = vld [vmem:[%s87] sm:$0xff]
    %v4081 = vld [vmem:[%s87 + $0x8] sm:$0xff]
    %v4082 = vld [vmem:[%s87 + $0x10] sm:$0xff]
    %v4083 = vld [vmem:[%s87 + $0x18] sm:$0xff]
    %v4084 = vld [vmem:[%s87 + $0x20] sm:$0xff]
    %v4085 = vld [vmem:[%s87 + $0x28] sm:$0xff]
    %v4086 = vadd.f32 %v4064, %v4080
    %v4087 = vadd.f32 %v4067, %v4081
    %v4088 = vadd.f32 %v4070, %v4082
    %v4089 = vadd.f32 %v4073, %v4083
    %v4090 = vadd.f32 %v4076, %v4084
    %v4091 = vadd.f32 %v4079, %v4085
    %v4092 = vld [vmem:[#allocation28] sm:$0xff]
    %v4093 = vld [vmem:[#allocation28 + $0x8] sm:$0xff]
    %v4094 = vld [vmem:[#allocation28 + $0x10] sm:$0xff]
    %v4095 = vld [vmem:[#allocation28 + $0x18] sm:$0xff]
    %v4096 = vld [vmem:[#allocation28 + $0x20] sm:$0xff]
    %v4097 = vld [vmem:[#allocation28 + $0x28] sm:$0xff]
    %v4098 = vld [vmem:[#allocation29] sm:$0xff]
    %v4099 = vld [vmem:[#allocation29 + $0x8] sm:$0xff]
    %v4100 = vld [vmem:[#allocation29 + $0x10] sm:$0xff]
    %v4101 = vld [vmem:[#allocation29 + $0x18] sm:$0xff]
    %v4102 = vld [vmem:[#allocation29 + $0x20] sm:$0xff]
    %v4103 = vld [vmem:[#allocation29 + $0x28] sm:$0xff]
    %v4105 = vsel %vm2035, %v4098, 0
    %v4108 = vsel %vm2035, %v4099, 0
    %v4111 = vsel %vm2035, %v4100, 0
    %v4114 = vsel %vm2035, %v4101, 0
    %v4117 = vsel %vm2035, %v4102, 0
    %v4120 = vsel %vm2035, %v4103, 0
    %4122 = vmatprep.subr.mxu0 0.0
    %4123 = vmatpush1.msra.mxu0 0.0
    %4124 = vmatprep.subr.mxu0 0.0
    %4125 = vmatpush1.msra.mxu0 0.0
    %4126 = vmatprep.subr.mxu0 0.0
    %4127 = vmatpush1.msra.mxu0 0.0
    %4128 = vmatprep.subr.mxu0 0.0
    %4129 = vmatpush1.msra.mxu0 0.0
    %4130 = vmatprep.subr.mxu0 0.0
    %4131 = vmatpush1.msra.mxu0 0.0
    %4132 = vmatprep.subr.mxu0 0.0
    %4133 = vmatpush1.msra.mxu0 0.0
    %4134 = vmatprep.subr.mxu0 0.0
    %4135 = vmatpush1.msra.mxu0 0.0
    %4136 = vmatprep.subr.mxu0 0.0
    %4137 = vmatpush1.msra.mxu0 0.0
    %4138 = vmatprep.subr.mxu0 0.0
    %4139 = vmatpush1.msra.mxu0 0.0
    %4140 = vmatprep.subr.mxu0 0.0
    %4141 = vmatpush1.msra.mxu0 0.0
    %4142 = vmatprep.subr.mxu0 0.0
    %4143 = vmatpush1.msra.mxu0 0.0
    %4144 = vmatprep.subr.mxu0 0.0
    %4145 = vmatpush1.msra.mxu0 0.0
    %4146 = vmatprep.subr.mxu0 0.0
    %4147 = vmatpush1.msra.mxu0 %v2363
    %4148 = vmatprep.subr.mxu0 0.0
    %4149 = vmatpush1.msra.mxu0 %v2358
    %4150 = vmatprep.subr.mxu0 0.0
    %4151 = vmatpush1.msra.mxu0 %v2353
    %4152 = vmatprep.subr.mxu0 0.0
    %4153 = vmatpush1.msra.mxu0 %v2348
    %4154 = vmatprep.subr.mxu0 0.0
    %4155 = vmatpush2.msra.mxu0 0.0
    %4156 = vmatprep.subr.mxu0 0.0
    %4157 = vmatpush2.msra.mxu0 0.0
    %4158 = vmatprep.subr.mxu0 0.0
    %4159 = vmatpush2.msra.mxu0 0.0
    %4160 = vmatprep.subr.mxu0 0.0
    %4161 = vmatpush2.msra.mxu0 0.0
    %4162 = vmatprep.subr.mxu0 0.0
    %4163 = vmatpush2.msra.mxu0 0.0
    %4164 = vmatprep.subr.mxu0 0.0
    %4165 = vmatpush2.msra.mxu0 0.0
    %4166 = vmatprep.subr.mxu0 0.0
    %4167 = vmatpush2.msra.mxu0 0.0
    %4168 = vmatprep.subr.mxu0 0.0
    %4169 = vmatpush2.msra.mxu0 0.0
    %4170 = vmatprep.subr.mxu0 0.0
    %4171 = vmatpush2.msra.mxu0 0.0
    %4172 = vmatprep.subr.mxu0 0.0
    %4173 = vmatpush2.msra.mxu0 0.0
    %4174 = vmatprep.subr.mxu0 0.0
    %4175 = vmatpush2.msra.mxu0 0.0
    %4176 = vmatprep.subr.mxu0 0.0
    %4177 = vmatpush2.msra.mxu0 0.0
    %4178 = vmatprep.subr.mxu0 0.0
    %4179 = vmatpush2.msra.mxu0 0.0
    %4180 = vmatprep.subr.mxu0 0.0
    %4181 = vmatpush2.msra.mxu0 0.0
    %4182 = vmatprep.subr.mxu0 0.0
    %4183 = vmatpush2.msra.mxu0 0.0
    %4184 = vmatprep.subr.mxu0 0.0
    %4185 = vmatpush2.msra.mxu0 0.0
    %4186 = vmatprep.mubr.f32.mxu0 0.0
    %4187 = vmatmul.mubr.f32.gmra.mxu0 %v4105
    %v4188 = vpop.f32.mrf.mxu0
    %v4189 = vadd.f32 0.0, %v4188
    %v4190 = vpop.f32.mrf.mxu0
    %4191 = vmatprep.mubr.f32.mxu0 0.0
    %4192 = vmatmul.mubr.f32.gmra.mxu0 %v4108
    %v4193 = vpop.f32.mrf.mxu0
    %v4194 = vadd.f32 0.0, %v4193
    %v4195 = vpop.f32.mrf.mxu0
    %4196 = vmatprep.mubr.f32.mxu0 0.0
    %4197 = vmatmul.mubr.f32.gmra.mxu0 %v4111
    %v4198 = vpop.f32.mrf.mxu0
    %v4199 = vadd.f32 0.0, %v4198
    %v4200 = vpop.f32.mrf.mxu0
    %4201 = vmatprep.mubr.f32.mxu0 0.0
    %4202 = vmatmul.mubr.f32.gmra.mxu0 %v4114
    %v4203 = vpop.f32.mrf.mxu0
    %v4204 = vadd.f32 0.0, %v4203
    %v4205 = vpop.f32.mrf.mxu0
    %4206 = vmatprep.mubr.f32.mxu0 0.0
    %4207 = vmatmul.mubr.f32.gmra.mxu0 %v4117
    %v4208 = vpop.f32.mrf.mxu0
    %v4209 = vadd.f32 0.0, %v4208
    %v4210 = vpop.f32.mrf.mxu0
    %4211 = vmatprep.mubr.f32.mxu0 0.0
    %4212 = vmatmul.mubr.f32.gmra.mxu0 %v4120
    %v4213 = vpop.f32.mrf.mxu0
    %v4214 = vadd.f32 0.0, %v4213
    %v4215 = vpop.f32.mrf.mxu0
    %4216 = vdwg.mxu0
    %4218 = vset.pattern.permute.xlu0 0
    %4219 = vperm.xlu0 %4218, %v4086
    %v4220 = vpop.permute.xlu0 %4219
    %4223 = vset.pattern.permute.xlu0 0
    %4224 = vperm.xlu0 %4223, %v4087
    %v4225 = vpop.permute.xlu0 %4224
    %4228 = vset.pattern.permute.xlu0 0
    %4229 = vperm.xlu0 %4228, %v4088
    %v4230 = vpop.permute.xlu0 %4229
    %4233 = vset.pattern.permute.xlu0 0
    %4234 = vperm.xlu0 %4233, %v4089
    %v4235 = vpop.permute.xlu0 %4234
    %4238 = vset.pattern.permute.xlu0 0
    %4239 = vperm.xlu0 %4238, %v4090
    %v4240 = vpop.permute.xlu0 %4239
    %4243 = vset.pattern.permute.xlu0 0
    %4244 = vperm.xlu0 %4243, %v4091
    %v4245 = vpop.permute.xlu0 %4244
    %v4247 = vmul.f32 %v4189, %v4220
    %v4248 = vmul.f32 %v4194, %v4225
    %v4249 = vmul.f32 %v4199, %v4230
    %v4250 = vmul.f32 %v4204, %v4235
    %v4251 = vmul.f32 %v4209, %v4240
    %v4252 = vmul.f32 %v4214, %v4245
    %v4254 = vsel %vm460, %v4092, 0
    %v4257 = vsel %vm460, %v4093, 0
    %v4260 = vsel %vm460, %v4094, 0
    %v4263 = vsel %vm460, %v4095, 0
    %v4266 = vsel %vm460, %v4096, 0
    %v4269 = vsel %vm460, %v4097, 0
    %4271 = vmatprep.subr.mxu0 0.0
    %4272 = vmatpush1.msra.mxu0 0.0
    %4273 = vmatprep.subr.mxu0 0.0
    %4274 = vmatpush1.msra.mxu0 0.0
    %4275 = vmatprep.subr.mxu0 0.0
    %4276 = vmatpush1.msra.mxu0 0.0
    %4277 = vmatprep.subr.mxu0 0.0
    %4278 = vmatpush1.msra.mxu0 %v472
    %4279 = vmatprep.subr.mxu0 0.0
    %4280 = vmatpush1.msra.mxu0 %v455
    %4281 = vmatprep.subr.mxu0 0.0
    %4282 = vmatpush1.msra.mxu0 %v454
    %4283 = vmatprep.subr.mxu0 0.0
    %4284 = vmatpush1.msra.mxu0 %v453
    %4285 = vmatprep.subr.mxu0 0.0
    %4286 = vmatpush1.msra.mxu0 %v452
    %4287 = vmatprep.subr.mxu0 0.0
    %4288 = vmatpush1.msra.mxu0 %v451
    %4289 = vmatprep.subr.mxu0 0.0
    %4290 = vmatpush1.msra.mxu0 %v450
    %4291 = vmatprep.subr.mxu0 0.0
    %4292 = vmatpush1.msra.mxu0 %v449
    %4293 = vmatprep.subr.mxu0 0.0
    %4294 = vmatpush1.msra.mxu0 %v448
    %4295 = vmatprep.subr.mxu0 0.0
    %4296 = vmatpush1.msra.mxu0 %v447
    %4297 = vmatprep.subr.mxu0 0.0
    %4298 = vmatpush1.msra.mxu0 %v446
    %4299 = vmatprep.subr.mxu0 0.0
    %4300 = vmatpush1.msra.mxu0 %v445
    %4301 = vmatprep.subr.mxu0 0.0
    %4302 = vmatpush1.msra.mxu0 %v444
    %4303 = vmatprep.subr.mxu0 0.0
    %4304 = vmatpush2.msra.mxu0 0.0
    %4305 = vmatprep.subr.mxu0 0.0
    %4306 = vmatpush2.msra.mxu0 0.0
    %4307 = vmatprep.subr.mxu0 0.0
    %4308 = vmatpush2.msra.mxu0 0.0
    %4309 = vmatprep.subr.mxu0 0.0
    %4310 = vmatpush2.msra.mxu0 0.0
    %4311 = vmatprep.subr.mxu0 0.0
    %4312 = vmatpush2.msra.mxu0 0.0
    %4313 = vmatprep.subr.mxu0 0.0
    %4314 = vmatpush2.msra.mxu0 0.0
    %4315 = vmatprep.subr.mxu0 0.0
    %4316 = vmatpush2.msra.mxu0 0.0
    %4317 = vmatprep.subr.mxu0 0.0
    %4318 = vmatpush2.msra.mxu0 0.0
    %4319 = vmatprep.subr.mxu0 0.0
    %4320 = vmatpush2.msra.mxu0 0.0
    %4321 = vmatprep.subr.mxu0 0.0
    %4322 = vmatpush2.msra.mxu0 0.0
    %4323 = vmatprep.subr.mxu0 0.0
    %4324 = vmatpush2.msra.mxu0 0.0
    %4325 = vmatprep.subr.mxu0 0.0
    %4326 = vmatpush2.msra.mxu0 0.0
    %4327 = vmatprep.subr.mxu0 0.0
    %4328 = vmatpush2.msra.mxu0 0.0
    %4329 = vmatprep.subr.mxu0 0.0
    %4330 = vmatpush2.msra.mxu0 0.0
    %4331 = vmatprep.subr.mxu0 0.0
    %4332 = vmatpush2.msra.mxu0 0.0
    %4333 = vmatprep.subr.mxu0 0.0
    %4334 = vmatpush2.msra.mxu0 0.0
    %4335 = vmatprep.mubr.f32.mxu0 0.0
    %4336 = vmatmul.mubr.f32.gmra.mxu0 %v4254
    %v4337 = vpop.f32.mrf.mxu0
    %v4338 = vadd.f32 %v4247, %v4337
    %v4339 = vpop.f32.mrf.mxu0
    %4340 = vmatprep.mubr.f32.mxu0 0.0
    %4341 = vmatmul.mubr.f32.gmra.mxu0 %v4257
    %v4342 = vpop.f32.mrf.mxu0
    %v4343 = vadd.f32 %v4248, %v4342
    %v4344 = vpop.f32.mrf.mxu0
    %4345 = vmatprep.mubr.f32.mxu0 0.0
    %4346 = vmatmul.mubr.f32.gmra.mxu0 %v4260
    %v4347 = vpop.f32.mrf.mxu0
    %v4348 = vadd.f32 %v4249, %v4347
    %v4349 = vpop.f32.mrf.mxu0
    %4350 = vmatprep.mubr.f32.mxu0 0.0
    %4351 = vmatmul.mubr.f32.gmra.mxu0 %v4263
    %v4352 = vpop.f32.mrf.mxu0
    %v4353 = vadd.f32 %v4250, %v4352
    %v4354 = vpop.f32.mrf.mxu0
    %4355 = vmatprep.mubr.f32.mxu0 0.0
    %4356 = vmatmul.mubr.f32.gmra.mxu0 %v4266
    %v4357 = vpop.f32.mrf.mxu0
    %v4358 = vadd.f32 %v4251, %v4357
    %v4359 = vpop.f32.mrf.mxu0
    %4360 = vmatprep.mubr.f32.mxu0 0.0
    %4361 = vmatmul.mubr.f32.gmra.mxu0 %v4269
    %v4362 = vpop.f32.mrf.mxu0
    %v4363 = vadd.f32 %v4252, %v4362
    %v4364 = vpop.f32.mrf.mxu0
    %4365 = vdwg.mxu0
    %v4366 = vld [vmem:[#allocation5] sm:$0xff]
    %v4367 = vld [vmem:[#allocation5 + $0x8] sm:$0xff]
    %v4368 = vld [vmem:[#allocation5 + $0x10] sm:$0xff]
    %v4369 = vld [vmem:[#allocation5 + $0x18] sm:$0xff]
    %v4370 = vld [vmem:[#allocation5 + $0x20] sm:$0xff]
    %v4371 = vld [vmem:[#allocation5 + $0x28] sm:$0xff]
    %v4372 = vld [vmem:[#allocation5 + $0x30] sm:$0x3]
    %v4373 = vld [vmem:[%s9] sm:$0xff]
    %v4374 = vld [vmem:[%s9 + $0x8] sm:$0xff]
    %v4375 = vld [vmem:[%s9 + $0x10] sm:$0xff]
    %v4376 = vld [vmem:[%s9 + $0x18] sm:$0xff]
    %v4377 = vld [vmem:[%s9 + $0x20] sm:$0xff]
    %v4378 = vld [vmem:[%s9 + $0x28] sm:$0xff]
    %v4379 = vld [vmem:[%s9 + $0x30] sm:$0x3]
    %vm4380 = vcmask 392192
    %v4382 = vsel %vm4380, %v4366, 0
    %v4385 = vsel %vm4380, %v4367, 0
    %v4388 = vsel %vm4380, %v4368, 0
    %v4391 = vsel %vm4380, %v4369, 0
    %v4394 = vsel %vm4380, %v4370, 0
    %v4397 = vsel %vm4380, %v4371, 0
    %v4400 = vsel %vm4380, %v4372, 0
    %4402 = vmatprep.subr.mxu0 0.0
    %4403 = vmatpush1.msra.mxu0 0.0
    %4404 = vmatprep.subr.mxu0 0.0
    %4405 = vmatpush1.msra.mxu0 0.0
    %4406 = vmatprep.subr.mxu0 0.0
    %4407 = vmatpush1.msra.mxu0 0.0
    %4408 = vmatprep.subr.mxu0 0.0
    %4409 = vmatpush1.msra.mxu0 0.0
    %4410 = vmatprep.subr.mxu0 0.0
    %4411 = vmatpush1.msra.mxu0 0.0
    %4412 = vmatprep.subr.mxu0 0.0
    %4413 = vmatpush1.msra.mxu0 0.0
    %4414 = vmatprep.subr.mxu0 0.0
    %4415 = vmatpush1.msra.mxu0 0.0
    %4416 = vmatprep.subr.mxu0 0.0
    %4417 = vmatpush1.msra.mxu0 0.0
    %4418 = vmatprep.subr.mxu0 0.0
    %4419 = vmatpush1.msra.mxu0 0.0
    %4420 = vmatprep.subr.mxu0 0.0
    %4421 = vmatpush1.msra.mxu0 0.0
    %4422 = vmatprep.subr.mxu0 0.0
    %4423 = vmatpush1.msra.mxu0 %v4363
    %4424 = vmatprep.subr.mxu0 0.0
    %4425 = vmatpush1.msra.mxu0 %v4358
    %4426 = vmatprep.subr.mxu0 0.0
    %4427 = vmatpush1.msra.mxu0 %v4353
    %4428 = vmatprep.subr.mxu0 0.0
    %4429 = vmatpush1.msra.mxu0 %v4348
    %4430 = vmatprep.subr.mxu0 0.0
    %4431 = vmatpush1.msra.mxu0 %v4343
    %4432 = vmatprep.subr.mxu0 0.0
    %4433 = vmatpush1.msra.mxu0 %v4338
    %4434 = vmatprep.subr.mxu0 0.0
    %4435 = vmatpush2.msra.mxu0 0.0
    %4436 = vmatprep.subr.mxu0 0.0
    %4437 = vmatpush2.msra.mxu0 0.0
    %4438 = vmatprep.subr.mxu0 0.0
    %4439 = vmatpush2.msra.mxu0 0.0
    %4440 = vmatprep.subr.mxu0 0.0
    %4441 = vmatpush2.msra.mxu0 0.0
    %4442 = vmatprep.subr.mxu0 0.0
    %4443 = vmatpush2.msra.mxu0 0.0
    %4444 = vmatprep.subr.mxu0 0.0
    %4445 = vmatpush2.msra.mxu0 0.0
    %4446 = vmatprep.subr.mxu0 0.0
    %4447 = vmatpush2.msra.mxu0 0.0
    %4448 = vmatprep.subr.mxu0 0.0
    %4449 = vmatpush2.msra.mxu0 0.0
    %4450 = vmatprep.subr.mxu0 0.0
    %4451 = vmatpush2.msra.mxu0 0.0
    %4452 = vmatprep.subr.mxu0 0.0
    %4453 = vmatpush2.msra.mxu0 0.0
    %4454 = vmatprep.subr.mxu0 0.0
    %4455 = vmatpush2.msra.mxu0 0.0
    %4456 = vmatprep.subr.mxu0 0.0
    %4457 = vmatpush2.msra.mxu0 0.0
    %4458 = vmatprep.subr.mxu0 0.0
    %4459 = vmatpush2.msra.mxu0 0.0
    %4460 = vmatprep.subr.mxu0 0.0
    %4461 = vmatpush2.msra.mxu0 0.0
    %4462 = vmatprep.subr.mxu0 0.0
    %4463 = vmatpush2.msra.mxu0 0.0
    %4464 = vmatprep.subr.mxu0 0.0
    %4465 = vmatpush2.msra.mxu0 0.0
    %4466 = vmatprep.mubr.f32.mxu0 0.0
    %4467 = vmatmul.mubr.f32.gmra.mxu0 %v4382
    %v4468 = vpop.f32.mrf.mxu0
    %v4469 = vadd.f32 %v4373, %v4468
    %v4470 = vpop.f32.mrf.mxu0
    %4471 = vmatprep.mubr.f32.mxu0 0.0
    %4472 = vmatmul.mubr.f32.gmra.mxu0 %v4385
    %v4473 = vpop.f32.mrf.mxu0
    %v4474 = vadd.f32 %v4374, %v4473
    %v4475 = vpop.f32.mrf.mxu0
    %4476 = vmatprep.mubr.f32.mxu0 0.0
    %4477 = vmatmul.mubr.f32.gmra.mxu0 %v4388
    %v4478 = vpop.f32.mrf.mxu0
    %v4479 = vadd.f32 %v4375, %v4478
    %v4480 = vpop.f32.mrf.mxu0
    %4481 = vmatprep.mubr.f32.mxu0 0.0
    %4482 = vmatmul.mubr.f32.gmra.mxu0 %v4391
    %v4483 = vpop.f32.mrf.mxu0
    %v4484 = vadd.f32 %v4376, %v4483
    %v4485 = vpop.f32.mrf.mxu0
    %4486 = vmatprep.mubr.f32.mxu0 0.0
    %4487 = vmatmul.mubr.f32.gmra.mxu0 %v4394
    %v4488 = vpop.f32.mrf.mxu0
    %v4489 = vadd.f32 %v4377, %v4488
    %v4490 = vpop.f32.mrf.mxu0
    %4491 = vmatprep.mubr.f32.mxu0 0.0
    %4492 = vmatmul.mubr.f32.gmra.mxu0 %v4397
    %v4493 = vpop.f32.mrf.mxu0
    %v4494 = vadd.f32 %v4378, %v4493
    %v4495 = vpop.f32.mrf.mxu0
    %4496 = vmatprep.mubr.f32.mxu0 0.0
    %4497 = vmatmul.mubr.f32.gmra.mxu0 %v4400
    %v4498 = vpop.f32.mrf.mxu0
    %v4499 = vadd.f32 %v4379, %v4498
    %v4500 = vpop.f32.mrf.mxu0
    %4501 = vdwg.mxu0
    %v4502 = vld [vmem:[#allocation2] sm:$0xff]
    %v4503 = vld [vmem:[#allocation2 + $0x8] sm:$0xff]
    %v4504 = vld [vmem:[#allocation2 + $0x10] sm:$0xff]
    %v4505 = vld [vmem:[#allocation2 + $0x18] sm:$0xff]
    %v4506 = vld [vmem:[#allocation2 + $0x20] sm:$0xff]
    %v4507 = vld [vmem:[#allocation2 + $0x28] sm:$0xff]
    %v4508 = vld [vmem:[#allocation2 + $0x30] sm:$0x3]
    loop: start=0, step=1, limit=2
    $region280: #{_lambda_.1} parent=1 // loop_pre_header
      _
    $region281: #{_lambda_.1} parent=1 // loop_header
      %s4510 = sphi 0, %s4514
      %p4511 = scmp.ge.s32.totalorder %s4510, 2
      %v4515 = vphi %v4469, %v7010
      %v4516 = vphi %v4474, %v7011
      %v4517 = vphi %v4479, %v7012
      %v4518 = vphi %v4484, %v7013
      %v4519 = vphi %v4489, %v7014
      %v4520 = vphi %v4494, %v7015
      %v4521 = vphi %v4499, %v7016
    $region282: #{_lambda_.1} parent=1 // loop_header_branch
      %4513 = sbr.rel (%p4511) target = $region286
    $region283: #{_lambda_.1} parent=1 // loop_body
      %s4522 = scalar_lea.vmem %s11, %s4510
      %v4523 = vld [vmem:[%s4522] sm:$0x1]
      %s4524 = scalar_lea.vmem %s13, %s4510
      %v4525 = vld [vmem:[%s4524] sm:$0x1]
      %v4526 = vsel %vm2035, %v4515, 0.0
      %4527 = vadd.xlane.f32.xlu0 %v4526
      %v4528 = vpop.xlane.xlu0 %4527
      %v4529 = vsel %vm2035, %v4516, 0.0
      %4530 = vadd.xlane.f32.xlu0 %v4529
      %v4531 = vpop.xlane.xlu0 %4530
      %v4532 = vsel %vm2035, %v4517, 0.0
      %4533 = vadd.xlane.f32.xlu0 %v4532
      %v4534 = vpop.xlane.xlu0 %4533
      %v4535 = vsel %vm2035, %v4518, 0.0
      %4536 = vadd.xlane.f32.xlu0 %v4535
      %v4537 = vpop.xlane.xlu0 %4536
      %v4538 = vsel %vm2035, %v4519, 0.0
      %4539 = vadd.xlane.f32.xlu0 %v4538
      %v4540 = vpop.xlane.xlu0 %4539
      %v4541 = vsel %vm2035, %v4520, 0.0
      %4542 = vadd.xlane.f32.xlu0 %v4541
      %v4543 = vpop.xlane.xlu0 %4542
      %vm4544 = vcmask 254976
      %v4545 = vsel %vm4544, %v4521, 0.0
      %4546 = vadd.xlane.f32.xlu0 %v4545
      %v4547 = vpop.xlane.xlu0 %4546
      %v4548 = vmul.f32 %v4528, %v2048
      %v4549 = vmul.f32 %v4531, %v2048
      %v4550 = vmul.f32 %v4534, %v2048
      %v4551 = vmul.f32 %v4537, %v2048
      %v4552 = vmul.f32 %v4540, %v2048
      %v4553 = vmul.f32 %v4543, %v2048
      %v4554 = vmul.f32 %v4547, %v2048
      %v4555 = vsub.f32 %v4515, %v4548
      %v4556 = vsub.f32 %v4516, %v4549
      %v4557 = vsub.f32 %v4517, %v4550
      %v4558 = vsub.f32 %v4518, %v4551
      %v4559 = vsub.f32 %v4519, %v4552
      %v4560 = vsub.f32 %v4520, %v4553
      %v4561 = vsub.f32 %v4521, %v4554
      %v4562 = vmul.f32 %v4555, %v4555
      %v4563 = vmul.f32 %v4556, %v4556
      %v4564 = vmul.f32 %v4557, %v4557
      %v4565 = vmul.f32 %v4558, %v4558
      %v4566 = vmul.f32 %v4559, %v4559
      %v4567 = vmul.f32 %v4560, %v4560
      %v4568 = vmul.f32 %v4561, %v4561
      %v4569 = vsel %vm2035, %v4562, 0.0
      %4570 = vadd.xlane.f32.xlu0 %v4569
      %v4571 = vpop.xlane.xlu0 %4570
      %v4572 = vsel %vm2035, %v4563, 0.0
      %4573 = vadd.xlane.f32.xlu0 %v4572
      %v4574 = vpop.xlane.xlu0 %4573
      %v4575 = vsel %vm2035, %v4564, 0.0
      %4576 = vadd.xlane.f32.xlu0 %v4575
      %v4577 = vpop.xlane.xlu0 %4576
      %v4578 = vsel %vm2035, %v4565, 0.0
      %4579 = vadd.xlane.f32.xlu0 %v4578
      %v4580 = vpop.xlane.xlu0 %4579
      %v4581 = vsel %vm2035, %v4566, 0.0
      %4582 = vadd.xlane.f32.xlu0 %v4581
      %v4583 = vpop.xlane.xlu0 %4582
      %v4584 = vsel %vm2035, %v4567, 0.0
      %4585 = vadd.xlane.f32.xlu0 %v4584
      %v4586 = vpop.xlane.xlu0 %4585
      %v4587 = vsel %vm4544, %v4568, 0.0
      %4588 = vadd.xlane.f32.xlu0 %v4587
      %v4589 = vpop.xlane.xlu0 %4588
      %v4590 = vmul.f32 %v4571, %v2048
      %v4591 = vmul.f32 %v4574, %v2048
      %v4592 = vmul.f32 %v4577, %v2048
      %v4593 = vmul.f32 %v4580, %v2048
      %v4594 = vmul.f32 %v4583, %v2048
      %v4595 = vmul.f32 %v4586, %v2048
      %v4596 = vmul.f32 %v4589, %v2048
      %v4597 = vadd.f32 %v4590, 1e-05
      %v4598 = vadd.f32 %v4591, 1e-05
      %v4599 = vadd.f32 %v4592, 1e-05
      %v4600 = vadd.f32 %v4593, 1e-05
      %v4601 = vadd.f32 %v4594, 1e-05
      %v4602 = vadd.f32 %v4595, 1e-05
      %v4603 = vadd.f32 %v4596, 1e-05
      %v4604 = vrsqrt.pop %v4597
      %v4605 = vrsqrt.pop %v4598
      %v4606 = vrsqrt.pop %v4599
      %v4607 = vrsqrt.pop %v4600
      %v4608 = vrsqrt.pop %v4601
      %v4609 = vrsqrt.pop %v4602
      %v4610 = vrsqrt.pop %v4603
      %v4611 = vmul.f32 %v4555, %v4604
      %v4612 = vmul.f32 %v4556, %v4605
      %v4613 = vmul.f32 %v4557, %v4606
      %v4614 = vmul.f32 %v4558, %v4607
      %v4615 = vmul.f32 %v4559, %v4608
      %v4616 = vmul.f32 %v4560, %v4609
      %v4617 = vmul.f32 %v4561, %v4610
      %v4619 = vlaneseq
      %v4620 = vshrl.u32 %v4619, 7
      %v4621 = vsub.s32 0, %v4620
      %v4622 = vrot.slane %v4523, %v4621
      %v4624 = vmul.f32 %v4611, %v4622
      %v4625 = vmul.f32 %v4612, %v4622
      %v4626 = vmul.f32 %v4613, %v4622
      %v4627 = vmul.f32 %v4614, %v4622
      %v4628 = vmul.f32 %v4615, %v4622
      %v4629 = vmul.f32 %v4616, %v4622
      %v4630 = vmul.f32 %v4617, %v4622
      %v4632 = vlaneseq
      %v4633 = vshrl.u32 %v4632, 7
      %v4634 = vsub.s32 0, %v4633
      %v4635 = vrot.slane %v4525, %v4634
      %v4637 = vadd.f32 %v4624, %v4635
      %v4638 = vadd.f32 %v4625, %v4635
      %v4639 = vadd.f32 %v4626, %v4635
      %v4640 = vadd.f32 %v4627, %v4635
      %v4641 = vadd.f32 %v4628, %v4635
      %v4642 = vadd.f32 %v4629, %v4635
      %v4643 = vadd.f32 %v4630, %v4635
      %v4644 = vpack.c.bf16 %v4638, %v4637
      %v4645 = vpack.c.bf16 %v4640, %v4639
      %v4646 = vpack.c.bf16 %v4642, %v4641
      %v4647 = vpack.c.bf16 %v4643, %v4643
      %s4648 = smul.u32 %s4510, 24
      %s4649 = smul.addr %s4648, 4
      %s4650 = scalar_lea.vmem [#allocation7], %s4649
      %v4651 = vld [vmem:[%s4650] sm:$0xff]
      %v4652 = vld [vmem:[%s4650 + $0x8] sm:$0xff]
      %v4653 = vld [vmem:[%s4650 + $0x10] sm:$0xff]
      %v4654 = vld [vmem:[%s4650 + $0x18] sm:$0xff]
      %v4655 = vld [vmem:[%s4650 + $0x20] sm:$0xff]
      %v4656 = vld [vmem:[%s4650 + $0x28] sm:$0xff]
      %v4657 = vld [vmem:[%s4650 + $0x30] sm:$0xff]
      %v4658 = vld [vmem:[%s4650 + $0x38] sm:$0xff]
      %v4659 = vld [vmem:[%s4650 + $0x40] sm:$0xff]
      %v4660 = vld [vmem:[%s4650 + $0x48] sm:$0xff]
      %v4661 = vld [vmem:[%s4650 + $0x50] sm:$0xff]
      %v4662 = vld [vmem:[%s4650 + $0x58] sm:$0xff]
      %v4675 = vunpack.c.l.b16 %v4651
      %v4676 = vunpack.c.h.b16 %v4651
      %v4677 = vunpack.c.l.b16 %v4652
      %v4678 = vunpack.c.h.b16 %v4652
      %v4679 = vunpack.c.l.b16 %v4653
      %v4680 = vunpack.c.h.b16 %v4653
      %v4681 = vunpack.c.l.b16 %v4654
      %v4682 = vunpack.c.h.b16 %v4654
      %v4683 = vunpack.c.l.b16 %v4655
      %v4684 = vunpack.c.h.b16 %v4655
      %v4685 = vunpack.c.l.b16 %v4656
      %v4686 = vunpack.c.h.b16 %v4656
      %v4687 = vunpack.c.l.b16 %v4657
      %v4688 = vunpack.c.h.b16 %v4657
      %v4689 = vunpack.c.l.b16 %v4658
      %v4690 = vunpack.c.h.b16 %v4658
      %v4691 = vunpack.c.l.b16 %v4659
      %v4692 = vunpack.c.h.b16 %v4659
      %v4693 = vunpack.c.l.b16 %v4660
      %v4694 = vunpack.c.h.b16 %v4660
      %v4695 = vunpack.c.l.b16 %v4661
      %v4696 = vunpack.c.h.b16 %v4661
      %v4697 = vunpack.c.l.b16 %v4662
      %v4698 = vunpack.c.h.b16 %v4662
      %v4699 = vpack.c.b16 %v4681, %v4675
      %v4700 = vpack.c.b16 %v4682, %v4676
      %v4701 = vpack.c.b16 %v4683, %v4677
      %v4702 = vpack.c.b16 %v4684, %v4678
      %v4703 = vpack.c.b16 %v4685, %v4679
      %v4704 = vpack.c.b16 %v4686, %v4680
      %v4705 = vpack.c.b16 %v4693, %v4687
      %v4706 = vpack.c.b16 %v4694, %v4688
      %v4707 = vpack.c.b16 %v4695, %v4689
      %v4708 = vpack.c.b16 %v4696, %v4690
      %v4709 = vpack.c.b16 %v4697, %v4691
      %v4710 = vpack.c.b16 %v4698, %v4692
      %v4724 = vsel %vm2035, %v4644, 0
      %v4727 = vsel %vm2035, %v4645, 0
      %v4730 = vsel %vm2035, %v4646, 0
      %v4733 = vsel %vm2035, %v4647, 0
      %4735 = vmatprep.subr.bf16.mxu0 0
      %4736 = vmatpush1.bf16.msra.mxu0 0
      %4737 = vmatprep.subr.bf16.mxu0 0
      %4738 = vmatpush1.bf16.msra.mxu0 0
      %4739 = vmatprep.subr.bf16.mxu0 0
      %4740 = vmatpush1.bf16.msra.mxu0 0
      %4741 = vmatprep.subr.bf16.mxu0 0
      %4742 = vmatpush1.bf16.msra.mxu0 0
      %4743 = vmatprep.subr.bf16.mxu0 0
      %4744 = vmatpush1.bf16.msra.mxu0 0
      %4745 = vmatprep.subr.bf16.mxu0 0
      %4746 = vmatpush1.bf16.msra.mxu0 0
      %4747 = vmatprep.subr.bf16.mxu0 %v4706
      %4748 = vmatpush1.bf16.msra.mxu0 %v4705
      %4749 = vmatprep.subr.bf16.mxu0 %v4700
      %4750 = vmatpush1.bf16.msra.mxu0 %v4699
      %4751 = vmatprep.subr.bf16.mxu0 0
      %4752 = vmatpush2.bf16.msra.mxu0 0
      %4753 = vmatprep.subr.bf16.mxu0 0
      %4754 = vmatpush2.bf16.msra.mxu0 0
      %4755 = vmatprep.subr.bf16.mxu0 0
      %4756 = vmatpush2.bf16.msra.mxu0 0
      %4757 = vmatprep.subr.bf16.mxu0 0
      %4758 = vmatpush2.bf16.msra.mxu0 0
      %4759 = vmatprep.subr.bf16.mxu0 0
      %4760 = vmatpush2.bf16.msra.mxu0 0
      %4761 = vmatprep.subr.bf16.mxu0 0
      %4762 = vmatpush2.bf16.msra.mxu0 0
      %4763 = vmatprep.subr.bf16.mxu0 0
      %4764 = vmatpush2.bf16.msra.mxu0 0
      %4765 = vmatprep.subr.bf16.mxu0 0
      %4766 = vmatpush2.bf16.msra.mxu0 0
      %4767 = vmatprep.mubr.bf16.mxu0 0
      %4768 = vmatmul.mubr.bf16.gmra.mxu0 %v4724
      %v4769 = vpop.f32.mrf.mxu0
      %v4770 = vadd.f32 0.0, %v4769
      %v4771 = vpop.f32.mrf.mxu0
      %v4772 = vadd.f32 0.0, %v4771
      %v4773 = vpop.f32.mrf.mxu0
      %v4774 = vadd.f32 0.0, %v4773
      %v4775 = vpop.f32.mrf.mxu0
      %v4776 = vadd.f32 0.0, %v4775
      %4777 = vmatprep.mubr.bf16.mxu0 0
      %4778 = vmatmul.mubr.bf16.gmra.mxu0 %v4727
      %v4779 = vpop.f32.mrf.mxu0
      %v4780 = vadd.f32 0.0, %v4779
      %v4781 = vpop.f32.mrf.mxu0
      %v4782 = vadd.f32 0.0, %v4781
      %v4783 = vpop.f32.mrf.mxu0
      %v4784 = vadd.f32 0.0, %v4783
      %v4785 = vpop.f32.mrf.mxu0
      %v4786 = vadd.f32 0.0, %v4785
      %4787 = vmatprep.mubr.bf16.mxu0 0
      %4788 = vmatmul.mubr.bf16.gmra.mxu0 %v4730
      %v4789 = vpop.f32.mrf.mxu0
      %v4790 = vadd.f32 0.0, %v4789
      %v4791 = vpop.f32.mrf.mxu0
      %v4792 = vadd.f32 0.0, %v4791
      %v4793 = vpop.f32.mrf.mxu0
      %v4794 = vadd.f32 0.0, %v4793
      %v4795 = vpop.f32.mrf.mxu0
      %v4796 = vadd.f32 0.0, %v4795
      %4797 = vmatprep.mubr.bf16.mxu0 0
      %4798 = vmatmul.mubr.bf16.gmra.mxu0 %v4733
      %v4799 = vpop.f32.mrf.mxu0
      %v4800 = vadd.f32 0.0, %v4799
      %v4801 = vpop.f32.mrf.mxu0
      %v4802 = vadd.f32 0.0, %v4801
      %v4803 = vpop.f32.mrf.mxu0
      %v4804 = vpop.f32.mrf.mxu0
      %4805 = vdwg.mxu0
      %4806 = vmatprep.subr.bf16.mxu0 0
      %4807 = vmatpush1.bf16.msra.mxu0 0
      %4808 = vmatprep.subr.bf16.mxu0 0
      %4809 = vmatpush1.bf16.msra.mxu0 0
      %4810 = vmatprep.subr.bf16.mxu0 0
      %4811 = vmatpush1.bf16.msra.mxu0 0
      %4812 = vmatprep.subr.bf16.mxu0 0
      %4813 = vmatpush1.bf16.msra.mxu0 0
      %4814 = vmatprep.subr.bf16.mxu0 0
      %4815 = vmatpush1.bf16.msra.mxu0 0
      %4816 = vmatprep.subr.bf16.mxu0 0
      %4817 = vmatpush1.bf16.msra.mxu0 0
      %4818 = vmatprep.subr.bf16.mxu0 %v4708
      %4819 = vmatpush1.bf16.msra.mxu0 %v4707
      %4820 = vmatprep.subr.bf16.mxu0 %v4702
      %4821 = vmatpush1.bf16.msra.mxu0 %v4701
      %4822 = vmatprep.subr.bf16.mxu0 0
      %4823 = vmatpush2.bf16.msra.mxu0 0
      %4824 = vmatprep.subr.bf16.mxu0 0
      %4825 = vmatpush2.bf16.msra.mxu0 0
      %4826 = vmatprep.subr.bf16.mxu0 0
      %4827 = vmatpush2.bf16.msra.mxu0 0
      %4828 = vmatprep.subr.bf16.mxu0 0
      %4829 = vmatpush2.bf16.msra.mxu0 0
      %4830 = vmatprep.subr.bf16.mxu0 0
      %4831 = vmatpush2.bf16.msra.mxu0 0
      %4832 = vmatprep.subr.bf16.mxu0 0
      %4833 = vmatpush2.bf16.msra.mxu0 0
      %4834 = vmatprep.subr.bf16.mxu0 0
      %4835 = vmatpush2.bf16.msra.mxu0 0
      %4836 = vmatprep.subr.bf16.mxu0 0
      %4837 = vmatpush2.bf16.msra.mxu0 0
      %4838 = vmatprep.mubr.bf16.mxu0 0
      %4839 = vmatmul.mubr.bf16.gmra.mxu0 %v4724
      %v4840 = vpop.f32.mrf.mxu0
      %v4841 = vadd.f32 0.0, %v4840
      %v4842 = vpop.f32.mrf.mxu0
      %v4843 = vadd.f32 0.0, %v4842
      %v4844 = vpop.f32.mrf.mxu0
      %v4845 = vadd.f32 0.0, %v4844
      %v4846 = vpop.f32.mrf.mxu0
      %v4847 = vadd.f32 0.0, %v4846
      %4848 = vmatprep.mubr.bf16.mxu0 0
      %4849 = vmatmul.mubr.bf16.gmra.mxu0 %v4727
      %v4850 = vpop.f32.mrf.mxu0
      %v4851 = vadd.f32 0.0, %v4850
      %v4852 = vpop.f32.mrf.mxu0
      %v4853 = vadd.f32 0.0, %v4852
      %v4854 = vpop.f32.mrf.mxu0
      %v4855 = vadd.f32 0.0, %v4854
      %v4856 = vpop.f32.mrf.mxu0
      %v4857 = vadd.f32 0.0, %v4856
      %4858 = vmatprep.mubr.bf16.mxu0 0
      %4859 = vmatmul.mubr.bf16.gmra.mxu0 %v4730
      %v4860 = vpop.f32.mrf.mxu0
      %v4861 = vadd.f32 0.0, %v4860
      %v4862 = vpop.f32.mrf.mxu0
      %v4863 = vadd.f32 0.0, %v4862
      %v4864 = vpop.f32.mrf.mxu0
      %v4865 = vadd.f32 0.0, %v4864
      %v4866 = vpop.f32.mrf.mxu0
      %v4867 = vadd.f32 0.0, %v4866
      %4868 = vmatprep.mubr.bf16.mxu0 0
      %4869 = vmatmul.mubr.bf16.gmra.mxu0 %v4733
      %v4870 = vpop.f32.mrf.mxu0
      %v4871 = vadd.f32 0.0, %v4870
      %v4872 = vpop.f32.mrf.mxu0
      %v4873 = vadd.f32 0.0, %v4872
      %v4874 = vpop.f32.mrf.mxu0
      %v4875 = vpop.f32.mrf.mxu0
      %4876 = vdwg.mxu0
      %4877 = vmatprep.subr.bf16.mxu0 0
      %4878 = vmatpush1.bf16.msra.mxu0 0
      %4879 = vmatprep.subr.bf16.mxu0 0
      %4880 = vmatpush1.bf16.msra.mxu0 0
      %4881 = vmatprep.subr.bf16.mxu0 0
      %4882 = vmatpush1.bf16.msra.mxu0 0
      %4883 = vmatprep.subr.bf16.mxu0 0
      %4884 = vmatpush1.bf16.msra.mxu0 0
      %4885 = vmatprep.subr.bf16.mxu0 0
      %4886 = vmatpush1.bf16.msra.mxu0 0
      %4887 = vmatprep.subr.bf16.mxu0 0
      %4888 = vmatpush1.bf16.msra.mxu0 0
      %4889 = vmatprep.subr.bf16.mxu0 %v4710
      %4890 = vmatpush1.bf16.msra.mxu0 %v4709
      %4891 = vmatprep.subr.bf16.mxu0 %v4704
      %4892 = vmatpush1.bf16.msra.mxu0 %v4703
      %4893 = vmatprep.subr.bf16.mxu0 0
      %4894 = vmatpush2.bf16.msra.mxu0 0
      %4895 = vmatprep.subr.bf16.mxu0 0
      %4896 = vmatpush2.bf16.msra.mxu0 0
      %4897 = vmatprep.subr.bf16.mxu0 0
      %4898 = vmatpush2.bf16.msra.mxu0 0
      %4899 = vmatprep.subr.bf16.mxu0 0
      %4900 = vmatpush2.bf16.msra.mxu0 0
      %4901 = vmatprep.subr.bf16.mxu0 0
      %4902 = vmatpush2.bf16.msra.mxu0 0
      %4903 = vmatprep.subr.bf16.mxu0 0
      %4904 = vmatpush2.bf16.msra.mxu0 0
      %4905 = vmatprep.subr.bf16.mxu0 0
      %4906 = vmatpush2.bf16.msra.mxu0 0
      %4907 = vmatprep.subr.bf16.mxu0 0
      %4908 = vmatpush2.bf16.msra.mxu0 0
      %4909 = vmatprep.mubr.bf16.mxu0 0
      %4910 = vmatmul.mubr.bf16.gmra.mxu0 %v4724
      %v4911 = vpop.f32.mrf.mxu0
      %v4912 = vadd.f32 0.0, %v4911
      %v4913 = vpop.f32.mrf.mxu0
      %v4914 = vadd.f32 0.0, %v4913
      %v4915 = vpop.f32.mrf.mxu0
      %v4916 = vadd.f32 0.0, %v4915
      %v4917 = vpop.f32.mrf.mxu0
      %v4918 = vadd.f32 0.0, %v4917
      %4919 = vmatprep.mubr.bf16.mxu0 0
      %4920 = vmatmul.mubr.bf16.gmra.mxu0 %v4727
      %v4921 = vpop.f32.mrf.mxu0
      %v4922 = vadd.f32 0.0, %v4921
      %v4923 = vpop.f32.mrf.mxu0
      %v4924 = vadd.f32 0.0, %v4923
      %v4925 = vpop.f32.mrf.mxu0
      %v4926 = vadd.f32 0.0, %v4925
      %v4927 = vpop.f32.mrf.mxu0
      %v4928 = vadd.f32 0.0, %v4927
      %4929 = vmatprep.mubr.bf16.mxu0 0
      %4930 = vmatmul.mubr.bf16.gmra.mxu0 %v4730
      %v4931 = vpop.f32.mrf.mxu0
      %v4932 = vadd.f32 0.0, %v4931
      %v4933 = vpop.f32.mrf.mxu0
      %v4934 = vadd.f32 0.0, %v4933
      %v4935 = vpop.f32.mrf.mxu0
      %v4936 = vadd.f32 0.0, %v4935
      %v4937 = vpop.f32.mrf.mxu0
      %v4938 = vadd.f32 0.0, %v4937
      %4939 = vmatprep.mubr.bf16.mxu0 0
      %4940 = vmatmul.mubr.bf16.gmra.mxu0 %v4733
      %v4941 = vpop.f32.mrf.mxu0
      %v4942 = vadd.f32 0.0, %v4941
      %v4943 = vpop.f32.mrf.mxu0
      %v4944 = vadd.f32 0.0, %v4943
      %v4945 = vpop.f32.mrf.mxu0
      %v4946 = vpop.f32.mrf.mxu0
      %4947 = vdwg.mxu0
      %s4948 = smul.u32 %s4510, 32
      %s4949 = smul.addr %s4948, 4
      %s4950 = scalar_lea.vmem %s17, %s4949
      %v4951 = vld [vmem:[%s4950] sm:$0xf]
      %v4952 = vld [vmem:[%s4950 + $0x4] sm:$0xf]
      %v4953 = vld [vmem:[%s4950 + $0x8] sm:$0xf]
      %v4954 = vld [vmem:[%s4950 + $0xc] sm:$0xf]
      %v4955 = vld [vmem:[%s4950 + $0x10] sm:$0xf]
      %v4956 = vld [vmem:[%s4950 + $0x14] sm:$0xf]
      %v4957 = vld [vmem:[%s4950 + $0x18] sm:$0xf]
      %v4958 = vld [vmem:[%s4950 + $0x1c] sm:$0xf]
      %v4959 = vld [vmem:[%s4950 + $0x20] sm:$0xf]
      %v4960 = vld [vmem:[%s4950 + $0x24] sm:$0xf]
      %v4961 = vld [vmem:[%s4950 + $0x28] sm:$0xf]
      %v4962 = vld [vmem:[%s4950 + $0x2c] sm:$0xf]
      %v4963 = vld [vmem:[%s4950 + $0x30] sm:$0xf]
      %v4964 = vld [vmem:[%s4950 + $0x34] sm:$0xf]
      %v4965 = vld [vmem:[%s4950 + $0x38] sm:$0xf]
      %v4966 = vld [vmem:[%s4950 + $0x3c] sm:$0xf]
      %v4967 = vld [vmem:[%s4950 + $0x40] sm:$0xf]
      %v4968 = vld [vmem:[%s4950 + $0x44] sm:$0xf]
      %v4969 = vld [vmem:[%s4950 + $0x48] sm:$0xf]
      %v4970 = vld [vmem:[%s4950 + $0x4c] sm:$0xf]
      %v4971 = vld [vmem:[%s4950 + $0x50] sm:$0xf]
      %v4972 = vld [vmem:[%s4950 + $0x54] sm:$0xf]
      %v4973 = vld [vmem:[%s4950 + $0x58] sm:$0xf]
      %v4974 = vld [vmem:[%s4950 + $0x5c] sm:$0xf]
      %v4975 = vld [vmem:[%s4950 + $0x60] sm:$0xf]
      %v4976 = vld [vmem:[%s4950 + $0x64] sm:$0xf]
      %v4977 = vld [vmem:[%s4950 + $0x68] sm:$0xf]
      %v4978 = vld [vmem:[%s4950 + $0x6c] sm:$0xf]
      %v4979 = vld [vmem:[%s4950 + $0x70] sm:$0xf]
      %v4980 = vld [vmem:[%s4950 + $0x74] sm:$0xf]
      %v4981 = vld [vmem:[%s4950 + $0x78] sm:$0xf]
      %v4982 = vld [vmem:[%s4950 + $0x7c] sm:$0xf]
      %v4983 = vpack.c.bf16 %v4774, %v4770
      %v4984 = vpack.c.bf16 %v4784, %v4780
      %v4985 = vpack.c.bf16 %v4794, %v4790
      %v4986 = vpack.c.bf16 %v4800, %v4800
      %v4987 = vpack.c.bf16 %v4845, %v4841
      %v4988 = vpack.c.bf16 %v4855, %v4851
      %v4989 = vpack.c.bf16 %v4865, %v4861
      %v4990 = vpack.c.bf16 %v4871, %v4871
      %vm4991 = vcmask 523264
      %v4993 = vsel %vm4991, %v4983, 0
      %v4996 = vsel %vm4991, %v4984, 0
      %v4999 = vsel %vm4991, %v4985, 0
      %v5002 = vsel %vm4991, %v4986, 0
      %v5005 = vsel %vm4991, %v4987, 0
      %v5008 = vsel %vm4991, %v4988, 0
      %v5011 = vsel %vm4991, %v4989, 0
      %v5014 = vsel %vm4991, %v4990, 0
      %5016 = vmatprep.subr.bf16.mxu0 0
      %5017 = vmatpush1.bf16.xpose.msra.mxu0 0
      %5018 = vmatprep.subr.bf16.mxu0 0
      %5019 = vmatpush1.bf16.xpose.msra.mxu0 0
      %5020 = vmatprep.subr.bf16.mxu0 0
      %5021 = vmatpush1.bf16.xpose.msra.mxu0 0
      %5022 = vmatprep.subr.bf16.mxu0 0
      %5023 = vmatpush1.bf16.xpose.msra.mxu0 0
      %5024 = vmatprep.subr.bf16.mxu0 0
      %5025 = vmatpush1.bf16.xpose.msra.mxu0 %v5014
      %5026 = vmatprep.subr.bf16.mxu0 0
      %5027 = vmatpush1.bf16.xpose.msra.mxu0 %v5011
      %5028 = vmatprep.subr.bf16.mxu0 0
      %5029 = vmatpush1.bf16.xpose.msra.mxu0 %v5008
      %5030 = vmatprep.subr.bf16.mxu0 0
      %5031 = vmatpush1.bf16.xpose.msra.mxu0 %v5005
      %5032 = vmatprep.subr.bf16.mxu0 0
      %5033 = vmatpush2.bf16.xpose.msra.mxu0 0
      %5034 = vmatprep.subr.bf16.mxu0 0
      %5035 = vmatpush2.bf16.xpose.msra.mxu0 0
      %5036 = vmatprep.subr.bf16.mxu0 0
      %5037 = vmatpush2.bf16.xpose.msra.mxu0 0
      %5038 = vmatprep.subr.bf16.mxu0 0
      %5039 = vmatpush2.bf16.xpose.msra.mxu0 0
      %5040 = vmatprep.subr.bf16.mxu0 0
      %5041 = vmatpush2.bf16.xpose.msra.mxu0 0
      %5042 = vmatprep.subr.bf16.mxu0 0
      %5043 = vmatpush2.bf16.xpose.msra.mxu0 0
      %5044 = vmatprep.subr.bf16.mxu0 0
      %5045 = vmatpush2.bf16.xpose.msra.mxu0 0
      %5046 = vmatprep.subr.bf16.mxu0 0
      %5047 = vmatpush2.bf16.xpose.msra.mxu0 0
      %5048 = vmatprep.mubr.bf16.mxu0 0
      %5049 = vmatmul.mubr.bf16.gmra.mxu0 %v4993
      %v5050 = vpop.f32.mrf.mxu0
      %v5051 = vadd.f32 0.0, %v5050
      %v5052 = vpop.f32.mrf.mxu0
      %v5053 = vpop.f32.mrf.mxu0
      %v5054 = vadd.f32 0.0, %v5053
      %v5055 = vpop.f32.mrf.mxu0
      %5056 = vmatprep.mubr.bf16.mxu0 0
      %5057 = vmatmul.mubr.bf16.gmra.mxu0 %v4996
      %v5058 = vpop.f32.mrf.mxu0
      %v5059 = vadd.f32 0.0, %v5058
      %v5060 = vpop.f32.mrf.mxu0
      %v5061 = vpop.f32.mrf.mxu0
      %v5062 = vadd.f32 0.0, %v5061
      %v5063 = vpop.f32.mrf.mxu0
      %5064 = vmatprep.mubr.bf16.mxu0 0
      %5065 = vmatmul.mubr.bf16.gmra.mxu0 %v4999
      %v5066 = vpop.f32.mrf.mxu0
      %v5067 = vadd.f32 0.0, %v5066
      %v5068 = vpop.f32.mrf.mxu0
      %v5069 = vpop.f32.mrf.mxu0
      %v5070 = vadd.f32 0.0, %v5069
      %v5071 = vpop.f32.mrf.mxu0
      %5072 = vmatprep.mubr.bf16.mxu0 0
      %5073 = vmatmul.mubr.bf16.gmra.mxu0 %v5002
      %v5074 = vpop.f32.mrf.mxu0
      %v5075 = vadd.f32 0.0, %v5074
      %v5076 = vpop.f32.mrf.mxu0
      %v5077 = vpop.f32.mrf.mxu0
      %v5078 = vpop.f32.mrf.mxu0
      %5079 = vdwg.mxu0
      %v5080 = vmul.f32 %v5051, 0.125
      %v5081 = vmul.f32 %v5054, 0.125
      %v5082 = vmul.f32 %v5059, 0.125
      %v5083 = vmul.f32 %v5062, 0.125
      %v5084 = vmul.f32 %v5067, 0.125
      %v5085 = vmul.f32 %v5070, 0.125
      %v5086 = vmul.f32 %v5075, 0.125
      %v5087 = vadd.f32 %v5080, %v4502
      %v5088 = vadd.f32 %v5081, %v4503
      %v5089 = vadd.f32 %v5082, %v4504
      %v5090 = vadd.f32 %v5083, %v4505
      %v5091 = vadd.f32 %v5084, %v4506
      %v5092 = vadd.f32 %v5085, %v4507
      %v5093 = vadd.f32 %v5086, %v4508
      %vm5094 = vcmask 408576
      %v5095 = vsel %vm5094, %v5087, -inf
      %5096 = vmax.xlane.f32.xlu0 %v5095
      %v5097 = vpop.xlane.xlu0 %5096
      %v5098 = vsel %vm5094, %v5088, -inf
      %5099 = vmax.xlane.f32.xlu0 %v5098
      %v5100 = vpop.xlane.xlu0 %5099
      %v5101 = vsel %vm5094, %v5089, -inf
      %5102 = vmax.xlane.f32.xlu0 %v5101
      %v5103 = vpop.xlane.xlu0 %5102
      %v5104 = vsel %vm5094, %v5090, -inf
      %5105 = vmax.xlane.f32.xlu0 %v5104
      %v5106 = vpop.xlane.xlu0 %5105
      %v5107 = vsel %vm5094, %v5091, -inf
      %5108 = vmax.xlane.f32.xlu0 %v5107
      %v5109 = vpop.xlane.xlu0 %5108
      %v5110 = vsel %vm5094, %v5092, -inf
      %5111 = vmax.xlane.f32.xlu0 %v5110
      %v5112 = vpop.xlane.xlu0 %5111
      %vm5113 = vcmask 402432
      %v5114 = vsel %vm5113, %v5093, -inf
      %5115 = vmax.xlane.f32.xlu0 %v5114
      %v5116 = vpop.xlane.xlu0 %5115
      %v5117 = vsub.f32 %v5087, %v5097
      %v5118 = vsub.f32 %v5088, %v5100
      %v5119 = vsub.f32 %v5089, %v5103
      %v5120 = vsub.f32 %v5090, %v5106
      %v5121 = vsub.f32 %v5091, %v5109
      %v5122 = vsub.f32 %v5092, %v5112
      %v5123 = vsub.f32 %v5093, %v5116
      %v5124 = vmul.f32 %v5117, 1.442695
      %v5125 = vpow.pop %v5124
      %v5126 = vmul.f32 %v5118, 1.442695
      %v5127 = vpow.pop %v5126
      %v5128 = vmul.f32 %v5119, 1.442695
      %v5129 = vpow.pop %v5128
      %v5130 = vmul.f32 %v5120, 1.442695
      %v5131 = vpow.pop %v5130
      %v5132 = vmul.f32 %v5121, 1.442695
      %v5133 = vpow.pop %v5132
      %v5134 = vmul.f32 %v5122, 1.442695
      %v5135 = vpow.pop %v5134
      %v5136 = vmul.f32 %v5123, 1.442695
      %v5137 = vpow.pop %v5136
      %v5138 = vsel %vm5094, %v5125, 0.0
      %5139 = vadd.xlane.f32.xlu0 %v5138
      %v5140 = vpop.xlane.xlu0 %5139
      %v5141 = vsel %vm5094, %v5127, 0.0
      %5142 = vadd.xlane.f32.xlu0 %v5141
      %v5143 = vpop.xlane.xlu0 %5142
      %v5144 = vsel %vm5094, %v5129, 0.0
      %5145 = vadd.xlane.f32.xlu0 %v5144
      %v5146 = vpop.xlane.xlu0 %5145
      %v5147 = vsel %vm5094, %v5131, 0.0
      %5148 = vadd.xlane.f32.xlu0 %v5147
      %v5149 = vpop.xlane.xlu0 %5148
      %v5150 = vsel %vm5094, %v5133, 0.0
      %5151 = vadd.xlane.f32.xlu0 %v5150
      %v5152 = vpop.xlane.xlu0 %5151
      %v5153 = vsel %vm5094, %v5135, 0.0
      %5154 = vadd.xlane.f32.xlu0 %v5153
      %v5155 = vpop.xlane.xlu0 %5154
      %v5156 = vsel %vm5113, %v5137, 0.0
      %5157 = vadd.xlane.f32.xlu0 %v5156
      %v5158 = vpop.xlane.xlu0 %5157
      %v5159 = vrcp.pop %v5140
      %v5160 = vrcp.pop %v5143
      %v5161 = vrcp.pop %v5146
      %v5162 = vrcp.pop %v5149
      %v5163 = vrcp.pop %v5152
      %v5164 = vrcp.pop %v5155
      %v5165 = vrcp.pop %v5158
      %v5166 = vmul.f32 %v5125, %v5159
      %v5167 = vmul.f32 %v5127, %v5160
      %v5168 = vmul.f32 %v5129, %v5161
      %v5169 = vmul.f32 %v5131, %v5162
      %v5170 = vmul.f32 %v5133, %v5163
      %v5171 = vmul.f32 %v5135, %v5164
      %v5172 = vmul.f32 %v5137, %v5165
      %v5173 = vpack.c.bf16 %v5167, %v5166
      %v5174 = vpack.c.bf16 %v5169, %v5168
      %v5175 = vpack.c.bf16 %v5171, %v5170
      %v5176 = vpack.c.bf16 %v5172, %v5172
      %v5177 = vpack.c.bf16 %v4916, %v4912
      %v5178 = vpack.c.bf16 %v4926, %v4922
      %v5179 = vpack.c.bf16 %v4936, %v4932
      %v5180 = vpack.c.bf16 %v4942, %v4942
      %v5182 = vsel %vm5094, %v5173, 0
      %v5185 = vsel %vm5094, %v5174, 0
      %v5188 = vsel %vm5094, %v5175, 0
      %v5191 = vsel %vm5094, %v5176, 0
      %vm5193 = vcmask 1040384
      %v5195 = vsel %vm5193, %v5180, 0
      %5197 = vmatprep.subr.bf16.mxu0 0
      %5198 = vmatpush1.bf16.msra.mxu0 0
      %5199 = vmatprep.subr.bf16.mxu0 0
      %5200 = vmatpush1.bf16.msra.mxu0 0
      %5201 = vmatprep.subr.bf16.mxu0 0
      %5202 = vmatpush1.bf16.msra.mxu0 0
      %5203 = vmatprep.subr.bf16.mxu0 0
      %5204 = vmatpush1.bf16.msra.mxu0 0
      %5205 = vmatprep.subr.bf16.mxu0 0
      %5206 = vmatpush1.bf16.msra.mxu0 %v5195
      %5207 = vmatprep.subr.bf16.mxu0 0
      %5208 = vmatpush1.bf16.msra.mxu0 %v5179
      %5209 = vmatprep.subr.bf16.mxu0 0
      %5210 = vmatpush1.bf16.msra.mxu0 %v5178
      %5211 = vmatprep.subr.bf16.mxu0 0
      %5212 = vmatpush1.bf16.msra.mxu0 %v5177
      %5213 = vmatprep.subr.bf16.mxu0 0
      %5214 = vmatpush2.bf16.msra.mxu0 0
      %5215 = vmatprep.subr.bf16.mxu0 0
      %5216 = vmatpush2.bf16.msra.mxu0 0
      %5217 = vmatprep.subr.bf16.mxu0 0
      %5218 = vmatpush2.bf16.msra.mxu0 0
      %5219 = vmatprep.subr.bf16.mxu0 0
      %5220 = vmatpush2.bf16.msra.mxu0 0
      %5221 = vmatprep.subr.bf16.mxu0 0
      %5222 = vmatpush2.bf16.msra.mxu0 0
      %5223 = vmatprep.subr.bf16.mxu0 0
      %5224 = vmatpush2.bf16.msra.mxu0 0
      %5225 = vmatprep.subr.bf16.mxu0 0
      %5226 = vmatpush2.bf16.msra.mxu0 0
      %5227 = vmatprep.subr.bf16.mxu0 0
      %5228 = vmatpush2.bf16.msra.mxu0 0
      %5229 = vmatprep.mubr.bf16.mxu0 0
      %5230 = vmatmul.mubr.bf16.gmra.mxu0 %v5182
      %v5231 = vpop.f32.mrf.mxu0
      %v5232 = vadd.f32 0.0, %v5231
      %v5233 = vpop.f32.mrf.mxu0
      %v5234 = vpop.f32.mrf.mxu0
      %v5235 = vadd.f32 0.0, %v5234
      %v5236 = vpop.f32.mrf.mxu0
      %5237 = vmatprep.mubr.bf16.mxu0 0
      %5238 = vmatmul.mubr.bf16.gmra.mxu0 %v5185
      %v5239 = vpop.f32.mrf.mxu0
      %v5240 = vadd.f32 0.0, %v5239
      %v5241 = vpop.f32.mrf.mxu0
      %v5242 = vpop.f32.mrf.mxu0
      %v5243 = vadd.f32 0.0, %v5242
      %v5244 = vpop.f32.mrf.mxu0
      %5245 = vmatprep.mubr.bf16.mxu0 0
      %5246 = vmatmul.mubr.bf16.gmra.mxu0 %v5188
      %v5247 = vpop.f32.mrf.mxu0
      %v5248 = vadd.f32 0.0, %v5247
      %v5249 = vpop.f32.mrf.mxu0
      %v5250 = vpop.f32.mrf.mxu0
      %v5251 = vadd.f32 0.0, %v5250
      %v5252 = vpop.f32.mrf.mxu0
      %5253 = vmatprep.mubr.bf16.mxu0 0
      %5254 = vmatmul.mubr.bf16.gmra.mxu0 %v5191
      %v5255 = vpop.f32.mrf.mxu0
      %v5256 = vadd.f32 0.0, %v5255
      %v5257 = vpop.f32.mrf.mxu0
      %v5258 = vpop.f32.mrf.mxu0
      %v5259 = vpop.f32.mrf.mxu0
      %5260 = vdwg.mxu0
      %v5261 = vpack.c.bf16 %v5235, %v5232
      %v5262 = vpack.c.bf16 %v5243, %v5240
      %v5263 = vpack.c.bf16 %v5251, %v5248
      %v5264 = vpack.c.bf16 %v5256, %v5256
      %5269 = vrot.lane.b32.xlu0 %v4983, 64
      %v5270 = vpop.permute.xlu0 %5269
      %5271 = vrot.lane.b32.xlu0 %v4984, 64
      %v5272 = vpop.permute.xlu0 %5271
      %5273 = vrot.lane.b32.xlu0 %v4985, 64
      %v5274 = vpop.permute.xlu0 %5273
      %5275 = vrot.lane.b32.xlu0 %v4986, 64
      %v5276 = vpop.permute.xlu0 %5275
      %5281 = vrot.lane.b32.xlu0 %v4987, 64
      %v5282 = vpop.permute.xlu0 %5281
      %5283 = vrot.lane.b32.xlu0 %v4988, 64
      %v5284 = vpop.permute.xlu0 %5283
      %5285 = vrot.lane.b32.xlu0 %v4989, 64
      %v5286 = vpop.permute.xlu0 %5285
      %5287 = vrot.lane.b32.xlu0 %v4990, 64
      %v5288 = vpop.permute.xlu0 %5287
      %v5290 = vsel %vm4991, %v5270, 0
      %v5293 = vsel %vm4991, %v5272, 0
      %v5296 = vsel %vm4991, %v5274, 0
      %v5299 = vsel %vm4991, %v5276, 0
      %v5302 = vsel %vm4991, %v5282, 0
      %v5305 = vsel %vm4991, %v5284, 0
      %v5308 = vsel %vm4991, %v5286, 0
      %v5311 = vsel %vm4991, %v5288, 0
      %5313 = vmatprep.subr.bf16.mxu0 0
      %5314 = vmatpush1.bf16.xpose.msra.mxu0 0
      %5315 = vmatprep.subr.bf16.mxu0 0
      %5316 = vmatpush1.bf16.xpose.msra.mxu0 0
      %5317 = vmatprep.subr.bf16.mxu0 0
      %5318 = vmatpush1.bf16.xpose.msra.mxu0 0
      %5319 = vmatprep.subr.bf16.mxu0 0
      %5320 = vmatpush1.bf16.xpose.msra.mxu0 0
      %5321 = vmatprep.subr.bf16.mxu0 0
      %5322 = vmatpush1.bf16.xpose.msra.mxu0 %v5311
      %5323 = vmatprep.subr.bf16.mxu0 0
      %5324 = vmatpush1.bf16.xpose.msra.mxu0 %v5308
      %5325 = vmatprep.subr.bf16.mxu0 0
      %5326 = vmatpush1.bf16.xpose.msra.mxu0 %v5305
      %5327 = vmatprep.subr.bf16.mxu0 0
      %5328 = vmatpush1.bf16.xpose.msra.mxu0 %v5302
      %5329 = vmatprep.subr.bf16.mxu0 0
      %5330 = vmatpush2.bf16.xpose.msra.mxu0 0
      %5331 = vmatprep.subr.bf16.mxu0 0
      %5332 = vmatpush2.bf16.xpose.msra.mxu0 0
      %5333 = vmatprep.subr.bf16.mxu0 0
      %5334 = vmatpush2.bf16.xpose.msra.mxu0 0
      %5335 = vmatprep.subr.bf16.mxu0 0
      %5336 = vmatpush2.bf16.xpose.msra.mxu0 0
      %5337 = vmatprep.subr.bf16.mxu0 0
      %5338 = vmatpush2.bf16.xpose.msra.mxu0 0
      %5339 = vmatprep.subr.bf16.mxu0 0
      %5340 = vmatpush2.bf16.xpose.msra.mxu0 0
      %5341 = vmatprep.subr.bf16.mxu0 0
      %5342 = vmatpush2.bf16.xpose.msra.mxu0 0
      %5343 = vmatprep.subr.bf16.mxu0 0
      %5344 = vmatpush2.bf16.xpose.msra.mxu0 0
      %5345 = vmatprep.mubr.bf16.mxu0 0
      %5346 = vmatmul.mubr.bf16.gmra.mxu0 %v5290
      %v5347 = vpop.f32.mrf.mxu0
      %v5348 = vadd.f32 0.0, %v5347
      %v5349 = vpop.f32.mrf.mxu0
      %v5350 = vpop.f32.mrf.mxu0
      %v5351 = vadd.f32 0.0, %v5350
      %v5352 = vpop.f32.mrf.mxu0
      %5353 = vmatprep.mubr.bf16.mxu0 0
      %5354 = vmatmul.mubr.bf16.gmra.mxu0 %v5293
      %v5355 = vpop.f32.mrf.mxu0
      %v5356 = vadd.f32 0.0, %v5355
      %v5357 = vpop.f32.mrf.mxu0
      %v5358 = vpop.f32.mrf.mxu0
      %v5359 = vadd.f32 0.0, %v5358
      %v5360 = vpop.f32.mrf.mxu0
      %5361 = vmatprep.mubr.bf16.mxu0 0
      %5362 = vmatmul.mubr.bf16.gmra.mxu0 %v5296
      %v5363 = vpop.f32.mrf.mxu0
      %v5364 = vadd.f32 0.0, %v5363
      %v5365 = vpop.f32.mrf.mxu0
      %v5366 = vpop.f32.mrf.mxu0
      %v5367 = vadd.f32 0.0, %v5366
      %v5368 = vpop.f32.mrf.mxu0
      %5369 = vmatprep.mubr.bf16.mxu0 0
      %5370 = vmatmul.mubr.bf16.gmra.mxu0 %v5299
      %v5371 = vpop.f32.mrf.mxu0
      %v5372 = vadd.f32 0.0, %v5371
      %v5373 = vpop.f32.mrf.mxu0
      %v5374 = vpop.f32.mrf.mxu0
      %v5375 = vpop.f32.mrf.mxu0
      %5376 = vdwg.mxu0
      %v5377 = vmul.f32 %v5348, 0.125
      %v5378 = vmul.f32 %v5351, 0.125
      %v5379 = vmul.f32 %v5356, 0.125
      %v5380 = vmul.f32 %v5359, 0.125
      %v5381 = vmul.f32 %v5364, 0.125
      %v5382 = vmul.f32 %v5367, 0.125
      %v5383 = vmul.f32 %v5372, 0.125
      %v5384 = vadd.f32 %v5377, %v4502
      %v5385 = vadd.f32 %v5378, %v4503
      %v5386 = vadd.f32 %v5379, %v4504
      %v5387 = vadd.f32 %v5380, %v4505
      %v5388 = vadd.f32 %v5381, %v4506
      %v5389 = vadd.f32 %v5382, %v4507
      %v5390 = vadd.f32 %v5383, %v4508
      %v5391 = vsel %vm5094, %v5384, -inf
      %5392 = vmax.xlane.f32.xlu0 %v5391
      %v5393 = vpop.xlane.xlu0 %5392
      %v5394 = vsel %vm5094, %v5385, -inf
      %5395 = vmax.xlane.f32.xlu0 %v5394
      %v5396 = vpop.xlane.xlu0 %5395
      %v5397 = vsel %vm5094, %v5386, -inf
      %5398 = vmax.xlane.f32.xlu0 %v5397
      %v5399 = vpop.xlane.xlu0 %5398
      %v5400 = vsel %vm5094, %v5387, -inf
      %5401 = vmax.xlane.f32.xlu0 %v5400
      %v5402 = vpop.xlane.xlu0 %5401
      %v5403 = vsel %vm5094, %v5388, -inf
      %5404 = vmax.xlane.f32.xlu0 %v5403
      %v5405 = vpop.xlane.xlu0 %5404
      %v5406 = vsel %vm5094, %v5389, -inf
      %5407 = vmax.xlane.f32.xlu0 %v5406
      %v5408 = vpop.xlane.xlu0 %5407
      %v5409 = vsel %vm5113, %v5390, -inf
      %5410 = vmax.xlane.f32.xlu0 %v5409
      %v5411 = vpop.xlane.xlu0 %5410
      %v5412 = vsub.f32 %v5384, %v5393
      %v5413 = vsub.f32 %v5385, %v5396
      %v5414 = vsub.f32 %v5386, %v5399
      %v5415 = vsub.f32 %v5387, %v5402
      %v5416 = vsub.f32 %v5388, %v5405
      %v5417 = vsub.f32 %v5389, %v5408
      %v5418 = vsub.f32 %v5390, %v5411
      %v5419 = vmul.f32 %v5412, 1.442695
      %v5420 = vpow.pop %v5419
      %v5421 = vmul.f32 %v5413, 1.442695
      %v5422 = vpow.pop %v5421
      %v5423 = vmul.f32 %v5414, 1.442695
      %v5424 = vpow.pop %v5423
      %v5425 = vmul.f32 %v5415, 1.442695
      %v5426 = vpow.pop %v5425
      %v5427 = vmul.f32 %v5416, 1.442695
      %v5428 = vpow.pop %v5427
      %v5429 = vmul.f32 %v5417, 1.442695
      %v5430 = vpow.pop %v5429
      %v5431 = vmul.f32 %v5418, 1.442695
      %v5432 = vpow.pop %v5431
      %v5433 = vsel %vm5094, %v5420, 0.0
      %5434 = vadd.xlane.f32.xlu0 %v5433
      %v5435 = vpop.xlane.xlu0 %5434
      %v5436 = vsel %vm5094, %v5422, 0.0
      %5437 = vadd.xlane.f32.xlu0 %v5436
      %v5438 = vpop.xlane.xlu0 %5437
      %v5439 = vsel %vm5094, %v5424, 0.0
      %5440 = vadd.xlane.f32.xlu0 %v5439
      %v5441 = vpop.xlane.xlu0 %5440
      %v5442 = vsel %vm5094, %v5426, 0.0
      %5443 = vadd.xlane.f32.xlu0 %v5442
      %v5444 = vpop.xlane.xlu0 %5443
      %v5445 = vsel %vm5094, %v5428, 0.0
      %5446 = vadd.xlane.f32.xlu0 %v5445
      %v5447 = vpop.xlane.xlu0 %5446
      %v5448 = vsel %vm5094, %v5430, 0.0
      %5449 = vadd.xlane.f32.xlu0 %v5448
      %v5450 = vpop.xlane.xlu0 %5449
      %v5451 = vsel %vm5113, %v5432, 0.0
      %5452 = vadd.xlane.f32.xlu0 %v5451
      %v5453 = vpop.xlane.xlu0 %5452
      %v5454 = vrcp.pop %v5435
      %v5455 = vrcp.pop %v5438
      %v5456 = vrcp.pop %v5441
      %v5457 = vrcp.pop %v5444
      %v5458 = vrcp.pop %v5447
      %v5459 = vrcp.pop %v5450
      %v5460 = vrcp.pop %v5453
      %v5461 = vmul.f32 %v5420, %v5454
      %v5462 = vmul.f32 %v5422, %v5455
      %v5463 = vmul.f32 %v5424, %v5456
      %v5464 = vmul.f32 %v5426, %v5457
      %v5465 = vmul.f32 %v5428, %v5458
      %v5466 = vmul.f32 %v5430, %v5459
      %v5467 = vmul.f32 %v5432, %v5460
      %v5468 = vpack.c.bf16 %v5462, %v5461
      %v5469 = vpack.c.bf16 %v5464, %v5463
      %v5470 = vpack.c.bf16 %v5466, %v5465
      %v5471 = vpack.c.bf16 %v5467, %v5467
      %5476 = vrot.lane.b32.xlu0 %v5177, 64
      %v5477 = vpop.permute.xlu0 %5476
      %5478 = vrot.lane.b32.xlu0 %v5178, 64
      %v5479 = vpop.permute.xlu0 %5478
      %5480 = vrot.lane.b32.xlu0 %v5179, 64
      %v5481 = vpop.permute.xlu0 %5480
      %5482 = vrot.lane.b32.xlu0 %v5180, 64
      %v5483 = vpop.permute.xlu0 %5482
      %v5488 = vsel %vm5094, %v5468, 0
      %v5491 = vsel %vm5094, %v5469, 0
      %v5494 = vsel %vm5094, %v5470, 0
      %v5497 = vsel %vm5094, %v5471, 0
      %v5500 = vsel %vm5193, %v5483, 0
      %5502 = vmatprep.subr.bf16.mxu0 0
      %5503 = vmatpush1.bf16.msra.mxu0 0
      %5504 = vmatprep.subr.bf16.mxu0 0
      %5505 = vmatpush1.bf16.msra.mxu0 0
      %5506 = vmatprep.subr.bf16.mxu0 0
      %5507 = vmatpush1.bf16.msra.mxu0 0
      %5508 = vmatprep.subr.bf16.mxu0 0
      %5509 = vmatpush1.bf16.msra.mxu0 0
      %5510 = vmatprep.subr.bf16.mxu0 0
      %5511 = vmatpush1.bf16.msra.mxu0 %v5500
      %5512 = vmatprep.subr.bf16.mxu0 0
      %5513 = vmatpush1.bf16.msra.mxu0 %v5481
      %5514 = vmatprep.subr.bf16.mxu0 0
      %5515 = vmatpush1.bf16.msra.mxu0 %v5479
      %5516 = vmatprep.subr.bf16.mxu0 0
      %5517 = vmatpush1.bf16.msra.mxu0 %v5477
      %5518 = vmatprep.subr.bf16.mxu0 0
      %5519 = vmatpush2.bf16.msra.mxu0 0
      %5520 = vmatprep.subr.bf16.mxu0 0
      %5521 = vmatpush2.bf16.msra.mxu0 0
      %5522 = vmatprep.subr.bf16.mxu0 0
      %5523 = vmatpush2.bf16.msra.mxu0 0
      %5524 = vmatprep.subr.bf16.mxu0 0
      %5525 = vmatpush2.bf16.msra.mxu0 0
      %5526 = vmatprep.subr.bf16.mxu0 0
      %5527 = vmatpush2.bf16.msra.mxu0 0
      %5528 = vmatprep.subr.bf16.mxu0 0
      %5529 = vmatpush2.bf16.msra.mxu0 0
      %5530 = vmatprep.subr.bf16.mxu0 0
      %5531 = vmatpush2.bf16.msra.mxu0 0
      %5532 = vmatprep.subr.bf16.mxu0 0
      %5533 = vmatpush2.bf16.msra.mxu0 0
      %5534 = vmatprep.mubr.bf16.mxu0 0
      %5535 = vmatmul.mubr.bf16.gmra.mxu0 %v5488
      %v5536 = vpop.f32.mrf.mxu0
      %v5537 = vadd.f32 0.0, %v5536
      %v5538 = vpop.f32.mrf.mxu0
      %v5539 = vpop.f32.mrf.mxu0
      %v5540 = vadd.f32 0.0, %v5539
      %v5541 = vpop.f32.mrf.mxu0
      %5542 = vmatprep.mubr.bf16.mxu0 0
      %5543 = vmatmul.mubr.bf16.gmra.mxu0 %v5491
      %v5544 = vpop.f32.mrf.mxu0
      %v5545 = vadd.f32 0.0, %v5544
      %v5546 = vpop.f32.mrf.mxu0
      %v5547 = vpop.f32.mrf.mxu0
      %v5548 = vadd.f32 0.0, %v5547
      %v5549 = vpop.f32.mrf.mxu0
      %5550 = vmatprep.mubr.bf16.mxu0 0
      %5551 = vmatmul.mubr.bf16.gmra.mxu0 %v5494
      %v5552 = vpop.f32.mrf.mxu0
      %v5553 = vadd.f32 0.0, %v5552
      %v5554 = vpop.f32.mrf.mxu0
      %v5555 = vpop.f32.mrf.mxu0
      %v5556 = vadd.f32 0.0, %v5555
      %v5557 = vpop.f32.mrf.mxu0
      %5558 = vmatprep.mubr.bf16.mxu0 0
      %5559 = vmatmul.mubr.bf16.gmra.mxu0 %v5497
      %v5560 = vpop.f32.mrf.mxu0
      %v5561 = vadd.f32 0.0, %v5560
      %v5562 = vpop.f32.mrf.mxu0
      %v5563 = vpop.f32.mrf.mxu0
      %v5564 = vpop.f32.mrf.mxu0
      %5565 = vdwg.mxu0
      %v5566 = vpack.c.bf16 %v5540, %v5537
      %v5567 = vpack.c.bf16 %v5548, %v5545
      %v5568 = vpack.c.bf16 %v5556, %v5553
      %v5569 = vpack.c.bf16 %v5561, %v5561
      %v5578 = vunpack.c.l.b16 %v4959
      %v5579 = vunpack.c.l.b16 %v4960
      %v5580 = vunpack.c.l.b16 %v4961
      %v5581 = vunpack.c.l.b16 %v4962
      %v5582 = vunpack.c.l.b16 %v4963
      %v5583 = vunpack.c.l.b16 %v4964
      %v5584 = vunpack.c.l.b16 %v4965
      %v5585 = vunpack.c.l.b16 %v4966
      %v5586 = vpack.c.b16 %v5579, %v5578
      %v5587 = vpack.c.b16 %v5581, %v5580
      %v5588 = vpack.c.b16 %v5583, %v5582
      %v5589 = vpack.c.b16 %v5585, %v5584
      %v5595 = vsel %vm4991, %v5566, 0
      %v5598 = vsel %vm4991, %v5567, 0
      %v5601 = vsel %vm4991, %v5568, 0
      %v5604 = vsel %vm4991, %v5569, 0
      %5606 = vmatprep.subr.bf16.mxu0 0
      %5607 = vmatpush1.bf16.msra.mxu0 0
      %5608 = vmatprep.subr.bf16.mxu0 0
      %5609 = vmatpush1.bf16.msra.mxu0 0
      %5610 = vmatprep.subr.bf16.mxu0 0
      %5611 = vmatpush1.bf16.msra.mxu0 0
      %5612 = vmatprep.subr.bf16.mxu0 0
      %5613 = vmatpush1.bf16.msra.mxu0 0
      %5614 = vmatprep.subr.bf16.mxu0 0
      %5615 = vmatpush1.bf16.msra.mxu0 %v5589
      %5616 = vmatprep.subr.bf16.mxu0 0
      %5617 = vmatpush1.bf16.msra.mxu0 %v5588
      %5618 = vmatprep.subr.bf16.mxu0 0
      %5619 = vmatpush1.bf16.msra.mxu0 %v5587
      %5620 = vmatprep.subr.bf16.mxu0 0
      %5621 = vmatpush1.bf16.msra.mxu0 %v5586
      %5622 = vmatprep.subr.bf16.mxu0 0
      %5623 = vmatpush2.bf16.msra.mxu0 0
      %5624 = vmatprep.subr.bf16.mxu0 0
      %5625 = vmatpush2.bf16.msra.mxu0 0
      %5626 = vmatprep.subr.bf16.mxu0 0
      %5627 = vmatpush2.bf16.msra.mxu0 0
      %5628 = vmatprep.subr.bf16.mxu0 0
      %5629 = vmatpush2.bf16.msra.mxu0 0
      %5630 = vmatprep.subr.bf16.mxu0 0
      %5631 = vmatpush2.bf16.msra.mxu0 0
      %5632 = vmatprep.subr.bf16.mxu0 0
      %5633 = vmatpush2.bf16.msra.mxu0 0
      %5634 = vmatprep.subr.bf16.mxu0 0
      %5635 = vmatpush2.bf16.msra.mxu0 0
      %5636 = vmatprep.subr.bf16.mxu0 0
      %5637 = vmatpush2.bf16.msra.mxu0 0
      %5638 = vmatprep.mubr.bf16.mxu0 0
      %5639 = vmatmul.mubr.bf16.gmra.mxu0 %v5595
      %v5640 = vpop.f32.mrf.mxu0
      %v5641 = vadd.f32 0.0, %v5640
      %v5642 = vpop.f32.mrf.mxu0
      %v5643 = vpop.f32.mrf.mxu0
      %v5644 = vadd.f32 0.0, %v5643
      %v5645 = vpop.f32.mrf.mxu0
      %5646 = vmatprep.mubr.bf16.mxu0 0
      %5647 = vmatmul.mubr.bf16.gmra.mxu0 %v5598
      %v5648 = vpop.f32.mrf.mxu0
      %v5649 = vadd.f32 0.0, %v5648
      %v5650 = vpop.f32.mrf.mxu0
      %v5651 = vpop.f32.mrf.mxu0
      %v5652 = vadd.f32 0.0, %v5651
      %v5653 = vpop.f32.mrf.mxu0
      %5654 = vmatprep.mubr.bf16.mxu0 0
      %5655 = vmatmul.mubr.bf16.gmra.mxu0 %v5601
      %v5656 = vpop.f32.mrf.mxu0
      %v5657 = vadd.f32 0.0, %v5656
      %v5658 = vpop.f32.mrf.mxu0
      %v5659 = vpop.f32.mrf.mxu0
      %v5660 = vadd.f32 0.0, %v5659
      %v5661 = vpop.f32.mrf.mxu0
      %5662 = vmatprep.mubr.bf16.mxu0 0
      %5663 = vmatmul.mubr.bf16.gmra.mxu0 %v5604
      %v5664 = vpop.f32.mrf.mxu0
      %v5665 = vadd.f32 0.0, %v5664
      %v5666 = vpop.f32.mrf.mxu0
      %v5667 = vpop.f32.mrf.mxu0
      %v5668 = vpop.f32.mrf.mxu0
      %5669 = vdwg.mxu0
      %v5678 = vunpack.c.l.b16 %v4951
      %v5679 = vunpack.c.l.b16 %v4952
      %v5680 = vunpack.c.l.b16 %v4953
      %v5681 = vunpack.c.l.b16 %v4954
      %v5682 = vunpack.c.l.b16 %v4955
      %v5683 = vunpack.c.l.b16 %v4956
      %v5684 = vunpack.c.l.b16 %v4957
      %v5685 = vunpack.c.l.b16 %v4958
      %v5686 = vpack.c.b16 %v5679, %v5678
      %v5687 = vpack.c.b16 %v5681, %v5680
      %v5688 = vpack.c.b16 %v5683, %v5682
      %v5689 = vpack.c.b16 %v5685, %v5684
      %v5695 = vsel %vm4991, %v5261, 0
      %v5698 = vsel %vm4991, %v5262, 0
      %v5701 = vsel %vm4991, %v5263, 0
      %v5704 = vsel %vm4991, %v5264, 0
      %5706 = vmatprep.subr.bf16.mxu0 0
      %5707 = vmatpush1.bf16.msra.mxu0 0
      %5708 = vmatprep.subr.bf16.mxu0 0
      %5709 = vmatpush1.bf16.msra.mxu0 0
      %5710 = vmatprep.subr.bf16.mxu0 0
      %5711 = vmatpush1.bf16.msra.mxu0 0
      %5712 = vmatprep.subr.bf16.mxu0 0
      %5713 = vmatpush1.bf16.msra.mxu0 0
      %5714 = vmatprep.subr.bf16.mxu0 0
      %5715 = vmatpush1.bf16.msra.mxu0 %v5689
      %5716 = vmatprep.subr.bf16.mxu0 0
      %5717 = vmatpush1.bf16.msra.mxu0 %v5688
      %5718 = vmatprep.subr.bf16.mxu0 0
      %5719 = vmatpush1.bf16.msra.mxu0 %v5687
      %5720 = vmatprep.subr.bf16.mxu0 0
      %5721 = vmatpush1.bf16.msra.mxu0 %v5686
      %5722 = vmatprep.subr.bf16.mxu0 0
      %5723 = vmatpush2.bf16.msra.mxu0 0
      %5724 = vmatprep.subr.bf16.mxu0 0
      %5725 = vmatpush2.bf16.msra.mxu0 0
      %5726 = vmatprep.subr.bf16.mxu0 0
      %5727 = vmatpush2.bf16.msra.mxu0 0
      %5728 = vmatprep.subr.bf16.mxu0 0
      %5729 = vmatpush2.bf16.msra.mxu0 0
      %5730 = vmatprep.subr.bf16.mxu0 0
      %5731 = vmatpush2.bf16.msra.mxu0 0
      %5732 = vmatprep.subr.bf16.mxu0 0
      %5733 = vmatpush2.bf16.msra.mxu0 0
      %5734 = vmatprep.subr.bf16.mxu0 0
      %5735 = vmatpush2.bf16.msra.mxu0 0
      %5736 = vmatprep.subr.bf16.mxu0 0
      %5737 = vmatpush2.bf16.msra.mxu0 0
      %5738 = vmatprep.mubr.bf16.mxu0 0
      %5739 = vmatmul.mubr.bf16.gmra.mxu0 %v5695
      %v5740 = vpop.f32.mrf.mxu0
      %v5741 = vadd.f32 %v5641, %v5740
      %v5742 = vpop.f32.mrf.mxu0
      %v5743 = vpop.f32.mrf.mxu0
      %v5744 = vadd.f32 %v5644, %v5743
      %v5745 = vpop.f32.mrf.mxu0
      %5746 = vmatprep.mubr.bf16.mxu0 0
      %5747 = vmatmul.mubr.bf16.gmra.mxu0 %v5698
      %v5748 = vpop.f32.mrf.mxu0
      %v5749 = vadd.f32 %v5649, %v5748
      %v5750 = vpop.f32.mrf.mxu0
      %v5751 = vpop.f32.mrf.mxu0
      %v5752 = vadd.f32 %v5652, %v5751
      %v5753 = vpop.f32.mrf.mxu0
      %5754 = vmatprep.mubr.bf16.mxu0 0
      %5755 = vmatmul.mubr.bf16.gmra.mxu0 %v5701
      %v5756 = vpop.f32.mrf.mxu0
      %v5757 = vadd.f32 %v5657, %v5756
      %v5758 = vpop.f32.mrf.mxu0
      %v5759 = vpop.f32.mrf.mxu0
      %v5760 = vadd.f32 %v5660, %v5759
      %v5761 = vpop.f32.mrf.mxu0
      %5762 = vmatprep.mubr.bf16.mxu0 0
      %5763 = vmatmul.mubr.bf16.gmra.mxu0 %v5704
      %v5764 = vpop.f32.mrf.mxu0
      %v5765 = vadd.f32 %v5665, %v5764
      %v5766 = vpop.f32.mrf.mxu0
      %v5767 = vpop.f32.mrf.mxu0
      %v5768 = vpop.f32.mrf.mxu0
      %5769 = vdwg.mxu0
      %v5770 = vpack.c.bf16 %v4776, %v4772
      %v5771 = vpack.c.bf16 %v4786, %v4782
      %v5772 = vpack.c.bf16 %v4796, %v4792
      %v5773 = vpack.c.bf16 %v4802, %v4802
      %v5774 = vpack.c.bf16 %v4847, %v4843
      %v5775 = vpack.c.bf16 %v4857, %v4853
      %v5776 = vpack.c.bf16 %v4867, %v4863
      %v5777 = vpack.c.bf16 %v4873, %v4873
      %v5779 = vsel %vm4991, %v5770, 0
      %v5782 = vsel %vm4991, %v5771, 0
      %v5785 = vsel %vm4991, %v5772, 0
      %v5788 = vsel %vm4991, %v5773, 0
      %v5791 = vsel %vm4991, %v5774, 0
      %v5794 = vsel %vm4991, %v5775, 0
      %v5797 = vsel %vm4991, %v5776, 0
      %v5800 = vsel %vm4991, %v5777, 0
      %5802 = vmatprep.subr.bf16.mxu0 0
      %5803 = vmatpush1.bf16.xpose.msra.mxu0 0
      %5804 = vmatprep.subr.bf16.mxu0 0
      %5805 = vmatpush1.bf16.xpose.msra.mxu0 0
      %5806 = vmatprep.subr.bf16.mxu0 0
      %5807 = vmatpush1.bf16.xpose.msra.mxu0 0
      %5808 = vmatprep.subr.bf16.mxu0 0
      %5809 = vmatpush1.bf16.xpose.msra.mxu0 0
      %5810 = vmatprep.subr.bf16.mxu0 0
      %5811 = vmatpush1.bf16.xpose.msra.mxu0 %v5800
      %5812 = vmatprep.subr.bf16.mxu0 0
      %5813 = vmatpush1.bf16.xpose.msra.mxu0 %v5797
      %5814 = vmatprep.subr.bf16.mxu0 0
      %5815 = vmatpush1.bf16.xpose.msra.mxu0 %v5794
      %5816 = vmatprep.subr.bf16.mxu0 0
      %5817 = vmatpush1.bf16.xpose.msra.mxu0 %v5791
      %5818 = vmatprep.subr.bf16.mxu0 0
      %5819 = vmatpush2.bf16.xpose.msra.mxu0 0
      %5820 = vmatprep.subr.bf16.mxu0 0
      %5821 = vmatpush2.bf16.xpose.msra.mxu0 0
      %5822 = vmatprep.subr.bf16.mxu0 0
      %5823 = vmatpush2.bf16.xpose.msra.mxu0 0
      %5824 = vmatprep.subr.bf16.mxu0 0
      %5825 = vmatpush2.bf16.xpose.msra.mxu0 0
      %5826 = vmatprep.subr.bf16.mxu0 0
      %5827 = vmatpush2.bf16.xpose.msra.mxu0 0
      %5828 = vmatprep.subr.bf16.mxu0 0
      %5829 = vmatpush2.bf16.xpose.msra.mxu0 0
      %5830 = vmatprep.subr.bf16.mxu0 0
      %5831 = vmatpush2.bf16.xpose.msra.mxu0 0
      %5832 = vmatprep.subr.bf16.mxu0 0
      %5833 = vmatpush2.bf16.xpose.msra.mxu0 0
      %5834 = vmatprep.mubr.bf16.mxu0 0
      %5835 = vmatmul.mubr.bf16.gmra.mxu0 %v5779
      %v5836 = vpop.f32.mrf.mxu0
      %v5837 = vadd.f32 0.0, %v5836
      %v5838 = vpop.f32.mrf.mxu0
      %v5839 = vpop.f32.mrf.mxu0
      %v5840 = vadd.f32 0.0, %v5839
      %v5841 = vpop.f32.mrf.mxu0
      %5842 = vmatprep.mubr.bf16.mxu0 0
      %5843 = vmatmul.mubr.bf16.gmra.mxu0 %v5782
      %v5844 = vpop.f32.mrf.mxu0
      %v5845 = vadd.f32 0.0, %v5844
      %v5846 = vpop.f32.mrf.mxu0
      %v5847 = vpop.f32.mrf.mxu0
      %v5848 = vadd.f32 0.0, %v5847
      %v5849 = vpop.f32.mrf.mxu0
      %5850 = vmatprep.mubr.bf16.mxu0 0
      %5851 = vmatmul.mubr.bf16.gmra.mxu0 %v5785
      %v5852 = vpop.f32.mrf.mxu0
      %v5853 = vadd.f32 0.0, %v5852
      %v5854 = vpop.f32.mrf.mxu0
      %v5855 = vpop.f32.mrf.mxu0
      %v5856 = vadd.f32 0.0, %v5855
      %v5857 = vpop.f32.mrf.mxu0
      %5858 = vmatprep.mubr.bf16.mxu0 0
      %5859 = vmatmul.mubr.bf16.gmra.mxu0 %v5788
      %v5860 = vpop.f32.mrf.mxu0
      %v5861 = vadd.f32 0.0, %v5860
      %v5862 = vpop.f32.mrf.mxu0
      %v5863 = vpop.f32.mrf.mxu0
      %v5864 = vpop.f32.mrf.mxu0
      %5865 = vdwg.mxu0
      %v5866 = vmul.f32 %v5837, 0.125
      %v5867 = vmul.f32 %v5840, 0.125
      %v5868 = vmul.f32 %v5845, 0.125
      %v5869 = vmul.f32 %v5848, 0.125
      %v5870 = vmul.f32 %v5853, 0.125
      %v5871 = vmul.f32 %v5856, 0.125
      %v5872 = vmul.f32 %v5861, 0.125
      %v5873 = vadd.f32 %v5866, %v4502
      %v5874 = vadd.f32 %v5867, %v4503
      %v5875 = vadd.f32 %v5868, %v4504
      %v5876 = vadd.f32 %v5869, %v4505
      %v5877 = vadd.f32 %v5870, %v4506
      %v5878 = vadd.f32 %v5871, %v4507
      %v5879 = vadd.f32 %v5872, %v4508
      %v5880 = vsel %vm5094, %v5873, -inf
      %5881 = vmax.xlane.f32.xlu0 %v5880
      %v5882 = vpop.xlane.xlu0 %5881
      %v5883 = vsel %vm5094, %v5874, -inf
      %5884 = vmax.xlane.f32.xlu0 %v5883
      %v5885 = vpop.xlane.xlu0 %5884
      %v5886 = vsel %vm5094, %v5875, -inf
      %5887 = vmax.xlane.f32.xlu0 %v5886
      %v5888 = vpop.xlane.xlu0 %5887
      %v5889 = vsel %vm5094, %v5876, -inf
      %5890 = vmax.xlane.f32.xlu0 %v5889
      %v5891 = vpop.xlane.xlu0 %5890
      %v5892 = vsel %vm5094, %v5877, -inf
      %5893 = vmax.xlane.f32.xlu0 %v5892
      %v5894 = vpop.xlane.xlu0 %5893
      %v5895 = vsel %vm5094, %v5878, -inf
      %5896 = vmax.xlane.f32.xlu0 %v5895
      %v5897 = vpop.xlane.xlu0 %5896
      %v5898 = vsel %vm5113, %v5879, -inf
      %5899 = vmax.xlane.f32.xlu0 %v5898
      %v5900 = vpop.xlane.xlu0 %5899
      %v5901 = vsub.f32 %v5873, %v5882
      %v5902 = vsub.f32 %v5874, %v5885
      %v5903 = vsub.f32 %v5875, %v5888
      %v5904 = vsub.f32 %v5876, %v5891
      %v5905 = vsub.f32 %v5877, %v5894
      %v5906 = vsub.f32 %v5878, %v5897
      %v5907 = vsub.f32 %v5879, %v5900
      %v5908 = vmul.f32 %v5901, 1.442695
      %v5909 = vpow.pop %v5908
      %v5910 = vmul.f32 %v5902, 1.442695
      %v5911 = vpow.pop %v5910
      %v5912 = vmul.f32 %v5903, 1.442695
      %v5913 = vpow.pop %v5912
      %v5914 = vmul.f32 %v5904, 1.442695
      %v5915 = vpow.pop %v5914
      %v5916 = vmul.f32 %v5905, 1.442695
      %v5917 = vpow.pop %v5916
      %v5918 = vmul.f32 %v5906, 1.442695
      %v5919 = vpow.pop %v5918
      %v5920 = vmul.f32 %v5907, 1.442695
      %v5921 = vpow.pop %v5920
      %v5922 = vsel %vm5094, %v5909, 0.0
      %5923 = vadd.xlane.f32.xlu0 %v5922
      %v5924 = vpop.xlane.xlu0 %5923
      %v5925 = vsel %vm5094, %v5911, 0.0
      %5926 = vadd.xlane.f32.xlu0 %v5925
      %v5927 = vpop.xlane.xlu0 %5926
      %v5928 = vsel %vm5094, %v5913, 0.0
      %5929 = vadd.xlane.f32.xlu0 %v5928
      %v5930 = vpop.xlane.xlu0 %5929
      %v5931 = vsel %vm5094, %v5915, 0.0
      %5932 = vadd.xlane.f32.xlu0 %v5931
      %v5933 = vpop.xlane.xlu0 %5932
      %v5934 = vsel %vm5094, %v5917, 0.0
      %5935 = vadd.xlane.f32.xlu0 %v5934
      %v5936 = vpop.xlane.xlu0 %5935
      %v5937 = vsel %vm5094, %v5919, 0.0
      %5938 = vadd.xlane.f32.xlu0 %v5937
      %v5939 = vpop.xlane.xlu0 %5938
      %v5940 = vsel %vm5113, %v5921, 0.0
      %5941 = vadd.xlane.f32.xlu0 %v5940
      %v5942 = vpop.xlane.xlu0 %5941
      %v5943 = vrcp.pop %v5924
      %v5944 = vrcp.pop %v5927
      %v5945 = vrcp.pop %v5930
      %v5946 = vrcp.pop %v5933
      %v5947 = vrcp.pop %v5936
      %v5948 = vrcp.pop %v5939
      %v5949 = vrcp.pop %v5942
      %v5950 = vmul.f32 %v5909, %v5943
      %v5951 = vmul.f32 %v5911, %v5944
      %v5952 = vmul.f32 %v5913, %v5945
      %v5953 = vmul.f32 %v5915, %v5946
      %v5954 = vmul.f32 %v5917, %v5947
      %v5955 = vmul.f32 %v5919, %v5948
      %v5956 = vmul.f32 %v5921, %v5949
      %v5957 = vpack.c.bf16 %v5951, %v5950
      %v5958 = vpack.c.bf16 %v5953, %v5952
      %v5959 = vpack.c.bf16 %v5955, %v5954
      %v5960 = vpack.c.bf16 %v5956, %v5956
      %v5961 = vpack.c.bf16 %v4918, %v4914
      %v5962 = vpack.c.bf16 %v4928, %v4924
      %v5963 = vpack.c.bf16 %v4938, %v4934
      %v5964 = vpack.c.bf16 %v4944, %v4944
      %v5966 = vsel %vm5094, %v5957, 0
      %v5969 = vsel %vm5094, %v5958, 0
      %v5972 = vsel %vm5094, %v5959, 0
      %v5975 = vsel %vm5094, %v5960, 0
      %v5978 = vsel %vm5193, %v5964, 0
      %5980 = vmatprep.subr.bf16.mxu0 0
      %5981 = vmatpush1.bf16.msra.mxu0 0
      %5982 = vmatprep.subr.bf16.mxu0 0
      %5983 = vmatpush1.bf16.msra.mxu0 0
      %5984 = vmatprep.subr.bf16.mxu0 0
      %5985 = vmatpush1.bf16.msra.mxu0 0
      %5986 = vmatprep.subr.bf16.mxu0 0
      %5987 = vmatpush1.bf16.msra.mxu0 0
      %5988 = vmatprep.subr.bf16.mxu0 0
      %5989 = vmatpush1.bf16.msra.mxu0 %v5978
      %5990 = vmatprep.subr.bf16.mxu0 0
      %5991 = vmatpush1.bf16.msra.mxu0 %v5963
      %5992 = vmatprep.subr.bf16.mxu0 0
      %5993 = vmatpush1.bf16.msra.mxu0 %v5962
      %5994 = vmatprep.subr.bf16.mxu0 0
      %5995 = vmatpush1.bf16.msra.mxu0 %v5961
      %5996 = vmatprep.subr.bf16.mxu0 0
      %5997 = vmatpush2.bf16.msra.mxu0 0
      %5998 = vmatprep.subr.bf16.mxu0 0
      %5999 = vmatpush2.bf16.msra.mxu0 0
      %6000 = vmatprep.subr.bf16.mxu0 0
      %6001 = vmatpush2.bf16.msra.mxu0 0
      %6002 = vmatprep.subr.bf16.mxu0 0
      %6003 = vmatpush2.bf16.msra.mxu0 0
      %6004 = vmatprep.subr.bf16.mxu0 0
      %6005 = vmatpush2.bf16.msra.mxu0 0
      %6006 = vmatprep.subr.bf16.mxu0 0
      %6007 = vmatpush2.bf16.msra.mxu0 0
      %6008 = vmatprep.subr.bf16.mxu0 0
      %6009 = vmatpush2.bf16.msra.mxu0 0
      %6010 = vmatprep.subr.bf16.mxu0 0
      %6011 = vmatpush2.bf16.msra.mxu0 0
      %6012 = vmatprep.mubr.bf16.mxu0 0
      %6013 = vmatmul.mubr.bf16.gmra.mxu0 %v5966
      %v6014 = vpop.f32.mrf.mxu0
      %v6015 = vadd.f32 0.0, %v6014
      %v6016 = vpop.f32.mrf.mxu0
      %v6017 = vpop.f32.mrf.mxu0
      %v6018 = vadd.f32 0.0, %v6017
      %v6019 = vpop.f32.mrf.mxu0
      %6020 = vmatprep.mubr.bf16.mxu0 0
      %6021 = vmatmul.mubr.bf16.gmra.mxu0 %v5969
      %v6022 = vpop.f32.mrf.mxu0
      %v6023 = vadd.f32 0.0, %v6022
      %v6024 = vpop.f32.mrf.mxu0
      %v6025 = vpop.f32.mrf.mxu0
      %v6026 = vadd.f32 0.0, %v6025
      %v6027 = vpop.f32.mrf.mxu0
      %6028 = vmatprep.mubr.bf16.mxu0 0
      %6029 = vmatmul.mubr.bf16.gmra.mxu0 %v5972
      %v6030 = vpop.f32.mrf.mxu0
      %v6031 = vadd.f32 0.0, %v6030
      %v6032 = vpop.f32.mrf.mxu0
      %v6033 = vpop.f32.mrf.mxu0
      %v6034 = vadd.f32 0.0, %v6033
      %v6035 = vpop.f32.mrf.mxu0
      %6036 = vmatprep.mubr.bf16.mxu0 0
      %6037 = vmatmul.mubr.bf16.gmra.mxu0 %v5975
      %v6038 = vpop.f32.mrf.mxu0
      %v6039 = vadd.f32 0.0, %v6038
      %v6040 = vpop.f32.mrf.mxu0
      %v6041 = vpop.f32.mrf.mxu0
      %v6042 = vpop.f32.mrf.mxu0
      %6043 = vdwg.mxu0
      %v6044 = vpack.c.bf16 %v6018, %v6015
      %v6045 = vpack.c.bf16 %v6026, %v6023
      %v6046 = vpack.c.bf16 %v6034, %v6031
      %v6047 = vpack.c.bf16 %v6039, %v6039
      %v6056 = vunpack.c.l.b16 %v4967
      %v6057 = vunpack.c.l.b16 %v4968
      %v6058 = vunpack.c.l.b16 %v4969
      %v6059 = vunpack.c.l.b16 %v4970
      %v6060 = vunpack.c.l.b16 %v4971
      %v6061 = vunpack.c.l.b16 %v4972
      %v6062 = vunpack.c.l.b16 %v4973
      %v6063 = vunpack.c.l.b16 %v4974
      %v6064 = vpack.c.b16 %v6057, %v6056
      %v6065 = vpack.c.b16 %v6059, %v6058
      %v6066 = vpack.c.b16 %v6061, %v6060
      %v6067 = vpack.c.b16 %v6063, %v6062
      %v6073 = vsel %vm4991, %v6044, 0
      %v6076 = vsel %vm4991, %v6045, 0
      %v6079 = vsel %vm4991, %v6046, 0
      %v6082 = vsel %vm4991, %v6047, 0
      %6084 = vmatprep.subr.bf16.mxu0 0
      %6085 = vmatpush1.bf16.msra.mxu0 0
      %6086 = vmatprep.subr.bf16.mxu0 0
      %6087 = vmatpush1.bf16.msra.mxu0 0
      %6088 = vmatprep.subr.bf16.mxu0 0
      %6089 = vmatpush1.bf16.msra.mxu0 0
      %6090 = vmatprep.subr.bf16.mxu0 0
      %6091 = vmatpush1.bf16.msra.mxu0 0
      %6092 = vmatprep.subr.bf16.mxu0 0
      %6093 = vmatpush1.bf16.msra.mxu0 %v6067
      %6094 = vmatprep.subr.bf16.mxu0 0
      %6095 = vmatpush1.bf16.msra.mxu0 %v6066
      %6096 = vmatprep.subr.bf16.mxu0 0
      %6097 = vmatpush1.bf16.msra.mxu0 %v6065
      %6098 = vmatprep.subr.bf16.mxu0 0
      %6099 = vmatpush1.bf16.msra.mxu0 %v6064
      %6100 = vmatprep.subr.bf16.mxu0 0
      %6101 = vmatpush2.bf16.msra.mxu0 0
      %6102 = vmatprep.subr.bf16.mxu0 0
      %6103 = vmatpush2.bf16.msra.mxu0 0
      %6104 = vmatprep.subr.bf16.mxu0 0
      %6105 = vmatpush2.bf16.msra.mxu0 0
      %6106 = vmatprep.subr.bf16.mxu0 0
      %6107 = vmatpush2.bf16.msra.mxu0 0
      %6108 = vmatprep.subr.bf16.mxu0 0
      %6109 = vmatpush2.bf16.msra.mxu0 0
      %6110 = vmatprep.subr.bf16.mxu0 0
      %6111 = vmatpush2.bf16.msra.mxu0 0
      %6112 = vmatprep.subr.bf16.mxu0 0
      %6113 = vmatpush2.bf16.msra.mxu0 0
      %6114 = vmatprep.subr.bf16.mxu0 0
      %6115 = vmatpush2.bf16.msra.mxu0 0
      %6116 = vmatprep.mubr.bf16.mxu0 0
      %6117 = vmatmul.mubr.bf16.gmra.mxu0 %v6073
      %v6118 = vpop.f32.mrf.mxu0
      %v6119 = vadd.f32 0.0, %v6118
      %v6120 = vpop.f32.mrf.mxu0
      %v6121 = vpop.f32.mrf.mxu0
      %v6122 = vadd.f32 0.0, %v6121
      %v6123 = vpop.f32.mrf.mxu0
      %6124 = vmatprep.mubr.bf16.mxu0 0
      %6125 = vmatmul.mubr.bf16.gmra.mxu0 %v6076
      %v6126 = vpop.f32.mrf.mxu0
      %v6127 = vadd.f32 0.0, %v6126
      %v6128 = vpop.f32.mrf.mxu0
      %v6129 = vpop.f32.mrf.mxu0
      %v6130 = vadd.f32 0.0, %v6129
      %v6131 = vpop.f32.mrf.mxu0
      %6132 = vmatprep.mubr.bf16.mxu0 0
      %6133 = vmatmul.mubr.bf16.gmra.mxu0 %v6079
      %v6134 = vpop.f32.mrf.mxu0
      %v6135 = vadd.f32 0.0, %v6134
      %v6136 = vpop.f32.mrf.mxu0
      %v6137 = vpop.f32.mrf.mxu0
      %v6138 = vadd.f32 0.0, %v6137
      %v6139 = vpop.f32.mrf.mxu0
      %6140 = vmatprep.mubr.bf16.mxu0 0
      %6141 = vmatmul.mubr.bf16.gmra.mxu0 %v6082
      %v6142 = vpop.f32.mrf.mxu0
      %v6143 = vadd.f32 0.0, %v6142
      %v6144 = vpop.f32.mrf.mxu0
      %v6145 = vpop.f32.mrf.mxu0
      %v6146 = vpop.f32.mrf.mxu0
      %6147 = vdwg.mxu0
      %v6148 = vadd.f32 %v5741, %v6119
      %v6149 = vadd.f32 %v5744, %v6122
      %v6150 = vadd.f32 %v5749, %v6127
      %v6151 = vadd.f32 %v5752, %v6130
      %v6152 = vadd.f32 %v5757, %v6135
      %v6153 = vadd.f32 %v5760, %v6138
      %v6154 = vadd.f32 %v5765, %v6143
      %6159 = vrot.lane.b32.xlu0 %v5770, 64
      %v6160 = vpop.permute.xlu0 %6159
      %6161 = vrot.lane.b32.xlu0 %v5771, 64
      %v6162 = vpop.permute.xlu0 %6161
      %6163 = vrot.lane.b32.xlu0 %v5772, 64
      %v6164 = vpop.permute.xlu0 %6163
      %6165 = vrot.lane.b32.xlu0 %v5773, 64
      %v6166 = vpop.permute.xlu0 %6165
      %6171 = vrot.lane.b32.xlu0 %v5774, 64
      %v6172 = vpop.permute.xlu0 %6171
      %6173 = vrot.lane.b32.xlu0 %v5775, 64
      %v6174 = vpop.permute.xlu0 %6173
      %6175 = vrot.lane.b32.xlu0 %v5776, 64
      %v6176 = vpop.permute.xlu0 %6175
      %6177 = vrot.lane.b32.xlu0 %v5777, 64
      %v6178 = vpop.permute.xlu0 %6177
      %v6180 = vsel %vm4991, %v6160, 0
      %v6183 = vsel %vm4991, %v6162, 0
      %v6186 = vsel %vm4991, %v6164, 0
      %v6189 = vsel %vm4991, %v6166, 0
      %v6192 = vsel %vm4991, %v6172, 0
      %v6195 = vsel %vm4991, %v6174, 0
      %v6198 = vsel %vm4991, %v6176, 0
      %v6201 = vsel %vm4991, %v6178, 0
      %6203 = vmatprep.subr.bf16.mxu0 0
      %6204 = vmatpush1.bf16.xpose.msra.mxu0 0
      %6205 = vmatprep.subr.bf16.mxu0 0
      %6206 = vmatpush1.bf16.xpose.msra.mxu0 0
      %6207 = vmatprep.subr.bf16.mxu0 0
      %6208 = vmatpush1.bf16.xpose.msra.mxu0 0
      %6209 = vmatprep.subr.bf16.mxu0 0
      %6210 = vmatpush1.bf16.xpose.msra.mxu0 0
      %6211 = vmatprep.subr.bf16.mxu0 0
      %6212 = vmatpush1.bf16.xpose.msra.mxu0 %v6201
      %6213 = vmatprep.subr.bf16.mxu0 0
      %6214 = vmatpush1.bf16.xpose.msra.mxu0 %v6198
      %6215 = vmatprep.subr.bf16.mxu0 0
      %6216 = vmatpush1.bf16.xpose.msra.mxu0 %v6195
      %6217 = vmatprep.subr.bf16.mxu0 0
      %6218 = vmatpush1.bf16.xpose.msra.mxu0 %v6192
      %6219 = vmatprep.subr.bf16.mxu0 0
      %6220 = vmatpush2.bf16.xpose.msra.mxu0 0
      %6221 = vmatprep.subr.bf16.mxu0 0
      %6222 = vmatpush2.bf16.xpose.msra.mxu0 0
      %6223 = vmatprep.subr.bf16.mxu0 0
      %6224 = vmatpush2.bf16.xpose.msra.mxu0 0
      %6225 = vmatprep.subr.bf16.mxu0 0
      %6226 = vmatpush2.bf16.xpose.msra.mxu0 0
      %6227 = vmatprep.subr.bf16.mxu0 0
      %6228 = vmatpush2.bf16.xpose.msra.mxu0 0
      %6229 = vmatprep.subr.bf16.mxu0 0
      %6230 = vmatpush2.bf16.xpose.msra.mxu0 0
      %6231 = vmatprep.subr.bf16.mxu0 0
      %6232 = vmatpush2.bf16.xpose.msra.mxu0 0
      %6233 = vmatprep.subr.bf16.mxu0 0
      %6234 = vmatpush2.bf16.xpose.msra.mxu0 0
      %6235 = vmatprep.mubr.bf16.mxu0 0
      %6236 = vmatmul.mubr.bf16.gmra.mxu0 %v6180
      %v6237 = vpop.f32.mrf.mxu0
      %v6238 = vadd.f32 0.0, %v6237
      %v6239 = vpop.f32.mrf.mxu0
      %v6240 = vpop.f32.mrf.mxu0
      %v6241 = vadd.f32 0.0, %v6240
      %v6242 = vpop.f32.mrf.mxu0
      %6243 = vmatprep.mubr.bf16.mxu0 0
      %6244 = vmatmul.mubr.bf16.gmra.mxu0 %v6183
      %v6245 = vpop.f32.mrf.mxu0
      %v6246 = vadd.f32 0.0, %v6245
      %v6247 = vpop.f32.mrf.mxu0
      %v6248 = vpop.f32.mrf.mxu0
      %v6249 = vadd.f32 0.0, %v6248
      %v6250 = vpop.f32.mrf.mxu0
      %6251 = vmatprep.mubr.bf16.mxu0 0
      %6252 = vmatmul.mubr.bf16.gmra.mxu0 %v6186
      %v6253 = vpop.f32.mrf.mxu0
      %v6254 = vadd.f32 0.0, %v6253
      %v6255 = vpop.f32.mrf.mxu0
      %v6256 = vpop.f32.mrf.mxu0
      %v6257 = vadd.f32 0.0, %v6256
      %v6258 = vpop.f32.mrf.mxu0
      %6259 = vmatprep.mubr.bf16.mxu0 0
      %6260 = vmatmul.mubr.bf16.gmra.mxu0 %v6189
      %v6261 = vpop.f32.mrf.mxu0
      %v6262 = vadd.f32 0.0, %v6261
      %v6263 = vpop.f32.mrf.mxu0
      %v6264 = vpop.f32.mrf.mxu0
      %v6265 = vpop.f32.mrf.mxu0
      %6266 = vdwg.mxu0
      %v6267 = vmul.f32 %v6238, 0.125
      %v6268 = vmul.f32 %v6241, 0.125
      %v6269 = vmul.f32 %v6246, 0.125
      %v6270 = vmul.f32 %v6249, 0.125
      %v6271 = vmul.f32 %v6254, 0.125
      %v6272 = vmul.f32 %v6257, 0.125
      %v6273 = vmul.f32 %v6262, 0.125
      %v6274 = vadd.f32 %v6267, %v4502
      %v6275 = vadd.f32 %v6268, %v4503
      %v6276 = vadd.f32 %v6269, %v4504
      %v6277 = vadd.f32 %v6270, %v4505
      %v6278 = vadd.f32 %v6271, %v4506
      %v6279 = vadd.f32 %v6272, %v4507
      %v6280 = vadd.f32 %v6273, %v4508
      %v6281 = vsel %vm5094, %v6274, -inf
      %6282 = vmax.xlane.f32.xlu0 %v6281
      %v6283 = vpop.xlane.xlu0 %6282
      %v6284 = vsel %vm5094, %v6275, -inf
      %6285 = vmax.xlane.f32.xlu0 %v6284
      %v6286 = vpop.xlane.xlu0 %6285
      %v6287 = vsel %vm5094, %v6276, -inf
      %6288 = vmax.xlane.f32.xlu0 %v6287
      %v6289 = vpop.xlane.xlu0 %6288
      %v6290 = vsel %vm5094, %v6277, -inf
      %6291 = vmax.xlane.f32.xlu0 %v6290
      %v6292 = vpop.xlane.xlu0 %6291
      %v6293 = vsel %vm5094, %v6278, -inf
      %6294 = vmax.xlane.f32.xlu0 %v6293
      %v6295 = vpop.xlane.xlu0 %6294
      %v6296 = vsel %vm5094, %v6279, -inf
      %6297 = vmax.xlane.f32.xlu0 %v6296
      %v6298 = vpop.xlane.xlu0 %6297
      %v6299 = vsel %vm5113, %v6280, -inf
      %6300 = vmax.xlane.f32.xlu0 %v6299
      %v6301 = vpop.xlane.xlu0 %6300
      %v6302 = vsub.f32 %v6274, %v6283
      %v6303 = vsub.f32 %v6275, %v6286
      %v6304 = vsub.f32 %v6276, %v6289
      %v6305 = vsub.f32 %v6277, %v6292
      %v6306 = vsub.f32 %v6278, %v6295
      %v6307 = vsub.f32 %v6279, %v6298
      %v6308 = vsub.f32 %v6280, %v6301
      %v6309 = vmul.f32 %v6302, 1.442695
      %v6310 = vpow.pop %v6309
      %v6311 = vmul.f32 %v6303, 1.442695
      %v6312 = vpow.pop %v6311
      %v6313 = vmul.f32 %v6304, 1.442695
      %v6314 = vpow.pop %v6313
      %v6315 = vmul.f32 %v6305, 1.442695
      %v6316 = vpow.pop %v6315
      %v6317 = vmul.f32 %v6306, 1.442695
      %v6318 = vpow.pop %v6317
      %v6319 = vmul.f32 %v6307, 1.442695
      %v6320 = vpow.pop %v6319
      %v6321 = vmul.f32 %v6308, 1.442695
      %v6322 = vpow.pop %v6321
      %v6323 = vsel %vm5094, %v6310, 0.0
      %6324 = vadd.xlane.f32.xlu0 %v6323
      %v6325 = vpop.xlane.xlu0 %6324
      %v6326 = vsel %vm5094, %v6312, 0.0
      %6327 = vadd.xlane.f32.xlu0 %v6326
      %v6328 = vpop.xlane.xlu0 %6327
      %v6329 = vsel %vm5094, %v6314, 0.0
      %6330 = vadd.xlane.f32.xlu0 %v6329
      %v6331 = vpop.xlane.xlu0 %6330
      %v6332 = vsel %vm5094, %v6316, 0.0
      %6333 = vadd.xlane.f32.xlu0 %v6332
      %v6334 = vpop.xlane.xlu0 %6333
      %v6335 = vsel %vm5094, %v6318, 0.0
      %6336 = vadd.xlane.f32.xlu0 %v6335
      %v6337 = vpop.xlane.xlu0 %6336
      %v6338 = vsel %vm5094, %v6320, 0.0
      %6339 = vadd.xlane.f32.xlu0 %v6338
      %v6340 = vpop.xlane.xlu0 %6339
      %v6341 = vsel %vm5113, %v6322, 0.0
      %6342 = vadd.xlane.f32.xlu0 %v6341
      %v6343 = vpop.xlane.xlu0 %6342
      %v6344 = vrcp.pop %v6325
      %v6345 = vrcp.pop %v6328
      %v6346 = vrcp.pop %v6331
      %v6347 = vrcp.pop %v6334
      %v6348 = vrcp.pop %v6337
      %v6349 = vrcp.pop %v6340
      %v6350 = vrcp.pop %v6343
      %v6351 = vmul.f32 %v6310, %v6344
      %v6352 = vmul.f32 %v6312, %v6345
      %v6353 = vmul.f32 %v6314, %v6346
      %v6354 = vmul.f32 %v6316, %v6347
      %v6355 = vmul.f32 %v6318, %v6348
      %v6356 = vmul.f32 %v6320, %v6349
      %v6357 = vmul.f32 %v6322, %v6350
      %v6358 = vpack.c.bf16 %v6352, %v6351
      %v6359 = vpack.c.bf16 %v6354, %v6353
      %v6360 = vpack.c.bf16 %v6356, %v6355
      %v6361 = vpack.c.bf16 %v6357, %v6357
      %6366 = vrot.lane.b32.xlu0 %v5961, 64
      %v6367 = vpop.permute.xlu0 %6366
      %6368 = vrot.lane.b32.xlu0 %v5962, 64
      %v6369 = vpop.permute.xlu0 %6368
      %6370 = vrot.lane.b32.xlu0 %v5963, 64
      %v6371 = vpop.permute.xlu0 %6370
      %6372 = vrot.lane.b32.xlu0 %v5964, 64
      %v6373 = vpop.permute.xlu0 %6372
      %v6378 = vsel %vm5094, %v6358, 0
      %v6381 = vsel %vm5094, %v6359, 0
      %v6384 = vsel %vm5094, %v6360, 0
      %v6387 = vsel %vm5094, %v6361, 0
      %v6390 = vsel %vm5193, %v6373, 0
      %6392 = vmatprep.subr.bf16.mxu0 0
      %6393 = vmatpush1.bf16.msra.mxu0 0
      %6394 = vmatprep.subr.bf16.mxu0 0
      %6395 = vmatpush1.bf16.msra.mxu0 0
      %6396 = vmatprep.subr.bf16.mxu0 0
      %6397 = vmatpush1.bf16.msra.mxu0 0
      %6398 = vmatprep.subr.bf16.mxu0 0
      %6399 = vmatpush1.bf16.msra.mxu0 0
      %6400 = vmatprep.subr.bf16.mxu0 0
      %6401 = vmatpush1.bf16.msra.mxu0 %v6390
      %6402 = vmatprep.subr.bf16.mxu0 0
      %6403 = vmatpush1.bf16.msra.mxu0 %v6371
      %6404 = vmatprep.subr.bf16.mxu0 0
      %6405 = vmatpush1.bf16.msra.mxu0 %v6369
      %6406 = vmatprep.subr.bf16.mxu0 0
      %6407 = vmatpush1.bf16.msra.mxu0 %v6367
      %6408 = vmatprep.subr.bf16.mxu0 0
      %6409 = vmatpush2.bf16.msra.mxu0 0
      %6410 = vmatprep.subr.bf16.mxu0 0
      %6411 = vmatpush2.bf16.msra.mxu0 0
      %6412 = vmatprep.subr.bf16.mxu0 0
      %6413 = vmatpush2.bf16.msra.mxu0 0
      %6414 = vmatprep.subr.bf16.mxu0 0
      %6415 = vmatpush2.bf16.msra.mxu0 0
      %6416 = vmatprep.subr.bf16.mxu0 0
      %6417 = vmatpush2.bf16.msra.mxu0 0
      %6418 = vmatprep.subr.bf16.mxu0 0
      %6419 = vmatpush2.bf16.msra.mxu0 0
      %6420 = vmatprep.subr.bf16.mxu0 0
      %6421 = vmatpush2.bf16.msra.mxu0 0
      %6422 = vmatprep.subr.bf16.mxu0 0
      %6423 = vmatpush2.bf16.msra.mxu0 0
      %6424 = vmatprep.mubr.bf16.mxu0 0
      %6425 = vmatmul.mubr.bf16.gmra.mxu0 %v6378
      %v6426 = vpop.f32.mrf.mxu0
      %v6427 = vadd.f32 0.0, %v6426
      %v6428 = vpop.f32.mrf.mxu0
      %v6429 = vpop.f32.mrf.mxu0
      %v6430 = vadd.f32 0.0, %v6429
      %v6431 = vpop.f32.mrf.mxu0
      %6432 = vmatprep.mubr.bf16.mxu0 0
      %6433 = vmatmul.mubr.bf16.gmra.mxu0 %v6381
      %v6434 = vpop.f32.mrf.mxu0
      %v6435 = vadd.f32 0.0, %v6434
      %v6436 = vpop.f32.mrf.mxu0
      %v6437 = vpop.f32.mrf.mxu0
      %v6438 = vadd.f32 0.0, %v6437
      %v6439 = vpop.f32.mrf.mxu0
      %6440 = vmatprep.mubr.bf16.mxu0 0
      %6441 = vmatmul.mubr.bf16.gmra.mxu0 %v6384
      %v6442 = vpop.f32.mrf.mxu0
      %v6443 = vadd.f32 0.0, %v6442
      %v6444 = vpop.f32.mrf.mxu0
      %v6445 = vpop.f32.mrf.mxu0
      %v6446 = vadd.f32 0.0, %v6445
      %v6447 = vpop.f32.mrf.mxu0
      %6448 = vmatprep.mubr.bf16.mxu0 0
      %6449 = vmatmul.mubr.bf16.gmra.mxu0 %v6387
      %v6450 = vpop.f32.mrf.mxu0
      %v6451 = vadd.f32 0.0, %v6450
      %v6452 = vpop.f32.mrf.mxu0
      %v6453 = vpop.f32.mrf.mxu0
      %v6454 = vpop.f32.mrf.mxu0
      %6455 = vdwg.mxu0
      %v6456 = vpack.c.bf16 %v6430, %v6427
      %v6457 = vpack.c.bf16 %v6438, %v6435
      %v6458 = vpack.c.bf16 %v6446, %v6443
      %v6459 = vpack.c.bf16 %v6451, %v6451
      %v6468 = vunpack.c.l.b16 %v4975
      %v6469 = vunpack.c.l.b16 %v4976
      %v6470 = vunpack.c.l.b16 %v4977
      %v6471 = vunpack.c.l.b16 %v4978
      %v6472 = vunpack.c.l.b16 %v4979
      %v6473 = vunpack.c.l.b16 %v4980
      %v6474 = vunpack.c.l.b16 %v4981
      %v6475 = vunpack.c.l.b16 %v4982
      %v6476 = vpack.c.b16 %v6469, %v6468
      %v6477 = vpack.c.b16 %v6471, %v6470
      %v6478 = vpack.c.b16 %v6473, %v6472
      %v6479 = vpack.c.b16 %v6475, %v6474
      %v6485 = vsel %vm4991, %v6456, 0
      %v6488 = vsel %vm4991, %v6457, 0
      %v6491 = vsel %vm4991, %v6458, 0
      %v6494 = vsel %vm4991, %v6459, 0
      %6496 = vmatprep.subr.bf16.mxu0 0
      %6497 = vmatpush1.bf16.msra.mxu0 0
      %6498 = vmatprep.subr.bf16.mxu0 0
      %6499 = vmatpush1.bf16.msra.mxu0 0
      %6500 = vmatprep.subr.bf16.mxu0 0
      %6501 = vmatpush1.bf16.msra.mxu0 0
      %6502 = vmatprep.subr.bf16.mxu0 0
      %6503 = vmatpush1.bf16.msra.mxu0 0
      %6504 = vmatprep.subr.bf16.mxu0 0
      %6505 = vmatpush1.bf16.msra.mxu0 %v6479
      %6506 = vmatprep.subr.bf16.mxu0 0
      %6507 = vmatpush1.bf16.msra.mxu0 %v6478
      %6508 = vmatprep.subr.bf16.mxu0 0
      %6509 = vmatpush1.bf16.msra.mxu0 %v6477
      %6510 = vmatprep.subr.bf16.mxu0 0
      %6511 = vmatpush1.bf16.msra.mxu0 %v6476
      %6512 = vmatprep.subr.bf16.mxu0 0
      %6513 = vmatpush2.bf16.msra.mxu0 0
      %6514 = vmatprep.subr.bf16.mxu0 0
      %6515 = vmatpush2.bf16.msra.mxu0 0
      %6516 = vmatprep.subr.bf16.mxu0 0
      %6517 = vmatpush2.bf16.msra.mxu0 0
      %6518 = vmatprep.subr.bf16.mxu0 0
      %6519 = vmatpush2.bf16.msra.mxu0 0
      %6520 = vmatprep.subr.bf16.mxu0 0
      %6521 = vmatpush2.bf16.msra.mxu0 0
      %6522 = vmatprep.subr.bf16.mxu0 0
      %6523 = vmatpush2.bf16.msra.mxu0 0
      %6524 = vmatprep.subr.bf16.mxu0 0
      %6525 = vmatpush2.bf16.msra.mxu0 0
      %6526 = vmatprep.subr.bf16.mxu0 0
      %6527 = vmatpush2.bf16.msra.mxu0 0
      %6528 = vmatprep.mubr.bf16.mxu0 0
      %6529 = vmatmul.mubr.bf16.gmra.mxu0 %v6485
      %v6530 = vpop.f32.mrf.mxu0
      %v6531 = vadd.f32 0.0, %v6530
      %v6532 = vpop.f32.mrf.mxu0
      %v6533 = vpop.f32.mrf.mxu0
      %v6534 = vadd.f32 0.0, %v6533
      %v6535 = vpop.f32.mrf.mxu0
      %6536 = vmatprep.mubr.bf16.mxu0 0
      %6537 = vmatmul.mubr.bf16.gmra.mxu0 %v6488
      %v6538 = vpop.f32.mrf.mxu0
      %v6539 = vadd.f32 0.0, %v6538
      %v6540 = vpop.f32.mrf.mxu0
      %v6541 = vpop.f32.mrf.mxu0
      %v6542 = vadd.f32 0.0, %v6541
      %v6543 = vpop.f32.mrf.mxu0
      %6544 = vmatprep.mubr.bf16.mxu0 0
      %6545 = vmatmul.mubr.bf16.gmra.mxu0 %v6491
      %v6546 = vpop.f32.mrf.mxu0
      %v6547 = vadd.f32 0.0, %v6546
      %v6548 = vpop.f32.mrf.mxu0
      %v6549 = vpop.f32.mrf.mxu0
      %v6550 = vadd.f32 0.0, %v6549
      %v6551 = vpop.f32.mrf.mxu0
      %6552 = vmatprep.mubr.bf16.mxu0 0
      %6553 = vmatmul.mubr.bf16.gmra.mxu0 %v6494
      %v6554 = vpop.f32.mrf.mxu0
      %v6555 = vadd.f32 0.0, %v6554
      %v6556 = vpop.f32.mrf.mxu0
      %v6557 = vpop.f32.mrf.mxu0
      %v6558 = vpop.f32.mrf.mxu0
      %6559 = vdwg.mxu0
      %v6560 = vadd.f32 %v6148, %v6531
      %v6561 = vadd.f32 %v6149, %v6534
      %v6562 = vadd.f32 %v6150, %v6539
      %v6563 = vadd.f32 %v6151, %v6542
      %v6564 = vadd.f32 %v6152, %v6547
      %v6565 = vadd.f32 %v6153, %v6550
      %v6566 = vadd.f32 %v6154, %v6555
      %v6567 = vadd.f32 %v4515, %v6560
      %v6568 = vadd.f32 %v4516, %v6561
      %v6569 = vadd.f32 %v4517, %v6562
      %v6570 = vadd.f32 %v4518, %v6563
      %v6571 = vadd.f32 %v4519, %v6564
      %v6572 = vadd.f32 %v4520, %v6565
      %v6573 = vadd.f32 %v4521, %v6566
      %s6574 = scalar_lea.vmem %s19, %s4510
      %v6575 = vld [vmem:[%s6574] sm:$0x1]
      %v6577 = vlaneseq
      %v6578 = vshrl.u32 %v6577, 7
      %v6579 = vsub.s32 0, %v6578
      %v6580 = vrot.slane %v6575, %v6579
      %v6582 = vadd.f32 %v6567, %v6580
      %v6583 = vadd.f32 %v6568, %v6580
      %v6584 = vadd.f32 %v6569, %v6580
      %v6585 = vadd.f32 %v6570, %v6580
      %v6586 = vadd.f32 %v6571, %v6580
      %v6587 = vadd.f32 %v6572, %v6580
      %v6588 = vadd.f32 %v6573, %v6580
      %s6589 = scalar_lea.vmem %s21, %s4510
      %v6590 = vld [vmem:[%s6589] sm:$0x1]
      %s6591 = scalar_lea.vmem %s23, %s4510
      %v6592 = vld [vmem:[%s6591] sm:$0x1]
      %v6593 = vsel %vm2035, %v6582, 0.0
      %6594 = vadd.xlane.f32.xlu0 %v6593
      %v6595 = vpop.xlane.xlu0 %6594
      %v6596 = vsel %vm2035, %v6583, 0.0
      %6597 = vadd.xlane.f32.xlu0 %v6596
      %v6598 = vpop.xlane.xlu0 %6597
      %v6599 = vsel %vm2035, %v6584, 0.0
      %6600 = vadd.xlane.f32.xlu0 %v6599
      %v6601 = vpop.xlane.xlu0 %6600
      %v6602 = vsel %vm2035, %v6585, 0.0
      %6603 = vadd.xlane.f32.xlu0 %v6602
      %v6604 = vpop.xlane.xlu0 %6603
      %v6605 = vsel %vm2035, %v6586, 0.0
      %6606 = vadd.xlane.f32.xlu0 %v6605
      %v6607 = vpop.xlane.xlu0 %6606
      %v6608 = vsel %vm2035, %v6587, 0.0
      %6609 = vadd.xlane.f32.xlu0 %v6608
      %v6610 = vpop.xlane.xlu0 %6609
      %v6611 = vsel %vm4544, %v6588, 0.0
      %6612 = vadd.xlane.f32.xlu0 %v6611
      %v6613 = vpop.xlane.xlu0 %6612
      %v6614 = vmul.f32 %v6595, %v2048
      %v6615 = vmul.f32 %v6598, %v2048
      %v6616 = vmul.f32 %v6601, %v2048
      %v6617 = vmul.f32 %v6604, %v2048
      %v6618 = vmul.f32 %v6607, %v2048
      %v6619 = vmul.f32 %v6610, %v2048
      %v6620 = vmul.f32 %v6613, %v2048
      %v6621 = vsub.f32 %v6582, %v6614
      %v6622 = vsub.f32 %v6583, %v6615
      %v6623 = vsub.f32 %v6584, %v6616
      %v6624 = vsub.f32 %v6585, %v6617
      %v6625 = vsub.f32 %v6586, %v6618
      %v6626 = vsub.f32 %v6587, %v6619
      %v6627 = vsub.f32 %v6588, %v6620
      %v6628 = vmul.f32 %v6621, %v6621
      %v6629 = vmul.f32 %v6622, %v6622
      %v6630 = vmul.f32 %v6623, %v6623
      %v6631 = vmul.f32 %v6624, %v6624
      %v6632 = vmul.f32 %v6625, %v6625
      %v6633 = vmul.f32 %v6626, %v6626
      %v6634 = vmul.f32 %v6627, %v6627
      %v6635 = vsel %vm2035, %v6628, 0.0
      %6636 = vadd.xlane.f32.xlu0 %v6635
      %v6637 = vpop.xlane.xlu0 %6636
      %v6638 = vsel %vm2035, %v6629, 0.0
      %6639 = vadd.xlane.f32.xlu0 %v6638
      %v6640 = vpop.xlane.xlu0 %6639
      %v6641 = vsel %vm2035, %v6630, 0.0
      %6642 = vadd.xlane.f32.xlu0 %v6641
      %v6643 = vpop.xlane.xlu0 %6642
      %v6644 = vsel %vm2035, %v6631, 0.0
      %6645 = vadd.xlane.f32.xlu0 %v6644
      %v6646 = vpop.xlane.xlu0 %6645
      %v6647 = vsel %vm2035, %v6632, 0.0
      %6648 = vadd.xlane.f32.xlu0 %v6647
      %v6649 = vpop.xlane.xlu0 %6648
      %v6650 = vsel %vm2035, %v6633, 0.0
      %6651 = vadd.xlane.f32.xlu0 %v6650
      %v6652 = vpop.xlane.xlu0 %6651
      %v6653 = vsel %vm4544, %v6634, 0.0
      %6654 = vadd.xlane.f32.xlu0 %v6653
      %v6655 = vpop.xlane.xlu0 %6654
      %v6656 = vmul.f32 %v6637, %v2048
      %v6657 = vmul.f32 %v6640, %v2048
      %v6658 = vmul.f32 %v6643, %v2048
      %v6659 = vmul.f32 %v6646, %v2048
      %v6660 = vmul.f32 %v6649, %v2048
      %v6661 = vmul.f32 %v6652, %v2048
      %v6662 = vmul.f32 %v6655, %v2048
      %v6663 = vadd.f32 %v6656, 1e-05
      %v6664 = vadd.f32 %v6657, 1e-05
      %v6665 = vadd.f32 %v6658, 1e-05
      %v6666 = vadd.f32 %v6659, 1e-05
      %v6667 = vadd.f32 %v6660, 1e-05
      %v6668 = vadd.f32 %v6661, 1e-05
      %v6669 = vadd.f32 %v6662, 1e-05
      %v6670 = vrsqrt.pop %v6663
      %v6671 = vrsqrt.pop %v6664
      %v6672 = vrsqrt.pop %v6665
      %v6673 = vrsqrt.pop %v6666
      %v6674 = vrsqrt.pop %v6667
      %v6675 = vrsqrt.pop %v6668
      %v6676 = vrsqrt.pop %v6669
      %v6677 = vmul.f32 %v6621, %v6670
      %v6678 = vmul.f32 %v6622, %v6671
      %v6679 = vmul.f32 %v6623, %v6672
      %v6680 = vmul.f32 %v6624, %v6673
      %v6681 = vmul.f32 %v6625, %v6674
      %v6682 = vmul.f32 %v6626, %v6675
      %v6683 = vmul.f32 %v6627, %v6676
      %v6685 = vlaneseq
      %v6686 = vshrl.u32 %v6685, 7
      %v6687 = vsub.s32 0, %v6686
      %v6688 = vrot.slane %v6590, %v6687
      %v6690 = vmul.f32 %v6677, %v6688
      %v6691 = vmul.f32 %v6678, %v6688
      %v6692 = vmul.f32 %v6679, %v6688
      %v6693 = vmul.f32 %v6680, %v6688
      %v6694 = vmul.f32 %v6681, %v6688
      %v6695 = vmul.f32 %v6682, %v6688
      %v6696 = vmul.f32 %v6683, %v6688
      %v6698 = vlaneseq
      %v6699 = vshrl.u32 %v6698, 7
      %v6700 = vsub.s32 0, %v6699
      %v6701 = vrot.slane %v6592, %v6700
      %v6703 = vadd.f32 %v6690, %v6701
      %v6704 = vadd.f32 %v6691, %v6701
      %v6705 = vadd.f32 %v6692, %v6701
      %v6706 = vadd.f32 %v6693, %v6701
      %v6707 = vadd.f32 %v6694, %v6701
      %v6708 = vadd.f32 %v6695, %v6701
      %v6709 = vadd.f32 %v6696, %v6701
      %v6710 = vpack.c.bf16 %v6704, %v6703
      %v6711 = vpack.c.bf16 %v6706, %v6705
      %v6712 = vpack.c.bf16 %v6708, %v6707
      %v6713 = vpack.c.bf16 %v6709, %v6709
      %s6714 = smul.u32 %s4510, 4
      %s6715 = smul.addr %s6714, 4
      %s6716 = scalar_lea.vmem [#allocation8], %s6715
      %v6717 = vld [vmem:[%s6716] sm:$0xf]
      %v6718 = vld [vmem:[%s6716 + $0x4] sm:$0xf]
      %v6719 = vld [vmem:[%s6716 + $0x8] sm:$0xf]
      %v6720 = vld [vmem:[%s6716 + $0xc] sm:$0xf]
      %s6721 = scalar_lea.vmem %s27, %s4510
      %v6722 = vld [vmem:[%s6721] sm:$0x1]
      %v6724 = vlaneseq
      %v6725 = vshrl.u32 %v6724, 7
      %v6726 = vsub.s32 0, %v6725
      %v6727 = vrot.slane %v6722, %v6726
      %v6733 = vunpack.c.l.b16 %v6717
      %v6734 = vunpack.c.l.b16 %v6718
      %v6735 = vunpack.c.l.b16 %v6719
      %v6736 = vunpack.c.l.b16 %v6720
      %v6737 = vpack.c.b16 %v6734, %v6733
      %v6738 = vpack.c.b16 %v6736, %v6735
      %v6742 = vsel %vm2035, %v6710, 0
      %v6745 = vsel %vm2035, %v6711, 0
      %v6748 = vsel %vm2035, %v6712, 0
      %v6751 = vsel %vm2035, %v6713, 0
      %6753 = vmatprep.subr.bf16.mxu0 0
      %6754 = vmatpush1.bf16.msra.mxu0 0
      %6755 = vmatprep.subr.bf16.mxu0 0
      %6756 = vmatpush1.bf16.msra.mxu0 0
      %6757 = vmatprep.subr.bf16.mxu0 0
      %6758 = vmatpush1.bf16.msra.mxu0 0
      %6759 = vmatprep.subr.bf16.mxu0 0
      %6760 = vmatpush1.bf16.msra.mxu0 0
      %6761 = vmatprep.subr.bf16.mxu0 0
      %6762 = vmatpush1.bf16.msra.mxu0 0
      %6763 = vmatprep.subr.bf16.mxu0 0
      %6764 = vmatpush1.bf16.msra.mxu0 0
      %6765 = vmatprep.subr.bf16.mxu0 0
      %6766 = vmatpush1.bf16.msra.mxu0 %v6738
      %6767 = vmatprep.subr.bf16.mxu0 0
      %6768 = vmatpush1.bf16.msra.mxu0 %v6737
      %6769 = vmatprep.subr.bf16.mxu0 0
      %6770 = vmatpush2.bf16.msra.mxu0 0
      %6771 = vmatprep.subr.bf16.mxu0 0
      %6772 = vmatpush2.bf16.msra.mxu0 0
      %6773 = vmatprep.subr.bf16.mxu0 0
      %6774 = vmatpush2.bf16.msra.mxu0 0
      %6775 = vmatprep.subr.bf16.mxu0 0
      %6776 = vmatpush2.bf16.msra.mxu0 0
      %6777 = vmatprep.subr.bf16.mxu0 0
      %6778 = vmatpush2.bf16.msra.mxu0 0
      %6779 = vmatprep.subr.bf16.mxu0 0
      %6780 = vmatpush2.bf16.msra.mxu0 0
      %6781 = vmatprep.subr.bf16.mxu0 0
      %6782 = vmatpush2.bf16.msra.mxu0 0
      %6783 = vmatprep.subr.bf16.mxu0 0
      %6784 = vmatpush2.bf16.msra.mxu0 0
      %6785 = vmatprep.mubr.bf16.mxu0 0
      %6786 = vmatmul.mubr.bf16.gmra.mxu0 %v6742
      %v6787 = vpop.f32.mrf.mxu0
      %v6788 = vadd.f32 %v6727, %v6787
      %v6789 = vpop.f32.mrf.mxu0
      %v6790 = vpop.f32.mrf.mxu0
      %v6791 = vadd.f32 %v6727, %v6790
      %v6792 = vpop.f32.mrf.mxu0
      %6793 = vmatprep.mubr.bf16.mxu0 0
      %6794 = vmatmul.mubr.bf16.gmra.mxu0 %v6745
      %v6795 = vpop.f32.mrf.mxu0
      %v6796 = vadd.f32 %v6727, %v6795
      %v6797 = vpop.f32.mrf.mxu0
      %v6798 = vpop.f32.mrf.mxu0
      %v6799 = vadd.f32 %v6727, %v6798
      %v6800 = vpop.f32.mrf.mxu0
      %6801 = vmatprep.mubr.bf16.mxu0 0
      %6802 = vmatmul.mubr.bf16.gmra.mxu0 %v6748
      %v6803 = vpop.f32.mrf.mxu0
      %v6804 = vadd.f32 %v6727, %v6803
      %v6805 = vpop.f32.mrf.mxu0
      %v6806 = vpop.f32.mrf.mxu0
      %v6807 = vadd.f32 %v6727, %v6806
      %v6808 = vpop.f32.mrf.mxu0
      %6809 = vmatprep.mubr.bf16.mxu0 0
      %6810 = vmatmul.mubr.bf16.gmra.mxu0 %v6751
      %v6811 = vpop.f32.mrf.mxu0
      %v6812 = vadd.f32 %v6727, %v6811
      %v6813 = vpop.f32.mrf.mxu0
      %v6814 = vpop.f32.mrf.mxu0
      %v6815 = vpop.f32.mrf.mxu0
      %6816 = vdwg.mxu0
      %v6817 = vmul.f32 %v6788, 0.5
      %v6818 = vmul.f32 %v6791, 0.5
      %v6819 = vmul.f32 %v6796, 0.5
      %v6820 = vmul.f32 %v6799, 0.5
      %v6821 = vmul.f32 %v6804, 0.5
      %v6822 = vmul.f32 %v6807, 0.5
      %v6823 = vmul.f32 %v6812, 0.5
      %v6824 = vmul.f32 %v6788, 0.044715
      %v6825 = vmul.f32 %v6791, 0.044715
      %v6826 = vmul.f32 %v6796, 0.044715
      %v6827 = vmul.f32 %v6799, 0.044715
      %v6828 = vmul.f32 %v6804, 0.044715
      %v6829 = vmul.f32 %v6807, 0.044715
      %v6830 = vmul.f32 %v6812, 0.044715
      %v6831 = vmul.f32 %v6824, %v6788
      %v6832 = vmul.f32 %v6825, %v6791
      %v6833 = vmul.f32 %v6826, %v6796
      %v6834 = vmul.f32 %v6827, %v6799
      %v6835 = vmul.f32 %v6828, %v6804
      %v6836 = vmul.f32 %v6829, %v6807
      %v6837 = vmul.f32 %v6830, %v6812
      %v6838 = vmul.f32 %v6831, %v6788
      %v6839 = vmul.f32 %v6832, %v6791
      %v6840 = vmul.f32 %v6833, %v6796
      %v6841 = vmul.f32 %v6834, %v6799
      %v6842 = vmul.f32 %v6835, %v6804
      %v6843 = vmul.f32 %v6836, %v6807
      %v6844 = vmul.f32 %v6837, %v6812
      %v6845 = vadd.f32 %v6788, %v6838
      %v6846 = vadd.f32 %v6791, %v6839
      %v6847 = vadd.f32 %v6796, %v6840
      %v6848 = vadd.f32 %v6799, %v6841
      %v6849 = vadd.f32 %v6804, %v6842
      %v6850 = vadd.f32 %v6807, %v6843
      %v6851 = vadd.f32 %v6812, %v6844
      %v6852 = vmul.f32 %v6845, 0.7978846
      %v6853 = vmul.f32 %v6846, 0.7978846
      %v6854 = vmul.f32 %v6847, 0.7978846
      %v6855 = vmul.f32 %v6848, 0.7978846
      %v6856 = vmul.f32 %v6849, 0.7978846
      %v6857 = vmul.f32 %v6850, 0.7978846
      %v6858 = vmul.f32 %v6851, 0.7978846
      %v6859 = vtanh.pop %v6852
      %v6860 = vtanh.pop %v6853
      %v6861 = vtanh.pop %v6854
      %v6862 = vtanh.pop %v6855
      %v6863 = vtanh.pop %v6856
      %v6864 = vtanh.pop %v6857
      %v6865 = vtanh.pop %v6858
      %v6866 = vadd.f32 %v6859, 1.0
      %v6867 = vadd.f32 %v6860, 1.0
      %v6868 = vadd.f32 %v6861, 1.0
      %v6869 = vadd.f32 %v6862, 1.0
      %v6870 = vadd.f32 %v6863, 1.0
      %v6871 = vadd.f32 %v6864, 1.0
      %v6872 = vadd.f32 %v6865, 1.0
      %v6873 = vmul.f32 %v6817, %v6866
      %v6874 = vmul.f32 %v6818, %v6867
      %v6875 = vmul.f32 %v6819, %v6868
      %v6876 = vmul.f32 %v6820, %v6869
      %v6877 = vmul.f32 %v6821, %v6870
      %v6878 = vmul.f32 %v6822, %v6871
      %v6879 = vmul.f32 %v6823, %v6872
      %v6880 = vpack.c.bf16 %v6874, %v6873
      %v6881 = vpack.c.bf16 %v6876, %v6875
      %v6882 = vpack.c.bf16 %v6878, %v6877
      %v6883 = vpack.c.bf16 %v6879, %v6879
      %s6884 = smul.u32 %s4510, 8
      %s6885 = smul.addr %s6884, 4
      %s6886 = scalar_lea.vmem [#allocation10], %s6885
      %v6887 = vld [vmem:[%s6886] sm:$0xf]
      %v6888 = vld [vmem:[%s6886 + $0x4] sm:$0xf]
      %v6889 = vld [vmem:[%s6886 + $0x8] sm:$0xf]
      %v6890 = vld [vmem:[%s6886 + $0xc] sm:$0xf]
      %v6891 = vld [vmem:[%s6886 + $0x10] sm:$0xf]
      %v6892 = vld [vmem:[%s6886 + $0x14] sm:$0xf]
      %v6893 = vld [vmem:[%s6886 + $0x18] sm:$0xf]
      %v6894 = vld [vmem:[%s6886 + $0x1c] sm:$0xf]
      %v6903 = vunpack.c.l.b16 %v6887
      %v6904 = vunpack.c.l.b16 %v6888
      %v6905 = vunpack.c.l.b16 %v6889
      %v6906 = vunpack.c.l.b16 %v6890
      %v6907 = vunpack.c.l.b16 %v6891
      %v6908 = vunpack.c.l.b16 %v6892
      %v6909 = vunpack.c.l.b16 %v6893
      %v6910 = vunpack.c.l.b16 %v6894
      %v6911 = vpack.c.b16 %v6904, %v6903
      %v6912 = vpack.c.b16 %v6906, %v6905
      %v6913 = vpack.c.b16 %v6908, %v6907
      %v6914 = vpack.c.b16 %v6910, %v6909
      %v6920 = vsel %vm4991, %v6880, 0
      %v6923 = vsel %vm4991, %v6881, 0
      %v6926 = vsel %vm4991, %v6882, 0
      %v6929 = vsel %vm4991, %v6883, 0
      %6931 = vmatprep.subr.bf16.mxu0 0
      %6932 = vmatpush1.bf16.msra.mxu0 0
      %6933 = vmatprep.subr.bf16.mxu0 0
      %6934 = vmatpush1.bf16.msra.mxu0 0
      %6935 = vmatprep.subr.bf16.mxu0 0
      %6936 = vmatpush1.bf16.msra.mxu0 0
      %6937 = vmatprep.subr.bf16.mxu0 0
      %6938 = vmatpush1.bf16.msra.mxu0 0
      %6939 = vmatprep.subr.bf16.mxu0 0
      %6940 = vmatpush1.bf16.msra.mxu0 %v6914
      %6941 = vmatprep.subr.bf16.mxu0 0
      %6942 = vmatpush1.bf16.msra.mxu0 %v6913
      %6943 = vmatprep.subr.bf16.mxu0 0
      %6944 = vmatpush1.bf16.msra.mxu0 %v6912
      %6945 = vmatprep.subr.bf16.mxu0 0
      %6946 = vmatpush1.bf16.msra.mxu0 %v6911
      %6947 = vmatprep.subr.bf16.mxu0 0
      %6948 = vmatpush2.bf16.msra.mxu0 0
      %6949 = vmatprep.subr.bf16.mxu0 0
      %6950 = vmatpush2.bf16.msra.mxu0 0
      %6951 = vmatprep.subr.bf16.mxu0 0
      %6952 = vmatpush2.bf16.msra.mxu0 0
      %6953 = vmatprep.subr.bf16.mxu0 0
      %6954 = vmatpush2.bf16.msra.mxu0 0
      %6955 = vmatprep.subr.bf16.mxu0 0
      %6956 = vmatpush2.bf16.msra.mxu0 0
      %6957 = vmatprep.subr.bf16.mxu0 0
      %6958 = vmatpush2.bf16.msra.mxu0 0
      %6959 = vmatprep.subr.bf16.mxu0 0
      %6960 = vmatpush2.bf16.msra.mxu0 0
      %6961 = vmatprep.subr.bf16.mxu0 0
      %6962 = vmatpush2.bf16.msra.mxu0 0
      %6963 = vmatprep.mubr.bf16.mxu0 0
      %6964 = vmatmul.mubr.bf16.gmra.mxu0 %v6920
      %v6965 = vpop.f32.mrf.mxu0
      %v6966 = vadd.f32 0.0, %v6965
      %v6967 = vpop.f32.mrf.mxu0
      %v6968 = vpop.f32.mrf.mxu0
      %v6969 = vadd.f32 0.0, %v6968
      %v6970 = vpop.f32.mrf.mxu0
      %6971 = vmatprep.mubr.bf16.mxu0 0
      %6972 = vmatmul.mubr.bf16.gmra.mxu0 %v6923
      %v6973 = vpop.f32.mrf.mxu0
      %v6974 = vadd.f32 0.0, %v6973
      %v6975 = vpop.f32.mrf.mxu0
      %v6976 = vpop.f32.mrf.mxu0
      %v6977 = vadd.f32 0.0, %v6976
      %v6978 = vpop.f32.mrf.mxu0
      %6979 = vmatprep.mubr.bf16.mxu0 0
      %6980 = vmatmul.mubr.bf16.gmra.mxu0 %v6926
      %v6981 = vpop.f32.mrf.mxu0
      %v6982 = vadd.f32 0.0, %v6981
      %v6983 = vpop.f32.mrf.mxu0
      %v6984 = vpop.f32.mrf.mxu0
      %v6985 = vadd.f32 0.0, %v6984
      %v6986 = vpop.f32.mrf.mxu0
      %6987 = vmatprep.mubr.bf16.mxu0 0
      %6988 = vmatmul.mubr.bf16.gmra.mxu0 %v6929
      %v6989 = vpop.f32.mrf.mxu0
      %v6990 = vadd.f32 0.0, %v6989
      %v6991 = vpop.f32.mrf.mxu0
      %v6992 = vpop.f32.mrf.mxu0
      %v6993 = vpop.f32.mrf.mxu0
      %6994 = vdwg.mxu0
      %v6995 = vadd.f32 %v6582, %v6966
      %v6996 = vadd.f32 %v6583, %v6969
      %v6997 = vadd.f32 %v6584, %v6974
      %v6998 = vadd.f32 %v6585, %v6977
      %v6999 = vadd.f32 %v6586, %v6982
      %v7000 = vadd.f32 %v6587, %v6985
      %v7001 = vadd.f32 %v6588, %v6990
      %s7002 = scalar_lea.vmem %s31, %s4510
      %v7003 = vld [vmem:[%s7002] sm:$0x1]
      %v7005 = vlaneseq
      %v7006 = vshrl.u32 %v7005, 7
      %v7007 = vsub.s32 0, %v7006
      %v7008 = vrot.slane %v7003, %v7007
      %v7010 = vadd.f32 %v6995, %v7008
      %v7011 = vadd.f32 %v6996, %v7008
      %v7012 = vadd.f32 %v6997, %v7008
      %v7013 = vadd.f32 %v6998, %v7008
      %v7014 = vadd.f32 %v6999, %v7008
      %v7015 = vadd.f32 %v7000, %v7008
      %v7016 = vadd.f32 %v7001, %v7008
    $region284: #{_lambda_.1} parent=1 // loop_footer
      %s4514 = sadd.s32 1, %s4510
    $region285: #{_lambda_.1} parent=1 // loop_footer_branch
      %4509 = sbr.rel target = $region281
    $region286: #{_lambda_.1} parent=1 // loop_exit
      _
    %v7017 = vld [vmem:[%s5] sm:$0x3]
    %vm7018 = vcmask 408576
    %v7020 = vsel %vm7018, %v7017, 0
    %v7023 = vsel %vm470, %v4521, 0
    %7025 = vmatprep.subr.mxu0 0.0
    %7026 = vmatpush1.msra.mxu0 0.0
    %7027 = vmatprep.subr.mxu0 0.0
    %7028 = vmatpush1.msra.mxu0 0.0
    %7029 = vmatprep.subr.mxu0 0.0
    %7030 = vmatpush1.msra.mxu0 0.0
    %7031 = vmatprep.subr.mxu0 0.0
    %7032 = vmatpush1.msra.mxu0 0.0
    %7033 = vmatprep.subr.mxu0 0.0
    %7034 = vmatpush1.msra.mxu0 0.0
    %7035 = vmatprep.subr.mxu0 0.0
    %7036 = vmatpush1.msra.mxu0 0.0
    %7037 = vmatprep.subr.mxu0 0.0
    %7038 = vmatpush1.msra.mxu0 0.0
    %7039 = vmatprep.subr.mxu0 0.0
    %7040 = vmatpush1.msra.mxu0 0.0
    %7041 = vmatprep.subr.mxu0 0.0
    %7042 = vmatpush1.msra.mxu0 0.0
    %7043 = vmatprep.subr.mxu0 0.0
    %7044 = vmatpush1.msra.mxu0 %v7023
    %7045 = vmatprep.subr.mxu0 0.0
    %7046 = vmatpush1.msra.mxu0 %v4520
    %7047 = vmatprep.subr.mxu0 0.0
    %7048 = vmatpush1.msra.mxu0 %v4519
    %7049 = vmatprep.subr.mxu0 0.0
    %7050 = vmatpush1.msra.mxu0 %v4518
    %7051 = vmatprep.subr.mxu0 0.0
    %7052 = vmatpush1.msra.mxu0 %v4517
    %7053 = vmatprep.subr.mxu0 0.0
    %7054 = vmatpush1.msra.mxu0 %v4516
    %7055 = vmatprep.subr.mxu0 0.0
    %7056 = vmatpush1.msra.mxu0 %v4515
    %7057 = vmatprep.subr.mxu0 0.0
    %7058 = vmatpush2.msra.mxu0 0.0
    %7059 = vmatprep.subr.mxu0 0.0
    %7060 = vmatpush2.msra.mxu0 0.0
    %7061 = vmatprep.subr.mxu0 0.0
    %7062 = vmatpush2.msra.mxu0 0.0
    %7063 = vmatprep.subr.mxu0 0.0
    %7064 = vmatpush2.msra.mxu0 0.0
    %7065 = vmatprep.subr.mxu0 0.0
    %7066 = vmatpush2.msra.mxu0 0.0
    %7067 = vmatprep.subr.mxu0 0.0
    %7068 = vmatpush2.msra.mxu0 0.0
    %7069 = vmatprep.subr.mxu0 0.0
    %7070 = vmatpush2.msra.mxu0 0.0
    %7071 = vmatprep.subr.mxu0 0.0
    %7072 = vmatpush2.msra.mxu0 0.0
    %7073 = vmatprep.subr.mxu0 0.0
    %7074 = vmatpush2.msra.mxu0 0.0
    %7075 = vmatprep.subr.mxu0 0.0
    %7076 = vmatpush2.msra.mxu0 0.0
    %7077 = vmatprep.subr.mxu0 0.0
    %7078 = vmatpush2.msra.mxu0 0.0
    %7079 = vmatprep.subr.mxu0 0.0
    %7080 = vmatpush2.msra.mxu0 0.0
    %7081 = vmatprep.subr.mxu0 0.0
    %7082 = vmatpush2.msra.mxu0 0.0
    %7083 = vmatprep.subr.mxu0 0.0
    %7084 = vmatpush2.msra.mxu0 0.0
    %7085 = vmatprep.subr.mxu0 0.0
    %7086 = vmatpush2.msra.mxu0 0.0
    %7087 = vmatprep.subr.mxu0 0.0
    %7088 = vmatpush2.msra.mxu0 0.0
    %7089 = vmatprep.mubr.f32.mxu0 0.0
    %7090 = vmatmul.mubr.f32.gmra.mxu0 %v7020
    %v7091 = vpop.f32.mrf.mxu0
    %v7092 = vadd.f32 0.0, %v7091
    %v7093 = vpop.f32.mrf.mxu0
    %7094 = vdwg.mxu0
    %v7095 = vld [vmem:[%s55] sm:$0x1]
    %v7096 = vld [vmem:[%s57] sm:$0x1]
    %vm7097 = vcmask 254976
    %v7098 = vsel %vm7097, %v7092, 0.0
    %7099 = vadd.xlane.f32.xlu0 %v7098
    %v7100 = vpop.xlane.xlu0 %7099
    %v7101 = vmul.f32 %v7100, %v2048
    %v7102 = vsub.f32 %v7092, %v7101
    %v7103 = vmul.f32 %v7102, %v7102
    %v7104 = vsel %vm7097, %v7103, 0.0
    %7105 = vadd.xlane.f32.xlu0 %v7104
    %v7106 = vpop.xlane.xlu0 %7105
    %v7107 = vmul.f32 %v7106, %v2048
    %v7108 = vadd.f32 %v7107, 1e-05
    %v7109 = vrsqrt.pop %v7108
    %v7110 = vmul.f32 %v7102, %v7109
    %v7112 = vlaneseq
    %v7113 = vshrl.u32 %v7112, 7
    %v7114 = vsub.s32 0, %v7113
    %v7115 = vrot.slane %v7095, %v7114
    %v7117 = vmul.f32 %v7110, %v7115
    %v7119 = vlaneseq
    %v7120 = vshrl.u32 %v7119, 7
    %v7121 = vsub.s32 0, %v7120
    %v7122 = vrot.slane %v7096, %v7121
    %v7124 = vadd.f32 %v7117, %v7122
    %v7125 = vld [vmem:[#allocation16] sm:$0xff]
    %v7126 = vld [vmem:[#allocation16 + $0x8] sm:$0xff]
    %v7127 = vld [vmem:[#allocation16 + $0x10] sm:$0xff]
    %v7128 = vld [vmem:[#allocation16 + $0x18] sm:$0xff]
    %v7129 = vld [vmem:[%s61] sm:$0x1]
    %v7131 = vlaneseq
    %v7132 = vshrl.u32 %v7131, 7
    %v7133 = vsub.s32 0, %v7132
    %v7134 = vrot.slane %v7129, %v7133
    %v7137 = vsel %vm2035, %v7124, 0
    %7139 = vmatprep.subr.mxu0 0.0
    %7140 = vmatpush1.msra.mxu0 0.0
    %7141 = vmatprep.subr.mxu0 0.0
    %7142 = vmatpush1.msra.mxu0 0.0
    %7143 = vmatprep.subr.mxu0 0.0
    %7144 = vmatpush1.msra.mxu0 0.0
    %7145 = vmatprep.subr.mxu0 0.0
    %7146 = vmatpush1.msra.mxu0 0.0
    %7147 = vmatprep.subr.mxu0 0.0
    %7148 = vmatpush1.msra.mxu0 0.0
    %7149 = vmatprep.subr.mxu0 0.0
    %7150 = vmatpush1.msra.mxu0 0.0
    %7151 = vmatprep.subr.mxu0 0.0
    %7152 = vmatpush1.msra.mxu0 0.0
    %7153 = vmatprep.subr.mxu0 0.0
    %7154 = vmatpush1.msra.mxu0 0.0
    %7155 = vmatprep.subr.mxu0 0.0
    %7156 = vmatpush1.msra.mxu0 0.0
    %7157 = vmatprep.subr.mxu0 0.0
    %7158 = vmatpush1.msra.mxu0 0.0
    %7159 = vmatprep.subr.mxu0 0.0
    %7160 = vmatpush1.msra.mxu0 0.0
    %7161 = vmatprep.subr.mxu0 0.0
    %7162 = vmatpush1.msra.mxu0 0.0
    %7163 = vmatprep.subr.mxu0 0.0
    %7164 = vmatpush1.msra.mxu0 %v7128
    %7165 = vmatprep.subr.mxu0 0.0
    %7166 = vmatpush1.msra.mxu0 %v7127
    %7167 = vmatprep.subr.mxu0 0.0
    %7168 = vmatpush1.msra.mxu0 %v7126
    %7169 = vmatprep.subr.mxu0 0.0
    %7170 = vmatpush1.msra.mxu0 %v7125
    %7171 = vmatprep.subr.mxu0 0.0
    %7172 = vmatpush2.msra.mxu0 0.0
    %7173 = vmatprep.subr.mxu0 0.0
    %7174 = vmatpush2.msra.mxu0 0.0
    %7175 = vmatprep.subr.mxu0 0.0
    %7176 = vmatpush2.msra.mxu0 0.0
    %7177 = vmatprep.subr.mxu0 0.0
    %7178 = vmatpush2.msra.mxu0 0.0
    %7179 = vmatprep.subr.mxu0 0.0
    %7180 = vmatpush2.msra.mxu0 0.0
    %7181 = vmatprep.subr.mxu0 0.0
    %7182 = vmatpush2.msra.mxu0 0.0
    %7183 = vmatprep.subr.mxu0 0.0
    %7184 = vmatpush2.msra.mxu0 0.0
    %7185 = vmatprep.subr.mxu0 0.0
    %7186 = vmatpush2.msra.mxu0 0.0
    %7187 = vmatprep.subr.mxu0 0.0
    %7188 = vmatpush2.msra.mxu0 0.0
    %7189 = vmatprep.subr.mxu0 0.0
    %7190 = vmatpush2.msra.mxu0 0.0
    %7191 = vmatprep.subr.mxu0 0.0
    %7192 = vmatpush2.msra.mxu0 0.0
    %7193 = vmatprep.subr.mxu0 0.0
    %7194 = vmatpush2.msra.mxu0 0.0
    %7195 = vmatprep.subr.mxu0 0.0
    %7196 = vmatpush2.msra.mxu0 0.0
    %7197 = vmatprep.subr.mxu0 0.0
    %7198 = vmatpush2.msra.mxu0 0.0
    %7199 = vmatprep.subr.mxu0 0.0
    %7200 = vmatpush2.msra.mxu0 0.0
    %7201 = vmatprep.subr.mxu0 0.0
    %7202 = vmatpush2.msra.mxu0 0.0
    %7203 = vmatprep.mubr.f32.mxu0 0.0
    %7204 = vmatmul.mubr.f32.gmra.mxu0 %v7137
    %v7205 = vpop.f32.mrf.mxu0
    %v7206 = vadd.f32 %v7134, %v7205
    %v7207 = vpop.f32.mrf.mxu0
    %7208 = vdwg.mxu0
    %vm7209 = vcmask 74752
    %7210 = vst.msk [vmem:[#allocation31] sm:$0x3] %vm7209, %v7206
    // Predicated region
    $region287: #{_lambda_.1} parent=1 // pred_check
      _
    $region288: #{_lambda_.1} parent=1 // pred_check_branch
      %7212 = sbr.rel (0) target = $region290
    $region289: #{_lambda_.1} parent=1 // pred_region
      %s7214 = ssub.s32 32, 32
      %7215 = vsyncadd [#allocation4], %s7214
      %s7217 = sshll.u32 [#allocation31], 4
      %s7218 = int_to_ptr.vmem [resolvable:$true] %s7217
      %7220 = dma.vmem_to_hbm [thread:$0]  %s7218, 32, %s97, [#allocation4]
    $region290: #{_lambda_.1} parent=1 // pred_fallthru
      _
    // Predicated region
    $region291: #{_lambda_.1} parent=1 // pred_check
      _
    $region292: #{_lambda_.1} parent=1 // pred_check_branch
      %7222 = sbr.rel (0) target = $region294
    $region293: #{_lambda_.1} parent=1 // pred_region
      %7223 = dma.done [#allocation4], 32
    $region294: #{_lambda_.1} parent=1 // pred_fallthru
      _
    %7224 = vsyncpa [#allocation3], 1
    %7225 = vsyncpa [#allocation6], 1
    %7226 = vsyncpa [#allocation9], 1
    %7227 = vsyncpa [#allocation12], 1
    %7228 = vsyncpa [#allocation15], 1
    %7229 = vsyncpa [#allocation18], 1
    %7230 = vsyncpa [#allocation21], 1
    %7231 = vsyncpa [#allocation24], 1
    %7232 = vsyncpa [#allocation27], 1
    %7233 = vsyncpa [#allocation30], 1
    %7234 = vsyncpa [#allocation4], 1

</llo_original>
